<compile_context>
chip_gen: v7x
topology: tpu7x:2x2x1
jax: 0.10.0
libtpu: 0.0.40
codegen_flags: <defaults>
</compile_context>

<pallas_src>
import functools
import math
from collections import namedtuple

import numpy as np
import jax
import jax.numpy as jnp
from jax.experimental import pallas as pl
from jax.experimental.pallas import tpu as pltpu

EPS = 1e-5
VMEM_LIMIT = 32 * 1024 * 1024  # within the scoped VMEM budget of v5e/v6e/v7x
MATMUL_TM_CAP = 256            # row-tile cap for the matmul kernel (multiple of 8)


def _cparams(n_grid_axes):
    return pltpu.CompilerParams(
        dimension_semantics=("parallel",) * n_grid_axes,
        vmem_limit_bytes=VMEM_LIMIT,
    )


def _pick_tile(m, cap=MATMUL_TM_CAP):
    """Largest divisor of m that is <= cap (m itself if already <= cap)."""
    if m <= cap:
        return m
    for t in range(cap, 0, -1):
        if m % t == 0:
            return t
    return m


# -----------------------------------------------------------------------------
# Pallas kernels
# -----------------------------------------------------------------------------
def _matmul_bn_kernel(a_ref, b_ref, s_ref, c_ref, o_ref, *, relu_in):
    a = a_ref[...]
    if relu_in:
        a = jnp.maximum(a, 0.0)
    acc = jnp.dot(a, b_ref[...], preferred_element_type=jnp.float32)
    o_ref[...] = acc * s_ref[...] + c_ref[...]


def pallas_matmul_bn(a, b, scale, bias, relu_in):
    """out = (relu?(a) @ b) * scale + bias (per output column), tiled over rows of a."""
    M, K = a.shape
    Kb, N = b.shape
    assert K == Kb
    tm = _pick_tile(M)
    kern = functools.partial(_matmul_bn_kernel, relu_in=bool(relu_in))
    return pl.pallas_call(
        kern,
        out_shape=jax.ShapeDtypeStruct((M, N), jnp.float32),
        grid=(M // tm,),
        in_specs=[
            pl.BlockSpec((tm, K), lambda i: (i, 0)),
            pl.BlockSpec((K, N), lambda i: (0, 0)),
            pl.BlockSpec((1, N), lambda i: (0, 0)),
            pl.BlockSpec((1, N), lambda i: (0, 0)),
        ],
        out_specs=pl.BlockSpec((tm, N), lambda i: (i, 0)),
        compiler_params=_cparams(1),
    )(a, b, scale.reshape(1, N), bias.reshape(1, N))


def _dwpw_bn_kernel(x_ref, w_ref, pw_ref, s_ref, c_ref, o_ref, *, offsets, ho, wo, relu_in):
    """Fused ReLU? -> depthwise -> 1x1 conv -> folded BN for one image."""
    x = x_ref[0]                                    # (Hp, Wp, C) -- loaded once
    if relu_in:
        x = jnp.maximum(x, 0.0)                     # single ReLU on the un-duplicated tile
    w = w_ref[...]                                  # (kk, 1, C)
    acc = None
    for t, (dy, dx) in enumerate(offsets):          # static unroll over taps
        term = x[dy:dy + ho, dx:dx + wo, :] * w[t]  # (Ho, Wo, C)
        acc = term if acc is None else acc + term
    c_in = x.shape[-1]
    y = acc.reshape(ho * wo, c_in)                  # wo % 8 == 0 guaranteed by caller
    out = jnp.dot(y, pw_ref[...], preferred_element_type=jnp.float32)
    o_ref[0] = out * s_ref[...] + c_ref[...]


def _dw_kernel(x_ref, w_ref, o_ref, *, offsets, ho, wo, relu_in):
    """Depthwise-only fallback (used when W is not sublane aligned)."""
    x = x_ref[0]
    if relu_in:
        x = jnp.maximum(x, 0.0)
    w = w_ref[...]
    acc = None
    for t, (dy, dx) in enumerate(offsets):
        term = x[dy:dy + ho, dx:dx + wo, :] * w[t]
        acc = term if acc is None else acc + term
    o_ref[0] = acc


def _maxpool_kernel(x_ref, o_ref, *, offsets, ho, wo):
    x = x_ref[0]
    acc = None
    for (dy, dx) in offsets:
        sl = x[dy:dy + ho, dx:dx + wo, :]
        acc = sl if acc is None else jnp.maximum(acc, sl)
    o_ref[0] = acc


def _avgpool_kernel(x_ref, inv_ref, o_ref, *, offsets, ho, wo):
    x = x_ref[0]
    acc = None
    for (dy, dx) in offsets:
        sl = x[dy:dy + ho, dx:dx + wo, :]
        acc = sl if acc is None else acc + sl
    o_ref[0] = acc * inv_ref[0]                     # count_include_pad=False via precomputed 1/cnt


def _head_kernel(x_ref, w_ref, b_ref, o_ref):
    pooled = jnp.mean(x_ref[...], axis=1)           # global average pool: (N, C)
    o_ref[...] = jnp.dot(pooled, w_ref[...], preferred_element_type=jnp.float32) + b_ref[...]


# -----------------------------------------------------------------------------
# Wrappers (host side does only pad / reshape / subsample glue)
# -----------------------------------------------------------------------------
def fused_dwpw_bn(x, dw_w, pw_w, scale, bias, k, stride, pad, dilation, relu_in):
    """ReLU? -> depthwise(k,'same') -> 1x1 conv -> folded BN; host subsample handles stride>1."""
    N, H, W, C = x.shape
    Cout = pw_w.shape[-1]
    assert dilation * (k - 1) == 2 * pad, "DARTS conv ops are all 'same'-padded"
    kk = k * k
    offsets = tuple((dy * dilation, dx * dilation) for dy in range(k) for dx in range(k))
    xp = jnp.pad(x, ((0, 0), (pad, pad), (pad, pad), (0, 0)))
    Hp, Wp = H + 2 * pad, W + 2 * pad

    if W % 8 == 0:
        kern = functools.partial(_dwpw_bn_kernel, offsets=offsets, ho=H, wo=W,
                                 relu_in=bool(relu_in))
        out = pl.pallas_call(
            kern,
            out_shape=jax.ShapeDtypeStruct((N, H * W, Cout), jnp.float32),
            grid=(N,),
            in_specs=[
                pl.BlockSpec((1, Hp, Wp, C), lambda n: (n, 0, 0, 0)),
                pl.BlockSpec((kk, 1, C), lambda n: (0, 0, 0)),
                pl.BlockSpec((C, Cout), lambda n: (0, 0)),
                pl.BlockSpec((1, Cout), lambda n: (0, 0)),
                pl.BlockSpec((1, Cout), lambda n: (0, 0)),
            ],
            out_specs=pl.BlockSpec((1, H * W, Cout), lambda n: (n, 0, 0)),
            compiler_params=_cparams(1),
        )(xp, dw_w.reshape(kk, 1, C), pw_w, scale.reshape(1, Cout), bias.reshape(1, Cout))
        y = out.reshape(N, H, W, Cout)
    else:
        # Fallback: depthwise kernel (4D output, no in-kernel reshape) + tiled pointwise matmul.
        dw = pl.pallas_call(
            functools.partial(_dw_kernel, offsets=offsets, ho=H, wo=W, relu_in=bool(relu_in)),
            out_shape=jax.ShapeDtypeStruct((N, H, W, C), jnp.float32),
            grid=(N,),
            in_specs=[
                pl.BlockSpec((1, Hp, Wp, C), lambda n: (n, 0, 0, 0)),
                pl.BlockSpec((kk, 1, C), lambda n: (0, 0, 0)),
            ],
            out_specs=pl.BlockSpec((1, H, W, C), lambda n: (n, 0, 0, 0)),
            compiler_params=_cparams(1),
        )(xp, dw_w.reshape(kk, 1, C))
        y = pointwise_bn(dw, pw_w, scale, bias, relu_in=False)

    if stride > 1:
        # TODO(synk): stride-2 depthwise is evaluated at stride 1 and subsampled (pointwise/BN
        # commute with subsampling); a strided in-kernel variant would avoid the 4x extra work.
        y = y[:, ::stride, ::stride, :]
    return y


_POOL_OFFSETS = tuple((dy, dx) for dy in range(3) for dx in range(3))


def max_pool3(x, stride):
    N, H, W, C = x.shape
    xp = jnp.pad(x, ((0, 0), (1, 1), (1, 1), (0, 0)), constant_values=float("-inf"))
    y = pl.pallas_call(
        functools.partial(_maxpool_kernel, offsets=_POOL_OFFSETS, ho=H, wo=W),
        out_shape=jax.ShapeDtypeStruct((N, H, W, C), jnp.float32),
        grid=(N,),
        in_specs=[pl.BlockSpec((1, H + 2, W + 2, C), lambda n: (n, 0, 0, 0))],
        out_specs=pl.BlockSpec((1, H, W, C), lambda n: (n, 0, 0, 0)),
        compiler_params=_cparams(1),
    )(xp)
    if stride > 1:
        y = y[:, ::stride, ::stride, :]
    return y


def _avg_inv_counts(H, W):
    """Reciprocal valid-count per output position (3x3, pad 1, stride 1) -- compile-time const."""
    r = np.arange(H)
    cr = np.minimum(r + 1, H - 1) - np.maximum(r - 1, 0) + 1
    c = np.arange(W)
    cc = np.minimum(c + 1, W - 1) - np.maximum(c - 1, 0) + 1
    cnt = cr[:, None].astype(np.float32) * cc[None, :].astype(np.float32)
    return jnp.asarray((1.0 / cnt).reshape(1, H, W, 1), jnp.float32)


def avg_pool3(x, stride):
    N, H, W, C = x.shape
    xp = jnp.pad(x, ((0, 0), (1, 1), (1, 1), (0, 0)))
    inv = _avg_inv_counts(H, W)
    y = pl.pallas_call(
        functools.partial(_avgpool_kernel, offsets=_POOL_OFFSETS, ho=H, wo=W),
        out_shape=jax.ShapeDtypeStruct((N, H, W, C), jnp.float32),
        grid=(N,),
        in_specs=[
            pl.BlockSpec((1, H + 2, W + 2, C), lambda n: (n, 0, 0, 0)),
            pl.BlockSpec((1, H, W, 1), lambda n: (0, 0, 0, 0)),
        ],
        out_specs=pl.BlockSpec((1, H, W, C), lambda n: (n, 0, 0, 0)),
        compiler_params=_cparams(1),
    )(xp, inv)
    if stride > 1:
        y = y[:, ::stride, ::stride, :]
    return y


def pallas_head(x, w, b, ncls):
    N, H, W, C = x.shape
    xr = x.reshape(N, H * W, C)
    return pl.pallas_call(
        _head_kernel,
        out_shape=jax.ShapeDtypeStruct((N, ncls), jnp.float32),
        grid=(1,),
        in_specs=[
            pl.BlockSpec((N, H * W, C), lambda i: (0, 0, 0)),
            pl.BlockSpec((C, ncls), lambda i: (0, 0)),
            pl.BlockSpec((1, ncls), lambda i: (0, 0)),
        ],
        out_specs=pl.BlockSpec((N, ncls), lambda i: (0, 0)),
        compiler_params=_cparams(1),
    )(xr, w, b.reshape(1, ncls))


def im2col(x, k, stride, dilation, pad):
    """(N,H,W,C) -> (N*Ho*Wo, k*k*C), built with one concatenate (no extra transpose pass)."""
    N, H, W, C = x.shape
    xp = jnp.pad(x, ((0, 0), (pad, pad), (pad, pad), (0, 0)))
    Ho = (H + 2 * pad - dilation * (k - 1) - 1) // stride + 1
    Wo = (W + 2 * pad - dilation * (k - 1) - 1) // stride + 1
    cols = []
    for dy in range(k):
        for dx in range(k):
            sl = xp[:, dy * dilation: dy * dilation + (Ho - 1) * stride + 1: stride,
                       dx * dilation: dx * dilation + (Wo - 1) * stride + 1: stride, :]
            cols.append(sl.reshape(N * Ho * Wo, C))
    return jnp.concatenate(cols, axis=-1), (N, Ho, Wo)


def conv_bn(x, w, scale, bias, k, stride, pad, relu_in=False, dilation=1):
    """Dense conv (weight layout (k,k,Cin,Cout)) + folded eval BN via im2col matmul."""
    a, (N, Ho, Wo) = im2col(x, k, stride, dilation, pad)
    Cout = w.shape[-1]
    b = w.reshape(-1, Cout)   # (k*k*Cin, Cout), tap-major / channel-minor -- matches im2col
    out = pallas_matmul_bn(a, b, scale, bias, relu_in)
    return out.reshape(N, Ho, Wo, Cout)


def pointwise_bn(x, w, scale, bias, relu_in=False):
    N, H, W, C = x.shape
    out = pallas_matmul_bn(x.reshape(N * H * W, C), w, scale, bias, relu_in)
    return out.reshape(N, H, W, -1)


# -----------------------------------------------------------------------------
# Deterministic parameter generation (synthetic, no checkpoint)
# -----------------------------------------------------------------------------
class ParamGen:
    def __init__(self, key):
        self.key = key
        self.i = 0

    def _next(self):
        k = jax.random.fold_in(self.key, self.i)
        self.i += 1
        return k

    def conv(self, kh, kw, cin, cout):
        fan_in = kh * kw * cin
        return jax.random.normal(self._next(), (kh, kw, cin, cout), jnp.float32) / math.sqrt(fan_in)

    def dwconv(self, k, c):
        return jax.random.normal(self._next(), (k * k, c), jnp.float32) / math.sqrt(k * k)

    def bn(self, c):
        gamma = 1.0 + 0.1 * jax.random.normal(self._next(), (c,), jnp.float32)
        beta = 0.1 * jax.random.normal(self._next(), (c,), jnp.float32)
        mean = 0.1 * jax.random.normal(self._next(), (c,), jnp.float32)
        var = 1.0 + 0.1 * jnp.abs(jax.random.normal(self._next(), (c,), jnp.float32))
        scale = gamma / jnp.sqrt(var + EPS)
        bias = beta - mean * scale
        return scale, bias

    def linear(self, cin, cout):
        return jax.random.normal(self._next(), (cin, cout), jnp.float32) / math.sqrt(cin)

    def linear_bias(self, cout):
        return 0.1 * jax.random.normal(self._next(), (cout,), jnp.float32)


# -----------------------------------------------------------------------------
# DARTS operations (genotype ops) built as closures over their parameters
# -----------------------------------------------------------------------------
def make_relu_conv_bn(pg, c_in, c_out):
    w = pg.conv(1, 1, c_in, c_out).reshape(c_in, c_out)
    s, b = pg.bn(c_out)
    return lambda x: pointwise_bn(x, w, s, b, relu_in=True)


def make_factorized_reduce(pg, c_in, c_out):
    assert c_out % 2 == 0
    half = c_out // 2
    w1 = pg.conv(1, 1, c_in, half).reshape(c_in, half)
    w2 = pg.conv(1, 1, c_in, half).reshape(c_in, half)
    s, b = pg.bn(c_out)

    def fn(x):
        assert x.shape[1] % 2 == 0 and x.shape[2] % 2 == 0  # even spatial (CIFAR) assumed
        x1 = x[:, ::2, ::2, :]          # conv_1(x), 1x1 stride 2
        x2 = x[:, 1::2, 1::2, :]        # conv_2(x[:, :, 1:, 1:]), 1x1 stride 2
        o1 = pointwise_bn(x1, w1, s[:half], b[:half], relu_in=True)
        o2 = pointwise_bn(x2, w2, s[half:], b[half:], relu_in=True)
        return jnp.concatenate([o1, o2], axis=-1)

    return fn


def make_sep_conv(pg, c, k, stride, pad):
    dw1 = pg.dwconv(k, c); pw1 = pg.conv(1, 1, c, c).reshape(c, c); s1, b1 = pg.bn(c)
    dw2 = pg.dwconv(k, c); pw2 = pg.conv(1, 1, c, c).reshape(c, c); s2, b2 = pg.bn(c)

    def fn(x):
        y = fused_dwpw_bn(x, dw1, pw1, s1, b1, k, stride, pad, 1, relu_in=True)
        y = fused_dwpw_bn(y, dw2, pw2, s2, b2, k, 1, pad, 1, relu_in=True)
        return y

    return fn


def make_dil_conv(pg, c, k, stride, pad, dil):
    dw = pg.dwconv(k, c); pw = pg.conv(1, 1, c, c).reshape(c, c); s, b = pg.bn(c)
    return lambda x: fused_dwpw_bn(x, dw, pw, s, b, k, stride, pad, dil, relu_in=True)


def make_op(pg, name, c, stride):
    if name == "skip_connect":
        if stride == 1:
            return lambda x: x
        return make_factorized_reduce(pg, c, c)
    if name == "max_pool_3x3":
        return lambda x: max_pool3(x, stride)
    if name == "avg_pool_3x3":
        return lambda x: avg_pool3(x, stride)
    if name == "sep_conv_3x3":
        return make_sep_conv(pg, c, 3, stride, 1)
    if name == "sep_conv_5x5":
        return make_sep_conv(pg, c, 5, stride, 2)
    if name == "dil_conv_3x3":
        return make_dil_conv(pg, c, 3, stride, 2, 2)
    if name == "dil_conv_5x5":
        return make_dil_conv(pg, c, 5, stride, 4, 2)
    if name == "none":
        def zero(x):
            if stride == 1:
                return jnp.zeros_like(x)
            return jnp.zeros_like(x[:, ::stride, ::stride, :])
        return zero
    raise ValueError(f"unknown op {name}")


class Cell:
    def __init__(self, pg, genotype, C_pp, C_p, C, reduction, reduction_prev):
        if reduction_prev:
            self.pre0 = make_factorized_reduce(pg, C_pp, C)
        else:
            self.pre0 = make_relu_conv_bn(pg, C_pp, C)
        self.pre1 = make_relu_conv_bn(pg, C_p, C)
        if reduction:
            op_names, indices = zip(*genotype.reduce)
            concat = genotype.reduce_concat
        else:
            op_names, indices = zip(*genotype.normal)
            concat = genotype.normal_concat
        self.indices = list(indices)
        self.concat = list(concat)
        self.multiplier = len(concat)
        self.ops = []
        for name, index in zip(op_names, indices):
            stride = 2 if reduction and index < 2 else 1
            self.ops.append(make_op(pg, name, C, stride))

    def __call__(self, s0, s1):
        s0 = self.pre0(s0)
        s1 = self.pre1(s1)
        states = [s0, s1]
        for i in range(len(self.ops) // 2):
            h1 = self.ops[2 * i](states[self.indices[2 * i]])
            h2 = self.ops[2 * i + 1](states[self.indices[2 * i + 1]])
            states.append(h1 + h2)
        return jnp.concatenate([states[i] for i in self.concat], axis=-1)


class NetworkCIFARPallas:
    def __init__(self, C, num_classes, layers, auxiliary, genotype, drop_path_prob, key):
        del drop_path_prob  # inference: drop_path gated on training and prob>0
        pg = ParamGen(key)
        self._layers = layers
        self._auxiliary = auxiliary
        self.num_classes = num_classes

        stem_multiplier = 3
        C_curr = stem_multiplier * C
        self.stem_w = pg.conv(3, 3, 3, C_curr)
        self.stem_s, self.stem_b = pg.bn(C_curr)

        C_pp, C_p, C_curr = C_curr, C_curr, C
        self.cells = []
        reduction_prev = False
        for i in range(layers):
            if i in [layers // 3, 2 * layers // 3]:
                C_curr *= 2
                reduction = True
            else:
                reduction = False
            cell = Cell(pg, genotype, C_pp, C_p, C_curr, reduction, reduction_prev)
            reduction_prev = reduction
            self.cells.append(cell)
            C_pp, C_p = C_p, cell.multiplier * C_curr
        # TODO(synk): AuxiliaryHeadCIFAR not built (auxiliary unused in eval forward).
        self.cls_w = pg.linear(C_p, num_classes)
        self.cls_b = pg.linear_bias(num_classes)

    def __call__(self, x_nchw):
        x = jnp.transpose(x_nchw, (0, 2, 3, 1)).astype(jnp.float32)  # NCHW -> NHWC
        stem_out = conv_bn(x, self.stem_w, self.stem_s, self.stem_b,
                           k=3, stride=1, pad=1, relu_in=False)
        s0, s1 = stem_out, stem_out  # stem(input) applied twice -> identical result, compute once
        for cell in self.cells:
            s0, s1 = s1, cell(s0, s1)
        logits = pallas_head(s1, self.cls_w, self.cls_b, self.num_classes)
        return logits, None  # logits_aux is None (eval / auxiliary disabled)


if __name__ == "__main__":
    Genotype = namedtuple("Genotype", "normal normal_concat reduce reduce_concat")
    DARTS_V2 = Genotype(
        normal=[("sep_conv_3x3", 0), ("sep_conv_3x3", 1),
                ("sep_conv_3x3", 0), ("sep_conv_3x3", 1),
                ("sep_conv_3x3", 1), ("skip_connect", 0),
                ("skip_connect", 0), ("dil_conv_3x3", 2)],
        normal_concat=[2, 3, 4, 5],
        reduce=[("max_pool_3x3", 0), ("max_pool_3x3", 1),
                ("skip_connect", 2), ("max_pool_3x3", 1),
                ("max_pool_3x3", 0), ("skip_connect", 2),
                ("skip_connect", 2), ("max_pool_3x3", 1)],
        reduce_concat=[2, 3, 4, 5],
    )

    key = jax.random.PRNGKey(0)
    net = NetworkCIFARPallas(
        C=4, num_classes=10, layers=3, auxiliary=False,
        genotype=DARTS_V2, drop_path_prob=0.0,
        key=jax.random.fold_in(key, 1),
    )

    x = jax.random.normal(jax.random.fold_in(key, 2), (2, 3, 16, 16), jnp.float32)

    fwd = jax.jit(net.__call__)
    logits, logits_aux = fwd(x)
    logits = jax.block_until_ready(logits)

    assert logits.shape == (2, 10), logits.shape
    assert logits_aux is None
    assert bool(jnp.all(jnp.isfinite(logits)))
    print("KERNEL_OK")
</pallas_src>

<mosaic_0001>
module attributes {stable_mosaic.version = 11 : i64} {
  func.func @_matmul_bn_kernel(%arg0: i32, %arg1: memref<256x12xf32, #tpu.memory_space<vmem>>, %arg2: memref<12x4xf32, #tpu.memory_space<vmem>>, %arg3: memref<1x4xf32, #tpu.memory_space<vmem>>, %arg4: memref<1x4xf32, #tpu.memory_space<vmem>>, %arg5: memref<256x4xf32, #tpu.memory_space<vmem>>) attributes {dimension_semantics = [#tpu.dimension_semantics<parallel>], iteration_bounds = array<i64: 2>, scalar_prefetch = 0 : i64, scratch_operands = 0 : i64, tpu.core_type = #tpu.core_type<tc>, window_params = [{transform_indices = @transform_0, window_bounds = array<i64: 256, 12>}, {pipeline_mode = #tpu.pipeline_mode<synchronous>, transform_indices = @transform_1, window_bounds = array<i64: 12, 4>}, {pipeline_mode = #tpu.pipeline_mode<synchronous>, transform_indices = @transform_2, window_bounds = array<i64: 1, 4>}, {pipeline_mode = #tpu.pipeline_mode<synchronous>, transform_indices = @transform_3, window_bounds = array<i64: 1, 4>}, {transform_indices = @transform_4, window_bounds = array<i64: 256, 4>}]} {
    %c0 = arith.constant 0 : index
    %c0_0 = arith.constant 0 : index
    %0 = vector.load %arg1[%c0, %c0_0] : memref<256x12xf32, #tpu.memory_space<vmem>>, vector<256x12xf32>
    %cst = arith.constant 0.000000e+00 : f32
    %1 = vector.broadcast %cst : f32 to vector<256x12xf32>
    %2 = arith.maximumf %0, %1 : vector<256x12xf32>
    %c0_1 = arith.constant 0 : index
    %c0_2 = arith.constant 0 : index
    %3 = vector.load %arg2[%c0_1, %c0_2] : memref<12x4xf32, #tpu.memory_space<vmem>>, vector<12x4xf32>
    %cst_3 = arith.constant dense<0.000000e+00> : vector<256x4xf32>
    %4 = tpu.matmul %2, %3, %cst_3 {dimension_numbers = #tpu.dot_dimension_numbers<[1], [0], [0], [1], [0, 0, 1, 1], [], []>} : vector<256x12xf32>, vector<12x4xf32>, vector<256x4xf32> -> vector<256x4xf32>
    %c0_4 = arith.constant 0 : index
    %c0_5 = arith.constant 0 : index
    %5 = vector.load %arg3[%c0_4, %c0_5] : memref<1x4xf32, #tpu.memory_space<vmem>>, vector<1x4xf32>
    %6 = vector.broadcast %5 : vector<1x4xf32> to vector<256x4xf32>
    %7 = arith.mulf %4, %6 : vector<256x4xf32>
    %c0_6 = arith.constant 0 : index
    %c0_7 = arith.constant 0 : index
    %8 = vector.load %arg4[%c0_6, %c0_7] : memref<1x4xf32, #tpu.memory_space<vmem>>, vector<1x4xf32>
    %9 = vector.broadcast %8 : vector<1x4xf32> to vector<256x4xf32>
    %10 = arith.addf %7, %9 : vector<256x4xf32>
    %c0_8 = arith.constant 0 : index
    %c0_9 = arith.constant 0 : index
    %11 = vector.load %arg5[%c0_8, %c0_9] : memref<256x4xf32, #tpu.memory_space<vmem>>, vector<256x4xf32>
    tpu.vector_store %arg5[%c0_8, %c0_9], %10 {strides = array<i32>} : memref<256x4xf32, #tpu.memory_space<vmem>>, vector<256x4xf32>,
    return
  }
  func.func @transform_0(%arg0: i32) -> (i32, i32) {
    %c0_i32 = arith.constant 0 : i32
    %c0_i32_0 = arith.constant 0 : i32
    return %arg0, %c0_i32 : i32, i32
  }
  func.func @transform_1(%arg0: i32) -> (i32, i32) {
    %c0_i32 = arith.constant 0 : i32
    %c0_i32_0 = arith.constant 0 : i32
    %c0_i32_1 = arith.constant 0 : i32
    return %c0_i32, %c0_i32_0 : i32, i32
  }
  func.func @transform_2(%arg0: i32) -> (i32, i32) {
    %c0_i32 = arith.constant 0 : i32
    %c0_i32_0 = arith.constant 0 : i32
    %c0_i32_1 = arith.constant 0 : i32
    return %c0_i32, %c0_i32_0 : i32, i32
  }
  func.func @transform_3(%arg0: i32) -> (i32, i32) {
    %c0_i32 = arith.constant 0 : i32
    %c0_i32_0 = arith.constant 0 : i32
    %c0_i32_1 = arith.constant 0 : i32
    return %c0_i32, %c0_i32_0 : i32, i32
  }
  func.func @transform_4(%arg0: i32) -> (i32, i32) {
    %c0_i32 = arith.constant 0 : i32
    %c0_i32_0 = arith.constant 0 : i32
    return %arg0, %c0_i32 : i32, i32
  }
}

module attributes {stable_mosaic.version = 11 : i64} {
  func.func @_matmul_bn_kernel(%arg0: i32, %arg1: memref<256x27xf32, #tpu.memory_space<vmem>>, %arg2: memref<27x12xf32, #tpu.memory_space<vmem>>, %arg3: memref<1x12xf32, #tpu.memory_space<vmem>>, %arg4: memref<1x12xf32, #tpu.memory_space<vmem>>, %arg5: memref<256x12xf32, #tpu.memory_space<vmem>>) attributes {dimension_semantics = [#tpu.dimension_semantics<parallel>], iteration_bounds = array<i64: 2>, scalar_prefetch = 0 : i64, scratch_operands = 0 : i64, tpu.core_type = #tpu.core_type<tc>, window_params = [{transform_indices = @transform_0, window_bounds = array<i64: 256, 27>}, {pipeline_mode = #tpu.pipeline_mode<synchronous>, transform_indices = @transform_1, window_bounds = array<i64: 27, 12>}, {pipeline_mode = #tpu.pipeline_mode<synchronous>, transform_indices = @transform_2, window_bounds = array<i64: 1, 12>}, {pipeline_mode = #tpu.pipeline_mode<synchronous>, transform_indices = @transform_3, window_bounds = array<i64: 1, 12>}, {transform_indices = @transform_4, window_bounds = array<i64: 256, 12>}]} {
    %c0 = arith.constant 0 : index
    %c0_0 = arith.constant 0 : index
    %0 = vector.load %arg1[%c0, %c0_0] : memref<256x27xf32, #tpu.memory_space<vmem>>, vector<256x27xf32>
    %c0_1 = arith.constant 0 : index
    %c0_2 = arith.constant 0 : index
    %1 = vector.load %arg2[%c0_1, %c0_2] : memref<27x12xf32, #tpu.memory_space<vmem>>, vector<27x12xf32>
    %cst = arith.constant dense<0.000000e+00> : vector<256x12xf32>
    %2 = tpu.matmul %0, %1, %cst {dimension_numbers = #tpu.dot_dimension_numbers<[1], [0], [0], [1], [0, 0, 1, 1], [], []>} : vector<256x27xf32>, vector<27x12xf32>, vector<256x12xf32> -> vector<256x12xf32>
    %c0_3 = arith.constant 0 : index
    %c0_4 = arith.constant 0 : index
    %3 = vector.load %arg3[%c0_3, %c0_4] : memref<1x12xf32, #tpu.memory_space<vmem>>, vector<1x12xf32>
    %4 = vector.broadcast %3 : vector<1x12xf32> to vector<256x12xf32>
    %5 = arith.mulf %2, %4 : vector<256x12xf32>
    %c0_5 = arith.constant 0 : index
    %c0_6 = arith.constant 0 : index
    %6 = vector.load %arg4[%c0_5, %c0_6] : memref<1x12xf32, #tpu.memory_space<vmem>>, vector<1x12xf32>
    %7 = vector.broadcast %6 : vector<1x12xf32> to vector<256x12xf32>
    %8 = arith.addf %5, %7 : vector<256x12xf32>
    %c0_7 = arith.constant 0 : index
    %c0_8 = arith.constant 0 : index
    %9 = vector.load %arg5[%c0_7, %c0_8] : memref<256x12xf32, #tpu.memory_space<vmem>>, vector<256x12xf32>
    tpu.vector_store %arg5[%c0_7, %c0_8], %8 {strides = array<i32>} : memref<256x12xf32, #tpu.memory_space<vmem>>, vector<256x12xf32>,
    return
  }
  func.func @transform_0(%arg0: i32) -> (i32, i32) {
    %c0_i32 = arith.constant 0 : i32
    %c0_i32_0 = arith.constant 0 : i32
    return %arg0, %c0_i32 : i32, i32
  }
  func.func @transform_1(%arg0: i32) -> (i32, i32) {
    %c0_i32 = arith.constant 0 : i32
    %c0_i32_0 = arith.constant 0 : i32
    %c0_i32_1 = arith.constant 0 : i32
    return %c0_i32, %c0_i32_0 : i32, i32
  }
  func.func @transform_2(%arg0: i32) -> (i32, i32) {
    %c0_i32 = arith.constant 0 : i32
    %c0_i32_0 = arith.constant 0 : i32
    %c0_i32_1 = arith.constant 0 : i32
    return %c0_i32, %c0_i32_0 : i32, i32
  }
  func.func @transform_3(%arg0: i32) -> (i32, i32) {
    %c0_i32 = arith.constant 0 : i32
    %c0_i32_0 = arith.constant 0 : i32
    %c0_i32_1 = arith.constant 0 : i32
    return %c0_i32, %c0_i32_0 : i32, i32
  }
  func.func @transform_4(%arg0: i32) -> (i32, i32) {
    %c0_i32 = arith.constant 0 : i32
    %c0_i32_0 = arith.constant 0 : i32
    return %arg0, %c0_i32 : i32, i32
  }
}

module attributes {stable_mosaic.version = 11 : i64} {
  func.func @_matmul_bn_kernel(%arg0: i32, %arg1: memref<256x12xf32, #tpu.memory_space<vmem>>, %arg2: memref<12x8xf32, #tpu.memory_space<vmem>>, %arg3: memref<1x8xf32, #tpu.memory_space<vmem>>, %arg4: memref<1x8xf32, #tpu.memory_space<vmem>>, %arg5: memref<256x8xf32, #tpu.memory_space<vmem>>) attributes {dimension_semantics = [#tpu.dimension_semantics<parallel>], iteration_bounds = array<i64: 2>, scalar_prefetch = 0 : i64, scratch_operands = 0 : i64, tpu.core_type = #tpu.core_type<tc>, window_params = [{transform_indices = @transform_0, window_bounds = array<i64: 256, 12>}, {pipeline_mode = #tpu.pipeline_mode<synchronous>, transform_indices = @transform_1, window_bounds = array<i64: 12, 8>}, {pipeline_mode = #tpu.pipeline_mode<synchronous>, transform_indices = @transform_2, window_bounds = array<i64: 1, 8>}, {pipeline_mode = #tpu.pipeline_mode<synchronous>, transform_indices = @transform_3, window_bounds = array<i64: 1, 8>}, {transform_indices = @transform_4, window_bounds = array<i64: 256, 8>}]} {
    %c0 = arith.constant 0 : index
    %c0_0 = arith.constant 0 : index
    %0 = vector.load %arg1[%c0, %c0_0] : memref<256x12xf32, #tpu.memory_space<vmem>>, vector<256x12xf32>
    %cst = arith.constant 0.000000e+00 : f32
    %1 = vector.broadcast %cst : f32 to vector<256x12xf32>
    %2 = arith.maximumf %0, %1 : vector<256x12xf32>
    %c0_1 = arith.constant 0 : index
    %c0_2 = arith.constant 0 : index
    %3 = vector.load %arg2[%c0_1, %c0_2] : memref<12x8xf32, #tpu.memory_space<vmem>>, vector<12x8xf32>
    %cst_3 = arith.constant dense<0.000000e+00> : vector<256x8xf32>
    %4 = tpu.matmul %2, %3, %cst_3 {dimension_numbers = #tpu.dot_dimension_numbers<[1], [0], [0], [1], [0, 0, 1, 1], [], []>} : vector<256x12xf32>, vector<12x8xf32>, vector<256x8xf32> -> vector<256x8xf32>
    %c0_4 = arith.constant 0 : index
    %c0_5 = arith.constant 0 : index
    %5 = vector.load %arg3[%c0_4, %c0_5] : memref<1x8xf32, #tpu.memory_space<vmem>>, vector<1x8xf32>
    %6 = vector.broadcast %5 : vector<1x8xf32> to vector<256x8xf32>
    %7 = arith.mulf %4, %6 : vector<256x8xf32>
    %c0_6 = arith.constant 0 : index
    %c0_7 = arith.constant 0 : index
    %8 = vector.load %arg4[%c0_6, %c0_7] : memref<1x8xf32, #tpu.memory_space<vmem>>, vector<1x8xf32>
    %9 = vector.broadcast %8 : vector<1x8xf32> to vector<256x8xf32>
    %10 = arith.addf %7, %9 : vector<256x8xf32>
    %c0_8 = arith.constant 0 : index
    %c0_9 = arith.constant 0 : index
    %11 = vector.load %arg5[%c0_8, %c0_9] : memref<256x8xf32, #tpu.memory_space<vmem>>, vector<256x8xf32>
    tpu.vector_store %arg5[%c0_8, %c0_9], %10 {strides = array<i32>} : memref<256x8xf32, #tpu.memory_space<vmem>>, vector<256x8xf32>,
    return
  }
  func.func @transform_0(%arg0: i32) -> (i32, i32) {
    %c0_i32 = arith.constant 0 : i32
    %c0_i32_0 = arith.constant 0 : i32
    return %arg0, %c0_i32 : i32, i32
  }
  func.func @transform_1(%arg0: i32) -> (i32, i32) {
    %c0_i32 = arith.constant 0 : i32
    %c0_i32_0 = arith.constant 0 : i32
    %c0_i32_1 = arith.constant 0 : i32
    return %c0_i32, %c0_i32_0 : i32, i32
  }
  func.func @transform_2(%arg0: i32) -> (i32, i32) {
    %c0_i32 = arith.constant 0 : i32
    %c0_i32_0 = arith.constant 0 : i32
    %c0_i32_1 = arith.constant 0 : i32
    return %c0_i32, %c0_i32_0 : i32, i32
  }
  func.func @transform_3(%arg0: i32) -> (i32, i32) {
    %c0_i32 = arith.constant 0 : i32
    %c0_i32_0 = arith.constant 0 : i32
    %c0_i32_1 = arith.constant 0 : i32
    return %c0_i32, %c0_i32_0 : i32, i32
  }
  func.func @transform_4(%arg0: i32) -> (i32, i32) {
    %c0_i32 = arith.constant 0 : i32
    %c0_i32_0 = arith.constant 0 : i32
    return %arg0, %c0_i32 : i32, i32
  }
}

module attributes {stable_mosaic.version = 11 : i64} {
  func.func @_maxpool_kernel(%arg0: i32, %arg1: memref<1x18x18x8xf32, #tpu.memory_space<vmem>>, %arg2: memref<1x16x16x8xf32, #tpu.memory_space<vmem>>) attributes {dimension_semantics = [#tpu.dimension_semantics<parallel>], iteration_bounds = array<i64: 2>, scalar_prefetch = 0 : i64, scratch_operands = 0 : i64, tpu.core_type = #tpu.core_type<tc>, window_params = [{transform_indices = @transform_0, window_bounds = array<i64: 1, 18, 18, 8>}, {transform_indices = @transform_1, window_bounds = array<i64: 1, 16, 16, 8>}]} {
    %c0 = arith.constant 0 : index
    %c0_0 = arith.constant 0 : index
    %c0_1 = arith.constant 0 : index
    %c0_2 = arith.constant 0 : index
    %0 = vector.load %arg1[%c0, %c0_0, %c0_1, %c0_2] : memref<1x18x18x8xf32, #tpu.memory_space<vmem>>, vector<1x18x18x8xf32>
    %1 = vector.shape_cast %0 : vector<1x18x18x8xf32> to vector<18x18x8xf32>
    %2 = vector.extract_strided_slice %1 {offsets = [0, 0, 0], sizes = [16, 16, 8], strides = [1, 1, 1]} : vector<18x18x8xf32> to vector<16x16x8xf32>
    %3 = vector.extract_strided_slice %1 {offsets = [0, 1, 0], sizes = [16, 16, 8], strides = [1, 1, 1]} : vector<18x18x8xf32> to vector<16x16x8xf32>
    %4 = arith.maximumf %2, %3 : vector<16x16x8xf32>
    %5 = vector.extract_strided_slice %1 {offsets = [0, 2, 0], sizes = [16, 16, 8], strides = [1, 1, 1]} : vector<18x18x8xf32> to vector<16x16x8xf32>
    %6 = arith.maximumf %4, %5 : vector<16x16x8xf32>
    %7 = vector.extract_strided_slice %1 {offsets = [1, 0, 0], sizes = [16, 16, 8], strides = [1, 1, 1]} : vector<18x18x8xf32> to vector<16x16x8xf32>
    %8 = arith.maximumf %6, %7 : vector<16x16x8xf32>
    %9 = vector.extract_strided_slice %1 {offsets = [1, 1, 0], sizes = [16, 16, 8], strides = [1, 1, 1]} : vector<18x18x8xf32> to vector<16x16x8xf32>
    %10 = arith.maximumf %8, %9 : vector<16x16x8xf32>
    %11 = vector.extract_strided_slice %1 {offsets = [1, 2, 0], sizes = [16, 16, 8], strides = [1, 1, 1]} : vector<18x18x8xf32> to vector<16x16x8xf32>
    %12 = arith.maximumf %10, %11 : vector<16x16x8xf32>
    %13 = vector.extract_strided_slice %1 {offsets = [2, 0, 0], sizes = [16, 16, 8], strides = [1, 1, 1]} : vector<18x18x8xf32> to vector<16x16x8xf32>
    %14 = arith.maximumf %12, %13 : vector<16x16x8xf32>
    %15 = vector.extract_strided_slice %1 {offsets = [2, 1, 0], sizes = [16, 16, 8], strides = [1, 1, 1]} : vector<18x18x8xf32> to vector<16x16x8xf32>
    %16 = arith.maximumf %14, %15 : vector<16x16x8xf32>
    %17 = vector.extract_strided_slice %1 {offsets = [2, 2, 0], sizes = [16, 16, 8], strides = [1, 1, 1]} : vector<18x18x8xf32> to vector<16x16x8xf32>
    %18 = arith.maximumf %16, %17 : vector<16x16x8xf32>
    %c0_3 = arith.constant 0 : index
    %c0_4 = arith.constant 0 : index
    %c0_5 = arith.constant 0 : index
    %c0_6 = arith.constant 0 : index
    %19 = vector.load %arg2[%c0_3, %c0_4, %c0_5, %c0_6] : memref<1x16x16x8xf32, #tpu.memory_space<vmem>>, vector<1x16x16x8xf32>
    %20 = vector.shape_cast %19 : vector<1x16x16x8xf32> to vector<16x16x8xf32>
    %21 = vector.shape_cast %18 : vector<16x16x8xf32> to vector<1x16x16x8xf32>
    tpu.vector_store %arg2[%c0_3, %c0_4, %c0_5, %c0_6], %21 {strides = array<i32>} : memref<1x16x16x8xf32, #tpu.memory_space<vmem>>, vector<1x16x16x8xf32>,
    return
  }
  func.func @transform_0(%arg0: i32) -> (i32, i32, i32, i32) {
    %c0_i32 = arith.constant 0 : i32
    %c0_i32_0 = arith.constant 0 : i32
    %c0_i32_1 = arith.constant 0 : i32
    %c0_i32_2 = arith.constant 0 : i32
    return %arg0, %c0_i32, %c0_i32_0, %c0_i32_1 : i32, i32, i32, i32
  }
  func.func @transform_1(%arg0: i32) -> (i32, i32, i32, i32) {
    %c0_i32 = arith.constant 0 : i32
    %c0_i32_0 = arith.constant 0 : i32
    %c0_i32_1 = arith.constant 0 : i32
    %c0_i32_2 = arith.constant 0 : i32
    return %arg0, %c0_i32, %c0_i32_0, %c0_i32_1 : i32, i32, i32, i32
  }
}

module attributes {stable_mosaic.version = 11 : i64} {
  func.func @_dwpw_bn_kernel(%arg0: i32, %arg1: memref<1x18x18x4xf32, #tpu.memory_space<vmem>>, %arg2: memref<9x1x4xf32, #tpu.memory_space<vmem>>, %arg3: memref<4x4xf32, #tpu.memory_space<vmem>>, %arg4: memref<1x4xf32, #tpu.memory_space<vmem>>, %arg5: memref<1x4xf32, #tpu.memory_space<vmem>>, %arg6: memref<1x256x4xf32, #tpu.memory_space<vmem>>) attributes {dimension_semantics = [#tpu.dimension_semantics<parallel>], iteration_bounds = array<i64: 2>, scalar_prefetch = 0 : i64, scratch_operands = 0 : i64, tpu.core_type = #tpu.core_type<tc>, window_params = [{transform_indices = @transform_0, window_bounds = array<i64: 1, 18, 18, 4>}, {pipeline_mode = #tpu.pipeline_mode<synchronous>, transform_indices = @transform_1, window_bounds = array<i64: 9, 1, 4>}, {pipeline_mode = #tpu.pipeline_mode<synchronous>, transform_indices = @transform_2, window_bounds = array<i64: 4, 4>}, {pipeline_mode = #tpu.pipeline_mode<synchronous>, transform_indices = @transform_3, window_bounds = array<i64: 1, 4>}, {pipeline_mode = #tpu.pipeline_mode<synchronous>, transform_indices = @transform_4, window_bounds = array<i64: 1, 4>}, {transform_indices = @transform_5, window_bounds = array<i64: 1, 256, 4>}]} {
    %c0 = arith.constant 0 : index
    %c0_0 = arith.constant 0 : index
    %c0_1 = arith.constant 0 : index
    %c0_2 = arith.constant 0 : index
    %0 = vector.load %arg1[%c0, %c0_0, %c0_1, %c0_2] : memref<1x18x18x4xf32, #tpu.memory_space<vmem>>, vector<1x18x18x4xf32>
    %1 = vector.shape_cast %0 : vector<1x18x18x4xf32> to vector<18x18x4xf32>
    %cst = arith.constant 0.000000e+00 : f32
    %2 = vector.broadcast %cst : f32 to vector<18x18x4xf32>
    %3 = arith.maximumf %1, %2 : vector<18x18x4xf32>
    %c0_3 = arith.constant 0 : index
    %c0_4 = arith.constant 0 : index
    %c0_5 = arith.constant 0 : index
    %4 = vector.load %arg2[%c0_3, %c0_4, %c0_5] : memref<9x1x4xf32, #tpu.memory_space<vmem>>, vector<9x1x4xf32>
    %5 = vector.extract_strided_slice %3 {offsets = [0, 0, 0], sizes = [16, 16, 4], strides = [1, 1, 1]} : vector<18x18x4xf32> to vector<16x16x4xf32>
    %6 = vector.extract_strided_slice %4 {offsets = [0, 0, 0], sizes = [1, 1, 4], strides = [1, 1, 1]} : vector<9x1x4xf32> to vector<1x1x4xf32>
    %7 = vector.shape_cast %6 : vector<1x1x4xf32> to vector<1x4xf32>
    %8 = vector.shape_cast %7 : vector<1x4xf32> to vector<1x1x4xf32>
    %9 = vector.broadcast %8 : vector<1x1x4xf32> to vector<16x16x4xf32>
    %10 = arith.mulf %5, %9 : vector<16x16x4xf32>
    %11 = vector.extract_strided_slice %3 {offsets = [0, 1, 0], sizes = [16, 16, 4], strides = [1, 1, 1]} : vector<18x18x4xf32> to vector<16x16x4xf32>
    %12 = vector.extract_strided_slice %4 {offsets = [1, 0, 0], sizes = [1, 1, 4], strides = [1, 1, 1]} : vector<9x1x4xf32> to vector<1x1x4xf32>
    %13 = vector.shape_cast %12 : vector<1x1x4xf32> to vector<1x4xf32>
    %14 = vector.shape_cast %13 : vector<1x4xf32> to vector<1x1x4xf32>
    %15 = vector.broadcast %14 : vector<1x1x4xf32> to vector<16x16x4xf32>
    %16 = arith.mulf %11, %15 : vector<16x16x4xf32>
    %17 = arith.addf %10, %16 : vector<16x16x4xf32>
    %18 = vector.extract_strided_slice %3 {offsets = [0, 2, 0], sizes = [16, 16, 4], strides = [1, 1, 1]} : vector<18x18x4xf32> to vector<16x16x4xf32>
    %19 = vector.extract_strided_slice %4 {offsets = [2, 0, 0], sizes = [1, 1, 4], strides = [1, 1, 1]} : vector<9x1x4xf32> to vector<1x1x4xf32>
    %20 = vector.shape_cast %19 : vector<1x1x4xf32> to vector<1x4xf32>
    %21 = vector.shape_cast %20 : vector<1x4xf32> to vector<1x1x4xf32>
    %22 = vector.broadcast %21 : vector<1x1x4xf32> to vector<16x16x4xf32>
    %23 = arith.mulf %18, %22 : vector<16x16x4xf32>
    %24 = arith.addf %17, %23 : vector<16x16x4xf32>
    %25 = vector.extract_strided_slice %3 {offsets = [1, 0, 0], sizes = [16, 16, 4], strides = [1, 1, 1]} : vector<18x18x4xf32> to vector<16x16x4xf32>
    %26 = vector.extract_strided_slice %4 {offsets = [3, 0, 0], sizes = [1, 1, 4], strides = [1, 1, 1]} : vector<9x1x4xf32> to vector<1x1x4xf32>
    %27 = vector.shape_cast %26 : vector<1x1x4xf32> to vector<1x4xf32>
    %28 = vector.shape_cast %27 : vector<1x4xf32> to vector<1x1x4xf32>
    %29 = vector.broadcast %28 : vector<1x1x4xf32> to vector<16x16x4xf32>
    %30 = arith.mulf %25, %29 : vector<16x16x4xf32>
    %31 = arith.addf %24, %30 : vector<16x16x4xf32>
    %32 = vector.extract_strided_slice %3 {offsets = [1, 1, 0], sizes = [16, 16, 4], strides = [1, 1, 1]} : vector<18x18x4xf32> to vector<16x16x4xf32>
    %33 = vector.extract_strided_slice %4 {offsets = [4, 0, 0], sizes = [1, 1, 4], strides = [1, 1, 1]} : vector<9x1x4xf32> to vector<1x1x4xf32>
    %34 = vector.shape_cast %33 : vector<1x1x4xf32> to vector<1x4xf32>
    %35 = vector.shape_cast %34 : vector<1x4xf32> to vector<1x1x4xf32>
    %36 = vector.broadcast %35 : vector<1x1x4xf32> to vector<16x16x4xf32>
    %37 = arith.mulf %32, %36 : vector<16x16x4xf32>
    %38 = arith.addf %31, %37 : vector<16x16x4xf32>
    %39 = vector.extract_strided_slice %3 {offsets = [1, 2, 0], sizes = [16, 16, 4], strides = [1, 1, 1]} : vector<18x18x4xf32> to vector<16x16x4xf32>
    %40 = vector.extract_strided_slice %4 {offsets = [5, 0, 0], sizes = [1, 1, 4], strides = [1, 1, 1]} : vector<9x1x4xf32> to vector<1x1x4xf32>
    %41 = vector.shape_cast %40 : vector<1x1x4xf32> to vector<1x4xf32>
    %42 = vector.shape_cast %41 : vector<1x4xf32> to vector<1x1x4xf32>
    %43 = vector.broadcast %42 : vector<1x1x4xf32> to vector<16x16x4xf32>
    %44 = arith.mulf %39, %43 : vector<16x16x4xf32>
    %45 = arith.addf %38, %44 : vector<16x16x4xf32>
    %46 = vector.extract_strided_slice %3 {offsets = [2, 0, 0], sizes = [16, 16, 4], strides = [1, 1, 1]} : vector<18x18x4xf32> to vector<16x16x4xf32>
    %47 = vector.extract_strided_slice %4 {offsets = [6, 0, 0], sizes = [1, 1, 4], strides = [1, 1, 1]} : vector<9x1x4xf32> to vector<1x1x4xf32>
    %48 = vector.shape_cast %47 : vector<1x1x4xf32> to vector<1x4xf32>
    %49 = vector.shape_cast %48 : vector<1x4xf32> to vector<1x1x4xf32>
    %50 = vector.broadcast %49 : vector<1x1x4xf32> to vector<16x16x4xf32>
    %51 = arith.mulf %46, %50 : vector<16x16x4xf32>
    %52 = arith.addf %45, %51 : vector<16x16x4xf32>
    %53 = vector.extract_strided_slice %3 {offsets = [2, 1, 0], sizes = [16, 16, 4], strides = [1, 1, 1]} : vector<18x18x4xf32> to vector<16x16x4xf32>
    %54 = vector.extract_strided_slice %4 {offsets = [7, 0, 0], sizes = [1, 1, 4], strides = [1, 1, 1]} : vector<9x1x4xf32> to vector<1x1x4xf32>
    %55 = vector.shape_cast %54 : vector<1x1x4xf32> to vector<1x4xf32>
    %56 = vector.shape_cast %55 : vector<1x4xf32> to vector<1x1x4xf32>
    %57 = vector.broadcast %56 : vector<1x1x4xf32> to vector<16x16x4xf32>
    %58 = arith.mulf %53, %57 : vector<16x16x4xf32>
    %59 = arith.addf %52, %58 : vector<16x16x4xf32>
    %60 = vector.extract_strided_slice %3 {offsets = [2, 2, 0], sizes = [16, 16, 4], strides = [1, 1, 1]} : vector<18x18x4xf32> to vector<16x16x4xf32>
    %61 = vector.extract_strided_slice %4 {offsets = [8, 0, 0], sizes = [1, 1, 4], strides = [1, 1, 1]} : vector<9x1x4xf32> to vector<1x1x4xf32>
    %62 = vector.shape_cast %61 : vector<1x1x4xf32> to vector<1x4xf32>
    %63 = vector.shape_cast %62 : vector<1x4xf32> to vector<1x1x4xf32>
    %64 = vector.broadcast %63 : vector<1x1x4xf32> to vector<16x16x4xf32>
    %65 = arith.mulf %60, %64 : vector<16x16x4xf32>
    %66 = arith.addf %59, %65 : vector<16x16x4xf32>
    %67 = vector.shape_cast %66 : vector<16x16x4xf32> to vector<256x4xf32>
    %c0_6 = arith.constant 0 : index
    %c0_7 = arith.constant 0 : index
    %68 = vector.load %arg3[%c0_6, %c0_7] : memref<4x4xf32, #tpu.memory_space<vmem>>, vector<4x4xf32>
    %cst_8 = arith.constant dense<0.000000e+00> : vector<256x4xf32>
    %69 = tpu.matmul %67, %68, %cst_8 {dimension_numbers = #tpu.dot_dimension_numbers<[1], [0], [0], [1], [0, 0, 1, 1], [], []>} : vector<256x4xf32>, vector<4x4xf32>, vector<256x4xf32> -> vector<256x4xf32>
    %c0_9 = arith.constant 0 : index
    %c0_10 = arith.constant 0 : index
    %70 = vector.load %arg4[%c0_9, %c0_10] : memref<1x4xf32, #tpu.memory_space<vmem>>, vector<1x4xf32>
    %71 = vector.broadcast %70 : vector<1x4xf32> to vector<256x4xf32>
    %72 = arith.mulf %69, %71 : vector<256x4xf32>
    %c0_11 = arith.constant 0 : index
    %c0_12 = arith.constant 0 : index
    %73 = vector.load %arg5[%c0_11, %c0_12] : memref<1x4xf32, #tpu.memory_space<vmem>>, vector<1x4xf32>
    %74 = vector.broadcast %73 : vector<1x4xf32> to vector<256x4xf32>
    %75 = arith.addf %72, %74 : vector<256x4xf32>
    %c0_13 = arith.constant 0 : index
    %c0_14 = arith.constant 0 : index
    %c0_15 = arith.constant 0 : index
    %76 = vector.load %arg6[%c0_13, %c0_14, %c0_15] : memref<1x256x4xf32, #tpu.memory_space<vmem>>, vector<1x256x4xf32>
    %77 = vector.shape_cast %76 : vector<1x256x4xf32> to vector<256x4xf32>
    %78 = vector.shape_cast %75 : vector<256x4xf32> to vector<1x256x4xf32>
    tpu.vector_store %arg6[%c0_13, %c0_14, %c0_15], %78 {strides = array<i32>} : memref<1x256x4xf32, #tpu.memory_space<vmem>>, vector<1x256x4xf32>,
    return
  }
  func.func @transform_0(%arg0: i32) -> (i32, i32, i32, i32) {
    %c0_i32 = arith.constant 0 : i32
    %c0_i32_0 = arith.constant 0 : i32
    %c0_i32_1 = arith.constant 0 : i32
    %c0_i32_2 = arith.constant 0 : i32
    return %arg0, %c0_i32, %c0_i32_0, %c0_i32_1 : i32, i32, i32, i32
  }
  func.func @transform_1(%arg0: i32) -> (i32, i32, i32) {
    %c0_i32 = arith.constant 0 : i32
    %c0_i32_0 = arith.constant 0 : i32
    %c0_i32_1 = arith.constant 0 : i32
    %c0_i32_2 = arith.constant 0 : i32
    return %c0_i32, %c0_i32_0, %c0_i32_1 : i32, i32, i32
  }
  func.func @transform_2(%arg0: i32) -> (i32, i32) {
    %c0_i32 = arith.constant 0 : i32
    %c0_i32_0 = arith.constant 0 : i32
    %c0_i32_1 = arith.constant 0 : i32
    return %c0_i32, %c0_i32_0 : i32, i32
  }
  func.func @transform_3(%arg0: i32) -> (i32, i32) {
    %c0_i32 = arith.constant 0 : i32
    %c0_i32_0 = arith.constant 0 : i32
    %c0_i32_1 = arith.constant 0 : i32
    return %c0_i32, %c0_i32_0 : i32, i32
  }
  func.func @transform_4(%arg0: i32) -> (i32, i32) {
    %c0_i32 = arith.constant 0 : i32
    %c0_i32_0 = arith.constant 0 : i32
    %c0_i32_1 = arith.constant 0 : i32
    return %c0_i32, %c0_i32_0 : i32, i32
  }
  func.func @transform_5(%arg0: i32) -> (i32, i32, i32) {
    %c0_i32 = arith.constant 0 : i32
    %c0_i32_0 = arith.constant 0 : i32
    %c0_i32_1 = arith.constant 0 : i32
    return %arg0, %c0_i32, %c0_i32_0 : i32, i32, i32
  }
}

module attributes {stable_mosaic.version = 11 : i64} {
  func.func @_dwpw_bn_kernel(%arg0: i32, %arg1: memref<1x20x20x4xf32, #tpu.memory_space<vmem>>, %arg2: memref<9x1x4xf32, #tpu.memory_space<vmem>>, %arg3: memref<4x4xf32, #tpu.memory_space<vmem>>, %arg4: memref<1x4xf32, #tpu.memory_space<vmem>>, %arg5: memref<1x4xf32, #tpu.memory_space<vmem>>, %arg6: memref<1x256x4xf32, #tpu.memory_space<vmem>>) attributes {dimension_semantics = [#tpu.dimension_semantics<parallel>], iteration_bounds = array<i64: 2>, scalar_prefetch = 0 : i64, scratch_operands = 0 : i64, tpu.core_type = #tpu.core_type<tc>, window_params = [{transform_indices = @transform_0, window_bounds = array<i64: 1, 20, 20, 4>}, {pipeline_mode = #tpu.pipeline_mode<synchronous>, transform_indices = @transform_1, window_bounds = array<i64: 9, 1, 4>}, {pipeline_mode = #tpu.pipeline_mode<synchronous>, transform_indices = @transform_2, window_bounds = array<i64: 4, 4>}, {pipeline_mode = #tpu.pipeline_mode<synchronous>, transform_indices = @transform_3, window_bounds = array<i64: 1, 4>}, {pipeline_mode = #tpu.pipeline_mode<synchronous>, transform_indices = @transform_4, window_bounds = array<i64: 1, 4>}, {transform_indices = @transform_5, window_bounds = array<i64: 1, 256, 4>}]} {
    %c0 = arith.constant 0 : index
    %c0_0 = arith.constant 0 : index
    %c0_1 = arith.constant 0 : index
    %c0_2 = arith.constant 0 : index
    %0 = vector.load %arg1[%c0, %c0_0, %c0_1, %c0_2] : memref<1x20x20x4xf32, #tpu.memory_space<vmem>>, vector<1x20x20x4xf32>
    %1 = vector.shape_cast %0 : vector<1x20x20x4xf32> to vector<20x20x4xf32>
    %cst = arith.constant 0.000000e+00 : f32
    %2 = vector.broadcast %cst : f32 to vector<20x20x4xf32>
    %3 = arith.maximumf %1, %2 : vector<20x20x4xf32>
    %c0_3 = arith.constant 0 : index
    %c0_4 = arith.constant 0 : index
    %c0_5 = arith.constant 0 : index
    %4 = vector.load %arg2[%c0_3, %c0_4, %c0_5] : memref<9x1x4xf32, #tpu.memory_space<vmem>>, vector<9x1x4xf32>
    %5 = vector.extract_strided_slice %3 {offsets = [0, 0, 0], sizes = [16, 16, 4], strides = [1, 1, 1]} : vector<20x20x4xf32> to vector<16x16x4xf32>
    %6 = vector.extract_strided_slice %4 {offsets = [0, 0, 0], sizes = [1, 1, 4], strides = [1, 1, 1]} : vector<9x1x4xf32> to vector<1x1x4xf32>
    %7 = vector.shape_cast %6 : vector<1x1x4xf32> to vector<1x4xf32>
    %8 = vector.shape_cast %7 : vector<1x4xf32> to vector<1x1x4xf32>
    %9 = vector.broadcast %8 : vector<1x1x4xf32> to vector<16x16x4xf32>
    %10 = arith.mulf %5, %9 : vector<16x16x4xf32>
    %11 = vector.extract_strided_slice %3 {offsets = [0, 2, 0], sizes = [16, 16, 4], strides = [1, 1, 1]} : vector<20x20x4xf32> to vector<16x16x4xf32>
    %12 = vector.extract_strided_slice %4 {offsets = [1, 0, 0], sizes = [1, 1, 4], strides = [1, 1, 1]} : vector<9x1x4xf32> to vector<1x1x4xf32>
    %13 = vector.shape_cast %12 : vector<1x1x4xf32> to vector<1x4xf32>
    %14 = vector.shape_cast %13 : vector<1x4xf32> to vector<1x1x4xf32>
    %15 = vector.broadcast %14 : vector<1x1x4xf32> to vector<16x16x4xf32>
    %16 = arith.mulf %11, %15 : vector<16x16x4xf32>
    %17 = arith.addf %10, %16 : vector<16x16x4xf32>
    %18 = vector.extract_strided_slice %3 {offsets = [0, 4, 0], sizes = [16, 16, 4], strides = [1, 1, 1]} : vector<20x20x4xf32> to vector<16x16x4xf32>
    %19 = vector.extract_strided_slice %4 {offsets = [2, 0, 0], sizes = [1, 1, 4], strides = [1, 1, 1]} : vector<9x1x4xf32> to vector<1x1x4xf32>
    %20 = vector.shape_cast %19 : vector<1x1x4xf32> to vector<1x4xf32>
    %21 = vector.shape_cast %20 : vector<1x4xf32> to vector<1x1x4xf32>
    %22 = vector.broadcast %21 : vector<1x1x4xf32> to vector<16x16x4xf32>
    %23 = arith.mulf %18, %22 : vector<16x16x4xf32>
    %24 = arith.addf %17, %23 : vector<16x16x4xf32>
    %25 = vector.extract_strided_slice %3 {offsets = [2, 0, 0], sizes = [16, 16, 4], strides = [1, 1, 1]} : vector<20x20x4xf32> to vector<16x16x4xf32>
    %26 = vector.extract_strided_slice %4 {offsets = [3, 0, 0], sizes = [1, 1, 4], strides = [1, 1, 1]} : vector<9x1x4xf32> to vector<1x1x4xf32>
    %27 = vector.shape_cast %26 : vector<1x1x4xf32> to vector<1x4xf32>
    %28 = vector.shape_cast %27 : vector<1x4xf32> to vector<1x1x4xf32>
    %29 = vector.broadcast %28 : vector<1x1x4xf32> to vector<16x16x4xf32>
    %30 = arith.mulf %25, %29 : vector<16x16x4xf32>
    %31 = arith.addf %24, %30 : vector<16x16x4xf32>
    %32 = vector.extract_strided_slice %3 {offsets = [2, 2, 0], sizes = [16, 16, 4], strides = [1, 1, 1]} : vector<20x20x4xf32> to vector<16x16x4xf32>
    %33 = vector.extract_strided_slice %4 {offsets = [4, 0, 0], sizes = [1, 1, 4], strides = [1, 1, 1]} : vector<9x1x4xf32> to vector<1x1x4xf32>
    %34 = vector.shape_cast %33 : vector<1x1x4xf32> to vector<1x4xf32>
    %35 = vector.shape_cast %34 : vector<1x4xf32> to vector<1x1x4xf32>
    %36 = vector.broadcast %35 : vector<1x1x4xf32> to vector<16x16x4xf32>
    %37 = arith.mulf %32, %36 : vector<16x16x4xf32>
    %38 = arith.addf %31, %37 : vector<16x16x4xf32>
    %39 = vector.extract_strided_slice %3 {offsets = [2, 4, 0], sizes = [16, 16, 4], strides = [1, 1, 1]} : vector<20x20x4xf32> to vector<16x16x4xf32>
    %40 = vector.extract_strided_slice %4 {offsets = [5, 0, 0], sizes = [1, 1, 4], strides = [1, 1, 1]} : vector<9x1x4xf32> to vector<1x1x4xf32>
    %41 = vector.shape_cast %40 : vector<1x1x4xf32> to vector<1x4xf32>
    %42 = vector.shape_cast %41 : vector<1x4xf32> to vector<1x1x4xf32>
    %43 = vector.broadcast %42 : vector<1x1x4xf32> to vector<16x16x4xf32>
    %44 = arith.mulf %39, %43 : vector<16x16x4xf32>
    %45 = arith.addf %38, %44 : vector<16x16x4xf32>
    %46 = vector.extract_strided_slice %3 {offsets = [4, 0, 0], sizes = [16, 16, 4], strides = [1, 1, 1]} : vector<20x20x4xf32> to vector<16x16x4xf32>
    %47 = vector.extract_strided_slice %4 {offsets = [6, 0, 0], sizes = [1, 1, 4], strides = [1, 1, 1]} : vector<9x1x4xf32> to vector<1x1x4xf32>
    %48 = vector.shape_cast %47 : vector<1x1x4xf32> to vector<1x4xf32>
    %49 = vector.shape_cast %48 : vector<1x4xf32> to vector<1x1x4xf32>
    %50 = vector.broadcast %49 : vector<1x1x4xf32> to vector<16x16x4xf32>
    %51 = arith.mulf %46, %50 : vector<16x16x4xf32>
    %52 = arith.addf %45, %51 : vector<16x16x4xf32>
    %53 = vector.extract_strided_slice %3 {offsets = [4, 2, 0], sizes = [16, 16, 4], strides = [1, 1, 1]} : vector<20x20x4xf32> to vector<16x16x4xf32>
    %54 = vector.extract_strided_slice %4 {offsets = [7, 0, 0], sizes = [1, 1, 4], strides = [1, 1, 1]} : vector<9x1x4xf32> to vector<1x1x4xf32>
    %55 = vector.shape_cast %54 : vector<1x1x4xf32> to vector<1x4xf32>
    %56 = vector.shape_cast %55 : vector<1x4xf32> to vector<1x1x4xf32>
    %57 = vector.broadcast %56 : vector<1x1x4xf32> to vector<16x16x4xf32>
    %58 = arith.mulf %53, %57 : vector<16x16x4xf32>
    %59 = arith.addf %52, %58 : vector<16x16x4xf32>
    %60 = vector.extract_strided_slice %3 {offsets = [4, 4, 0], sizes = [16, 16, 4], strides = [1, 1, 1]} : vector<20x20x4xf32> to vector<16x16x4xf32>
    %61 = vector.extract_strided_slice %4 {offsets = [8, 0, 0], sizes = [1, 1, 4], strides = [1, 1, 1]} : vector<9x1x4xf32> to vector<1x1x4xf32>
    %62 = vector.shape_cast %61 : vector<1x1x4xf32> to vector<1x4xf32>
    %63 = vector.shape_cast %62 : vector<1x4xf32> to vector<1x1x4xf32>
    %64 = vector.broadcast %63 : vector<1x1x4xf32> to vector<16x16x4xf32>
    %65 = arith.mulf %60, %64 : vector<16x16x4xf32>
    %66 = arith.addf %59, %65 : vector<16x16x4xf32>
    %67 = vector.shape_cast %66 : vector<16x16x4xf32> to vector<256x4xf32>
    %c0_6 = arith.constant 0 : index
    %c0_7 = arith.constant 0 : index
    %68 = vector.load %arg3[%c0_6, %c0_7] : memref<4x4xf32, #tpu.memory_space<vmem>>, vector<4x4xf32>
    %cst_8 = arith.constant dense<0.000000e+00> : vector<256x4xf32>
    %69 = tpu.matmul %67, %68, %cst_8 {dimension_numbers = #tpu.dot_dimension_numbers<[1], [0], [0], [1], [0, 0, 1, 1], [], []>} : vector<256x4xf32>, vector<4x4xf32>, vector<256x4xf32> -> vector<256x4xf32>
    %c0_9 = arith.constant 0 : index
    %c0_10 = arith.constant 0 : index
    %70 = vector.load %arg4[%c0_9, %c0_10] : memref<1x4xf32, #tpu.memory_space<vmem>>, vector<1x4xf32>
    %71 = vector.broadcast %70 : vector<1x4xf32> to vector<256x4xf32>
    %72 = arith.mulf %69, %71 : vector<256x4xf32>
    %c0_11 = arith.constant 0 : index
    %c0_12 = arith.constant 0 : index
    %73 = vector.load %arg5[%c0_11, %c0_12] : memref<1x4xf32, #tpu.memory_space<vmem>>, vector<1x4xf32>
    %74 = vector.broadcast %73 : vector<1x4xf32> to vector<256x4xf32>
    %75 = arith.addf %72, %74 : vector<256x4xf32>
    %c0_13 = arith.constant 0 : index
    %c0_14 = arith.constant 0 : index
    %c0_15 = arith.constant 0 : index
    %76 = vector.load %arg6[%c0_13, %c0_14, %c0_15] : memref<1x256x4xf32, #tpu.memory_space<vmem>>, vector<1x256x4xf32>
    %77 = vector.shape_cast %76 : vector<1x256x4xf32> to vector<256x4xf32>
    %78 = vector.shape_cast %75 : vector<256x4xf32> to vector<1x256x4xf32>
    tpu.vector_store %arg6[%c0_13, %c0_14, %c0_15], %78 {strides = array<i32>} : memref<1x256x4xf32, #tpu.memory_space<vmem>>, vector<1x256x4xf32>,
    return
  }
  func.func @transform_0(%arg0: i32) -> (i32, i32, i32, i32) {
    %c0_i32 = arith.constant 0 : i32
    %c0_i32_0 = arith.constant 0 : i32
    %c0_i32_1 = arith.constant 0 : i32
    %c0_i32_2 = arith.constant 0 : i32
    return %arg0, %c0_i32, %c0_i32_0, %c0_i32_1 : i32, i32, i32, i32
  }
  func.func @transform_1(%arg0: i32) -> (i32, i32, i32) {
    %c0_i32 = arith.constant 0 : i32
    %c0_i32_0 = arith.constant 0 : i32
    %c0_i32_1 = arith.constant 0 : i32
    %c0_i32_2 = arith.constant 0 : i32
    return %c0_i32, %c0_i32_0, %c0_i32_1 : i32, i32, i32
  }
  func.func @transform_2(%arg0: i32) -> (i32, i32) {
    %c0_i32 = arith.constant 0 : i32
    %c0_i32_0 = arith.constant 0 : i32
    %c0_i32_1 = arith.constant 0 : i32
    return %c0_i32, %c0_i32_0 : i32, i32
  }
  func.func @transform_3(%arg0: i32) -> (i32, i32) {
    %c0_i32 = arith.constant 0 : i32
    %c0_i32_0 = arith.constant 0 : i32
    %c0_i32_1 = arith.constant 0 : i32
    return %c0_i32, %c0_i32_0 : i32, i32
  }
  func.func @transform_4(%arg0: i32) -> (i32, i32) {
    %c0_i32 = arith.constant 0 : i32
    %c0_i32_0 = arith.constant 0 : i32
    %c0_i32_1 = arith.constant 0 : i32
    return %c0_i32, %c0_i32_0 : i32, i32
  }
  func.func @transform_5(%arg0: i32) -> (i32, i32, i32) {
    %c0_i32 = arith.constant 0 : i32
    %c0_i32_0 = arith.constant 0 : i32
    %c0_i32_1 = arith.constant 0 : i32
    return %arg0, %c0_i32, %c0_i32_0 : i32, i32, i32
  }
}

module attributes {stable_mosaic.version = 11 : i64} {
  func.func @_matmul_bn_kernel(%arg0: i32, %arg1: memref<128x16xf32, #tpu.memory_space<vmem>>, %arg2: memref<16x8xf32, #tpu.memory_space<vmem>>, %arg3: memref<1x8xf32, #tpu.memory_space<vmem>>, %arg4: memref<1x8xf32, #tpu.memory_space<vmem>>, %arg5: memref<128x8xf32, #tpu.memory_space<vmem>>) attributes {dimension_semantics = [#tpu.dimension_semantics<parallel>], iteration_bounds = array<i64: 1>, scalar_prefetch = 0 : i64, scratch_operands = 0 : i64, tpu.core_type = #tpu.core_type<tc>, window_params = [{transform_indices = @transform_0, window_bounds = array<i64: 128, 16>}, {pipeline_mode = #tpu.pipeline_mode<synchronous>, transform_indices = @transform_1, window_bounds = array<i64: 16, 8>}, {pipeline_mode = #tpu.pipeline_mode<synchronous>, transform_indices = @transform_2, window_bounds = array<i64: 1, 8>}, {pipeline_mode = #tpu.pipeline_mode<synchronous>, transform_indices = @transform_3, window_bounds = array<i64: 1, 8>}, {transform_indices = @transform_4, window_bounds = array<i64: 128, 8>}]} {
    %c0 = arith.constant 0 : index
    %c0_0 = arith.constant 0 : index
    %0 = vector.load %arg1[%c0, %c0_0] : memref<128x16xf32, #tpu.memory_space<vmem>>, vector<128x16xf32>
    %cst = arith.constant 0.000000e+00 : f32
    %1 = vector.broadcast %cst : f32 to vector<128x16xf32>
    %2 = arith.maximumf %0, %1 : vector<128x16xf32>
    %c0_1 = arith.constant 0 : index
    %c0_2 = arith.constant 0 : index
    %3 = vector.load %arg2[%c0_1, %c0_2] : memref<16x8xf32, #tpu.memory_space<vmem>>, vector<16x8xf32>
    %cst_3 = arith.constant dense<0.000000e+00> : vector<128x8xf32>
    %4 = tpu.matmul %2, %3, %cst_3 {dimension_numbers = #tpu.dot_dimension_numbers<[1], [0], [0], [1], [0, 0, 1, 1], [], []>} : vector<128x16xf32>, vector<16x8xf32>, vector<128x8xf32> -> vector<128x8xf32>
    %c0_4 = arith.constant 0 : index
    %c0_5 = arith.constant 0 : index
    %5 = vector.load %arg3[%c0_4, %c0_5] : memref<1x8xf32, #tpu.memory_space<vmem>>, vector<1x8xf32>
    %6 = vector.broadcast %5 : vector<1x8xf32> to vector<128x8xf32>
    %7 = arith.mulf %4, %6 : vector<128x8xf32>
    %c0_6 = arith.constant 0 : index
    %c0_7 = arith.constant 0 : index
    %8 = vector.load %arg4[%c0_6, %c0_7] : memref<1x8xf32, #tpu.memory_space<vmem>>, vector<1x8xf32>
    %9 = vector.broadcast %8 : vector<1x8xf32> to vector<128x8xf32>
    %10 = arith.addf %7, %9 : vector<128x8xf32>
    %c0_8 = arith.constant 0 : index
    %c0_9 = arith.constant 0 : index
    %11 = vector.load %arg5[%c0_8, %c0_9] : memref<128x8xf32, #tpu.memory_space<vmem>>, vector<128x8xf32>
    tpu.vector_store %arg5[%c0_8, %c0_9], %10 {strides = array<i32>} : memref<128x8xf32, #tpu.memory_space<vmem>>, vector<128x8xf32>,
    return
  }
  func.func @transform_0(%arg0: i32) -> (i32, i32) {
    %c0_i32 = arith.constant 0 : i32
    %c0_i32_0 = arith.constant 0 : i32
    return %arg0, %c0_i32 : i32, i32
  }
  func.func @transform_1(%arg0: i32) -> (i32, i32) {
    %c0_i32 = arith.constant 0 : i32
    %c0_i32_0 = arith.constant 0 : i32
    %c0_i32_1 = arith.constant 0 : i32
    return %c0_i32, %c0_i32_0 : i32, i32
  }
  func.func @transform_2(%arg0: i32) -> (i32, i32) {
    %c0_i32 = arith.constant 0 : i32
    %c0_i32_0 = arith.constant 0 : i32
    %c0_i32_1 = arith.constant 0 : i32
    return %c0_i32, %c0_i32_0 : i32, i32
  }
  func.func @transform_3(%arg0: i32) -> (i32, i32) {
    %c0_i32 = arith.constant 0 : i32
    %c0_i32_0 = arith.constant 0 : i32
    %c0_i32_1 = arith.constant 0 : i32
    return %c0_i32, %c0_i32_0 : i32, i32
  }
  func.func @transform_4(%arg0: i32) -> (i32, i32) {
    %c0_i32 = arith.constant 0 : i32
    %c0_i32_0 = arith.constant 0 : i32
    return %arg0, %c0_i32 : i32, i32
  }
}

module attributes {stable_mosaic.version = 11 : i64} {
  func.func @_maxpool_kernel(%arg0: i32, %arg1: memref<1x10x10x16xf32, #tpu.memory_space<vmem>>, %arg2: memref<1x8x8x16xf32, #tpu.memory_space<vmem>>) attributes {dimension_semantics = [#tpu.dimension_semantics<parallel>], iteration_bounds = array<i64: 2>, scalar_prefetch = 0 : i64, scratch_operands = 0 : i64, tpu.core_type = #tpu.core_type<tc>, window_params = [{transform_indices = @transform_0, window_bounds = array<i64: 1, 10, 10, 16>}, {transform_indices = @transform_1, window_bounds = array<i64: 1, 8, 8, 16>}]} {
    %c0 = arith.constant 0 : index
    %c0_0 = arith.constant 0 : index
    %c0_1 = arith.constant 0 : index
    %c0_2 = arith.constant 0 : index
    %0 = vector.load %arg1[%c0, %c0_0, %c0_1, %c0_2] : memref<1x10x10x16xf32, #tpu.memory_space<vmem>>, vector<1x10x10x16xf32>
    %1 = vector.shape_cast %0 : vector<1x10x10x16xf32> to vector<10x10x16xf32>
    %2 = vector.extract_strided_slice %1 {offsets = [0, 0, 0], sizes = [8, 8, 16], strides = [1, 1, 1]} : vector<10x10x16xf32> to vector<8x8x16xf32>
    %3 = vector.extract_strided_slice %1 {offsets = [0, 1, 0], sizes = [8, 8, 16], strides = [1, 1, 1]} : vector<10x10x16xf32> to vector<8x8x16xf32>
    %4 = arith.maximumf %2, %3 : vector<8x8x16xf32>
    %5 = vector.extract_strided_slice %1 {offsets = [0, 2, 0], sizes = [8, 8, 16], strides = [1, 1, 1]} : vector<10x10x16xf32> to vector<8x8x16xf32>
    %6 = arith.maximumf %4, %5 : vector<8x8x16xf32>
    %7 = vector.extract_strided_slice %1 {offsets = [1, 0, 0], sizes = [8, 8, 16], strides = [1, 1, 1]} : vector<10x10x16xf32> to vector<8x8x16xf32>
    %8 = arith.maximumf %6, %7 : vector<8x8x16xf32>
    %9 = vector.extract_strided_slice %1 {offsets = [1, 1, 0], sizes = [8, 8, 16], strides = [1, 1, 1]} : vector<10x10x16xf32> to vector<8x8x16xf32>
    %10 = arith.maximumf %8, %9 : vector<8x8x16xf32>
    %11 = vector.extract_strided_slice %1 {offsets = [1, 2, 0], sizes = [8, 8, 16], strides = [1, 1, 1]} : vector<10x10x16xf32> to vector<8x8x16xf32>
    %12 = arith.maximumf %10, %11 : vector<8x8x16xf32>
    %13 = vector.extract_strided_slice %1 {offsets = [2, 0, 0], sizes = [8, 8, 16], strides = [1, 1, 1]} : vector<10x10x16xf32> to vector<8x8x16xf32>
    %14 = arith.maximumf %12, %13 : vector<8x8x16xf32>
    %15 = vector.extract_strided_slice %1 {offsets = [2, 1, 0], sizes = [8, 8, 16], strides = [1, 1, 1]} : vector<10x10x16xf32> to vector<8x8x16xf32>
    %16 = arith.maximumf %14, %15 : vector<8x8x16xf32>
    %17 = vector.extract_strided_slice %1 {offsets = [2, 2, 0], sizes = [8, 8, 16], strides = [1, 1, 1]} : vector<10x10x16xf32> to vector<8x8x16xf32>
    %18 = arith.maximumf %16, %17 : vector<8x8x16xf32>
    %c0_3 = arith.constant 0 : index
    %c0_4 = arith.constant 0 : index
    %c0_5 = arith.constant 0 : index
    %c0_6 = arith.constant 0 : index
    %19 = vector.load %arg2[%c0_3, %c0_4, %c0_5, %c0_6] : memref<1x8x8x16xf32, #tpu.memory_space<vmem>>, vector<1x8x8x16xf32>
    %20 = vector.shape_cast %19 : vector<1x8x8x16xf32> to vector<8x8x16xf32>
    %21 = vector.shape_cast %18 : vector<8x8x16xf32> to vector<1x8x8x16xf32>
    tpu.vector_store %arg2[%c0_3, %c0_4, %c0_5, %c0_6], %21 {strides = array<i32>} : memref<1x8x8x16xf32, #tpu.memory_space<vmem>>, vector<1x8x8x16xf32>,
    return
  }
  func.func @transform_0(%arg0: i32) -> (i32, i32, i32, i32) {
    %c0_i32 = arith.constant 0 : i32
    %c0_i32_0 = arith.constant 0 : i32
    %c0_i32_1 = arith.constant 0 : i32
    %c0_i32_2 = arith.constant 0 : i32
    return %arg0, %c0_i32, %c0_i32_0, %c0_i32_1 : i32, i32, i32, i32
  }
  func.func @transform_1(%arg0: i32) -> (i32, i32, i32, i32) {
    %c0_i32 = arith.constant 0 : i32
    %c0_i32_0 = arith.constant 0 : i32
    %c0_i32_1 = arith.constant 0 : i32
    %c0_i32_2 = arith.constant 0 : i32
    return %arg0, %c0_i32, %c0_i32_0, %c0_i32_1 : i32, i32, i32, i32
  }
}

module attributes {stable_mosaic.version = 11 : i64} {
  func.func @_matmul_bn_kernel(%arg0: i32, %arg1: memref<256x16xf32, #tpu.memory_space<vmem>>, %arg2: memref<16x8xf32, #tpu.memory_space<vmem>>, %arg3: memref<1x8xf32, #tpu.memory_space<vmem>>, %arg4: memref<1x8xf32, #tpu.memory_space<vmem>>, %arg5: memref<256x8xf32, #tpu.memory_space<vmem>>) attributes {dimension_semantics = [#tpu.dimension_semantics<parallel>], iteration_bounds = array<i64: 2>, scalar_prefetch = 0 : i64, scratch_operands = 0 : i64, tpu.core_type = #tpu.core_type<tc>, window_params = [{transform_indices = @transform_0, window_bounds = array<i64: 256, 16>}, {pipeline_mode = #tpu.pipeline_mode<synchronous>, transform_indices = @transform_1, window_bounds = array<i64: 16, 8>}, {pipeline_mode = #tpu.pipeline_mode<synchronous>, transform_indices = @transform_2, window_bounds = array<i64: 1, 8>}, {pipeline_mode = #tpu.pipeline_mode<synchronous>, transform_indices = @transform_3, window_bounds = array<i64: 1, 8>}, {transform_indices = @transform_4, window_bounds = array<i64: 256, 8>}]} {
    %c0 = arith.constant 0 : index
    %c0_0 = arith.constant 0 : index
    %0 = vector.load %arg1[%c0, %c0_0] : memref<256x16xf32, #tpu.memory_space<vmem>>, vector<256x16xf32>
    %cst = arith.constant 0.000000e+00 : f32
    %1 = vector.broadcast %cst : f32 to vector<256x16xf32>
    %2 = arith.maximumf %0, %1 : vector<256x16xf32>
    %c0_1 = arith.constant 0 : index
    %c0_2 = arith.constant 0 : index
    %3 = vector.load %arg2[%c0_1, %c0_2] : memref<16x8xf32, #tpu.memory_space<vmem>>, vector<16x8xf32>
    %cst_3 = arith.constant dense<0.000000e+00> : vector<256x8xf32>
    %4 = tpu.matmul %2, %3, %cst_3 {dimension_numbers = #tpu.dot_dimension_numbers<[1], [0], [0], [1], [0, 0, 1, 1], [], []>} : vector<256x16xf32>, vector<16x8xf32>, vector<256x8xf32> -> vector<256x8xf32>
    %c0_4 = arith.constant 0 : index
    %c0_5 = arith.constant 0 : index
    %5 = vector.load %arg3[%c0_4, %c0_5] : memref<1x8xf32, #tpu.memory_space<vmem>>, vector<1x8xf32>
    %6 = vector.broadcast %5 : vector<1x8xf32> to vector<256x8xf32>
    %7 = arith.mulf %4, %6 : vector<256x8xf32>
    %c0_6 = arith.constant 0 : index
    %c0_7 = arith.constant 0 : index
    %8 = vector.load %arg4[%c0_6, %c0_7] : memref<1x8xf32, #tpu.memory_space<vmem>>, vector<1x8xf32>
    %9 = vector.broadcast %8 : vector<1x8xf32> to vector<256x8xf32>
    %10 = arith.addf %7, %9 : vector<256x8xf32>
    %c0_8 = arith.constant 0 : index
    %c0_9 = arith.constant 0 : index
    %11 = vector.load %arg5[%c0_8, %c0_9] : memref<256x8xf32, #tpu.memory_space<vmem>>, vector<256x8xf32>
    tpu.vector_store %arg5[%c0_8, %c0_9], %10 {strides = array<i32>} : memref<256x8xf32, #tpu.memory_space<vmem>>, vector<256x8xf32>,
    return
  }
  func.func @transform_0(%arg0: i32) -> (i32, i32) {
    %c0_i32 = arith.constant 0 : i32
    %c0_i32_0 = arith.constant 0 : i32
    return %arg0, %c0_i32 : i32, i32
  }
  func.func @transform_1(%arg0: i32) -> (i32, i32) {
    %c0_i32 = arith.constant 0 : i32
    %c0_i32_0 = arith.constant 0 : i32
    %c0_i32_1 = arith.constant 0 : i32
    return %c0_i32, %c0_i32_0 : i32, i32
  }
  func.func @transform_2(%arg0: i32) -> (i32, i32) {
    %c0_i32 = arith.constant 0 : i32
    %c0_i32_0 = arith.constant 0 : i32
    %c0_i32_1 = arith.constant 0 : i32
    return %c0_i32, %c0_i32_0 : i32, i32
  }
  func.func @transform_3(%arg0: i32) -> (i32, i32) {
    %c0_i32 = arith.constant 0 : i32
    %c0_i32_0 = arith.constant 0 : i32
    %c0_i32_1 = arith.constant 0 : i32
    return %c0_i32, %c0_i32_0 : i32, i32
  }
  func.func @transform_4(%arg0: i32) -> (i32, i32) {
    %c0_i32 = arith.constant 0 : i32
    %c0_i32_0 = arith.constant 0 : i32
    return %arg0, %c0_i32 : i32, i32
  }
}

module attributes {stable_mosaic.version = 11 : i64} {
  func.func @_matmul_bn_kernel(%arg0: i32, %arg1: memref<128x32xf32, #tpu.memory_space<vmem>>, %arg2: memref<32x16xf32, #tpu.memory_space<vmem>>, %arg3: memref<1x16xf32, #tpu.memory_space<vmem>>, %arg4: memref<1x16xf32, #tpu.memory_space<vmem>>, %arg5: memref<128x16xf32, #tpu.memory_space<vmem>>) attributes {dimension_semantics = [#tpu.dimension_semantics<parallel>], iteration_bounds = array<i64: 1>, scalar_prefetch = 0 : i64, scratch_operands = 0 : i64, tpu.core_type = #tpu.core_type<tc>, window_params = [{transform_indices = @transform_0, window_bounds = array<i64: 128, 32>}, {pipeline_mode = #tpu.pipeline_mode<synchronous>, transform_indices = @transform_1, window_bounds = array<i64: 32, 16>}, {pipeline_mode = #tpu.pipeline_mode<synchronous>, transform_indices = @transform_2, window_bounds = array<i64: 1, 16>}, {pipeline_mode = #tpu.pipeline_mode<synchronous>, transform_indices = @transform_3, window_bounds = array<i64: 1, 16>}, {transform_indices = @transform_4, window_bounds = array<i64: 128, 16>}]} {
    %c0 = arith.constant 0 : index
    %c0_0 = arith.constant 0 : index
    %0 = vector.load %arg1[%c0, %c0_0] : memref<128x32xf32, #tpu.memory_space<vmem>>, vector<128x32xf32>
    %cst = arith.constant 0.000000e+00 : f32
    %1 = vector.broadcast %cst : f32 to vector<128x32xf32>
    %2 = arith.maximumf %0, %1 : vector<128x32xf32>
    %c0_1 = arith.constant 0 : index
    %c0_2 = arith.constant 0 : index
    %3 = vector.load %arg2[%c0_1, %c0_2] : memref<32x16xf32, #tpu.memory_space<vmem>>, vector<32x16xf32>
    %cst_3 = arith.constant dense<0.000000e+00> : vector<128x16xf32>
    %4 = tpu.matmul %2, %3, %cst_3 {dimension_numbers = #tpu.dot_dimension_numbers<[1], [0], [0], [1], [0, 0, 1, 1], [], []>} : vector<128x32xf32>, vector<32x16xf32>, vector<128x16xf32> -> vector<128x16xf32>
    %c0_4 = arith.constant 0 : index
    %c0_5 = arith.constant 0 : index
    %5 = vector.load %arg3[%c0_4, %c0_5] : memref<1x16xf32, #tpu.memory_space<vmem>>, vector<1x16xf32>
    %6 = vector.broadcast %5 : vector<1x16xf32> to vector<128x16xf32>
    %7 = arith.mulf %4, %6 : vector<128x16xf32>
    %c0_6 = arith.constant 0 : index
    %c0_7 = arith.constant 0 : index
    %8 = vector.load %arg4[%c0_6, %c0_7] : memref<1x16xf32, #tpu.memory_space<vmem>>, vector<1x16xf32>
    %9 = vector.broadcast %8 : vector<1x16xf32> to vector<128x16xf32>
    %10 = arith.addf %7, %9 : vector<128x16xf32>
    %c0_8 = arith.constant 0 : index
    %c0_9 = arith.constant 0 : index
    %11 = vector.load %arg5[%c0_8, %c0_9] : memref<128x16xf32, #tpu.memory_space<vmem>>, vector<128x16xf32>
    tpu.vector_store %arg5[%c0_8, %c0_9], %10 {strides = array<i32>} : memref<128x16xf32, #tpu.memory_space<vmem>>, vector<128x16xf32>,
    return
  }
  func.func @transform_0(%arg0: i32) -> (i32, i32) {
    %c0_i32 = arith.constant 0 : i32
    %c0_i32_0 = arith.constant 0 : i32
    return %arg0, %c0_i32 : i32, i32
  }
  func.func @transform_1(%arg0: i32) -> (i32, i32) {
    %c0_i32 = arith.constant 0 : i32
    %c0_i32_0 = arith.constant 0 : i32
    %c0_i32_1 = arith.constant 0 : i32
    return %c0_i32, %c0_i32_0 : i32, i32
  }
  func.func @transform_2(%arg0: i32) -> (i32, i32) {
    %c0_i32 = arith.constant 0 : i32
    %c0_i32_0 = arith.constant 0 : i32
    %c0_i32_1 = arith.constant 0 : i32
    return %c0_i32, %c0_i32_0 : i32, i32
  }
  func.func @transform_3(%arg0: i32) -> (i32, i32) {
    %c0_i32 = arith.constant 0 : i32
    %c0_i32_0 = arith.constant 0 : i32
    %c0_i32_1 = arith.constant 0 : i32
    return %c0_i32, %c0_i32_0 : i32, i32
  }
  func.func @transform_4(%arg0: i32) -> (i32, i32) {
    %c0_i32 = arith.constant 0 : i32
    %c0_i32_0 = arith.constant 0 : i32
    return %arg0, %c0_i32 : i32, i32
  }
}

module attributes {stable_mosaic.version = 11 : i64} {
  func.func @_head_kernel(%arg0: i32, %arg1: memref<2x16x64xf32, #tpu.memory_space<vmem>>, %arg2: memref<64x10xf32, #tpu.memory_space<vmem>>, %arg3: memref<1x10xf32, #tpu.memory_space<vmem>>, %arg4: memref<2x10xf32, #tpu.memory_space<vmem>>) attributes {dimension_semantics = [#tpu.dimension_semantics<parallel>], iteration_bounds = array<i64: 1>, scalar_prefetch = 0 : i64, scratch_operands = 0 : i64, tpu.core_type = #tpu.core_type<tc>, window_params = [{pipeline_mode = #tpu.pipeline_mode<synchronous>, transform_indices = @transform_0, window_bounds = array<i64: 2, 16, 64>}, {pipeline_mode = #tpu.pipeline_mode<synchronous>, transform_indices = @transform_1, window_bounds = array<i64: 64, 10>}, {pipeline_mode = #tpu.pipeline_mode<synchronous>, transform_indices = @transform_2, window_bounds = array<i64: 1, 10>}, {pipeline_mode = #tpu.pipeline_mode<synchronous>, transform_indices = @transform_3, window_bounds = array<i64: 2, 10>}]} {
    %c0 = arith.constant 0 : index
    %c0_0 = arith.constant 0 : index
    %c0_1 = arith.constant 0 : index
    %0 = vector.load %arg1[%c0, %c0_0, %c0_1] : memref<2x16x64xf32, #tpu.memory_space<vmem>>, vector<2x16x64xf32>
    %cst = arith.constant dense<0.000000e+00> : vector<2x64xf32>
    %1 = vector.multi_reduction <add>, %0, %cst [1] : vector<2x16x64xf32> to vector<2x64xf32>
    %cst_2 = arith.constant 1.600000e+01 : f32
    %2 = vector.broadcast %cst_2 : f32 to vector<2x64xf32>
    %3 = arith.divf %1, %2 : vector<2x64xf32>
    %c0_3 = arith.constant 0 : index
    %c0_4 = arith.constant 0 : index
    %4 = vector.load %arg2[%c0_3, %c0_4] : memref<64x10xf32, #tpu.memory_space<vmem>>, vector<64x10xf32>
    %cst_5 = arith.constant dense<0.000000e+00> : vector<2x10xf32>
    %5 = tpu.matmul %3, %4, %cst_5 {dimension_numbers = #tpu.dot_dimension_numbers<[1], [0], [0], [1], [0, 0, 1, 1], [], []>} : vector<2x64xf32>, vector<64x10xf32>, vector<2x10xf32> -> vector<2x10xf32>
    %c0_6 = arith.constant 0 : index
    %c0_7 = arith.constant 0 : index
    %6 = vector.load %arg3[%c0_6, %c0_7] : memref<1x10xf32, #tpu.memory_space<vmem>>, vector<1x10xf32>
    %7 = vector.broadcast %6 : vector<1x10xf32> to vector<2x10xf32>
    %8 = arith.addf %5, %7 : vector<2x10xf32>
    %c0_8 = arith.constant 0 : index
    %c0_9 = arith.constant 0 : index
    %9 = vector.load %arg4[%c0_8, %c0_9] : memref<2x10xf32, #tpu.memory_space<vmem>>, vector<2x10xf32>
    tpu.vector_store %arg4[%c0_8, %c0_9], %8 {strides = array<i32>} : memref<2x10xf32, #tpu.memory_space<vmem>>, vector<2x10xf32>,
    return
  }
  func.func @transform_0(%arg0: i32) -> (i32, i32, i32) {
    %c0_i32 = arith.constant 0 : i32
    %c0_i32_0 = arith.constant 0 : i32
    %c0_i32_1 = arith.constant 0 : i32
    %c0_i32_2 = arith.constant 0 : i32
    return %c0_i32, %c0_i32_0, %c0_i32_1 : i32, i32, i32
  }
  func.func @transform_1(%arg0: i32) -> (i32, i32) {
    %c0_i32 = arith.constant 0 : i32
    %c0_i32_0 = arith.constant 0 : i32
    %c0_i32_1 = arith.constant 0 : i32
    return %c0_i32, %c0_i32_0 : i32, i32
  }
  func.func @transform_2(%arg0: i32) -> (i32, i32) {
    %c0_i32 = arith.constant 0 : i32
    %c0_i32_0 = arith.constant 0 : i32
    %c0_i32_1 = arith.constant 0 : i32
    return %c0_i32, %c0_i32_0 : i32, i32
  }
  func.func @transform_3(%arg0: i32) -> (i32, i32) {
    %c0_i32 = arith.constant 0 : i32
    %c0_i32_0 = arith.constant 0 : i32
    %c0_i32_1 = arith.constant 0 : i32
    return %c0_i32, %c0_i32_0 : i32, i32
  }
}

</mosaic_0001>

<llo_original>
// kernel: a_call__.30
$region0: #{a_call__.30}
  #allocation0 [shape = 'u32[]', space=smem, size = 0x4, offset = 0x4, fixed_abs, tag = 'smem constant byte address 0x4 - core index']
  #allocation1 [shape = 'u32[144,128]{1,0:T(1,128)}', space=vmem, size = 0x12000, scoped, tag = 'internal scratch']
  %s0 = inlined_call_operand.vmem [shape: f32[512,27], index: 0, kind: input, shape index: {}]
  %s1 = inlined_call_operand.vmem [shape: f32[27,12], index: 1, kind: input, shape index: {}]
  %s2 = inlined_call_operand.vmem [shape: f32[1,12], index: 2, kind: input, shape index: {}]
  %s3 = inlined_call_operand.vmem [shape: f32[1,12], index: 3, kind: input, shape index: {}]
  %s4 = inlined_call_operand.vmem [shape: f32[512,12], index: 4, kind: output, shape index: {}]
  %s5 = sld [smem:[#allocation0]]
  $region49: #{a_call__.30} parent=0
    _
  %s7 = ssub.s32 1, %s5
  %s8 = scalar_select 0, %s7, %s5
  loop: start=0, step=1, limit=4
  $region2: #{a_call__.30} parent=0 // loop_pre_header
    _
  $region3: #{a_call__.30} parent=0 // loop_header
    %s10 = sphi 0, %s14
    %p11 = scmp.ge.s32.totalorder %s10, 4
    %s20 = sphi 0, %s22
    %s23 = sphi 0, %s20
    %s24 = sphi 0, %s23
    %s40 = sphi 0, %s24
    %s44 = sphi 0, %s44
    %s46 = sphi 0, %s44
    %s47 = sphi 0, %s46
    %s61 = sphi 0, %s47
    %s65 = sphi 0, %s65
    %s67 = sphi 0, %s65
    %s68 = sphi 0, %s67
    %s82 = sphi 0, %s68
    %s86 = sphi 0, %s86
    %s88 = sphi 0, %s86
    %s89 = sphi 0, %s88
    %s103 = sphi 0, %s89
    %s109 = sphi 0, %s111
    %s112 = sphi 0, %s109
    %s113 = sphi 0, %s112
    %s129 = sphi 0, %s113
  $region4: #{a_call__.30} parent=0 // loop_header_branch
    %13 = sbr.rel (%p11) target = $region8
  $region5: #{a_call__.30} parent=0 // loop_body
    %s15 = ssub.s32 %s10, 1
    %s16 = ssub.s32 %s10, 2
    %s17 = sadd.s32 %s10, 1
    %s18 = ssub.s32 %s10, %s17
    %p19 = scmp.eq.s32.totalorder %s18, 0
    %s21 = sadd.s32 %s20, 1
    %s22 = scalar_select %p19, %s20, %s21
    %p25 = pneg %p19
    %p26 = scmp.eq.s32.totalorder %s10, 1
    %p27 = por %p25, %p26
    %p28 = scmp.ne.s32.totalorder %s20, %s23
    %p29 = scmp.eq.s32.totalorder %s10, 0
    %p30 = por %p28, %p29
    %p31 = scmp.ne.s32.totalorder %s20, %s23
    %p32 = scmp.eq.s32.totalorder %s15, 1
    %p33 = por %p31, %p32
    %p34 = scmp.ne.s32.totalorder %s23, %s24
    %p35 = scmp.eq.s32.totalorder %s15, 0
    %p36 = por %p34, %p35
    %p37 = scmp.ne.s32.totalorder %s23, %s24
    %p38 = scmp.eq.s32.totalorder %s16, 1
    %p39 = por %p37, %p38
    %p41 = scmp.ne.s32.totalorder %s24, %s40
    %p42 = scmp.eq.s32.totalorder %s16, 0
    %p43 = por %p41, %p42
    %s45 = sadd.s32 %s44, 1
    %p48 = scmp.eq.s32.totalorder %s10, 1
    %p49 = scmp.ne.s32.totalorder %s44, %s46
    %p50 = scmp.eq.s32.totalorder %s10, 0
    %p51 = por %p49, %p50
    %p52 = scmp.ne.s32.totalorder %s44, %s46
    %p53 = scmp.eq.s32.totalorder %s15, 1
    %p54 = por %p52, %p53
    %p55 = scmp.ne.s32.totalorder %s46, %s47
    %p56 = scmp.eq.s32.totalorder %s15, 0
    %p57 = por %p55, %p56
    %p58 = scmp.ne.s32.totalorder %s46, %s47
    %p59 = scmp.eq.s32.totalorder %s16, 1
    %p60 = por %p58, %p59
    %p62 = scmp.ne.s32.totalorder %s47, %s61
    %p63 = scmp.eq.s32.totalorder %s16, 0
    %p64 = por %p62, %p63
    %s66 = sadd.s32 %s65, 1
    %p69 = scmp.eq.s32.totalorder %s10, 1
    %p70 = scmp.ne.s32.totalorder %s65, %s67
    %p71 = scmp.eq.s32.totalorder %s10, 0
    %p72 = por %p70, %p71
    %p73 = scmp.ne.s32.totalorder %s65, %s67
    %p74 = scmp.eq.s32.totalorder %s15, 1
    %p75 = por %p73, %p74
    %p76 = scmp.ne.s32.totalorder %s67, %s68
    %p77 = scmp.eq.s32.totalorder %s15, 0
    %p78 = por %p76, %p77
    %p79 = scmp.ne.s32.totalorder %s67, %s68
    %p80 = scmp.eq.s32.totalorder %s16, 1
    %p81 = por %p79, %p80
    %p83 = scmp.ne.s32.totalorder %s68, %s82
    %p84 = scmp.eq.s32.totalorder %s16, 0
    %p85 = por %p83, %p84
    %s87 = sadd.s32 %s86, 1
    %p90 = scmp.eq.s32.totalorder %s10, 1
    %p91 = scmp.ne.s32.totalorder %s86, %s88
    %p92 = scmp.eq.s32.totalorder %s10, 0
    %p93 = por %p91, %p92
    %p94 = scmp.ne.s32.totalorder %s86, %s88
    %p95 = scmp.eq.s32.totalorder %s15, 1
    %p96 = por %p94, %p95
    %p97 = scmp.ne.s32.totalorder %s88, %s89
    %p98 = scmp.eq.s32.totalorder %s15, 0
    %p99 = por %p97, %p98
    %p100 = scmp.ne.s32.totalorder %s88, %s89
    %p101 = scmp.eq.s32.totalorder %s16, 1
    %p102 = por %p100, %p101
    %p104 = scmp.ne.s32.totalorder %s89, %s103
    %p105 = scmp.eq.s32.totalorder %s16, 0
    %p106 = por %p104, %p105
    %s107 = ssub.s32 %s10, %s17
    %p108 = scmp.eq.s32.totalorder %s107, 0
    %s110 = sadd.s32 %s109, 1
    %s111 = scalar_select %p108, %s109, %s110
    %p114 = pneg %p108
    %p115 = scmp.eq.s32.totalorder %s10, 1
    %p116 = por %p114, %p115
    %p117 = scmp.ne.s32.totalorder %s109, %s112
    %p118 = scmp.eq.s32.totalorder %s10, 0
    %p119 = por %p117, %p118
    %p120 = scmp.ne.s32.totalorder %s109, %s112
    %p121 = scmp.eq.s32.totalorder %s15, 1
    %p122 = por %p120, %p121
    %p123 = scmp.ne.s32.totalorder %s112, %s113
    %p124 = scmp.eq.s32.totalorder %s15, 0
    %p125 = por %p123, %p124
    %p126 = scmp.ne.s32.totalorder %s112, %s113
    %p127 = scmp.eq.s32.totalorder %s16, 1
    %p128 = por %p126, %p127
    %p130 = scmp.ne.s32.totalorder %s113, %s129
    %p131 = scmp.eq.s32.totalorder %s16, 0
    %p132 = por %p130, %p131
    %p133 = scmp.le.s32.totalorder 1, %s10
    %p134 = scmp.lt.s32.totalorder %s10, 3
    %p135 = pnand %p133, %p134
    %p136 = pneg %p135
    // Predicated region
    $region9: #{a_call__.30} parent=5 // pred_check
      _
    $region10: #{a_call__.30} parent=5 // pred_check_branch
      %138 = sbr.rel (%p135) target = $region12
    $region11: #{a_call__.30} parent=5 // pred_region
      %s139 = ssub.s32 %s10, 1
      // Predicated region
      $region13: #{a_call__.30} parent=11 // pred_check
        %p140 = pneg %p57
      $region14: #{a_call__.30} parent=11 // pred_check_branch
        %142 = sbr.rel (%p140) target = $region16
      $region15: #{a_call__.30} parent=11 // pred_region
        _
      $region16: #{a_call__.30} parent=11 // pred_fallthru
        _
      // Predicated region
      $region17: #{a_call__.30} parent=11 // pred_check
        %p143 = pneg %p78
      $region18: #{a_call__.30} parent=11 // pred_check_branch
        %145 = sbr.rel (%p143) target = $region20
      $region19: #{a_call__.30} parent=11 // pred_region
        _
      $region20: #{a_call__.30} parent=11 // pred_fallthru
        _
      // Predicated region
      $region21: #{a_call__.30} parent=11 // pred_check
        %p146 = pneg %p99
      $region22: #{a_call__.30} parent=11 // pred_check_branch
        %148 = sbr.rel (%p146) target = $region24
      $region23: #{a_call__.30} parent=11 // pred_region
        _
      $region24: #{a_call__.30} parent=11 // pred_fallthru
        _
    $region12: #{a_call__.30} parent=5 // pred_fallthru
      _
    %p149 = scmp.lt.s32.totalorder %s10, 2
    // Predicated region
    $region25: #{a_call__.30} parent=5 // pred_check
      %p150 = pneg %p149
    $region26: #{a_call__.30} parent=5 // pred_check_branch
      %152 = sbr.rel (%p150) target = $region28
    $region27: #{a_call__.30} parent=5 // pred_region
      // Predicated region
      $region29: #{a_call__.30} parent=27 // pred_check
        %p153 = pneg %p30
      $region30: #{a_call__.30} parent=27 // pred_check_branch
        %155 = sbr.rel (%p153) target = $region32
      $region31: #{a_call__.30} parent=27 // pred_region
        %s156 = smul.u32 32, %s10
        %p157 = scmp.lt.s32.totalorder %s156, 63
        %s158 = scalar_select %p157, %s156, 63
        %s159 = smul.addr %s158, 8
        %s160 = scalar_lea.vmem %s0, %s159
        %s161 = smul.u32 32, %s10
      $region32: #{a_call__.30} parent=27 // pred_fallthru
        _
    $region28: #{a_call__.30} parent=5 // pred_fallthru
      _
    %p162 = scmp.le.s32.totalorder 1, %s10
    %p163 = scmp.lt.s32.totalorder %s10, 3
    %p164 = pnand %p162, %p163
    %p165 = pneg %p164
    // Predicated region
    $region33: #{a_call__.30} parent=5 // pred_check
      _
    $region34: #{a_call__.30} parent=5 // pred_check_branch
      %167 = sbr.rel (%p164) target = $region36
    $region35: #{a_call__.30} parent=5 // pred_region
      %s168 = ssub.s32 %s10, 1
      %s169 = smul.u32 32, %s15
      %p170 = scmp.lt.s32.totalorder %s169, 63
      %s171 = scalar_select %p170, %s169, 63
      %s172 = smul.addr %s171, 8
      %s173 = scalar_lea.vmem %s0, %s172
      %p174 = pneg %p36
      %p175 = pneg %p33
      %p176 = pneg %p57
      %p177 = pneg %p54
      %p178 = pneg %p78
      %p179 = pneg %p75
      %p180 = pneg %p99
      %p181 = pneg %p96
      %p182 = pneg %p125
      %p183 = pneg %p122
      %s184 = smul.u32 32, %s15
      %p185 = scmp.lt.s32.totalorder %s184, 63
      %s186 = scalar_select %p185, %s184, 63
      %s187 = smul.addr %s186, 8
      %s188 = scalar_lea.vmem %s4, %s187
      %s189 = smul.u32 32, %s15
      %p190 = scmp.lt.s32.totalorder %s189, 63
      %s191 = scalar_select %p190, %s189, 63
      %s192 = smul.addr %s191, 8
      %s193 = scalar_lea.vmem %s0, %s192
      %s194 = smul.u32 32, %s15
      %s195 = smul.u32 32, %s15
      %p196 = scmp.lt.s32.totalorder %s195, 63
      %s197 = scalar_select %p196, %s195, 63
      %s198 = smul.addr %s197, 8
      %s199 = scalar_lea.vmem %s4, %s198
      %s200 = smul.u32 32, %s15
      %v201 = vld [vmem:[%s193] sm:$0xff]
      %v202 = vld [vmem:[%s193 + $0x8] sm:$0xff]
      %v203 = vld [vmem:[%s193 + $0x10] sm:$0xff]
      %v204 = vld [vmem:[%s193 + $0x18] sm:$0xff]
      %v205 = vld [vmem:[%s193 + $0x20] sm:$0xff]
      %v206 = vld [vmem:[%s193 + $0x28] sm:$0xff]
      %v207 = vld [vmem:[%s193 + $0x30] sm:$0xff]
      %v208 = vld [vmem:[%s193 + $0x38] sm:$0xff]
      %v209 = vld [vmem:[%s193 + $0x40] sm:$0xff]
      %v210 = vld [vmem:[%s193 + $0x48] sm:$0xff]
      %v211 = vld [vmem:[%s193 + $0x50] sm:$0xff]
      %v212 = vld [vmem:[%s193 + $0x58] sm:$0xff]
      %v213 = vld [vmem:[%s193 + $0x60] sm:$0xff]
      %v214 = vld [vmem:[%s193 + $0x68] sm:$0xff]
      %v215 = vld [vmem:[%s193 + $0x70] sm:$0xff]
      %v216 = vld [vmem:[%s193 + $0x78] sm:$0xff]
      %v217 = vld [vmem:[%s193 + $0x80] sm:$0xff]
      %v218 = vld [vmem:[%s193 + $0x88] sm:$0xff]
      %v219 = vld [vmem:[%s193 + $0x90] sm:$0xff]
      %v220 = vld [vmem:[%s193 + $0x98] sm:$0xff]
      %v221 = vld [vmem:[%s193 + $0xa0] sm:$0xff]
      %v222 = vld [vmem:[%s193 + $0xa8] sm:$0xff]
      %v223 = vld [vmem:[%s193 + $0xb0] sm:$0xff]
      %v224 = vld [vmem:[%s193 + $0xb8] sm:$0xff]
      %v225 = vld [vmem:[%s193 + $0xc0] sm:$0xff]
      %v226 = vld [vmem:[%s193 + $0xc8] sm:$0xff]
      %v227 = vld [vmem:[%s193 + $0xd0] sm:$0xff]
      %v228 = vld [vmem:[%s193 + $0xd8] sm:$0xff]
      %v229 = vld [vmem:[%s193 + $0xe0] sm:$0xff]
      %v230 = vld [vmem:[%s193 + $0xe8] sm:$0xff]
      %v231 = vld [vmem:[%s193 + $0xf0] sm:$0xff]
      %v232 = vld [vmem:[%s193 + $0xf8] sm:$0xff]
      %v233 = vld [vmem:[%s1] sm:$0xff]
      %v234 = vld [vmem:[%s1 + $0x8] sm:$0xff]
      %v235 = vld [vmem:[%s1 + $0x10] sm:$0xff]
      %v236 = vld [vmem:[%s1 + $0x18] sm:$0x7]
      %vm237 = vcmask 220160
      %v239 = vsel %vm237, %v201, 0
      %v242 = vsel %vm237, %v202, 0
      %v245 = vsel %vm237, %v203, 0
      %v248 = vsel %vm237, %v204, 0
      %v251 = vsel %vm237, %v205, 0
      %v254 = vsel %vm237, %v206, 0
      %v257 = vsel %vm237, %v207, 0
      %v260 = vsel %vm237, %v208, 0
      %v263 = vsel %vm237, %v209, 0
      %v266 = vsel %vm237, %v210, 0
      %v269 = vsel %vm237, %v211, 0
      %v272 = vsel %vm237, %v212, 0
      %v275 = vsel %vm237, %v213, 0
      %v278 = vsel %vm237, %v214, 0
      %v281 = vsel %vm237, %v215, 0
      %v284 = vsel %vm237, %v216, 0
      %v287 = vsel %vm237, %v217, 0
      %v290 = vsel %vm237, %v218, 0
      %v293 = vsel %vm237, %v219, 0
      %v296 = vsel %vm237, %v220, 0
      %v299 = vsel %vm237, %v221, 0
      %v302 = vsel %vm237, %v222, 0
      %v305 = vsel %vm237, %v223, 0
      %v308 = vsel %vm237, %v224, 0
      %v311 = vsel %vm237, %v225, 0
      %v314 = vsel %vm237, %v226, 0
      %v317 = vsel %vm237, %v227, 0
      %v320 = vsel %vm237, %v228, 0
      %v323 = vsel %vm237, %v229, 0
      %v326 = vsel %vm237, %v230, 0
      %v329 = vsel %vm237, %v231, 0
      %v332 = vsel %vm237, %v232, 0
      %vm334 = vcmask 1042432
      %v336 = vsel %vm334, %v236, 0
      %338 = vmatprep.subr.mxu0 0.0
      %339 = vmatpush1.msra.mxu0 %v233
      %340 = vmatprep.subr.mxu0 0.0
      %341 = vmatpush1.msra.mxu0 %v234
      %342 = vmatprep.subr.mxu0 0.0
      %343 = vmatpush1.msra.mxu0 %v235
      %344 = vmatprep.subr.mxu0 0.0
      %345 = vmatpush1.msra.mxu0 %v336
      %346 = vmatprep.subr.mxu0 0.0
      %347 = vmatpush1.msra.mxu0 0.0
      %348 = vmatprep.subr.mxu0 0.0
      %349 = vmatpush1.msra.mxu0 0.0
      %350 = vmatprep.subr.mxu0 0.0
      %351 = vmatpush1.msra.mxu0 0.0
      %352 = vmatprep.subr.mxu0 0.0
      %353 = vmatpush1.msra.mxu0 0.0
      %354 = vmatprep.subr.mxu0 0.0
      %355 = vmatpush1.msra.mxu0 0.0
      %356 = vmatprep.subr.mxu0 0.0
      %357 = vmatpush1.msra.mxu0 0.0
      %358 = vmatprep.subr.mxu0 0.0
      %359 = vmatpush1.msra.mxu0 0.0
      %360 = vmatprep.subr.mxu0 0.0
      %361 = vmatpush1.msra.mxu0 0.0
      %362 = vmatprep.subr.mxu0 0.0
      %363 = vmatpush1.msra.mxu0 0.0
      %364 = vmatprep.subr.mxu0 0.0
      %365 = vmatpush1.msra.mxu0 0.0
      %366 = vmatprep.subr.mxu0 0.0
      %367 = vmatpush1.msra.mxu0 0.0
      %368 = vmatprep.subr.mxu0 0.0
      %369 = vmatpush1.msra.mxu0 0.0
      %370 = vmatprep.subr.mxu0 0.0
      %371 = vmatpush1.msra.mxu0 0.0
      %372 = vmatprep.subr.mxu0 0.0
      %373 = vmatpush1.msra.mxu0 0.0
      %374 = vmatprep.subr.mxu0 0.0
      %375 = vmatpush1.msra.mxu0 0.0
      %376 = vmatprep.subr.mxu0 0.0
      %377 = vmatpush1.msra.mxu0 0.0
      %378 = vmatprep.subr.mxu0 0.0
      %379 = vmatpush1.msra.mxu0 0.0
      %380 = vmatprep.subr.mxu0 0.0
      %381 = vmatpush1.msra.mxu0 0.0
      %382 = vmatprep.subr.mxu0 0.0
      %383 = vmatpush1.msra.mxu0 0.0
      %384 = vmatprep.subr.mxu0 0.0
      %385 = vmatpush1.msra.mxu0 0.0
      %386 = vmatprep.subr.mxu0 0.0
      %387 = vmatpush1.msra.mxu0 0.0
      %388 = vmatprep.subr.mxu0 0.0
      %389 = vmatpush1.msra.mxu0 0.0
      %390 = vmatprep.subr.mxu0 0.0
      %391 = vmatpush1.msra.mxu0 0.0
      %392 = vmatprep.subr.mxu0 0.0
      %393 = vmatpush1.msra.mxu0 0.0
      %394 = vmatprep.subr.mxu0 0.0
      %395 = vmatpush1.msra.mxu0 0.0
      %396 = vmatprep.subr.mxu0 0.0
      %397 = vmatpush1.msra.mxu0 0.0
      %398 = vmatprep.subr.mxu0 0.0
      %399 = vmatpush1.msra.mxu0 0.0
      %400 = vmatprep.subr.mxu0 0.0
      %401 = vmatpush1.msra.mxu0 0.0
      %402 = vmatprep.mubr.f32.mxu0 0.0
      %403 = vmatmul.mubr.f32.gmra.mrb[0].mxu0 %v239
      %v404 = vpop.f32.mrb[0].mxu0
      %v405 = vadd.f32 0.0, %v404
      %v406 = vpop.f32.mrb[0].mxu0
      %407 = vmatprep.mubr.f32.mxu0 0.0
      %408 = vmatmul.mubr.f32.gmra.mrb[0].mxu0 %v242
      %v409 = vpop.f32.mrb[0].mxu0
      %v410 = vadd.f32 0.0, %v409
      %v411 = vpop.f32.mrb[0].mxu0
      %412 = vmatprep.mubr.f32.mxu0 0.0
      %413 = vmatmul.mubr.f32.gmra.mrb[0].mxu0 %v245
      %v414 = vpop.f32.mrb[0].mxu0
      %v415 = vadd.f32 0.0, %v414
      %v416 = vpop.f32.mrb[0].mxu0
      %417 = vmatprep.mubr.f32.mxu0 0.0
      %418 = vmatmul.mubr.f32.gmra.mrb[0].mxu0 %v248
      %v419 = vpop.f32.mrb[0].mxu0
      %v420 = vadd.f32 0.0, %v419
      %v421 = vpop.f32.mrb[0].mxu0
      %422 = vmatprep.mubr.f32.mxu0 0.0
      %423 = vmatmul.mubr.f32.gmra.mrb[0].mxu0 %v251
      %v424 = vpop.f32.mrb[0].mxu0
      %v425 = vadd.f32 0.0, %v424
      %v426 = vpop.f32.mrb[0].mxu0
      %427 = vmatprep.mubr.f32.mxu0 0.0
      %428 = vmatmul.mubr.f32.gmra.mrb[0].mxu0 %v254
      %v429 = vpop.f32.mrb[0].mxu0
      %v430 = vadd.f32 0.0, %v429
      %v431 = vpop.f32.mrb[0].mxu0
      %432 = vmatprep.mubr.f32.mxu0 0.0
      %433 = vmatmul.mubr.f32.gmra.mrb[0].mxu0 %v257
      %v434 = vpop.f32.mrb[0].mxu0
      %v435 = vadd.f32 0.0, %v434
      %v436 = vpop.f32.mrb[0].mxu0
      %437 = vmatprep.mubr.f32.mxu0 0.0
      %438 = vmatmul.mubr.f32.gmra.mrb[0].mxu0 %v260
      %v439 = vpop.f32.mrb[0].mxu0
      %v440 = vadd.f32 0.0, %v439
      %v441 = vpop.f32.mrb[0].mxu0
      %442 = vmatprep.mubr.f32.mxu0 0.0
      %443 = vmatmul.mubr.f32.gmra.mrb[0].mxu0 %v263
      %v444 = vpop.f32.mrb[0].mxu0
      %v445 = vadd.f32 0.0, %v444
      %v446 = vpop.f32.mrb[0].mxu0
      %447 = vmatprep.mubr.f32.mxu0 0.0
      %448 = vmatmul.mubr.f32.gmra.mrb[0].mxu0 %v266
      %v449 = vpop.f32.mrb[0].mxu0
      %v450 = vadd.f32 0.0, %v449
      %v451 = vpop.f32.mrb[0].mxu0
      %452 = vmatprep.mubr.f32.mxu0 0.0
      %453 = vmatmul.mubr.f32.gmra.mrb[0].mxu0 %v269
      %v454 = vpop.f32.mrb[0].mxu0
      %v455 = vadd.f32 0.0, %v454
      %v456 = vpop.f32.mrb[0].mxu0
      %457 = vmatprep.mubr.f32.mxu0 0.0
      %458 = vmatmul.mubr.f32.gmra.mrb[0].mxu0 %v272
      %v459 = vpop.f32.mrb[0].mxu0
      %v460 = vadd.f32 0.0, %v459
      %v461 = vpop.f32.mrb[0].mxu0
      %462 = vmatprep.mubr.f32.mxu0 0.0
      %463 = vmatmul.mubr.f32.gmra.mrb[0].mxu0 %v275
      %v464 = vpop.f32.mrb[0].mxu0
      %v465 = vadd.f32 0.0, %v464
      %v466 = vpop.f32.mrb[0].mxu0
      %467 = vmatprep.mubr.f32.mxu0 0.0
      %468 = vmatmul.mubr.f32.gmra.mrb[0].mxu0 %v278
      %v469 = vpop.f32.mrb[0].mxu0
      %v470 = vadd.f32 0.0, %v469
      %v471 = vpop.f32.mrb[0].mxu0
      %472 = vmatprep.mubr.f32.mxu0 0.0
      %473 = vmatmul.mubr.f32.gmra.mrb[0].mxu0 %v281
      %v474 = vpop.f32.mrb[0].mxu0
      %v475 = vadd.f32 0.0, %v474
      %v476 = vpop.f32.mrb[0].mxu0
      %477 = vmatprep.mubr.f32.mxu0 0.0
      %478 = vmatmul.mubr.f32.gmra.mrb[0].mxu0 %v284
      %v479 = vpop.f32.mrb[0].mxu0
      %v480 = vadd.f32 0.0, %v479
      %v481 = vpop.f32.mrb[0].mxu0
      %482 = vmatprep.mubr.f32.mxu0 0.0
      %483 = vmatmul.mubr.f32.gmra.mrb[0].mxu0 %v287
      %v484 = vpop.f32.mrb[0].mxu0
      %v485 = vadd.f32 0.0, %v484
      %v486 = vpop.f32.mrb[0].mxu0
      %487 = vmatprep.mubr.f32.mxu0 0.0
      %488 = vmatmul.mubr.f32.gmra.mrb[0].mxu0 %v290
      %v489 = vpop.f32.mrb[0].mxu0
      %v490 = vadd.f32 0.0, %v489
      %v491 = vpop.f32.mrb[0].mxu0
      %492 = vmatprep.mubr.f32.mxu0 0.0
      %493 = vmatmul.mubr.f32.gmra.mrb[0].mxu0 %v293
      %v494 = vpop.f32.mrb[0].mxu0
      %v495 = vadd.f32 0.0, %v494
      %v496 = vpop.f32.mrb[0].mxu0
      %497 = vmatprep.mubr.f32.mxu0 0.0
      %498 = vmatmul.mubr.f32.gmra.mrb[0].mxu0 %v296
      %v499 = vpop.f32.mrb[0].mxu0
      %v500 = vadd.f32 0.0, %v499
      %v501 = vpop.f32.mrb[0].mxu0
      %502 = vmatprep.mubr.f32.mxu0 0.0
      %503 = vmatmul.mubr.f32.gmra.mrb[0].mxu0 %v299
      %v504 = vpop.f32.mrb[0].mxu0
      %v505 = vadd.f32 0.0, %v504
      %v506 = vpop.f32.mrb[0].mxu0
      %507 = vmatprep.mubr.f32.mxu0 0.0
      %508 = vmatmul.mubr.f32.gmra.mrb[0].mxu0 %v302
      %v509 = vpop.f32.mrb[0].mxu0
      %v510 = vadd.f32 0.0, %v509
      %v511 = vpop.f32.mrb[0].mxu0
      %512 = vmatprep.mubr.f32.mxu0 0.0
      %513 = vmatmul.mubr.f32.gmra.mrb[0].mxu0 %v305
      %v514 = vpop.f32.mrb[0].mxu0
      %v515 = vadd.f32 0.0, %v514
      %v516 = vpop.f32.mrb[0].mxu0
      %517 = vmatprep.mubr.f32.mxu0 0.0
      %518 = vmatmul.mubr.f32.gmra.mrb[0].mxu0 %v308
      %v519 = vpop.f32.mrb[0].mxu0
      %v520 = vadd.f32 0.0, %v519
      %v521 = vpop.f32.mrb[0].mxu0
      %522 = vmatprep.mubr.f32.mxu0 0.0
      %523 = vmatmul.mubr.f32.gmra.mrb[0].mxu0 %v311
      %v524 = vpop.f32.mrb[0].mxu0
      %v525 = vadd.f32 0.0, %v524
      %v526 = vpop.f32.mrb[0].mxu0
      %527 = vmatprep.mubr.f32.mxu0 0.0
      %528 = vmatmul.mubr.f32.gmra.mrb[0].mxu0 %v314
      %v529 = vpop.f32.mrb[0].mxu0
      %v530 = vadd.f32 0.0, %v529
      %v531 = vpop.f32.mrb[0].mxu0
      %532 = vmatprep.mubr.f32.mxu0 0.0
      %533 = vmatmul.mubr.f32.gmra.mrb[0].mxu0 %v317
      %v534 = vpop.f32.mrb[0].mxu0
      %v535 = vadd.f32 0.0, %v534
      %v536 = vpop.f32.mrb[0].mxu0
      %537 = vmatprep.mubr.f32.mxu0 0.0
      %538 = vmatmul.mubr.f32.gmra.mrb[0].mxu0 %v320
      %v539 = vpop.f32.mrb[0].mxu0
      %v540 = vadd.f32 0.0, %v539
      %v541 = vpop.f32.mrb[0].mxu0
      %542 = vmatprep.mubr.f32.mxu0 0.0
      %543 = vmatmul.mubr.f32.gmra.mrb[0].mxu0 %v323
      %v544 = vpop.f32.mrb[0].mxu0
      %v545 = vadd.f32 0.0, %v544
      %v546 = vpop.f32.mrb[0].mxu0
      %547 = vmatprep.mubr.f32.mxu0 0.0
      %548 = vmatmul.mubr.f32.gmra.mrb[0].mxu0 %v326
      %v549 = vpop.f32.mrb[0].mxu0
      %v550 = vadd.f32 0.0, %v549
      %v551 = vpop.f32.mrb[0].mxu0
      %552 = vmatprep.mubr.f32.mxu0 0.0
      %553 = vmatmul.mubr.f32.gmra.mrb[0].mxu0 %v329
      %v554 = vpop.f32.mrb[0].mxu0
      %v555 = vadd.f32 0.0, %v554
      %v556 = vpop.f32.mrb[0].mxu0
      %557 = vmatprep.mubr.f32.mxu0 0.0
      %558 = vmatmul.mubr.f32.gmra.mrb[0].mxu0 %v332
      %v559 = vpop.f32.mrb[0].mxu0
      %v560 = vadd.f32 0.0, %v559
      %v561 = vpop.f32.mrb[0].mxu0
      %562 = vdwg.mxu0
      %v563 = vld [vmem:[%s2] sm:$0x1]
      %v565 = vlaneseq
      %v566 = vshrl.u32 %v565, 7
      %v567 = vsub.s32 0, %v566
      %v568 = vrot.slane %v563, %v567
      %v570 = vmul.f32 %v405, %v568
      %v571 = vmul.f32 %v410, %v568
      %v572 = vmul.f32 %v415, %v568
      %v573 = vmul.f32 %v420, %v568
      %v574 = vmul.f32 %v425, %v568
      %v575 = vmul.f32 %v430, %v568
      %v576 = vmul.f32 %v435, %v568
      %v577 = vmul.f32 %v440, %v568
      %v578 = vmul.f32 %v445, %v568
      %v579 = vmul.f32 %v450, %v568
      %v580 = vmul.f32 %v455, %v568
      %v581 = vmul.f32 %v460, %v568
      %v582 = vmul.f32 %v465, %v568
      %v583 = vmul.f32 %v470, %v568
      %v584 = vmul.f32 %v475, %v568
      %v585 = vmul.f32 %v480, %v568
      %v586 = vmul.f32 %v485, %v568
      %v587 = vmul.f32 %v490, %v568
      %v588 = vmul.f32 %v495, %v568
      %v589 = vmul.f32 %v500, %v568
      %v590 = vmul.f32 %v505, %v568
      %v591 = vmul.f32 %v510, %v568
      %v592 = vmul.f32 %v515, %v568
      %v593 = vmul.f32 %v520, %v568
      %v594 = vmul.f32 %v525, %v568
      %v595 = vmul.f32 %v530, %v568
      %v596 = vmul.f32 %v535, %v568
      %v597 = vmul.f32 %v540, %v568
      %v598 = vmul.f32 %v545, %v568
      %v599 = vmul.f32 %v550, %v568
      %v600 = vmul.f32 %v555, %v568
      %v601 = vmul.f32 %v560, %v568
      %v602 = vld [vmem:[%s3] sm:$0x1]
      %v604 = vlaneseq
      %v605 = vshrl.u32 %v604, 7
      %v606 = vsub.s32 0, %v605
      %v607 = vrot.slane %v602, %v606
      %v609 = vadd.f32 %v570, %v607
      %v610 = vadd.f32 %v571, %v607
      %v611 = vadd.f32 %v572, %v607
      %v612 = vadd.f32 %v573, %v607
      %v613 = vadd.f32 %v574, %v607
      %v614 = vadd.f32 %v575, %v607
      %v615 = vadd.f32 %v576, %v607
      %v616 = vadd.f32 %v577, %v607
      %v617 = vadd.f32 %v578, %v607
      %v618 = vadd.f32 %v579, %v607
      %v619 = vadd.f32 %v580, %v607
      %v620 = vadd.f32 %v581, %v607
      %v621 = vadd.f32 %v582, %v607
      %v622 = vadd.f32 %v583, %v607
      %v623 = vadd.f32 %v584, %v607
      %v624 = vadd.f32 %v585, %v607
      %v625 = vadd.f32 %v586, %v607
      %v626 = vadd.f32 %v587, %v607
      %v627 = vadd.f32 %v588, %v607
      %v628 = vadd.f32 %v589, %v607
      %v629 = vadd.f32 %v590, %v607
      %v630 = vadd.f32 %v591, %v607
      %v631 = vadd.f32 %v592, %v607
      %v632 = vadd.f32 %v593, %v607
      %v633 = vadd.f32 %v594, %v607
      %v634 = vadd.f32 %v595, %v607
      %v635 = vadd.f32 %v596, %v607
      %v636 = vadd.f32 %v597, %v607
      %v637 = vadd.f32 %v598, %v607
      %v638 = vadd.f32 %v599, %v607
      %v639 = vadd.f32 %v600, %v607
      %v640 = vadd.f32 %v601, %v607
      %vm641 = vcmask 97280
      %642 = vst.msk [vmem:[%s199] sm:$0xff] %vm641, %v609
      %643 = vst.msk [vmem:[%s199 + $0x8] sm:$0xff] %vm641, %v610
      %644 = vst.msk [vmem:[%s199 + $0x10] sm:$0xff] %vm641, %v611
      %645 = vst.msk [vmem:[%s199 + $0x18] sm:$0xff] %vm641, %v612
      %646 = vst.msk [vmem:[%s199 + $0x20] sm:$0xff] %vm641, %v613
      %647 = vst.msk [vmem:[%s199 + $0x28] sm:$0xff] %vm641, %v614
      %648 = vst.msk [vmem:[%s199 + $0x30] sm:$0xff] %vm641, %v615
      %649 = vst.msk [vmem:[%s199 + $0x38] sm:$0xff] %vm641, %v616
      %650 = vst.msk [vmem:[%s199 + $0x40] sm:$0xff] %vm641, %v617
      %651 = vst.msk [vmem:[%s199 + $0x48] sm:$0xff] %vm641, %v618
      %652 = vst.msk [vmem:[%s199 + $0x50] sm:$0xff] %vm641, %v619
      %653 = vst.msk [vmem:[%s199 + $0x58] sm:$0xff] %vm641, %v620
      %654 = vst.msk [vmem:[%s199 + $0x60] sm:$0xff] %vm641, %v621
      %655 = vst.msk [vmem:[%s199 + $0x68] sm:$0xff] %vm641, %v622
      %656 = vst.msk [vmem:[%s199 + $0x70] sm:$0xff] %vm641, %v623
      %657 = vst.msk [vmem:[%s199 + $0x78] sm:$0xff] %vm641, %v624
      %658 = vst.msk [vmem:[%s199 + $0x80] sm:$0xff] %vm641, %v625
      %659 = vst.msk [vmem:[%s199 + $0x88] sm:$0xff] %vm641, %v626
      %660 = vst.msk [vmem:[%s199 + $0x90] sm:$0xff] %vm641, %v627
      %661 = vst.msk [vmem:[%s199 + $0x98] sm:$0xff] %vm641, %v628
      %662 = vst.msk [vmem:[%s199 + $0xa0] sm:$0xff] %vm641, %v629
      %663 = vst.msk [vmem:[%s199 + $0xa8] sm:$0xff] %vm641, %v630
      %664 = vst.msk [vmem:[%s199 + $0xb0] sm:$0xff] %vm641, %v631
      %665 = vst.msk [vmem:[%s199 + $0xb8] sm:$0xff] %vm641, %v632
      %666 = vst.msk [vmem:[%s199 + $0xc0] sm:$0xff] %vm641, %v633
      %667 = vst.msk [vmem:[%s199 + $0xc8] sm:$0xff] %vm641, %v634
      %668 = vst.msk [vmem:[%s199 + $0xd0] sm:$0xff] %vm641, %v635
      %669 = vst.msk [vmem:[%s199 + $0xd8] sm:$0xff] %vm641, %v636
      %670 = vst.msk [vmem:[%s199 + $0xe0] sm:$0xff] %vm641, %v637
      %671 = vst.msk [vmem:[%s199 + $0xe8] sm:$0xff] %vm641, %v638
      %672 = vst.msk [vmem:[%s199 + $0xf0] sm:$0xff] %vm641, %v639
      %673 = vst.msk [vmem:[%s199 + $0xf8] sm:$0xff] %vm641, %v640
      %s674 = smul.u32 32, %s15
      %p675 = scmp.lt.s32.totalorder %s674, 63
      %s676 = scalar_select %p675, %s674, 63
      %s677 = smul.addr %s676, 8
      %s678 = scalar_lea.vmem %s4, %s677
      // Predicated region
      $region37: #{a_call__.30} parent=35 // pred_check
        %p679 = pneg %p122
      $region38: #{a_call__.30} parent=35 // pred_check_branch
        %681 = sbr.rel (%p679) target = $region40
      $region39: #{a_call__.30} parent=35 // pred_region
        %s682 = smul.u32 32, %s15
      $region40: #{a_call__.30} parent=35 // pred_fallthru
        _
    $region36: #{a_call__.30} parent=5 // pred_fallthru
      _
    %p683 = scmp.le.s32.totalorder 2, %s10
    // Predicated region
    $region41: #{a_call__.30} parent=5 // pred_check
      %p684 = pneg %p683
    $region42: #{a_call__.30} parent=5 // pred_check_branch
      %686 = sbr.rel (%p684) target = $region44
    $region43: #{a_call__.30} parent=5 // pred_region
      %s687 = ssub.s32 %s10, 2
      // Predicated region
      $region45: #{a_call__.30} parent=43 // pred_check
        %p688 = pneg %p128
      $region46: #{a_call__.30} parent=43 // pred_check_branch
        %690 = sbr.rel (%p688) target = $region48
      $region47: #{a_call__.30} parent=43 // pred_region
        %s691 = smul.u32 32, %s16
        %p692 = scmp.lt.s32.totalorder %s691, 63
        %s693 = scalar_select %p692, %s691, 63
        %s694 = smul.addr %s693, 8
        %s695 = scalar_lea.vmem %s4, %s694
      $region48: #{a_call__.30} parent=43 // pred_fallthru
        _
    $region44: #{a_call__.30} parent=5 // pred_fallthru
      _
  $region6: #{a_call__.30} parent=0 // loop_footer
    %s14 = sadd.s32 1, %s10
  $region7: #{a_call__.30} parent=0 // loop_footer_branch
    %9 = sbr.rel target = $region3
  $region8: #{a_call__.30} parent=0 // loop_exit
    _

// kernel: a_call__.31
$region0: #{a_call__.31}
  #allocation0 [shape = 'u32[]', space=smem, size = 0x4, offset = 0x4, fixed_abs, tag = 'smem constant byte address 0x4 - core index']
  #allocation1 [shape = 'u32[144,128]{1,0:T(1,128)}', space=vmem, size = 0x12000, scoped, tag = 'internal scratch']
  %s0 = inlined_call_operand.vmem [shape: f32[512,12], index: 0, kind: input, shape index: {}]
  %s1 = inlined_call_operand.vmem [shape: f32[12,4], index: 1, kind: input, shape index: {}]
  %s2 = inlined_call_operand.vmem [shape: f32[1,4], index: 2, kind: input, shape index: {}]
  %s3 = inlined_call_operand.vmem [shape: f32[1,4], index: 3, kind: input, shape index: {}]
  %s4 = inlined_call_operand.vmem [shape: f32[512,4], index: 4, kind: output, shape index: {}]
  %s5 = sld [smem:[#allocation0]]
  $region49: #{a_call__.31} parent=0
    _
  %s7 = ssub.s32 1, %s5
  %s8 = scalar_select 0, %s7, %s5
  loop: start=0, step=1, limit=4
  $region2: #{a_call__.31} parent=0 // loop_pre_header
    _
  $region3: #{a_call__.31} parent=0 // loop_header
    %s10 = sphi 0, %s14
    %p11 = scmp.ge.s32.totalorder %s10, 4
    %s20 = sphi 0, %s22
    %s23 = sphi 0, %s20
    %s24 = sphi 0, %s23
    %s40 = sphi 0, %s24
    %s44 = sphi 0, %s44
    %s46 = sphi 0, %s44
    %s47 = sphi 0, %s46
    %s61 = sphi 0, %s47
    %s65 = sphi 0, %s65
    %s67 = sphi 0, %s65
    %s68 = sphi 0, %s67
    %s82 = sphi 0, %s68
    %s86 = sphi 0, %s86
    %s88 = sphi 0, %s86
    %s89 = sphi 0, %s88
    %s103 = sphi 0, %s89
    %s109 = sphi 0, %s111
    %s112 = sphi 0, %s109
    %s113 = sphi 0, %s112
    %s129 = sphi 0, %s113
  $region4: #{a_call__.31} parent=0 // loop_header_branch
    %13 = sbr.rel (%p11) target = $region8
  $region5: #{a_call__.31} parent=0 // loop_body
    %s15 = ssub.s32 %s10, 1
    %s16 = ssub.s32 %s10, 2
    %s17 = sadd.s32 %s10, 1
    %s18 = ssub.s32 %s10, %s17
    %p19 = scmp.eq.s32.totalorder %s18, 0
    %s21 = sadd.s32 %s20, 1
    %s22 = scalar_select %p19, %s20, %s21
    %p25 = pneg %p19
    %p26 = scmp.eq.s32.totalorder %s10, 1
    %p27 = por %p25, %p26
    %p28 = scmp.ne.s32.totalorder %s20, %s23
    %p29 = scmp.eq.s32.totalorder %s10, 0
    %p30 = por %p28, %p29
    %p31 = scmp.ne.s32.totalorder %s20, %s23
    %p32 = scmp.eq.s32.totalorder %s15, 1
    %p33 = por %p31, %p32
    %p34 = scmp.ne.s32.totalorder %s23, %s24
    %p35 = scmp.eq.s32.totalorder %s15, 0
    %p36 = por %p34, %p35
    %p37 = scmp.ne.s32.totalorder %s23, %s24
    %p38 = scmp.eq.s32.totalorder %s16, 1
    %p39 = por %p37, %p38
    %p41 = scmp.ne.s32.totalorder %s24, %s40
    %p42 = scmp.eq.s32.totalorder %s16, 0
    %p43 = por %p41, %p42
    %s45 = sadd.s32 %s44, 1
    %p48 = scmp.eq.s32.totalorder %s10, 1
    %p49 = scmp.ne.s32.totalorder %s44, %s46
    %p50 = scmp.eq.s32.totalorder %s10, 0
    %p51 = por %p49, %p50
    %p52 = scmp.ne.s32.totalorder %s44, %s46
    %p53 = scmp.eq.s32.totalorder %s15, 1
    %p54 = por %p52, %p53
    %p55 = scmp.ne.s32.totalorder %s46, %s47
    %p56 = scmp.eq.s32.totalorder %s15, 0
    %p57 = por %p55, %p56
    %p58 = scmp.ne.s32.totalorder %s46, %s47
    %p59 = scmp.eq.s32.totalorder %s16, 1
    %p60 = por %p58, %p59
    %p62 = scmp.ne.s32.totalorder %s47, %s61
    %p63 = scmp.eq.s32.totalorder %s16, 0
    %p64 = por %p62, %p63
    %s66 = sadd.s32 %s65, 1
    %p69 = scmp.eq.s32.totalorder %s10, 1
    %p70 = scmp.ne.s32.totalorder %s65, %s67
    %p71 = scmp.eq.s32.totalorder %s10, 0
    %p72 = por %p70, %p71
    %p73 = scmp.ne.s32.totalorder %s65, %s67
    %p74 = scmp.eq.s32.totalorder %s15, 1
    %p75 = por %p73, %p74
    %p76 = scmp.ne.s32.totalorder %s67, %s68
    %p77 = scmp.eq.s32.totalorder %s15, 0
    %p78 = por %p76, %p77
    %p79 = scmp.ne.s32.totalorder %s67, %s68
    %p80 = scmp.eq.s32.totalorder %s16, 1
    %p81 = por %p79, %p80
    %p83 = scmp.ne.s32.totalorder %s68, %s82
    %p84 = scmp.eq.s32.totalorder %s16, 0
    %p85 = por %p83, %p84
    %s87 = sadd.s32 %s86, 1
    %p90 = scmp.eq.s32.totalorder %s10, 1
    %p91 = scmp.ne.s32.totalorder %s86, %s88
    %p92 = scmp.eq.s32.totalorder %s10, 0
    %p93 = por %p91, %p92
    %p94 = scmp.ne.s32.totalorder %s86, %s88
    %p95 = scmp.eq.s32.totalorder %s15, 1
    %p96 = por %p94, %p95
    %p97 = scmp.ne.s32.totalorder %s88, %s89
    %p98 = scmp.eq.s32.totalorder %s15, 0
    %p99 = por %p97, %p98
    %p100 = scmp.ne.s32.totalorder %s88, %s89
    %p101 = scmp.eq.s32.totalorder %s16, 1
    %p102 = por %p100, %p101
    %p104 = scmp.ne.s32.totalorder %s89, %s103
    %p105 = scmp.eq.s32.totalorder %s16, 0
    %p106 = por %p104, %p105
    %s107 = ssub.s32 %s10, %s17
    %p108 = scmp.eq.s32.totalorder %s107, 0
    %s110 = sadd.s32 %s109, 1
    %s111 = scalar_select %p108, %s109, %s110
    %p114 = pneg %p108
    %p115 = scmp.eq.s32.totalorder %s10, 1
    %p116 = por %p114, %p115
    %p117 = scmp.ne.s32.totalorder %s109, %s112
    %p118 = scmp.eq.s32.totalorder %s10, 0
    %p119 = por %p117, %p118
    %p120 = scmp.ne.s32.totalorder %s109, %s112
    %p121 = scmp.eq.s32.totalorder %s15, 1
    %p122 = por %p120, %p121
    %p123 = scmp.ne.s32.totalorder %s112, %s113
    %p124 = scmp.eq.s32.totalorder %s15, 0
    %p125 = por %p123, %p124
    %p126 = scmp.ne.s32.totalorder %s112, %s113
    %p127 = scmp.eq.s32.totalorder %s16, 1
    %p128 = por %p126, %p127
    %p130 = scmp.ne.s32.totalorder %s113, %s129
    %p131 = scmp.eq.s32.totalorder %s16, 0
    %p132 = por %p130, %p131
    %p133 = scmp.le.s32.totalorder 1, %s10
    %p134 = scmp.lt.s32.totalorder %s10, 3
    %p135 = pnand %p133, %p134
    %p136 = pneg %p135
    // Predicated region
    $region9: #{a_call__.31} parent=5 // pred_check
      _
    $region10: #{a_call__.31} parent=5 // pred_check_branch
      %138 = sbr.rel (%p135) target = $region12
    $region11: #{a_call__.31} parent=5 // pred_region
      %s139 = ssub.s32 %s10, 1
      // Predicated region
      $region13: #{a_call__.31} parent=11 // pred_check
        %p140 = pneg %p57
      $region14: #{a_call__.31} parent=11 // pred_check_branch
        %142 = sbr.rel (%p140) target = $region16
      $region15: #{a_call__.31} parent=11 // pred_region
        _
      $region16: #{a_call__.31} parent=11 // pred_fallthru
        _
      // Predicated region
      $region17: #{a_call__.31} parent=11 // pred_check
        %p143 = pneg %p78
      $region18: #{a_call__.31} parent=11 // pred_check_branch
        %145 = sbr.rel (%p143) target = $region20
      $region19: #{a_call__.31} parent=11 // pred_region
        _
      $region20: #{a_call__.31} parent=11 // pred_fallthru
        _
      // Predicated region
      $region21: #{a_call__.31} parent=11 // pred_check
        %p146 = pneg %p99
      $region22: #{a_call__.31} parent=11 // pred_check_branch
        %148 = sbr.rel (%p146) target = $region24
      $region23: #{a_call__.31} parent=11 // pred_region
        _
      $region24: #{a_call__.31} parent=11 // pred_fallthru
        _
    $region12: #{a_call__.31} parent=5 // pred_fallthru
      _
    %p149 = scmp.lt.s32.totalorder %s10, 2
    // Predicated region
    $region25: #{a_call__.31} parent=5 // pred_check
      %p150 = pneg %p149
    $region26: #{a_call__.31} parent=5 // pred_check_branch
      %152 = sbr.rel (%p150) target = $region28
    $region27: #{a_call__.31} parent=5 // pred_region
      // Predicated region
      $region29: #{a_call__.31} parent=27 // pred_check
        %p153 = pneg %p30
      $region30: #{a_call__.31} parent=27 // pred_check_branch
        %155 = sbr.rel (%p153) target = $region32
      $region31: #{a_call__.31} parent=27 // pred_region
        %s156 = smul.u32 32, %s10
        %p157 = scmp.lt.s32.totalorder %s156, 63
        %s158 = scalar_select %p157, %s156, 63
        %s159 = smul.addr %s158, 8
        %s160 = scalar_lea.vmem %s0, %s159
        %s161 = smul.u32 32, %s10
      $region32: #{a_call__.31} parent=27 // pred_fallthru
        _
    $region28: #{a_call__.31} parent=5 // pred_fallthru
      _
    %p162 = scmp.le.s32.totalorder 1, %s10
    %p163 = scmp.lt.s32.totalorder %s10, 3
    %p164 = pnand %p162, %p163
    %p165 = pneg %p164
    // Predicated region
    $region33: #{a_call__.31} parent=5 // pred_check
      _
    $region34: #{a_call__.31} parent=5 // pred_check_branch
      %167 = sbr.rel (%p164) target = $region36
    $region35: #{a_call__.31} parent=5 // pred_region
      %s168 = ssub.s32 %s10, 1
      %s169 = smul.u32 32, %s15
      %p170 = scmp.lt.s32.totalorder %s169, 63
      %s171 = scalar_select %p170, %s169, 63
      %s172 = smul.addr %s171, 8
      %s173 = scalar_lea.vmem %s0, %s172
      %p174 = pneg %p36
      %p175 = pneg %p33
      %p176 = pneg %p57
      %p177 = pneg %p54
      %p178 = pneg %p78
      %p179 = pneg %p75
      %p180 = pneg %p99
      %p181 = pneg %p96
      %p182 = pneg %p125
      %p183 = pneg %p122
      %s184 = smul.u32 32, %s15
      %p185 = scmp.lt.s32.totalorder %s184, 63
      %s186 = scalar_select %p185, %s184, 63
      %s187 = smul.addr %s186, 8
      %s188 = scalar_lea.vmem %s4, %s187
      %s189 = smul.u32 32, %s15
      %p190 = scmp.lt.s32.totalorder %s189, 63
      %s191 = scalar_select %p190, %s189, 63
      %s192 = smul.addr %s191, 8
      %s193 = scalar_lea.vmem %s0, %s192
      %s194 = smul.u32 32, %s15
      %s195 = smul.u32 32, %s15
      %p196 = scmp.lt.s32.totalorder %s195, 63
      %s197 = scalar_select %p196, %s195, 63
      %s198 = smul.addr %s197, 8
      %s199 = scalar_lea.vmem %s4, %s198
      %s200 = smul.u32 32, %s15
      %v201 = vld [vmem:[%s193] sm:$0xff]
      %v202 = vld [vmem:[%s193 + $0x8] sm:$0xff]
      %v203 = vld [vmem:[%s193 + $0x10] sm:$0xff]
      %v204 = vld [vmem:[%s193 + $0x18] sm:$0xff]
      %v205 = vld [vmem:[%s193 + $0x20] sm:$0xff]
      %v206 = vld [vmem:[%s193 + $0x28] sm:$0xff]
      %v207 = vld [vmem:[%s193 + $0x30] sm:$0xff]
      %v208 = vld [vmem:[%s193 + $0x38] sm:$0xff]
      %v209 = vld [vmem:[%s193 + $0x40] sm:$0xff]
      %v210 = vld [vmem:[%s193 + $0x48] sm:$0xff]
      %v211 = vld [vmem:[%s193 + $0x50] sm:$0xff]
      %v212 = vld [vmem:[%s193 + $0x58] sm:$0xff]
      %v213 = vld [vmem:[%s193 + $0x60] sm:$0xff]
      %v214 = vld [vmem:[%s193 + $0x68] sm:$0xff]
      %v215 = vld [vmem:[%s193 + $0x70] sm:$0xff]
      %v216 = vld [vmem:[%s193 + $0x78] sm:$0xff]
      %v217 = vld [vmem:[%s193 + $0x80] sm:$0xff]
      %v218 = vld [vmem:[%s193 + $0x88] sm:$0xff]
      %v219 = vld [vmem:[%s193 + $0x90] sm:$0xff]
      %v220 = vld [vmem:[%s193 + $0x98] sm:$0xff]
      %v221 = vld [vmem:[%s193 + $0xa0] sm:$0xff]
      %v222 = vld [vmem:[%s193 + $0xa8] sm:$0xff]
      %v223 = vld [vmem:[%s193 + $0xb0] sm:$0xff]
      %v224 = vld [vmem:[%s193 + $0xb8] sm:$0xff]
      %v225 = vld [vmem:[%s193 + $0xc0] sm:$0xff]
      %v226 = vld [vmem:[%s193 + $0xc8] sm:$0xff]
      %v227 = vld [vmem:[%s193 + $0xd0] sm:$0xff]
      %v228 = vld [vmem:[%s193 + $0xd8] sm:$0xff]
      %v229 = vld [vmem:[%s193 + $0xe0] sm:$0xff]
      %v230 = vld [vmem:[%s193 + $0xe8] sm:$0xff]
      %v231 = vld [vmem:[%s193 + $0xf0] sm:$0xff]
      %v232 = vld [vmem:[%s193 + $0xf8] sm:$0xff]
      %v233 = vmax.f32 %v201, 0.0
      %v234 = vmax.f32 %v202, 0.0
      %v235 = vmax.f32 %v203, 0.0
      %v236 = vmax.f32 %v204, 0.0
      %v237 = vmax.f32 %v205, 0.0
      %v238 = vmax.f32 %v206, 0.0
      %v239 = vmax.f32 %v207, 0.0
      %v240 = vmax.f32 %v208, 0.0
      %v241 = vmax.f32 %v209, 0.0
      %v242 = vmax.f32 %v210, 0.0
      %v243 = vmax.f32 %v211, 0.0
      %v244 = vmax.f32 %v212, 0.0
      %v245 = vmax.f32 %v213, 0.0
      %v246 = vmax.f32 %v214, 0.0
      %v247 = vmax.f32 %v215, 0.0
      %v248 = vmax.f32 %v216, 0.0
      %v249 = vmax.f32 %v217, 0.0
      %v250 = vmax.f32 %v218, 0.0
      %v251 = vmax.f32 %v219, 0.0
      %v252 = vmax.f32 %v220, 0.0
      %v253 = vmax.f32 %v221, 0.0
      %v254 = vmax.f32 %v222, 0.0
      %v255 = vmax.f32 %v223, 0.0
      %v256 = vmax.f32 %v224, 0.0
      %v257 = vmax.f32 %v225, 0.0
      %v258 = vmax.f32 %v226, 0.0
      %v259 = vmax.f32 %v227, 0.0
      %v260 = vmax.f32 %v228, 0.0
      %v261 = vmax.f32 %v229, 0.0
      %v262 = vmax.f32 %v230, 0.0
      %v263 = vmax.f32 %v231, 0.0
      %v264 = vmax.f32 %v232, 0.0
      %v265 = vld [vmem:[%s1] sm:$0xff]
      %v266 = vld [vmem:[%s1 + $0x8] sm:$0xf]
      %vm267 = vcmask 97280
      %v269 = vsel %vm267, %v233, 0
      %v272 = vsel %vm267, %v234, 0
      %v275 = vsel %vm267, %v235, 0
      %v278 = vsel %vm267, %v236, 0
      %v281 = vsel %vm267, %v237, 0
      %v284 = vsel %vm267, %v238, 0
      %v287 = vsel %vm267, %v239, 0
      %v290 = vsel %vm267, %v240, 0
      %v293 = vsel %vm267, %v241, 0
      %v296 = vsel %vm267, %v242, 0
      %v299 = vsel %vm267, %v243, 0
      %v302 = vsel %vm267, %v244, 0
      %v305 = vsel %vm267, %v245, 0
      %v308 = vsel %vm267, %v246, 0
      %v311 = vsel %vm267, %v247, 0
      %v314 = vsel %vm267, %v248, 0
      %v317 = vsel %vm267, %v249, 0
      %v320 = vsel %vm267, %v250, 0
      %v323 = vsel %vm267, %v251, 0
      %v326 = vsel %vm267, %v252, 0
      %v329 = vsel %vm267, %v253, 0
      %v332 = vsel %vm267, %v254, 0
      %v335 = vsel %vm267, %v255, 0
      %v338 = vsel %vm267, %v256, 0
      %v341 = vsel %vm267, %v257, 0
      %v344 = vsel %vm267, %v258, 0
      %v347 = vsel %vm267, %v259, 0
      %v350 = vsel %vm267, %v260, 0
      %v353 = vsel %vm267, %v261, 0
      %v356 = vsel %vm267, %v262, 0
      %v359 = vsel %vm267, %v263, 0
      %v362 = vsel %vm267, %v264, 0
      %vm364 = vcmask 1043456
      %v366 = vsel %vm364, %v266, 0
      %368 = vmatprep.subr.mxu0 0.0
      %369 = vmatpush1.msra.mxu0 %v265
      %370 = vmatprep.subr.mxu0 0.0
      %371 = vmatpush1.msra.mxu0 %v366
      %372 = vmatprep.subr.mxu0 0.0
      %373 = vmatpush1.msra.mxu0 0.0
      %374 = vmatprep.subr.mxu0 0.0
      %375 = vmatpush1.msra.mxu0 0.0
      %376 = vmatprep.subr.mxu0 0.0
      %377 = vmatpush1.msra.mxu0 0.0
      %378 = vmatprep.subr.mxu0 0.0
      %379 = vmatpush1.msra.mxu0 0.0
      %380 = vmatprep.subr.mxu0 0.0
      %381 = vmatpush1.msra.mxu0 0.0
      %382 = vmatprep.subr.mxu0 0.0
      %383 = vmatpush1.msra.mxu0 0.0
      %384 = vmatprep.subr.mxu0 0.0
      %385 = vmatpush1.msra.mxu0 0.0
      %386 = vmatprep.subr.mxu0 0.0
      %387 = vmatpush1.msra.mxu0 0.0
      %388 = vmatprep.subr.mxu0 0.0
      %389 = vmatpush1.msra.mxu0 0.0
      %390 = vmatprep.subr.mxu0 0.0
      %391 = vmatpush1.msra.mxu0 0.0
      %392 = vmatprep.subr.mxu0 0.0
      %393 = vmatpush1.msra.mxu0 0.0
      %394 = vmatprep.subr.mxu0 0.0
      %395 = vmatpush1.msra.mxu0 0.0
      %396 = vmatprep.subr.mxu0 0.0
      %397 = vmatpush1.msra.mxu0 0.0
      %398 = vmatprep.subr.mxu0 0.0
      %399 = vmatpush1.msra.mxu0 0.0
      %400 = vmatprep.subr.mxu0 0.0
      %401 = vmatpush1.msra.mxu0 0.0
      %402 = vmatprep.subr.mxu0 0.0
      %403 = vmatpush1.msra.mxu0 0.0
      %404 = vmatprep.subr.mxu0 0.0
      %405 = vmatpush1.msra.mxu0 0.0
      %406 = vmatprep.subr.mxu0 0.0
      %407 = vmatpush1.msra.mxu0 0.0
      %408 = vmatprep.subr.mxu0 0.0
      %409 = vmatpush1.msra.mxu0 0.0
      %410 = vmatprep.subr.mxu0 0.0
      %411 = vmatpush1.msra.mxu0 0.0
      %412 = vmatprep.subr.mxu0 0.0
      %413 = vmatpush1.msra.mxu0 0.0
      %414 = vmatprep.subr.mxu0 0.0
      %415 = vmatpush1.msra.mxu0 0.0
      %416 = vmatprep.subr.mxu0 0.0
      %417 = vmatpush1.msra.mxu0 0.0
      %418 = vmatprep.subr.mxu0 0.0
      %419 = vmatpush1.msra.mxu0 0.0
      %420 = vmatprep.subr.mxu0 0.0
      %421 = vmatpush1.msra.mxu0 0.0
      %422 = vmatprep.subr.mxu0 0.0
      %423 = vmatpush1.msra.mxu0 0.0
      %424 = vmatprep.subr.mxu0 0.0
      %425 = vmatpush1.msra.mxu0 0.0
      %426 = vmatprep.subr.mxu0 0.0
      %427 = vmatpush1.msra.mxu0 0.0
      %428 = vmatprep.subr.mxu0 0.0
      %429 = vmatpush1.msra.mxu0 0.0
      %430 = vmatprep.subr.mxu0 0.0
      %431 = vmatpush1.msra.mxu0 0.0
      %432 = vmatprep.mubr.f32.mxu0 0.0
      %433 = vmatmul.mubr.f32.gmra.mrb[0].mxu0 %v269
      %v434 = vpop.f32.mrb[0].mxu0
      %v435 = vadd.f32 0.0, %v434
      %v436 = vpop.f32.mrb[0].mxu0
      %437 = vmatprep.mubr.f32.mxu0 0.0
      %438 = vmatmul.mubr.f32.gmra.mrb[0].mxu0 %v272
      %v439 = vpop.f32.mrb[0].mxu0
      %v440 = vadd.f32 0.0, %v439
      %v441 = vpop.f32.mrb[0].mxu0
      %442 = vmatprep.mubr.f32.mxu0 0.0
      %443 = vmatmul.mubr.f32.gmra.mrb[0].mxu0 %v275
      %v444 = vpop.f32.mrb[0].mxu0
      %v445 = vadd.f32 0.0, %v444
      %v446 = vpop.f32.mrb[0].mxu0
      %447 = vmatprep.mubr.f32.mxu0 0.0
      %448 = vmatmul.mubr.f32.gmra.mrb[0].mxu0 %v278
      %v449 = vpop.f32.mrb[0].mxu0
      %v450 = vadd.f32 0.0, %v449
      %v451 = vpop.f32.mrb[0].mxu0
      %452 = vmatprep.mubr.f32.mxu0 0.0
      %453 = vmatmul.mubr.f32.gmra.mrb[0].mxu0 %v281
      %v454 = vpop.f32.mrb[0].mxu0
      %v455 = vadd.f32 0.0, %v454
      %v456 = vpop.f32.mrb[0].mxu0
      %457 = vmatprep.mubr.f32.mxu0 0.0
      %458 = vmatmul.mubr.f32.gmra.mrb[0].mxu0 %v284
      %v459 = vpop.f32.mrb[0].mxu0
      %v460 = vadd.f32 0.0, %v459
      %v461 = vpop.f32.mrb[0].mxu0
      %462 = vmatprep.mubr.f32.mxu0 0.0
      %463 = vmatmul.mubr.f32.gmra.mrb[0].mxu0 %v287
      %v464 = vpop.f32.mrb[0].mxu0
      %v465 = vadd.f32 0.0, %v464
      %v466 = vpop.f32.mrb[0].mxu0
      %467 = vmatprep.mubr.f32.mxu0 0.0
      %468 = vmatmul.mubr.f32.gmra.mrb[0].mxu0 %v290
      %v469 = vpop.f32.mrb[0].mxu0
      %v470 = vadd.f32 0.0, %v469
      %v471 = vpop.f32.mrb[0].mxu0
      %472 = vmatprep.mubr.f32.mxu0 0.0
      %473 = vmatmul.mubr.f32.gmra.mrb[0].mxu0 %v293
      %v474 = vpop.f32.mrb[0].mxu0
      %v475 = vadd.f32 0.0, %v474
      %v476 = vpop.f32.mrb[0].mxu0
      %477 = vmatprep.mubr.f32.mxu0 0.0
      %478 = vmatmul.mubr.f32.gmra.mrb[0].mxu0 %v296
      %v479 = vpop.f32.mrb[0].mxu0
      %v480 = vadd.f32 0.0, %v479
      %v481 = vpop.f32.mrb[0].mxu0
      %482 = vmatprep.mubr.f32.mxu0 0.0
      %483 = vmatmul.mubr.f32.gmra.mrb[0].mxu0 %v299
      %v484 = vpop.f32.mrb[0].mxu0
      %v485 = vadd.f32 0.0, %v484
      %v486 = vpop.f32.mrb[0].mxu0
      %487 = vmatprep.mubr.f32.mxu0 0.0
      %488 = vmatmul.mubr.f32.gmra.mrb[0].mxu0 %v302
      %v489 = vpop.f32.mrb[0].mxu0
      %v490 = vadd.f32 0.0, %v489
      %v491 = vpop.f32.mrb[0].mxu0
      %492 = vmatprep.mubr.f32.mxu0 0.0
      %493 = vmatmul.mubr.f32.gmra.mrb[0].mxu0 %v305
      %v494 = vpop.f32.mrb[0].mxu0
      %v495 = vadd.f32 0.0, %v494
      %v496 = vpop.f32.mrb[0].mxu0
      %497 = vmatprep.mubr.f32.mxu0 0.0
      %498 = vmatmul.mubr.f32.gmra.mrb[0].mxu0 %v308
      %v499 = vpop.f32.mrb[0].mxu0
      %v500 = vadd.f32 0.0, %v499
      %v501 = vpop.f32.mrb[0].mxu0
      %502 = vmatprep.mubr.f32.mxu0 0.0
      %503 = vmatmul.mubr.f32.gmra.mrb[0].mxu0 %v311
      %v504 = vpop.f32.mrb[0].mxu0
      %v505 = vadd.f32 0.0, %v504
      %v506 = vpop.f32.mrb[0].mxu0
      %507 = vmatprep.mubr.f32.mxu0 0.0
      %508 = vmatmul.mubr.f32.gmra.mrb[0].mxu0 %v314
      %v509 = vpop.f32.mrb[0].mxu0
      %v510 = vadd.f32 0.0, %v509
      %v511 = vpop.f32.mrb[0].mxu0
      %512 = vmatprep.mubr.f32.mxu0 0.0
      %513 = vmatmul.mubr.f32.gmra.mrb[0].mxu0 %v317
      %v514 = vpop.f32.mrb[0].mxu0
      %v515 = vadd.f32 0.0, %v514
      %v516 = vpop.f32.mrb[0].mxu0
      %517 = vmatprep.mubr.f32.mxu0 0.0
      %518 = vmatmul.mubr.f32.gmra.mrb[0].mxu0 %v320
      %v519 = vpop.f32.mrb[0].mxu0
      %v520 = vadd.f32 0.0, %v519
      %v521 = vpop.f32.mrb[0].mxu0
      %522 = vmatprep.mubr.f32.mxu0 0.0
      %523 = vmatmul.mubr.f32.gmra.mrb[0].mxu0 %v323
      %v524 = vpop.f32.mrb[0].mxu0
      %v525 = vadd.f32 0.0, %v524
      %v526 = vpop.f32.mrb[0].mxu0
      %527 = vmatprep.mubr.f32.mxu0 0.0
      %528 = vmatmul.mubr.f32.gmra.mrb[0].mxu0 %v326
      %v529 = vpop.f32.mrb[0].mxu0
      %v530 = vadd.f32 0.0, %v529
      %v531 = vpop.f32.mrb[0].mxu0
      %532 = vmatprep.mubr.f32.mxu0 0.0
      %533 = vmatmul.mubr.f32.gmra.mrb[0].mxu0 %v329
      %v534 = vpop.f32.mrb[0].mxu0
      %v535 = vadd.f32 0.0, %v534
      %v536 = vpop.f32.mrb[0].mxu0
      %537 = vmatprep.mubr.f32.mxu0 0.0
      %538 = vmatmul.mubr.f32.gmra.mrb[0].mxu0 %v332
      %v539 = vpop.f32.mrb[0].mxu0
      %v540 = vadd.f32 0.0, %v539
      %v541 = vpop.f32.mrb[0].mxu0
      %542 = vmatprep.mubr.f32.mxu0 0.0
      %543 = vmatmul.mubr.f32.gmra.mrb[0].mxu0 %v335
      %v544 = vpop.f32.mrb[0].mxu0
      %v545 = vadd.f32 0.0, %v544
      %v546 = vpop.f32.mrb[0].mxu0
      %547 = vmatprep.mubr.f32.mxu0 0.0
      %548 = vmatmul.mubr.f32.gmra.mrb[0].mxu0 %v338
      %v549 = vpop.f32.mrb[0].mxu0
      %v550 = vadd.f32 0.0, %v549
      %v551 = vpop.f32.mrb[0].mxu0
      %552 = vmatprep.mubr.f32.mxu0 0.0
      %553 = vmatmul.mubr.f32.gmra.mrb[0].mxu0 %v341
      %v554 = vpop.f32.mrb[0].mxu0
      %v555 = vadd.f32 0.0, %v554
      %v556 = vpop.f32.mrb[0].mxu0
      %557 = vmatprep.mubr.f32.mxu0 0.0
      %558 = vmatmul.mubr.f32.gmra.mrb[0].mxu0 %v344
      %v559 = vpop.f32.mrb[0].mxu0
      %v560 = vadd.f32 0.0, %v559
      %v561 = vpop.f32.mrb[0].mxu0
      %562 = vmatprep.mubr.f32.mxu0 0.0
      %563 = vmatmul.mubr.f32.gmra.mrb[0].mxu0 %v347
      %v564 = vpop.f32.mrb[0].mxu0
      %v565 = vadd.f32 0.0, %v564
      %v566 = vpop.f32.mrb[0].mxu0
      %567 = vmatprep.mubr.f32.mxu0 0.0
      %568 = vmatmul.mubr.f32.gmra.mrb[0].mxu0 %v350
      %v569 = vpop.f32.mrb[0].mxu0
      %v570 = vadd.f32 0.0, %v569
      %v571 = vpop.f32.mrb[0].mxu0
      %572 = vmatprep.mubr.f32.mxu0 0.0
      %573 = vmatmul.mubr.f32.gmra.mrb[0].mxu0 %v353
      %v574 = vpop.f32.mrb[0].mxu0
      %v575 = vadd.f32 0.0, %v574
      %v576 = vpop.f32.mrb[0].mxu0
      %577 = vmatprep.mubr.f32.mxu0 0.0
      %578 = vmatmul.mubr.f32.gmra.mrb[0].mxu0 %v356
      %v579 = vpop.f32.mrb[0].mxu0
      %v580 = vadd.f32 0.0, %v579
      %v581 = vpop.f32.mrb[0].mxu0
      %582 = vmatprep.mubr.f32.mxu0 0.0
      %583 = vmatmul.mubr.f32.gmra.mrb[0].mxu0 %v359
      %v584 = vpop.f32.mrb[0].mxu0
      %v585 = vadd.f32 0.0, %v584
      %v586 = vpop.f32.mrb[0].mxu0
      %587 = vmatprep.mubr.f32.mxu0 0.0
      %588 = vmatmul.mubr.f32.gmra.mrb[0].mxu0 %v362
      %v589 = vpop.f32.mrb[0].mxu0
      %v590 = vadd.f32 0.0, %v589
      %v591 = vpop.f32.mrb[0].mxu0
      %592 = vdwg.mxu0
      %v593 = vld [vmem:[%s2] sm:$0x1]
      %v595 = vlaneseq
      %v596 = vshrl.u32 %v595, 7
      %v597 = vsub.s32 0, %v596
      %v598 = vrot.slane %v593, %v597
      %v600 = vmul.f32 %v435, %v598
      %v601 = vmul.f32 %v440, %v598
      %v602 = vmul.f32 %v445, %v598
      %v603 = vmul.f32 %v450, %v598
      %v604 = vmul.f32 %v455, %v598
      %v605 = vmul.f32 %v460, %v598
      %v606 = vmul.f32 %v465, %v598
      %v607 = vmul.f32 %v470, %v598
      %v608 = vmul.f32 %v475, %v598
      %v609 = vmul.f32 %v480, %v598
      %v610 = vmul.f32 %v485, %v598
      %v611 = vmul.f32 %v490, %v598
      %v612 = vmul.f32 %v495, %v598
      %v613 = vmul.f32 %v500, %v598
      %v614 = vmul.f32 %v505, %v598
      %v615 = vmul.f32 %v510, %v598
      %v616 = vmul.f32 %v515, %v598
      %v617 = vmul.f32 %v520, %v598
      %v618 = vmul.f32 %v525, %v598
      %v619 = vmul.f32 %v530, %v598
      %v620 = vmul.f32 %v535, %v598
      %v621 = vmul.f32 %v540, %v598
      %v622 = vmul.f32 %v545, %v598
      %v623 = vmul.f32 %v550, %v598
      %v624 = vmul.f32 %v555, %v598
      %v625 = vmul.f32 %v560, %v598
      %v626 = vmul.f32 %v565, %v598
      %v627 = vmul.f32 %v570, %v598
      %v628 = vmul.f32 %v575, %v598
      %v629 = vmul.f32 %v580, %v598
      %v630 = vmul.f32 %v585, %v598
      %v631 = vmul.f32 %v590, %v598
      %v632 = vld [vmem:[%s3] sm:$0x1]
      %v634 = vlaneseq
      %v635 = vshrl.u32 %v634, 7
      %v636 = vsub.s32 0, %v635
      %v637 = vrot.slane %v632, %v636
      %v639 = vadd.f32 %v600, %v637
      %v640 = vadd.f32 %v601, %v637
      %v641 = vadd.f32 %v602, %v637
      %v642 = vadd.f32 %v603, %v637
      %v643 = vadd.f32 %v604, %v637
      %v644 = vadd.f32 %v605, %v637
      %v645 = vadd.f32 %v606, %v637
      %v646 = vadd.f32 %v607, %v637
      %v647 = vadd.f32 %v608, %v637
      %v648 = vadd.f32 %v609, %v637
      %v649 = vadd.f32 %v610, %v637
      %v650 = vadd.f32 %v611, %v637
      %v651 = vadd.f32 %v612, %v637
      %v652 = vadd.f32 %v613, %v637
      %v653 = vadd.f32 %v614, %v637
      %v654 = vadd.f32 %v615, %v637
      %v655 = vadd.f32 %v616, %v637
      %v656 = vadd.f32 %v617, %v637
      %v657 = vadd.f32 %v618, %v637
      %v658 = vadd.f32 %v619, %v637
      %v659 = vadd.f32 %v620, %v637
      %v660 = vadd.f32 %v621, %v637
      %v661 = vadd.f32 %v622, %v637
      %v662 = vadd.f32 %v623, %v637
      %v663 = vadd.f32 %v624, %v637
      %v664 = vadd.f32 %v625, %v637
      %v665 = vadd.f32 %v626, %v637
      %v666 = vadd.f32 %v627, %v637
      %v667 = vadd.f32 %v628, %v637
      %v668 = vadd.f32 %v629, %v637
      %v669 = vadd.f32 %v630, %v637
      %v670 = vadd.f32 %v631, %v637
      %vm671 = vcmask 31744
      %672 = vst.msk [vmem:[%s199] sm:$0xff] %vm671, %v639
      %673 = vst.msk [vmem:[%s199 + $0x8] sm:$0xff] %vm671, %v640
      %674 = vst.msk [vmem:[%s199 + $0x10] sm:$0xff] %vm671, %v641
      %675 = vst.msk [vmem:[%s199 + $0x18] sm:$0xff] %vm671, %v642
      %676 = vst.msk [vmem:[%s199 + $0x20] sm:$0xff] %vm671, %v643
      %677 = vst.msk [vmem:[%s199 + $0x28] sm:$0xff] %vm671, %v644
      %678 = vst.msk [vmem:[%s199 + $0x30] sm:$0xff] %vm671, %v645
      %679 = vst.msk [vmem:[%s199 + $0x38] sm:$0xff] %vm671, %v646
      %680 = vst.msk [vmem:[%s199 + $0x40] sm:$0xff] %vm671, %v647
      %681 = vst.msk [vmem:[%s199 + $0x48] sm:$0xff] %vm671, %v648
      %682 = vst.msk [vmem:[%s199 + $0x50] sm:$0xff] %vm671, %v649
      %683 = vst.msk [vmem:[%s199 + $0x58] sm:$0xff] %vm671, %v650
      %684 = vst.msk [vmem:[%s199 + $0x60] sm:$0xff] %vm671, %v651
      %685 = vst.msk [vmem:[%s199 + $0x68] sm:$0xff] %vm671, %v652
      %686 = vst.msk [vmem:[%s199 + $0x70] sm:$0xff] %vm671, %v653
      %687 = vst.msk [vmem:[%s199 + $0x78] sm:$0xff] %vm671, %v654
      %688 = vst.msk [vmem:[%s199 + $0x80] sm:$0xff] %vm671, %v655
      %689 = vst.msk [vmem:[%s199 + $0x88] sm:$0xff] %vm671, %v656
      %690 = vst.msk [vmem:[%s199 + $0x90] sm:$0xff] %vm671, %v657
      %691 = vst.msk [vmem:[%s199 + $0x98] sm:$0xff] %vm671, %v658
      %692 = vst.msk [vmem:[%s199 + $0xa0] sm:$0xff] %vm671, %v659
      %693 = vst.msk [vmem:[%s199 + $0xa8] sm:$0xff] %vm671, %v660
      %694 = vst.msk [vmem:[%s199 + $0xb0] sm:$0xff] %vm671, %v661
      %695 = vst.msk [vmem:[%s199 + $0xb8] sm:$0xff] %vm671, %v662
      %696 = vst.msk [vmem:[%s199 + $0xc0] sm:$0xff] %vm671, %v663
      %697 = vst.msk [vmem:[%s199 + $0xc8] sm:$0xff] %vm671, %v664
      %698 = vst.msk [vmem:[%s199 + $0xd0] sm:$0xff] %vm671, %v665
      %699 = vst.msk [vmem:[%s199 + $0xd8] sm:$0xff] %vm671, %v666
      %700 = vst.msk [vmem:[%s199 + $0xe0] sm:$0xff] %vm671, %v667
      %701 = vst.msk [vmem:[%s199 + $0xe8] sm:$0xff] %vm671, %v668
      %702 = vst.msk [vmem:[%s199 + $0xf0] sm:$0xff] %vm671, %v669
      %703 = vst.msk [vmem:[%s199 + $0xf8] sm:$0xff] %vm671, %v670
      %s704 = smul.u32 32, %s15
      %p705 = scmp.lt.s32.totalorder %s704, 63
      %s706 = scalar_select %p705, %s704, 63
      %s707 = smul.addr %s706, 8
      %s708 = scalar_lea.vmem %s4, %s707
      // Predicated region
      $region37: #{a_call__.31} parent=35 // pred_check
        %p709 = pneg %p122
      $region38: #{a_call__.31} parent=35 // pred_check_branch
        %711 = sbr.rel (%p709) target = $region40
      $region39: #{a_call__.31} parent=35 // pred_region
        %s712 = smul.u32 32, %s15
      $region40: #{a_call__.31} parent=35 // pred_fallthru
        _
    $region36: #{a_call__.31} parent=5 // pred_fallthru
      _
    %p713 = scmp.le.s32.totalorder 2, %s10
    // Predicated region
    $region41: #{a_call__.31} parent=5 // pred_check
      %p714 = pneg %p713
    $region42: #{a_call__.31} parent=5 // pred_check_branch
      %716 = sbr.rel (%p714) target = $region44
    $region43: #{a_call__.31} parent=5 // pred_region
      %s717 = ssub.s32 %s10, 2
      // Predicated region
      $region45: #{a_call__.31} parent=43 // pred_check
        %p718 = pneg %p128
      $region46: #{a_call__.31} parent=43 // pred_check_branch
        %720 = sbr.rel (%p718) target = $region48
      $region47: #{a_call__.31} parent=43 // pred_region
        %s721 = smul.u32 32, %s16
        %p722 = scmp.lt.s32.totalorder %s721, 63
        %s723 = scalar_select %p722, %s721, 63
        %s724 = smul.addr %s723, 8
        %s725 = scalar_lea.vmem %s4, %s724
      $region48: #{a_call__.31} parent=43 // pred_fallthru
        _
    $region44: #{a_call__.31} parent=5 // pred_fallthru
      _
  $region6: #{a_call__.31} parent=0 // loop_footer
    %s14 = sadd.s32 1, %s10
  $region7: #{a_call__.31} parent=0 // loop_footer_branch
    %9 = sbr.rel target = $region3
  $region8: #{a_call__.31} parent=0 // loop_exit
    _

// kernel: a_call__.44
$region0: #{a_call__.44}
  #allocation0 [shape = 'u32[]', space=smem, size = 0x4, offset = 0x4, fixed_abs, tag = 'smem constant byte address 0x4 - core index']
  #allocation1 [shape = 'u32[144,128]{1,0:T(1,128)}', space=vmem, size = 0x12000, scoped, tag = 'internal scratch']
  %s0 = inlined_call_operand.vmem [shape: f32[512,12], index: 0, kind: input, shape index: {}]
  %s1 = inlined_call_operand.vmem [shape: f32[12,8], index: 1, kind: input, shape index: {}]
  %s2 = inlined_call_operand.vmem [shape: f32[1,8], index: 2, kind: input, shape index: {}]
  %s3 = inlined_call_operand.vmem [shape: f32[1,8], index: 3, kind: input, shape index: {}]
  %s4 = inlined_call_operand.vmem [shape: f32[512,8], index: 4, kind: output, shape index: {}]
  %s5 = sld [smem:[#allocation0]]
  $region49: #{a_call__.44} parent=0
    _
  %s7 = ssub.s32 1, %s5
  %s8 = scalar_select 0, %s7, %s5
  loop: start=0, step=1, limit=4
  $region2: #{a_call__.44} parent=0 // loop_pre_header
    _
  $region3: #{a_call__.44} parent=0 // loop_header
    %s10 = sphi 0, %s14
    %p11 = scmp.ge.s32.totalorder %s10, 4
    %s20 = sphi 0, %s22
    %s23 = sphi 0, %s20
    %s24 = sphi 0, %s23
    %s40 = sphi 0, %s24
    %s44 = sphi 0, %s44
    %s46 = sphi 0, %s44
    %s47 = sphi 0, %s46
    %s61 = sphi 0, %s47
    %s65 = sphi 0, %s65
    %s67 = sphi 0, %s65
    %s68 = sphi 0, %s67
    %s82 = sphi 0, %s68
    %s86 = sphi 0, %s86
    %s88 = sphi 0, %s86
    %s89 = sphi 0, %s88
    %s103 = sphi 0, %s89
    %s109 = sphi 0, %s111
    %s112 = sphi 0, %s109
    %s113 = sphi 0, %s112
    %s129 = sphi 0, %s113
  $region4: #{a_call__.44} parent=0 // loop_header_branch
    %13 = sbr.rel (%p11) target = $region8
  $region5: #{a_call__.44} parent=0 // loop_body
    %s15 = ssub.s32 %s10, 1
    %s16 = ssub.s32 %s10, 2
    %s17 = sadd.s32 %s10, 1
    %s18 = ssub.s32 %s10, %s17
    %p19 = scmp.eq.s32.totalorder %s18, 0
    %s21 = sadd.s32 %s20, 1
    %s22 = scalar_select %p19, %s20, %s21
    %p25 = pneg %p19
    %p26 = scmp.eq.s32.totalorder %s10, 1
    %p27 = por %p25, %p26
    %p28 = scmp.ne.s32.totalorder %s20, %s23
    %p29 = scmp.eq.s32.totalorder %s10, 0
    %p30 = por %p28, %p29
    %p31 = scmp.ne.s32.totalorder %s20, %s23
    %p32 = scmp.eq.s32.totalorder %s15, 1
    %p33 = por %p31, %p32
    %p34 = scmp.ne.s32.totalorder %s23, %s24
    %p35 = scmp.eq.s32.totalorder %s15, 0
    %p36 = por %p34, %p35
    %p37 = scmp.ne.s32.totalorder %s23, %s24
    %p38 = scmp.eq.s32.totalorder %s16, 1
    %p39 = por %p37, %p38
    %p41 = scmp.ne.s32.totalorder %s24, %s40
    %p42 = scmp.eq.s32.totalorder %s16, 0
    %p43 = por %p41, %p42
    %s45 = sadd.s32 %s44, 1
    %p48 = scmp.eq.s32.totalorder %s10, 1
    %p49 = scmp.ne.s32.totalorder %s44, %s46
    %p50 = scmp.eq.s32.totalorder %s10, 0
    %p51 = por %p49, %p50
    %p52 = scmp.ne.s32.totalorder %s44, %s46
    %p53 = scmp.eq.s32.totalorder %s15, 1
    %p54 = por %p52, %p53
    %p55 = scmp.ne.s32.totalorder %s46, %s47
    %p56 = scmp.eq.s32.totalorder %s15, 0
    %p57 = por %p55, %p56
    %p58 = scmp.ne.s32.totalorder %s46, %s47
    %p59 = scmp.eq.s32.totalorder %s16, 1
    %p60 = por %p58, %p59
    %p62 = scmp.ne.s32.totalorder %s47, %s61
    %p63 = scmp.eq.s32.totalorder %s16, 0
    %p64 = por %p62, %p63
    %s66 = sadd.s32 %s65, 1
    %p69 = scmp.eq.s32.totalorder %s10, 1
    %p70 = scmp.ne.s32.totalorder %s65, %s67
    %p71 = scmp.eq.s32.totalorder %s10, 0
    %p72 = por %p70, %p71
    %p73 = scmp.ne.s32.totalorder %s65, %s67
    %p74 = scmp.eq.s32.totalorder %s15, 1
    %p75 = por %p73, %p74
    %p76 = scmp.ne.s32.totalorder %s67, %s68
    %p77 = scmp.eq.s32.totalorder %s15, 0
    %p78 = por %p76, %p77
    %p79 = scmp.ne.s32.totalorder %s67, %s68
    %p80 = scmp.eq.s32.totalorder %s16, 1
    %p81 = por %p79, %p80
    %p83 = scmp.ne.s32.totalorder %s68, %s82
    %p84 = scmp.eq.s32.totalorder %s16, 0
    %p85 = por %p83, %p84
    %s87 = sadd.s32 %s86, 1
    %p90 = scmp.eq.s32.totalorder %s10, 1
    %p91 = scmp.ne.s32.totalorder %s86, %s88
    %p92 = scmp.eq.s32.totalorder %s10, 0
    %p93 = por %p91, %p92
    %p94 = scmp.ne.s32.totalorder %s86, %s88
    %p95 = scmp.eq.s32.totalorder %s15, 1
    %p96 = por %p94, %p95
    %p97 = scmp.ne.s32.totalorder %s88, %s89
    %p98 = scmp.eq.s32.totalorder %s15, 0
    %p99 = por %p97, %p98
    %p100 = scmp.ne.s32.totalorder %s88, %s89
    %p101 = scmp.eq.s32.totalorder %s16, 1
    %p102 = por %p100, %p101
    %p104 = scmp.ne.s32.totalorder %s89, %s103
    %p105 = scmp.eq.s32.totalorder %s16, 0
    %p106 = por %p104, %p105
    %s107 = ssub.s32 %s10, %s17
    %p108 = scmp.eq.s32.totalorder %s107, 0
    %s110 = sadd.s32 %s109, 1
    %s111 = scalar_select %p108, %s109, %s110
    %p114 = pneg %p108
    %p115 = scmp.eq.s32.totalorder %s10, 1
    %p116 = por %p114, %p115
    %p117 = scmp.ne.s32.totalorder %s109, %s112
    %p118 = scmp.eq.s32.totalorder %s10, 0
    %p119 = por %p117, %p118
    %p120 = scmp.ne.s32.totalorder %s109, %s112
    %p121 = scmp.eq.s32.totalorder %s15, 1
    %p122 = por %p120, %p121
    %p123 = scmp.ne.s32.totalorder %s112, %s113
    %p124 = scmp.eq.s32.totalorder %s15, 0
    %p125 = por %p123, %p124
    %p126 = scmp.ne.s32.totalorder %s112, %s113
    %p127 = scmp.eq.s32.totalorder %s16, 1
    %p128 = por %p126, %p127
    %p130 = scmp.ne.s32.totalorder %s113, %s129
    %p131 = scmp.eq.s32.totalorder %s16, 0
    %p132 = por %p130, %p131
    %p133 = scmp.le.s32.totalorder 1, %s10
    %p134 = scmp.lt.s32.totalorder %s10, 3
    %p135 = pnand %p133, %p134
    %p136 = pneg %p135
    // Predicated region
    $region9: #{a_call__.44} parent=5 // pred_check
      _
    $region10: #{a_call__.44} parent=5 // pred_check_branch
      %138 = sbr.rel (%p135) target = $region12
    $region11: #{a_call__.44} parent=5 // pred_region
      %s139 = ssub.s32 %s10, 1
      // Predicated region
      $region13: #{a_call__.44} parent=11 // pred_check
        %p140 = pneg %p57
      $region14: #{a_call__.44} parent=11 // pred_check_branch
        %142 = sbr.rel (%p140) target = $region16
      $region15: #{a_call__.44} parent=11 // pred_region
        _
      $region16: #{a_call__.44} parent=11 // pred_fallthru
        _
      // Predicated region
      $region17: #{a_call__.44} parent=11 // pred_check
        %p143 = pneg %p78
      $region18: #{a_call__.44} parent=11 // pred_check_branch
        %145 = sbr.rel (%p143) target = $region20
      $region19: #{a_call__.44} parent=11 // pred_region
        _
      $region20: #{a_call__.44} parent=11 // pred_fallthru
        _
      // Predicated region
      $region21: #{a_call__.44} parent=11 // pred_check
        %p146 = pneg %p99
      $region22: #{a_call__.44} parent=11 // pred_check_branch
        %148 = sbr.rel (%p146) target = $region24
      $region23: #{a_call__.44} parent=11 // pred_region
        _
      $region24: #{a_call__.44} parent=11 // pred_fallthru
        _
    $region12: #{a_call__.44} parent=5 // pred_fallthru
      _
    %p149 = scmp.lt.s32.totalorder %s10, 2
    // Predicated region
    $region25: #{a_call__.44} parent=5 // pred_check
      %p150 = pneg %p149
    $region26: #{a_call__.44} parent=5 // pred_check_branch
      %152 = sbr.rel (%p150) target = $region28
    $region27: #{a_call__.44} parent=5 // pred_region
      // Predicated region
      $region29: #{a_call__.44} parent=27 // pred_check
        %p153 = pneg %p30
      $region30: #{a_call__.44} parent=27 // pred_check_branch
        %155 = sbr.rel (%p153) target = $region32
      $region31: #{a_call__.44} parent=27 // pred_region
        %s156 = smul.u32 32, %s10
        %p157 = scmp.lt.s32.totalorder %s156, 63
        %s158 = scalar_select %p157, %s156, 63
        %s159 = smul.addr %s158, 8
        %s160 = scalar_lea.vmem %s0, %s159
        %s161 = smul.u32 32, %s10
      $region32: #{a_call__.44} parent=27 // pred_fallthru
        _
    $region28: #{a_call__.44} parent=5 // pred_fallthru
      _
    %p162 = scmp.le.s32.totalorder 1, %s10
    %p163 = scmp.lt.s32.totalorder %s10, 3
    %p164 = pnand %p162, %p163
    %p165 = pneg %p164
    // Predicated region
    $region33: #{a_call__.44} parent=5 // pred_check
      _
    $region34: #{a_call__.44} parent=5 // pred_check_branch
      %167 = sbr.rel (%p164) target = $region36
    $region35: #{a_call__.44} parent=5 // pred_region
      %s168 = ssub.s32 %s10, 1
      %s169 = smul.u32 32, %s15
      %p170 = scmp.lt.s32.totalorder %s169, 63
      %s171 = scalar_select %p170, %s169, 63
      %s172 = smul.addr %s171, 8
      %s173 = scalar_lea.vmem %s0, %s172
      %p174 = pneg %p36
      %p175 = pneg %p33
      %p176 = pneg %p57
      %p177 = pneg %p54
      %p178 = pneg %p78
      %p179 = pneg %p75
      %p180 = pneg %p99
      %p181 = pneg %p96
      %p182 = pneg %p125
      %p183 = pneg %p122
      %s184 = smul.u32 32, %s15
      %p185 = scmp.lt.s32.totalorder %s184, 63
      %s186 = scalar_select %p185, %s184, 63
      %s187 = smul.addr %s186, 8
      %s188 = scalar_lea.vmem %s4, %s187
      %s189 = smul.u32 32, %s15
      %p190 = scmp.lt.s32.totalorder %s189, 63
      %s191 = scalar_select %p190, %s189, 63
      %s192 = smul.addr %s191, 8
      %s193 = scalar_lea.vmem %s0, %s192
      %s194 = smul.u32 32, %s15
      %s195 = smul.u32 32, %s15
      %p196 = scmp.lt.s32.totalorder %s195, 63
      %s197 = scalar_select %p196, %s195, 63
      %s198 = smul.addr %s197, 8
      %s199 = scalar_lea.vmem %s4, %s198
      %s200 = smul.u32 32, %s15
      %v201 = vld [vmem:[%s193] sm:$0xff]
      %v202 = vld [vmem:[%s193 + $0x8] sm:$0xff]
      %v203 = vld [vmem:[%s193 + $0x10] sm:$0xff]
      %v204 = vld [vmem:[%s193 + $0x18] sm:$0xff]
      %v205 = vld [vmem:[%s193 + $0x20] sm:$0xff]
      %v206 = vld [vmem:[%s193 + $0x28] sm:$0xff]
      %v207 = vld [vmem:[%s193 + $0x30] sm:$0xff]
      %v208 = vld [vmem:[%s193 + $0x38] sm:$0xff]
      %v209 = vld [vmem:[%s193 + $0x40] sm:$0xff]
      %v210 = vld [vmem:[%s193 + $0x48] sm:$0xff]
      %v211 = vld [vmem:[%s193 + $0x50] sm:$0xff]
      %v212 = vld [vmem:[%s193 + $0x58] sm:$0xff]
      %v213 = vld [vmem:[%s193 + $0x60] sm:$0xff]
      %v214 = vld [vmem:[%s193 + $0x68] sm:$0xff]
      %v215 = vld [vmem:[%s193 + $0x70] sm:$0xff]
      %v216 = vld [vmem:[%s193 + $0x78] sm:$0xff]
      %v217 = vld [vmem:[%s193 + $0x80] sm:$0xff]
      %v218 = vld [vmem:[%s193 + $0x88] sm:$0xff]
      %v219 = vld [vmem:[%s193 + $0x90] sm:$0xff]
      %v220 = vld [vmem:[%s193 + $0x98] sm:$0xff]
      %v221 = vld [vmem:[%s193 + $0xa0] sm:$0xff]
      %v222 = vld [vmem:[%s193 + $0xa8] sm:$0xff]
      %v223 = vld [vmem:[%s193 + $0xb0] sm:$0xff]
      %v224 = vld [vmem:[%s193 + $0xb8] sm:$0xff]
      %v225 = vld [vmem:[%s193 + $0xc0] sm:$0xff]
      %v226 = vld [vmem:[%s193 + $0xc8] sm:$0xff]
      %v227 = vld [vmem:[%s193 + $0xd0] sm:$0xff]
      %v228 = vld [vmem:[%s193 + $0xd8] sm:$0xff]
      %v229 = vld [vmem:[%s193 + $0xe0] sm:$0xff]
      %v230 = vld [vmem:[%s193 + $0xe8] sm:$0xff]
      %v231 = vld [vmem:[%s193 + $0xf0] sm:$0xff]
      %v232 = vld [vmem:[%s193 + $0xf8] sm:$0xff]
      %v233 = vmax.f32 %v201, 0.0
      %v234 = vmax.f32 %v202, 0.0
      %v235 = vmax.f32 %v203, 0.0
      %v236 = vmax.f32 %v204, 0.0
      %v237 = vmax.f32 %v205, 0.0
      %v238 = vmax.f32 %v206, 0.0
      %v239 = vmax.f32 %v207, 0.0
      %v240 = vmax.f32 %v208, 0.0
      %v241 = vmax.f32 %v209, 0.0
      %v242 = vmax.f32 %v210, 0.0
      %v243 = vmax.f32 %v211, 0.0
      %v244 = vmax.f32 %v212, 0.0
      %v245 = vmax.f32 %v213, 0.0
      %v246 = vmax.f32 %v214, 0.0
      %v247 = vmax.f32 %v215, 0.0
      %v248 = vmax.f32 %v216, 0.0
      %v249 = vmax.f32 %v217, 0.0
      %v250 = vmax.f32 %v218, 0.0
      %v251 = vmax.f32 %v219, 0.0
      %v252 = vmax.f32 %v220, 0.0
      %v253 = vmax.f32 %v221, 0.0
      %v254 = vmax.f32 %v222, 0.0
      %v255 = vmax.f32 %v223, 0.0
      %v256 = vmax.f32 %v224, 0.0
      %v257 = vmax.f32 %v225, 0.0
      %v258 = vmax.f32 %v226, 0.0
      %v259 = vmax.f32 %v227, 0.0
      %v260 = vmax.f32 %v228, 0.0
      %v261 = vmax.f32 %v229, 0.0
      %v262 = vmax.f32 %v230, 0.0
      %v263 = vmax.f32 %v231, 0.0
      %v264 = vmax.f32 %v232, 0.0
      %v265 = vld [vmem:[%s1] sm:$0xff]
      %v266 = vld [vmem:[%s1 + $0x8] sm:$0xf]
      %vm267 = vcmask 97280
      %v269 = vsel %vm267, %v233, 0
      %v272 = vsel %vm267, %v234, 0
      %v275 = vsel %vm267, %v235, 0
      %v278 = vsel %vm267, %v236, 0
      %v281 = vsel %vm267, %v237, 0
      %v284 = vsel %vm267, %v238, 0
      %v287 = vsel %vm267, %v239, 0
      %v290 = vsel %vm267, %v240, 0
      %v293 = vsel %vm267, %v241, 0
      %v296 = vsel %vm267, %v242, 0
      %v299 = vsel %vm267, %v243, 0
      %v302 = vsel %vm267, %v244, 0
      %v305 = vsel %vm267, %v245, 0
      %v308 = vsel %vm267, %v246, 0
      %v311 = vsel %vm267, %v247, 0
      %v314 = vsel %vm267, %v248, 0
      %v317 = vsel %vm267, %v249, 0
      %v320 = vsel %vm267, %v250, 0
      %v323 = vsel %vm267, %v251, 0
      %v326 = vsel %vm267, %v252, 0
      %v329 = vsel %vm267, %v253, 0
      %v332 = vsel %vm267, %v254, 0
      %v335 = vsel %vm267, %v255, 0
      %v338 = vsel %vm267, %v256, 0
      %v341 = vsel %vm267, %v257, 0
      %v344 = vsel %vm267, %v258, 0
      %v347 = vsel %vm267, %v259, 0
      %v350 = vsel %vm267, %v260, 0
      %v353 = vsel %vm267, %v261, 0
      %v356 = vsel %vm267, %v262, 0
      %v359 = vsel %vm267, %v263, 0
      %v362 = vsel %vm267, %v264, 0
      %vm364 = vcmask 1043456
      %v366 = vsel %vm364, %v266, 0
      %368 = vmatprep.subr.mxu0 0.0
      %369 = vmatpush1.msra.mxu0 %v265
      %370 = vmatprep.subr.mxu0 0.0
      %371 = vmatpush1.msra.mxu0 %v366
      %372 = vmatprep.subr.mxu0 0.0
      %373 = vmatpush1.msra.mxu0 0.0
      %374 = vmatprep.subr.mxu0 0.0
      %375 = vmatpush1.msra.mxu0 0.0
      %376 = vmatprep.subr.mxu0 0.0
      %377 = vmatpush1.msra.mxu0 0.0
      %378 = vmatprep.subr.mxu0 0.0
      %379 = vmatpush1.msra.mxu0 0.0
      %380 = vmatprep.subr.mxu0 0.0
      %381 = vmatpush1.msra.mxu0 0.0
      %382 = vmatprep.subr.mxu0 0.0
      %383 = vmatpush1.msra.mxu0 0.0
      %384 = vmatprep.subr.mxu0 0.0
      %385 = vmatpush1.msra.mxu0 0.0
      %386 = vmatprep.subr.mxu0 0.0
      %387 = vmatpush1.msra.mxu0 0.0
      %388 = vmatprep.subr.mxu0 0.0
      %389 = vmatpush1.msra.mxu0 0.0
      %390 = vmatprep.subr.mxu0 0.0
      %391 = vmatpush1.msra.mxu0 0.0
      %392 = vmatprep.subr.mxu0 0.0
      %393 = vmatpush1.msra.mxu0 0.0
      %394 = vmatprep.subr.mxu0 0.0
      %395 = vmatpush1.msra.mxu0 0.0
      %396 = vmatprep.subr.mxu0 0.0
      %397 = vmatpush1.msra.mxu0 0.0
      %398 = vmatprep.subr.mxu0 0.0
      %399 = vmatpush1.msra.mxu0 0.0
      %400 = vmatprep.subr.mxu0 0.0
      %401 = vmatpush1.msra.mxu0 0.0
      %402 = vmatprep.subr.mxu0 0.0
      %403 = vmatpush1.msra.mxu0 0.0
      %404 = vmatprep.subr.mxu0 0.0
      %405 = vmatpush1.msra.mxu0 0.0
      %406 = vmatprep.subr.mxu0 0.0
      %407 = vmatpush1.msra.mxu0 0.0
      %408 = vmatprep.subr.mxu0 0.0
      %409 = vmatpush1.msra.mxu0 0.0
      %410 = vmatprep.subr.mxu0 0.0
      %411 = vmatpush1.msra.mxu0 0.0
      %412 = vmatprep.subr.mxu0 0.0
      %413 = vmatpush1.msra.mxu0 0.0
      %414 = vmatprep.subr.mxu0 0.0
      %415 = vmatpush1.msra.mxu0 0.0
      %416 = vmatprep.subr.mxu0 0.0
      %417 = vmatpush1.msra.mxu0 0.0
      %418 = vmatprep.subr.mxu0 0.0
      %419 = vmatpush1.msra.mxu0 0.0
      %420 = vmatprep.subr.mxu0 0.0
      %421 = vmatpush1.msra.mxu0 0.0
      %422 = vmatprep.subr.mxu0 0.0
      %423 = vmatpush1.msra.mxu0 0.0
      %424 = vmatprep.subr.mxu0 0.0
      %425 = vmatpush1.msra.mxu0 0.0
      %426 = vmatprep.subr.mxu0 0.0
      %427 = vmatpush1.msra.mxu0 0.0
      %428 = vmatprep.subr.mxu0 0.0
      %429 = vmatpush1.msra.mxu0 0.0
      %430 = vmatprep.subr.mxu0 0.0
      %431 = vmatpush1.msra.mxu0 0.0
      %432 = vmatprep.mubr.f32.mxu0 0.0
      %433 = vmatmul.mubr.f32.gmra.mrb[0].mxu0 %v269
      %v434 = vpop.f32.mrb[0].mxu0
      %v435 = vadd.f32 0.0, %v434
      %v436 = vpop.f32.mrb[0].mxu0
      %437 = vmatprep.mubr.f32.mxu0 0.0
      %438 = vmatmul.mubr.f32.gmra.mrb[0].mxu0 %v272
      %v439 = vpop.f32.mrb[0].mxu0
      %v440 = vadd.f32 0.0, %v439
      %v441 = vpop.f32.mrb[0].mxu0
      %442 = vmatprep.mubr.f32.mxu0 0.0
      %443 = vmatmul.mubr.f32.gmra.mrb[0].mxu0 %v275
      %v444 = vpop.f32.mrb[0].mxu0
      %v445 = vadd.f32 0.0, %v444
      %v446 = vpop.f32.mrb[0].mxu0
      %447 = vmatprep.mubr.f32.mxu0 0.0
      %448 = vmatmul.mubr.f32.gmra.mrb[0].mxu0 %v278
      %v449 = vpop.f32.mrb[0].mxu0
      %v450 = vadd.f32 0.0, %v449
      %v451 = vpop.f32.mrb[0].mxu0
      %452 = vmatprep.mubr.f32.mxu0 0.0
      %453 = vmatmul.mubr.f32.gmra.mrb[0].mxu0 %v281
      %v454 = vpop.f32.mrb[0].mxu0
      %v455 = vadd.f32 0.0, %v454
      %v456 = vpop.f32.mrb[0].mxu0
      %457 = vmatprep.mubr.f32.mxu0 0.0
      %458 = vmatmul.mubr.f32.gmra.mrb[0].mxu0 %v284
      %v459 = vpop.f32.mrb[0].mxu0
      %v460 = vadd.f32 0.0, %v459
      %v461 = vpop.f32.mrb[0].mxu0
      %462 = vmatprep.mubr.f32.mxu0 0.0
      %463 = vmatmul.mubr.f32.gmra.mrb[0].mxu0 %v287
      %v464 = vpop.f32.mrb[0].mxu0
      %v465 = vadd.f32 0.0, %v464
      %v466 = vpop.f32.mrb[0].mxu0
      %467 = vmatprep.mubr.f32.mxu0 0.0
      %468 = vmatmul.mubr.f32.gmra.mrb[0].mxu0 %v290
      %v469 = vpop.f32.mrb[0].mxu0
      %v470 = vadd.f32 0.0, %v469
      %v471 = vpop.f32.mrb[0].mxu0
      %472 = vmatprep.mubr.f32.mxu0 0.0
      %473 = vmatmul.mubr.f32.gmra.mrb[0].mxu0 %v293
      %v474 = vpop.f32.mrb[0].mxu0
      %v475 = vadd.f32 0.0, %v474
      %v476 = vpop.f32.mrb[0].mxu0
      %477 = vmatprep.mubr.f32.mxu0 0.0
      %478 = vmatmul.mubr.f32.gmra.mrb[0].mxu0 %v296
      %v479 = vpop.f32.mrb[0].mxu0
      %v480 = vadd.f32 0.0, %v479
      %v481 = vpop.f32.mrb[0].mxu0
      %482 = vmatprep.mubr.f32.mxu0 0.0
      %483 = vmatmul.mubr.f32.gmra.mrb[0].mxu0 %v299
      %v484 = vpop.f32.mrb[0].mxu0
      %v485 = vadd.f32 0.0, %v484
      %v486 = vpop.f32.mrb[0].mxu0
      %487 = vmatprep.mubr.f32.mxu0 0.0
      %488 = vmatmul.mubr.f32.gmra.mrb[0].mxu0 %v302
      %v489 = vpop.f32.mrb[0].mxu0
      %v490 = vadd.f32 0.0, %v489
      %v491 = vpop.f32.mrb[0].mxu0
      %492 = vmatprep.mubr.f32.mxu0 0.0
      %493 = vmatmul.mubr.f32.gmra.mrb[0].mxu0 %v305
      %v494 = vpop.f32.mrb[0].mxu0
      %v495 = vadd.f32 0.0, %v494
      %v496 = vpop.f32.mrb[0].mxu0
      %497 = vmatprep.mubr.f32.mxu0 0.0
      %498 = vmatmul.mubr.f32.gmra.mrb[0].mxu0 %v308
      %v499 = vpop.f32.mrb[0].mxu0
      %v500 = vadd.f32 0.0, %v499
      %v501 = vpop.f32.mrb[0].mxu0
      %502 = vmatprep.mubr.f32.mxu0 0.0
      %503 = vmatmul.mubr.f32.gmra.mrb[0].mxu0 %v311
      %v504 = vpop.f32.mrb[0].mxu0
      %v505 = vadd.f32 0.0, %v504
      %v506 = vpop.f32.mrb[0].mxu0
      %507 = vmatprep.mubr.f32.mxu0 0.0
      %508 = vmatmul.mubr.f32.gmra.mrb[0].mxu0 %v314
      %v509 = vpop.f32.mrb[0].mxu0
      %v510 = vadd.f32 0.0, %v509
      %v511 = vpop.f32.mrb[0].mxu0
      %512 = vmatprep.mubr.f32.mxu0 0.0
      %513 = vmatmul.mubr.f32.gmra.mrb[0].mxu0 %v317
      %v514 = vpop.f32.mrb[0].mxu0
      %v515 = vadd.f32 0.0, %v514
      %v516 = vpop.f32.mrb[0].mxu0
      %517 = vmatprep.mubr.f32.mxu0 0.0
      %518 = vmatmul.mubr.f32.gmra.mrb[0].mxu0 %v320
      %v519 = vpop.f32.mrb[0].mxu0
      %v520 = vadd.f32 0.0, %v519
      %v521 = vpop.f32.mrb[0].mxu0
      %522 = vmatprep.mubr.f32.mxu0 0.0
      %523 = vmatmul.mubr.f32.gmra.mrb[0].mxu0 %v323
      %v524 = vpop.f32.mrb[0].mxu0
      %v525 = vadd.f32 0.0, %v524
      %v526 = vpop.f32.mrb[0].mxu0
      %527 = vmatprep.mubr.f32.mxu0 0.0
      %528 = vmatmul.mubr.f32.gmra.mrb[0].mxu0 %v326
      %v529 = vpop.f32.mrb[0].mxu0
      %v530 = vadd.f32 0.0, %v529
      %v531 = vpop.f32.mrb[0].mxu0
      %532 = vmatprep.mubr.f32.mxu0 0.0
      %533 = vmatmul.mubr.f32.gmra.mrb[0].mxu0 %v329
      %v534 = vpop.f32.mrb[0].mxu0
      %v535 = vadd.f32 0.0, %v534
      %v536 = vpop.f32.mrb[0].mxu0
      %537 = vmatprep.mubr.f32.mxu0 0.0
      %538 = vmatmul.mubr.f32.gmra.mrb[0].mxu0 %v332
      %v539 = vpop.f32.mrb[0].mxu0
      %v540 = vadd.f32 0.0, %v539
      %v541 = vpop.f32.mrb[0].mxu0
      %542 = vmatprep.mubr.f32.mxu0 0.0
      %543 = vmatmul.mubr.f32.gmra.mrb[0].mxu0 %v335
      %v544 = vpop.f32.mrb[0].mxu0
      %v545 = vadd.f32 0.0, %v544
      %v546 = vpop.f32.mrb[0].mxu0
      %547 = vmatprep.mubr.f32.mxu0 0.0
      %548 = vmatmul.mubr.f32.gmra.mrb[0].mxu0 %v338
      %v549 = vpop.f32.mrb[0].mxu0
      %v550 = vadd.f32 0.0, %v549
      %v551 = vpop.f32.mrb[0].mxu0
      %552 = vmatprep.mubr.f32.mxu0 0.0
      %553 = vmatmul.mubr.f32.gmra.mrb[0].mxu0 %v341
      %v554 = vpop.f32.mrb[0].mxu0
      %v555 = vadd.f32 0.0, %v554
      %v556 = vpop.f32.mrb[0].mxu0
      %557 = vmatprep.mubr.f32.mxu0 0.0
      %558 = vmatmul.mubr.f32.gmra.mrb[0].mxu0 %v344
      %v559 = vpop.f32.mrb[0].mxu0
      %v560 = vadd.f32 0.0, %v559
      %v561 = vpop.f32.mrb[0].mxu0
      %562 = vmatprep.mubr.f32.mxu0 0.0
      %563 = vmatmul.mubr.f32.gmra.mrb[0].mxu0 %v347
      %v564 = vpop.f32.mrb[0].mxu0
      %v565 = vadd.f32 0.0, %v564
      %v566 = vpop.f32.mrb[0].mxu0
      %567 = vmatprep.mubr.f32.mxu0 0.0
      %568 = vmatmul.mubr.f32.gmra.mrb[0].mxu0 %v350
      %v569 = vpop.f32.mrb[0].mxu0
      %v570 = vadd.f32 0.0, %v569
      %v571 = vpop.f32.mrb[0].mxu0
      %572 = vmatprep.mubr.f32.mxu0 0.0
      %573 = vmatmul.mubr.f32.gmra.mrb[0].mxu0 %v353
      %v574 = vpop.f32.mrb[0].mxu0
      %v575 = vadd.f32 0.0, %v574
      %v576 = vpop.f32.mrb[0].mxu0
      %577 = vmatprep.mubr.f32.mxu0 0.0
      %578 = vmatmul.mubr.f32.gmra.mrb[0].mxu0 %v356
      %v579 = vpop.f32.mrb[0].mxu0
      %v580 = vadd.f32 0.0, %v579
      %v581 = vpop.f32.mrb[0].mxu0
      %582 = vmatprep.mubr.f32.mxu0 0.0
      %583 = vmatmul.mubr.f32.gmra.mrb[0].mxu0 %v359
      %v584 = vpop.f32.mrb[0].mxu0
      %v585 = vadd.f32 0.0, %v584
      %v586 = vpop.f32.mrb[0].mxu0
      %587 = vmatprep.mubr.f32.mxu0 0.0
      %588 = vmatmul.mubr.f32.gmra.mrb[0].mxu0 %v362
      %v589 = vpop.f32.mrb[0].mxu0
      %v590 = vadd.f32 0.0, %v589
      %v591 = vpop.f32.mrb[0].mxu0
      %592 = vdwg.mxu0
      %v593 = vld [vmem:[%s2] sm:$0x1]
      %v595 = vlaneseq
      %v596 = vshrl.u32 %v595, 7
      %v597 = vsub.s32 0, %v596
      %v598 = vrot.slane %v593, %v597
      %v600 = vmul.f32 %v435, %v598
      %v601 = vmul.f32 %v440, %v598
      %v602 = vmul.f32 %v445, %v598
      %v603 = vmul.f32 %v450, %v598
      %v604 = vmul.f32 %v455, %v598
      %v605 = vmul.f32 %v460, %v598
      %v606 = vmul.f32 %v465, %v598
      %v607 = vmul.f32 %v470, %v598
      %v608 = vmul.f32 %v475, %v598
      %v609 = vmul.f32 %v480, %v598
      %v610 = vmul.f32 %v485, %v598
      %v611 = vmul.f32 %v490, %v598
      %v612 = vmul.f32 %v495, %v598
      %v613 = vmul.f32 %v500, %v598
      %v614 = vmul.f32 %v505, %v598
      %v615 = vmul.f32 %v510, %v598
      %v616 = vmul.f32 %v515, %v598
      %v617 = vmul.f32 %v520, %v598
      %v618 = vmul.f32 %v525, %v598
      %v619 = vmul.f32 %v530, %v598
      %v620 = vmul.f32 %v535, %v598
      %v621 = vmul.f32 %v540, %v598
      %v622 = vmul.f32 %v545, %v598
      %v623 = vmul.f32 %v550, %v598
      %v624 = vmul.f32 %v555, %v598
      %v625 = vmul.f32 %v560, %v598
      %v626 = vmul.f32 %v565, %v598
      %v627 = vmul.f32 %v570, %v598
      %v628 = vmul.f32 %v575, %v598
      %v629 = vmul.f32 %v580, %v598
      %v630 = vmul.f32 %v585, %v598
      %v631 = vmul.f32 %v590, %v598
      %v632 = vld [vmem:[%s3] sm:$0x1]
      %v634 = vlaneseq
      %v635 = vshrl.u32 %v634, 7
      %v636 = vsub.s32 0, %v635
      %v637 = vrot.slane %v632, %v636
      %v639 = vadd.f32 %v600, %v637
      %v640 = vadd.f32 %v601, %v637
      %v641 = vadd.f32 %v602, %v637
      %v642 = vadd.f32 %v603, %v637
      %v643 = vadd.f32 %v604, %v637
      %v644 = vadd.f32 %v605, %v637
      %v645 = vadd.f32 %v606, %v637
      %v646 = vadd.f32 %v607, %v637
      %v647 = vadd.f32 %v608, %v637
      %v648 = vadd.f32 %v609, %v637
      %v649 = vadd.f32 %v610, %v637
      %v650 = vadd.f32 %v611, %v637
      %v651 = vadd.f32 %v612, %v637
      %v652 = vadd.f32 %v613, %v637
      %v653 = vadd.f32 %v614, %v637
      %v654 = vadd.f32 %v615, %v637
      %v655 = vadd.f32 %v616, %v637
      %v656 = vadd.f32 %v617, %v637
      %v657 = vadd.f32 %v618, %v637
      %v658 = vadd.f32 %v619, %v637
      %v659 = vadd.f32 %v620, %v637
      %v660 = vadd.f32 %v621, %v637
      %v661 = vadd.f32 %v622, %v637
      %v662 = vadd.f32 %v623, %v637
      %v663 = vadd.f32 %v624, %v637
      %v664 = vadd.f32 %v625, %v637
      %v665 = vadd.f32 %v626, %v637
      %v666 = vadd.f32 %v627, %v637
      %v667 = vadd.f32 %v628, %v637
      %v668 = vadd.f32 %v629, %v637
      %v669 = vadd.f32 %v630, %v637
      %v670 = vadd.f32 %v631, %v637
      %vm671 = vcmask 64512
      %672 = vst.msk [vmem:[%s199] sm:$0xff] %vm671, %v639
      %673 = vst.msk [vmem:[%s199 + $0x8] sm:$0xff] %vm671, %v640
      %674 = vst.msk [vmem:[%s199 + $0x10] sm:$0xff] %vm671, %v641
      %675 = vst.msk [vmem:[%s199 + $0x18] sm:$0xff] %vm671, %v642
      %676 = vst.msk [vmem:[%s199 + $0x20] sm:$0xff] %vm671, %v643
      %677 = vst.msk [vmem:[%s199 + $0x28] sm:$0xff] %vm671, %v644
      %678 = vst.msk [vmem:[%s199 + $0x30] sm:$0xff] %vm671, %v645
      %679 = vst.msk [vmem:[%s199 + $0x38] sm:$0xff] %vm671, %v646
      %680 = vst.msk [vmem:[%s199 + $0x40] sm:$0xff] %vm671, %v647
      %681 = vst.msk [vmem:[%s199 + $0x48] sm:$0xff] %vm671, %v648
      %682 = vst.msk [vmem:[%s199 + $0x50] sm:$0xff] %vm671, %v649
      %683 = vst.msk [vmem:[%s199 + $0x58] sm:$0xff] %vm671, %v650
      %684 = vst.msk [vmem:[%s199 + $0x60] sm:$0xff] %vm671, %v651
      %685 = vst.msk [vmem:[%s199 + $0x68] sm:$0xff] %vm671, %v652
      %686 = vst.msk [vmem:[%s199 + $0x70] sm:$0xff] %vm671, %v653
      %687 = vst.msk [vmem:[%s199 + $0x78] sm:$0xff] %vm671, %v654
      %688 = vst.msk [vmem:[%s199 + $0x80] sm:$0xff] %vm671, %v655
      %689 = vst.msk [vmem:[%s199 + $0x88] sm:$0xff] %vm671, %v656
      %690 = vst.msk [vmem:[%s199 + $0x90] sm:$0xff] %vm671, %v657
      %691 = vst.msk [vmem:[%s199 + $0x98] sm:$0xff] %vm671, %v658
      %692 = vst.msk [vmem:[%s199 + $0xa0] sm:$0xff] %vm671, %v659
      %693 = vst.msk [vmem:[%s199 + $0xa8] sm:$0xff] %vm671, %v660
      %694 = vst.msk [vmem:[%s199 + $0xb0] sm:$0xff] %vm671, %v661
      %695 = vst.msk [vmem:[%s199 + $0xb8] sm:$0xff] %vm671, %v662
      %696 = vst.msk [vmem:[%s199 + $0xc0] sm:$0xff] %vm671, %v663
      %697 = vst.msk [vmem:[%s199 + $0xc8] sm:$0xff] %vm671, %v664
      %698 = vst.msk [vmem:[%s199 + $0xd0] sm:$0xff] %vm671, %v665
      %699 = vst.msk [vmem:[%s199 + $0xd8] sm:$0xff] %vm671, %v666
      %700 = vst.msk [vmem:[%s199 + $0xe0] sm:$0xff] %vm671, %v667
      %701 = vst.msk [vmem:[%s199 + $0xe8] sm:$0xff] %vm671, %v668
      %702 = vst.msk [vmem:[%s199 + $0xf0] sm:$0xff] %vm671, %v669
      %703 = vst.msk [vmem:[%s199 + $0xf8] sm:$0xff] %vm671, %v670
      %s704 = smul.u32 32, %s15
      %p705 = scmp.lt.s32.totalorder %s704, 63
      %s706 = scalar_select %p705, %s704, 63
      %s707 = smul.addr %s706, 8
      %s708 = scalar_lea.vmem %s4, %s707
      // Predicated region
      $region37: #{a_call__.44} parent=35 // pred_check
        %p709 = pneg %p122
      $region38: #{a_call__.44} parent=35 // pred_check_branch
        %711 = sbr.rel (%p709) target = $region40
      $region39: #{a_call__.44} parent=35 // pred_region
        %s712 = smul.u32 32, %s15
      $region40: #{a_call__.44} parent=35 // pred_fallthru
        _
    $region36: #{a_call__.44} parent=5 // pred_fallthru
      _
    %p713 = scmp.le.s32.totalorder 2, %s10
    // Predicated region
    $region41: #{a_call__.44} parent=5 // pred_check
      %p714 = pneg %p713
    $region42: #{a_call__.44} parent=5 // pred_check_branch
      %716 = sbr.rel (%p714) target = $region44
    $region43: #{a_call__.44} parent=5 // pred_region
      %s717 = ssub.s32 %s10, 2
      // Predicated region
      $region45: #{a_call__.44} parent=43 // pred_check
        %p718 = pneg %p128
      $region46: #{a_call__.44} parent=43 // pred_check_branch
        %720 = sbr.rel (%p718) target = $region48
      $region47: #{a_call__.44} parent=43 // pred_region
        %s721 = smul.u32 32, %s16
        %p722 = scmp.lt.s32.totalorder %s721, 63
        %s723 = scalar_select %p722, %s721, 63
        %s724 = smul.addr %s723, 8
        %s725 = scalar_lea.vmem %s4, %s724
      $region48: #{a_call__.44} parent=43 // pred_fallthru
        _
    $region44: #{a_call__.44} parent=5 // pred_fallthru
      _
  $region6: #{a_call__.44} parent=0 // loop_footer
    %s14 = sadd.s32 1, %s10
  $region7: #{a_call__.44} parent=0 // loop_footer_branch
    %9 = sbr.rel target = $region3
  $region8: #{a_call__.44} parent=0 // loop_exit
    _

// kernel: a_call__.46
$region0: #{a_call__.46}
  #allocation0 [shape = 'u32[]', space=smem, size = 0x4, offset = 0x4, fixed_abs, tag = 'smem constant byte address 0x4 - core index']
  #allocation1 [shape = 'u32[144,128]{1,0:T(1,128)}', space=vmem, size = 0x12000, scoped, tag = 'internal scratch']
  %s0 = inlined_call_operand.vmem [shape: f32[2,18,18,8], index: 0, kind: input, shape index: {}]
  %s1 = inlined_call_operand.vmem [shape: f32[2,16,16,8], index: 1, kind: output, shape index: {}]
  %s2 = sld [smem:[#allocation0]]
  $region37: #{a_call__.46} parent=0
    _
  %s4 = ssub.s32 1, %s2
  %s5 = scalar_select 0, %s4, %s2
  loop: start=0, step=1, limit=4
  $region2: #{a_call__.46} parent=0 // loop_pre_header
    _
  $region3: #{a_call__.46} parent=0 // loop_header
    %s7 = sphi 0, %s11
    %p8 = scmp.ge.s32.totalorder %s7, 4
    %s17 = sphi 0, %s19
    %s20 = sphi 0, %s17
    %s21 = sphi 0, %s20
    %s37 = sphi 0, %s21
    %s43 = sphi 0, %s45
    %s46 = sphi 0, %s43
    %s47 = sphi 0, %s46
    %s63 = sphi 0, %s47
  $region4: #{a_call__.46} parent=0 // loop_header_branch
    %10 = sbr.rel (%p8) target = $region8
  $region5: #{a_call__.46} parent=0 // loop_body
    %s12 = ssub.s32 %s7, 1
    %s13 = ssub.s32 %s7, 2
    %s14 = sadd.s32 %s7, 1
    %s15 = ssub.s32 %s7, %s14
    %p16 = scmp.eq.s32.totalorder %s15, 0
    %s18 = sadd.s32 %s17, 1
    %s19 = scalar_select %p16, %s17, %s18
    %p22 = pneg %p16
    %p23 = scmp.eq.s32.totalorder %s7, 1
    %p24 = por %p22, %p23
    %p25 = scmp.ne.s32.totalorder %s17, %s20
    %p26 = scmp.eq.s32.totalorder %s7, 0
    %p27 = por %p25, %p26
    %p28 = scmp.ne.s32.totalorder %s17, %s20
    %p29 = scmp.eq.s32.totalorder %s12, 1
    %p30 = por %p28, %p29
    %p31 = scmp.ne.s32.totalorder %s20, %s21
    %p32 = scmp.eq.s32.totalorder %s12, 0
    %p33 = por %p31, %p32
    %p34 = scmp.ne.s32.totalorder %s20, %s21
    %p35 = scmp.eq.s32.totalorder %s13, 1
    %p36 = por %p34, %p35
    %p38 = scmp.ne.s32.totalorder %s21, %s37
    %p39 = scmp.eq.s32.totalorder %s13, 0
    %p40 = por %p38, %p39
    %s41 = ssub.s32 %s7, %s14
    %p42 = scmp.eq.s32.totalorder %s41, 0
    %s44 = sadd.s32 %s43, 1
    %s45 = scalar_select %p42, %s43, %s44
    %p48 = pneg %p42
    %p49 = scmp.eq.s32.totalorder %s7, 1
    %p50 = por %p48, %p49
    %p51 = scmp.ne.s32.totalorder %s43, %s46
    %p52 = scmp.eq.s32.totalorder %s7, 0
    %p53 = por %p51, %p52
    %p54 = scmp.ne.s32.totalorder %s43, %s46
    %p55 = scmp.eq.s32.totalorder %s12, 1
    %p56 = por %p54, %p55
    %p57 = scmp.ne.s32.totalorder %s46, %s47
    %p58 = scmp.eq.s32.totalorder %s12, 0
    %p59 = por %p57, %p58
    %p60 = scmp.ne.s32.totalorder %s46, %s47
    %p61 = scmp.eq.s32.totalorder %s13, 1
    %p62 = por %p60, %p61
    %p64 = scmp.ne.s32.totalorder %s47, %s63
    %p65 = scmp.eq.s32.totalorder %s13, 0
    %p66 = por %p64, %p65
    %p67 = scmp.le.s32.totalorder 1, %s7
    %p68 = scmp.lt.s32.totalorder %s7, 3
    %p69 = pnand %p67, %p68
    %p70 = pneg %p69
    // Predicated region
    $region9: #{a_call__.46} parent=5 // pred_check
      _
    $region10: #{a_call__.46} parent=5 // pred_check_branch
      %72 = sbr.rel (%p69) target = $region12
    $region11: #{a_call__.46} parent=5 // pred_region
      %s73 = ssub.s32 %s7, 1
    $region12: #{a_call__.46} parent=5 // pred_fallthru
      _
    %p74 = scmp.lt.s32.totalorder %s7, 2
    // Predicated region
    $region13: #{a_call__.46} parent=5 // pred_check
      %p75 = pneg %p74
    $region14: #{a_call__.46} parent=5 // pred_check_branch
      %77 = sbr.rel (%p75) target = $region16
    $region15: #{a_call__.46} parent=5 // pred_region
      // Predicated region
      $region17: #{a_call__.46} parent=15 // pred_check
        %p78 = pneg %p27
      $region18: #{a_call__.46} parent=15 // pred_check_branch
        %80 = sbr.rel (%p78) target = $region20
      $region19: #{a_call__.46} parent=15 // pred_region
        %p81 = scmp.lt.s32.totalorder %s7, 1
        %s82 = scalar_select %p81, %s7, 1
        %s83 = smul.addr %s82, 54
        %s84 = smul.addr %s83, 8
        %s85 = scalar_lea.vmem %s0, %s84
      $region20: #{a_call__.46} parent=15 // pred_fallthru
        _
    $region16: #{a_call__.46} parent=5 // pred_fallthru
      _
    %p86 = scmp.le.s32.totalorder 1, %s7
    %p87 = scmp.lt.s32.totalorder %s7, 3
    %p88 = pnand %p86, %p87
    %p89 = pneg %p88
    // Predicated region
    $region21: #{a_call__.46} parent=5 // pred_check
      _
    $region22: #{a_call__.46} parent=5 // pred_check_branch
      %91 = sbr.rel (%p88) target = $region24
    $region23: #{a_call__.46} parent=5 // pred_region
      %s92 = ssub.s32 %s7, 1
      %p93 = scmp.lt.s32.totalorder %s12, 1
      %s94 = scalar_select %p93, %s12, 1
      %s95 = smul.addr %s94, 54
      %s96 = smul.addr %s95, 8
      %s97 = scalar_lea.vmem %s0, %s96
      %p98 = pneg %p33
      %p99 = pneg %p30
      %p100 = pneg %p59
      %p101 = pneg %p56
      %p102 = scmp.lt.s32.totalorder %s12, 1
      %s103 = scalar_select %p102, %s12, 1
      %s104 = smul.addr %s103, 32
      %s105 = smul.addr %s104, 8
      %s106 = scalar_lea.vmem %s1, %s105
      %p107 = scmp.lt.s32.totalorder %s12, 1
      %s108 = scalar_select %p107, %s12, 1
      %s109 = smul.addr %s108, 54
      %s110 = smul.addr %s109, 8
      %s111 = scalar_lea.vmem %s0, %s110
      %p112 = scmp.lt.s32.totalorder %s12, 1
      %s113 = scalar_select %p112, %s12, 1
      %s114 = smul.addr %s113, 32
      %s115 = smul.addr %s114, 8
      %s116 = scalar_lea.vmem %s1, %s115
      %v117 = vld [vmem:[%s111] sm:$0xff]
      %v118 = vld [vmem:[%s111 + $0x8] sm:$0xff]
      %v119 = vld [vmem:[%s111 + $0x10] sm:$0x3]
      %v120 = vld [vmem:[%s111 + $0x18] sm:$0xff]
      %v121 = vld [vmem:[%s111 + $0x20] sm:$0xff]
      %v122 = vld [vmem:[%s111 + $0x28] sm:$0x3]
      %v123 = vld [vmem:[%s111 + $0x30] sm:$0xff]
      %v124 = vld [vmem:[%s111 + $0x38] sm:$0xff]
      %v125 = vld [vmem:[%s111 + $0x40] sm:$0x3]
      %v126 = vld [vmem:[%s111 + $0x48] sm:$0xff]
      %v127 = vld [vmem:[%s111 + $0x50] sm:$0xff]
      %v128 = vld [vmem:[%s111 + $0x58] sm:$0x3]
      %v129 = vld [vmem:[%s111 + $0x60] sm:$0xff]
      %v130 = vld [vmem:[%s111 + $0x68] sm:$0xff]
      %v131 = vld [vmem:[%s111 + $0x70] sm:$0x3]
      %v132 = vld [vmem:[%s111 + $0x78] sm:$0xff]
      %v133 = vld [vmem:[%s111 + $0x80] sm:$0xff]
      %v134 = vld [vmem:[%s111 + $0x88] sm:$0x3]
      %v135 = vld [vmem:[%s111 + $0x90] sm:$0xff]
      %v136 = vld [vmem:[%s111 + $0x98] sm:$0xff]
      %v137 = vld [vmem:[%s111 + $0xa0] sm:$0x3]
      %v138 = vld [vmem:[%s111 + $0xa8] sm:$0xff]
      %v139 = vld [vmem:[%s111 + $0xb0] sm:$0xff]
      %v140 = vld [vmem:[%s111 + $0xb8] sm:$0x3]
      %v141 = vld [vmem:[%s111 + $0xc0] sm:$0xff]
      %v142 = vld [vmem:[%s111 + $0xc8] sm:$0xff]
      %v143 = vld [vmem:[%s111 + $0xd0] sm:$0x3]
      %v144 = vld [vmem:[%s111 + $0xd8] sm:$0xff]
      %v145 = vld [vmem:[%s111 + $0xe0] sm:$0xff]
      %v146 = vld [vmem:[%s111 + $0xe8] sm:$0x3]
      %v147 = vld [vmem:[%s111 + $0xf0] sm:$0xff]
      %v148 = vld [vmem:[%s111 + $0xf8] sm:$0xff]
      %v149 = vld [vmem:[%s111 + $0x100] sm:$0x3]
      %v150 = vld [vmem:[%s111 + $0x108] sm:$0xff]
      %v151 = vld [vmem:[%s111 + $0x110] sm:$0xff]
      %v152 = vld [vmem:[%s111 + $0x118] sm:$0x3]
      %v153 = vld [vmem:[%s111 + $0x120] sm:$0xff]
      %v154 = vld [vmem:[%s111 + $0x128] sm:$0xff]
      %v155 = vld [vmem:[%s111 + $0x130] sm:$0x3]
      %v156 = vld [vmem:[%s111 + $0x138] sm:$0xff]
      %v157 = vld [vmem:[%s111 + $0x140] sm:$0xff]
      %v158 = vld [vmem:[%s111 + $0x148] sm:$0x3]
      %v159 = vld [vmem:[%s111 + $0x150] sm:$0xff]
      %v160 = vld [vmem:[%s111 + $0x158] sm:$0xff]
      %v161 = vld [vmem:[%s111 + $0x160] sm:$0x3]
      %v162 = vld [vmem:[%s111 + $0x168] sm:$0xff]
      %v163 = vld [vmem:[%s111 + $0x170] sm:$0xff]
      %v164 = vld [vmem:[%s111 + $0x178] sm:$0x3]
      %v165 = vld [vmem:[%s111 + $0x180] sm:$0xff]
      %v166 = vld [vmem:[%s111 + $0x188] sm:$0xff]
      %v167 = vld [vmem:[%s111 + $0x190] sm:$0x3]
      %v168 = vld [vmem:[%s111 + $0x198] sm:$0xff]
      %v169 = vld [vmem:[%s111 + $0x1a0] sm:$0xff]
      %v170 = vld [vmem:[%s111 + $0x1a8] sm:$0x3]
      %vm219 = vcmask 1046528
      %v220 = vrot.slane %v117, 1
      %v221 = vrot.slane %v118, 1
      %v222 = vsel %vm219, %v220, %v221
      %v223 = vrot.slane %v119, 1
      %v224 = vsel %vm219, %v221, %v223
      %v225 = vrot.slane %v120, 1
      %v226 = vrot.slane %v121, 1
      %v227 = vsel %vm219, %v225, %v226
      %v228 = vrot.slane %v122, 1
      %v229 = vsel %vm219, %v226, %v228
      %v230 = vrot.slane %v123, 1
      %v231 = vrot.slane %v124, 1
      %v232 = vsel %vm219, %v230, %v231
      %v233 = vrot.slane %v125, 1
      %v234 = vsel %vm219, %v231, %v233
      %v235 = vrot.slane %v126, 1
      %v236 = vrot.slane %v127, 1
      %v237 = vsel %vm219, %v235, %v236
      %v238 = vrot.slane %v128, 1
      %v239 = vsel %vm219, %v236, %v238
      %v240 = vrot.slane %v129, 1
      %v241 = vrot.slane %v130, 1
      %v242 = vsel %vm219, %v240, %v241
      %v243 = vrot.slane %v131, 1
      %v244 = vsel %vm219, %v241, %v243
      %v245 = vrot.slane %v132, 1
      %v246 = vrot.slane %v133, 1
      %v247 = vsel %vm219, %v245, %v246
      %v248 = vrot.slane %v134, 1
      %v249 = vsel %vm219, %v246, %v248
      %v250 = vrot.slane %v135, 1
      %v251 = vrot.slane %v136, 1
      %v252 = vsel %vm219, %v250, %v251
      %v253 = vrot.slane %v137, 1
      %v254 = vsel %vm219, %v251, %v253
      %v255 = vrot.slane %v138, 1
      %v256 = vrot.slane %v139, 1
      %v257 = vsel %vm219, %v255, %v256
      %v258 = vrot.slane %v140, 1
      %v259 = vsel %vm219, %v256, %v258
      %v260 = vrot.slane %v141, 1
      %v261 = vrot.slane %v142, 1
      %v262 = vsel %vm219, %v260, %v261
      %v263 = vrot.slane %v143, 1
      %v264 = vsel %vm219, %v261, %v263
      %v265 = vrot.slane %v144, 1
      %v266 = vrot.slane %v145, 1
      %v267 = vsel %vm219, %v265, %v266
      %v268 = vrot.slane %v146, 1
      %v269 = vsel %vm219, %v266, %v268
      %v270 = vrot.slane %v147, 1
      %v271 = vrot.slane %v148, 1
      %v272 = vsel %vm219, %v270, %v271
      %v273 = vrot.slane %v149, 1
      %v274 = vsel %vm219, %v271, %v273
      %v275 = vrot.slane %v150, 1
      %v276 = vrot.slane %v151, 1
      %v277 = vsel %vm219, %v275, %v276
      %v278 = vrot.slane %v152, 1
      %v279 = vsel %vm219, %v276, %v278
      %v280 = vrot.slane %v153, 1
      %v281 = vrot.slane %v154, 1
      %v282 = vsel %vm219, %v280, %v281
      %v283 = vrot.slane %v155, 1
      %v284 = vsel %vm219, %v281, %v283
      %v285 = vrot.slane %v156, 1
      %v286 = vrot.slane %v157, 1
      %v287 = vsel %vm219, %v285, %v286
      %v288 = vrot.slane %v158, 1
      %v289 = vsel %vm219, %v286, %v288
      %v290 = vrot.slane %v159, 1
      %v291 = vrot.slane %v160, 1
      %v292 = vsel %vm219, %v290, %v291
      %v293 = vrot.slane %v161, 1
      %v294 = vsel %vm219, %v291, %v293
      %v295 = vrot.slane %v162, 1
      %v296 = vrot.slane %v163, 1
      %v297 = vsel %vm219, %v295, %v296
      %v298 = vrot.slane %v164, 1
      %v299 = vsel %vm219, %v296, %v298
      %v332 = vmax.f32 %v117, %v222
      %v333 = vmax.f32 %v118, %v224
      %v334 = vmax.f32 %v120, %v227
      %v335 = vmax.f32 %v121, %v229
      %v336 = vmax.f32 %v123, %v232
      %v337 = vmax.f32 %v124, %v234
      %v338 = vmax.f32 %v126, %v237
      %v339 = vmax.f32 %v127, %v239
      %v340 = vmax.f32 %v129, %v242
      %v341 = vmax.f32 %v130, %v244
      %v342 = vmax.f32 %v132, %v247
      %v343 = vmax.f32 %v133, %v249
      %v344 = vmax.f32 %v135, %v252
      %v345 = vmax.f32 %v136, %v254
      %v346 = vmax.f32 %v138, %v257
      %v347 = vmax.f32 %v139, %v259
      %v348 = vmax.f32 %v141, %v262
      %v349 = vmax.f32 %v142, %v264
      %v350 = vmax.f32 %v144, %v267
      %v351 = vmax.f32 %v145, %v269
      %v352 = vmax.f32 %v147, %v272
      %v353 = vmax.f32 %v148, %v274
      %v354 = vmax.f32 %v150, %v277
      %v355 = vmax.f32 %v151, %v279
      %v356 = vmax.f32 %v153, %v282
      %v357 = vmax.f32 %v154, %v284
      %v358 = vmax.f32 %v156, %v287
      %v359 = vmax.f32 %v157, %v289
      %v360 = vmax.f32 %v159, %v292
      %v361 = vmax.f32 %v160, %v294
      %v362 = vmax.f32 %v162, %v297
      %v363 = vmax.f32 %v163, %v299
      %vm364 = vcmask 1045504
      %v365 = vrot.slane %v117, 2
      %v366 = vrot.slane %v118, 2
      %v367 = vsel %vm364, %v365, %v366
      %v368 = vrot.slane %v119, 2
      %v369 = vsel %vm364, %v366, %v368
      %v370 = vrot.slane %v120, 2
      %v371 = vrot.slane %v121, 2
      %v372 = vsel %vm364, %v370, %v371
      %v373 = vrot.slane %v122, 2
      %v374 = vsel %vm364, %v371, %v373
      %v375 = vrot.slane %v123, 2
      %v376 = vrot.slane %v124, 2
      %v377 = vsel %vm364, %v375, %v376
      %v378 = vrot.slane %v125, 2
      %v379 = vsel %vm364, %v376, %v378
      %v380 = vrot.slane %v126, 2
      %v381 = vrot.slane %v127, 2
      %v382 = vsel %vm364, %v380, %v381
      %v383 = vrot.slane %v128, 2
      %v384 = vsel %vm364, %v381, %v383
      %v385 = vrot.slane %v129, 2
      %v386 = vrot.slane %v130, 2
      %v387 = vsel %vm364, %v385, %v386
      %v388 = vrot.slane %v131, 2
      %v389 = vsel %vm364, %v386, %v388
      %v390 = vrot.slane %v132, 2
      %v391 = vrot.slane %v133, 2
      %v392 = vsel %vm364, %v390, %v391
      %v393 = vrot.slane %v134, 2
      %v394 = vsel %vm364, %v391, %v393
      %v395 = vrot.slane %v135, 2
      %v396 = vrot.slane %v136, 2
      %v397 = vsel %vm364, %v395, %v396
      %v398 = vrot.slane %v137, 2
      %v399 = vsel %vm364, %v396, %v398
      %v400 = vrot.slane %v138, 2
      %v401 = vrot.slane %v139, 2
      %v402 = vsel %vm364, %v400, %v401
      %v403 = vrot.slane %v140, 2
      %v404 = vsel %vm364, %v401, %v403
      %v405 = vrot.slane %v141, 2
      %v406 = vrot.slane %v142, 2
      %v407 = vsel %vm364, %v405, %v406
      %v408 = vrot.slane %v143, 2
      %v409 = vsel %vm364, %v406, %v408
      %v410 = vrot.slane %v144, 2
      %v411 = vrot.slane %v145, 2
      %v412 = vsel %vm364, %v410, %v411
      %v413 = vrot.slane %v146, 2
      %v414 = vsel %vm364, %v411, %v413
      %v415 = vrot.slane %v147, 2
      %v416 = vrot.slane %v148, 2
      %v417 = vsel %vm364, %v415, %v416
      %v418 = vrot.slane %v149, 2
      %v419 = vsel %vm364, %v416, %v418
      %v420 = vrot.slane %v150, 2
      %v421 = vrot.slane %v151, 2
      %v422 = vsel %vm364, %v420, %v421
      %v423 = vrot.slane %v152, 2
      %v424 = vsel %vm364, %v421, %v423
      %v425 = vrot.slane %v153, 2
      %v426 = vrot.slane %v154, 2
      %v427 = vsel %vm364, %v425, %v426
      %v428 = vrot.slane %v155, 2
      %v429 = vsel %vm364, %v426, %v428
      %v430 = vrot.slane %v156, 2
      %v431 = vrot.slane %v157, 2
      %v432 = vsel %vm364, %v430, %v431
      %v433 = vrot.slane %v158, 2
      %v434 = vsel %vm364, %v431, %v433
      %v435 = vrot.slane %v159, 2
      %v436 = vrot.slane %v160, 2
      %v437 = vsel %vm364, %v435, %v436
      %v438 = vrot.slane %v161, 2
      %v439 = vsel %vm364, %v436, %v438
      %v440 = vrot.slane %v162, 2
      %v441 = vrot.slane %v163, 2
      %v442 = vsel %vm364, %v440, %v441
      %v443 = vrot.slane %v164, 2
      %v444 = vsel %vm364, %v441, %v443
      %v477 = vmax.f32 %v332, %v367
      %v478 = vmax.f32 %v333, %v369
      %v479 = vmax.f32 %v334, %v372
      %v480 = vmax.f32 %v335, %v374
      %v481 = vmax.f32 %v336, %v377
      %v482 = vmax.f32 %v337, %v379
      %v483 = vmax.f32 %v338, %v382
      %v484 = vmax.f32 %v339, %v384
      %v485 = vmax.f32 %v340, %v387
      %v486 = vmax.f32 %v341, %v389
      %v487 = vmax.f32 %v342, %v392
      %v488 = vmax.f32 %v343, %v394
      %v489 = vmax.f32 %v344, %v397
      %v490 = vmax.f32 %v345, %v399
      %v491 = vmax.f32 %v346, %v402
      %v492 = vmax.f32 %v347, %v404
      %v493 = vmax.f32 %v348, %v407
      %v494 = vmax.f32 %v349, %v409
      %v495 = vmax.f32 %v350, %v412
      %v496 = vmax.f32 %v351, %v414
      %v497 = vmax.f32 %v352, %v417
      %v498 = vmax.f32 %v353, %v419
      %v499 = vmax.f32 %v354, %v422
      %v500 = vmax.f32 %v355, %v424
      %v501 = vmax.f32 %v356, %v427
      %v502 = vmax.f32 %v357, %v429
      %v503 = vmax.f32 %v358, %v432
      %v504 = vmax.f32 %v359, %v434
      %v505 = vmax.f32 %v360, %v437
      %v506 = vmax.f32 %v361, %v439
      %v507 = vmax.f32 %v362, %v442
      %v508 = vmax.f32 %v363, %v444
      %v509 = vmax.f32 %v477, %v120
      %v510 = vmax.f32 %v478, %v121
      %v511 = vmax.f32 %v479, %v123
      %v512 = vmax.f32 %v480, %v124
      %v513 = vmax.f32 %v481, %v126
      %v514 = vmax.f32 %v482, %v127
      %v515 = vmax.f32 %v483, %v129
      %v516 = vmax.f32 %v484, %v130
      %v517 = vmax.f32 %v485, %v132
      %v518 = vmax.f32 %v486, %v133
      %v519 = vmax.f32 %v487, %v135
      %v520 = vmax.f32 %v488, %v136
      %v521 = vmax.f32 %v489, %v138
      %v522 = vmax.f32 %v490, %v139
      %v523 = vmax.f32 %v491, %v141
      %v524 = vmax.f32 %v492, %v142
      %v525 = vmax.f32 %v493, %v144
      %v526 = vmax.f32 %v494, %v145
      %v527 = vmax.f32 %v495, %v147
      %v528 = vmax.f32 %v496, %v148
      %v529 = vmax.f32 %v497, %v150
      %v530 = vmax.f32 %v498, %v151
      %v531 = vmax.f32 %v499, %v153
      %v532 = vmax.f32 %v500, %v154
      %v533 = vmax.f32 %v501, %v156
      %v534 = vmax.f32 %v502, %v157
      %v535 = vmax.f32 %v503, %v159
      %v536 = vmax.f32 %v504, %v160
      %v537 = vmax.f32 %v505, %v162
      %v538 = vmax.f32 %v506, %v163
      %v539 = vmax.f32 %v507, %v165
      %v540 = vmax.f32 %v508, %v166
      %v544 = vrot.slane %v165, 1
      %v545 = vrot.slane %v166, 1
      %v546 = vsel %vm219, %v544, %v545
      %v547 = vrot.slane %v167, 1
      %v548 = vsel %vm219, %v545, %v547
      %v551 = vmax.f32 %v509, %v227
      %v552 = vmax.f32 %v510, %v229
      %v553 = vmax.f32 %v511, %v232
      %v554 = vmax.f32 %v512, %v234
      %v555 = vmax.f32 %v513, %v237
      %v556 = vmax.f32 %v514, %v239
      %v557 = vmax.f32 %v515, %v242
      %v558 = vmax.f32 %v516, %v244
      %v559 = vmax.f32 %v517, %v247
      %v560 = vmax.f32 %v518, %v249
      %v561 = vmax.f32 %v519, %v252
      %v562 = vmax.f32 %v520, %v254
      %v563 = vmax.f32 %v521, %v257
      %v564 = vmax.f32 %v522, %v259
      %v565 = vmax.f32 %v523, %v262
      %v566 = vmax.f32 %v524, %v264
      %v567 = vmax.f32 %v525, %v267
      %v568 = vmax.f32 %v526, %v269
      %v569 = vmax.f32 %v527, %v272
      %v570 = vmax.f32 %v528, %v274
      %v571 = vmax.f32 %v529, %v277
      %v572 = vmax.f32 %v530, %v279
      %v573 = vmax.f32 %v531, %v282
      %v574 = vmax.f32 %v532, %v284
      %v575 = vmax.f32 %v533, %v287
      %v576 = vmax.f32 %v534, %v289
      %v577 = vmax.f32 %v535, %v292
      %v578 = vmax.f32 %v536, %v294
      %v579 = vmax.f32 %v537, %v297
      %v580 = vmax.f32 %v538, %v299
      %v581 = vmax.f32 %v539, %v546
      %v582 = vmax.f32 %v540, %v548
      %v583 = vrot.slane %v165, 2
      %v584 = vrot.slane %v166, 2
      %v585 = vsel %vm364, %v583, %v584
      %v586 = vrot.slane %v167, 2
      %v587 = vsel %vm364, %v584, %v586
      %v590 = vmax.f32 %v551, %v372
      %v591 = vmax.f32 %v552, %v374
      %v592 = vmax.f32 %v553, %v377
      %v593 = vmax.f32 %v554, %v379
      %v594 = vmax.f32 %v555, %v382
      %v595 = vmax.f32 %v556, %v384
      %v596 = vmax.f32 %v557, %v387
      %v597 = vmax.f32 %v558, %v389
      %v598 = vmax.f32 %v559, %v392
      %v599 = vmax.f32 %v560, %v394
      %v600 = vmax.f32 %v561, %v397
      %v601 = vmax.f32 %v562, %v399
      %v602 = vmax.f32 %v563, %v402
      %v603 = vmax.f32 %v564, %v404
      %v604 = vmax.f32 %v565, %v407
      %v605 = vmax.f32 %v566, %v409
      %v606 = vmax.f32 %v567, %v412
      %v607 = vmax.f32 %v568, %v414
      %v608 = vmax.f32 %v569, %v417
      %v609 = vmax.f32 %v570, %v419
      %v610 = vmax.f32 %v571, %v422
      %v611 = vmax.f32 %v572, %v424
      %v612 = vmax.f32 %v573, %v427
      %v613 = vmax.f32 %v574, %v429
      %v614 = vmax.f32 %v575, %v432
      %v615 = vmax.f32 %v576, %v434
      %v616 = vmax.f32 %v577, %v437
      %v617 = vmax.f32 %v578, %v439
      %v618 = vmax.f32 %v579, %v442
      %v619 = vmax.f32 %v580, %v444
      %v620 = vmax.f32 %v581, %v585
      %v621 = vmax.f32 %v582, %v587
      %v622 = vmax.f32 %v590, %v123
      %v623 = vmax.f32 %v591, %v124
      %v624 = vmax.f32 %v592, %v126
      %v625 = vmax.f32 %v593, %v127
      %v626 = vmax.f32 %v594, %v129
      %v627 = vmax.f32 %v595, %v130
      %v628 = vmax.f32 %v596, %v132
      %v629 = vmax.f32 %v597, %v133
      %v630 = vmax.f32 %v598, %v135
      %v631 = vmax.f32 %v599, %v136
      %v632 = vmax.f32 %v600, %v138
      %v633 = vmax.f32 %v601, %v139
      %v634 = vmax.f32 %v602, %v141
      %v635 = vmax.f32 %v603, %v142
      %v636 = vmax.f32 %v604, %v144
      %v637 = vmax.f32 %v605, %v145
      %v638 = vmax.f32 %v606, %v147
      %v639 = vmax.f32 %v607, %v148
      %v640 = vmax.f32 %v608, %v150
      %v641 = vmax.f32 %v609, %v151
      %v642 = vmax.f32 %v610, %v153
      %v643 = vmax.f32 %v611, %v154
      %v644 = vmax.f32 %v612, %v156
      %v645 = vmax.f32 %v613, %v157
      %v646 = vmax.f32 %v614, %v159
      %v647 = vmax.f32 %v615, %v160
      %v648 = vmax.f32 %v616, %v162
      %v649 = vmax.f32 %v617, %v163
      %v650 = vmax.f32 %v618, %v165
      %v651 = vmax.f32 %v619, %v166
      %v652 = vmax.f32 %v620, %v168
      %v653 = vmax.f32 %v621, %v169
      %v657 = vrot.slane %v168, 1
      %v658 = vrot.slane %v169, 1
      %v659 = vsel %vm219, %v657, %v658
      %v660 = vrot.slane %v170, 1
      %v661 = vsel %vm219, %v658, %v660
      %v664 = vmax.f32 %v622, %v232
      %v665 = vmax.f32 %v623, %v234
      %v666 = vmax.f32 %v624, %v237
      %v667 = vmax.f32 %v625, %v239
      %v668 = vmax.f32 %v626, %v242
      %v669 = vmax.f32 %v627, %v244
      %v670 = vmax.f32 %v628, %v247
      %v671 = vmax.f32 %v629, %v249
      %v672 = vmax.f32 %v630, %v252
      %v673 = vmax.f32 %v631, %v254
      %v674 = vmax.f32 %v632, %v257
      %v675 = vmax.f32 %v633, %v259
      %v676 = vmax.f32 %v634, %v262
      %v677 = vmax.f32 %v635, %v264
      %v678 = vmax.f32 %v636, %v267
      %v679 = vmax.f32 %v637, %v269
      %v680 = vmax.f32 %v638, %v272
      %v681 = vmax.f32 %v639, %v274
      %v682 = vmax.f32 %v640, %v277
      %v683 = vmax.f32 %v641, %v279
      %v684 = vmax.f32 %v642, %v282
      %v685 = vmax.f32 %v643, %v284
      %v686 = vmax.f32 %v644, %v287
      %v687 = vmax.f32 %v645, %v289
      %v688 = vmax.f32 %v646, %v292
      %v689 = vmax.f32 %v647, %v294
      %v690 = vmax.f32 %v648, %v297
      %v691 = vmax.f32 %v649, %v299
      %v692 = vmax.f32 %v650, %v546
      %v693 = vmax.f32 %v651, %v548
      %v694 = vmax.f32 %v652, %v659
      %v695 = vmax.f32 %v653, %v661
      %v696 = vrot.slane %v168, 2
      %v697 = vrot.slane %v169, 2
      %v698 = vsel %vm364, %v696, %v697
      %v699 = vrot.slane %v170, 2
      %v700 = vsel %vm364, %v697, %v699
      %v703 = vmax.f32 %v664, %v377
      %v704 = vmax.f32 %v665, %v379
      %v705 = vmax.f32 %v666, %v382
      %v706 = vmax.f32 %v667, %v384
      %v707 = vmax.f32 %v668, %v387
      %v708 = vmax.f32 %v669, %v389
      %v709 = vmax.f32 %v670, %v392
      %v710 = vmax.f32 %v671, %v394
      %v711 = vmax.f32 %v672, %v397
      %v712 = vmax.f32 %v673, %v399
      %v713 = vmax.f32 %v674, %v402
      %v714 = vmax.f32 %v675, %v404
      %v715 = vmax.f32 %v676, %v407
      %v716 = vmax.f32 %v677, %v409
      %v717 = vmax.f32 %v678, %v412
      %v718 = vmax.f32 %v679, %v414
      %v719 = vmax.f32 %v680, %v417
      %v720 = vmax.f32 %v681, %v419
      %v721 = vmax.f32 %v682, %v422
      %v722 = vmax.f32 %v683, %v424
      %v723 = vmax.f32 %v684, %v427
      %v724 = vmax.f32 %v685, %v429
      %v725 = vmax.f32 %v686, %v432
      %v726 = vmax.f32 %v687, %v434
      %v727 = vmax.f32 %v688, %v437
      %v728 = vmax.f32 %v689, %v439
      %v729 = vmax.f32 %v690, %v442
      %v730 = vmax.f32 %v691, %v444
      %v731 = vmax.f32 %v692, %v585
      %v732 = vmax.f32 %v693, %v587
      %v733 = vmax.f32 %v694, %v698
      %v734 = vmax.f32 %v695, %v700
      %vm735 = vcmask 64512
      %736 = vst.msk [vmem:[%s116] sm:$0xff] %vm735, %v703
      %737 = vst.msk [vmem:[%s116 + $0x8] sm:$0xff] %vm735, %v704
      %738 = vst.msk [vmem:[%s116 + $0x10] sm:$0xff] %vm735, %v705
      %739 = vst.msk [vmem:[%s116 + $0x18] sm:$0xff] %vm735, %v706
      %740 = vst.msk [vmem:[%s116 + $0x20] sm:$0xff] %vm735, %v707
      %741 = vst.msk [vmem:[%s116 + $0x28] sm:$0xff] %vm735, %v708
      %742 = vst.msk [vmem:[%s116 + $0x30] sm:$0xff] %vm735, %v709
      %743 = vst.msk [vmem:[%s116 + $0x38] sm:$0xff] %vm735, %v710
      %744 = vst.msk [vmem:[%s116 + $0x40] sm:$0xff] %vm735, %v711
      %745 = vst.msk [vmem:[%s116 + $0x48] sm:$0xff] %vm735, %v712
      %746 = vst.msk [vmem:[%s116 + $0x50] sm:$0xff] %vm735, %v713
      %747 = vst.msk [vmem:[%s116 + $0x58] sm:$0xff] %vm735, %v714
      %748 = vst.msk [vmem:[%s116 + $0x60] sm:$0xff] %vm735, %v715
      %749 = vst.msk [vmem:[%s116 + $0x68] sm:$0xff] %vm735, %v716
      %750 = vst.msk [vmem:[%s116 + $0x70] sm:$0xff] %vm735, %v717
      %751 = vst.msk [vmem:[%s116 + $0x78] sm:$0xff] %vm735, %v718
      %752 = vst.msk [vmem:[%s116 + $0x80] sm:$0xff] %vm735, %v719
      %753 = vst.msk [vmem:[%s116 + $0x88] sm:$0xff] %vm735, %v720
      %754 = vst.msk [vmem:[%s116 + $0x90] sm:$0xff] %vm735, %v721
      %755 = vst.msk [vmem:[%s116 + $0x98] sm:$0xff] %vm735, %v722
      %756 = vst.msk [vmem:[%s116 + $0xa0] sm:$0xff] %vm735, %v723
      %757 = vst.msk [vmem:[%s116 + $0xa8] sm:$0xff] %vm735, %v724
      %758 = vst.msk [vmem:[%s116 + $0xb0] sm:$0xff] %vm735, %v725
      %759 = vst.msk [vmem:[%s116 + $0xb8] sm:$0xff] %vm735, %v726
      %760 = vst.msk [vmem:[%s116 + $0xc0] sm:$0xff] %vm735, %v727
      %761 = vst.msk [vmem:[%s116 + $0xc8] sm:$0xff] %vm735, %v728
      %762 = vst.msk [vmem:[%s116 + $0xd0] sm:$0xff] %vm735, %v729
      %763 = vst.msk [vmem:[%s116 + $0xd8] sm:$0xff] %vm735, %v730
      %764 = vst.msk [vmem:[%s116 + $0xe0] sm:$0xff] %vm735, %v731
      %765 = vst.msk [vmem:[%s116 + $0xe8] sm:$0xff] %vm735, %v732
      %766 = vst.msk [vmem:[%s116 + $0xf0] sm:$0xff] %vm735, %v733
      %767 = vst.msk [vmem:[%s116 + $0xf8] sm:$0xff] %vm735, %v734
      %p768 = scmp.lt.s32.totalorder %s12, 1
      %s769 = scalar_select %p768, %s12, 1
      %s770 = smul.addr %s769, 32
      %s771 = smul.addr %s770, 8
      %s772 = scalar_lea.vmem %s1, %s771
      // Predicated region
      $region25: #{a_call__.46} parent=23 // pred_check
        %p773 = pneg %p56
      $region26: #{a_call__.46} parent=23 // pred_check_branch
        %775 = sbr.rel (%p773) target = $region28
      $region27: #{a_call__.46} parent=23 // pred_region
        _
      $region28: #{a_call__.46} parent=23 // pred_fallthru
        _
    $region24: #{a_call__.46} parent=5 // pred_fallthru
      _
    %p776 = scmp.le.s32.totalorder 2, %s7
    // Predicated region
    $region29: #{a_call__.46} parent=5 // pred_check
      %p777 = pneg %p776
    $region30: #{a_call__.46} parent=5 // pred_check_branch
      %779 = sbr.rel (%p777) target = $region32
    $region31: #{a_call__.46} parent=5 // pred_region
      %s780 = ssub.s32 %s7, 2
      // Predicated region
      $region33: #{a_call__.46} parent=31 // pred_check
        %p781 = pneg %p62
      $region34: #{a_call__.46} parent=31 // pred_check_branch
        %783 = sbr.rel (%p781) target = $region36
      $region35: #{a_call__.46} parent=31 // pred_region
        %p784 = scmp.lt.s32.totalorder %s13, 1
        %s785 = scalar_select %p784, %s13, 1
        %s786 = smul.addr %s785, 32
        %s787 = smul.addr %s786, 8
        %s788 = scalar_lea.vmem %s1, %s787
      $region36: #{a_call__.46} parent=31 // pred_fallthru
        _
    $region32: #{a_call__.46} parent=5 // pred_fallthru
      _
  $region6: #{a_call__.46} parent=0 // loop_footer
    %s11 = sadd.s32 1, %s7
  $region7: #{a_call__.46} parent=0 // loop_footer_branch
    %6 = sbr.rel target = $region3
  $region8: #{a_call__.46} parent=0 // loop_exit
    _

// kernel: a_call__.41
$region0: #{a_call__.41}
  #allocation0 [shape = 'u32[]', space=smem, size = 0x4, offset = 0x4, fixed_abs, tag = 'smem constant byte address 0x4 - core index']
  #allocation1 [shape = 'u32[144,128]{1,0:T(1,128)}', space=vmem, size = 0x12000, scoped, tag = 'internal scratch']
  %s0 = inlined_call_operand.vmem [shape: f32[2,18,18,4], index: 0, kind: input, shape index: {}]
  %s1 = inlined_call_operand.vmem [shape: f32[9,1,4], index: 1, kind: input, shape index: {}]
  %s2 = inlined_call_operand.vmem [shape: f32[4,4], index: 2, kind: input, shape index: {}]
  %s3 = inlined_call_operand.vmem [shape: f32[1,4], index: 3, kind: input, shape index: {}]
  %s4 = inlined_call_operand.vmem [shape: f32[1,4], index: 4, kind: input, shape index: {}]
  %s5 = inlined_call_operand.vmem [shape: f32[2,256,4], index: 5, kind: output, shape index: {}]
  %s6 = sld [smem:[#allocation0]]
  $region53: #{a_call__.41} parent=0
    _
  %s8 = ssub.s32 1, %s6
  %s9 = scalar_select 0, %s8, %s6
  loop: start=0, step=1, limit=4
  $region2: #{a_call__.41} parent=0 // loop_pre_header
    _
  $region3: #{a_call__.41} parent=0 // loop_header
    %s11 = sphi 0, %s15
    %p12 = scmp.ge.s32.totalorder %s11, 4
    %s21 = sphi 0, %s23
    %s24 = sphi 0, %s21
    %s25 = sphi 0, %s24
    %s41 = sphi 0, %s25
    %s45 = sphi 0, %s45
    %s47 = sphi 0, %s45
    %s48 = sphi 0, %s47
    %s62 = sphi 0, %s48
    %s66 = sphi 0, %s66
    %s68 = sphi 0, %s66
    %s69 = sphi 0, %s68
    %s83 = sphi 0, %s69
    %s87 = sphi 0, %s87
    %s89 = sphi 0, %s87
    %s90 = sphi 0, %s89
    %s104 = sphi 0, %s90
    %s108 = sphi 0, %s108
    %s110 = sphi 0, %s108
    %s111 = sphi 0, %s110
    %s125 = sphi 0, %s111
    %s131 = sphi 0, %s133
    %s134 = sphi 0, %s131
    %s135 = sphi 0, %s134
    %s151 = sphi 0, %s135
  $region4: #{a_call__.41} parent=0 // loop_header_branch
    %14 = sbr.rel (%p12) target = $region8
  $region5: #{a_call__.41} parent=0 // loop_body
    %s16 = ssub.s32 %s11, 1
    %s17 = ssub.s32 %s11, 2
    %s18 = sadd.s32 %s11, 1
    %s19 = ssub.s32 %s11, %s18
    %p20 = scmp.eq.s32.totalorder %s19, 0
    %s22 = sadd.s32 %s21, 1
    %s23 = scalar_select %p20, %s21, %s22
    %p26 = pneg %p20
    %p27 = scmp.eq.s32.totalorder %s11, 1
    %p28 = por %p26, %p27
    %p29 = scmp.ne.s32.totalorder %s21, %s24
    %p30 = scmp.eq.s32.totalorder %s11, 0
    %p31 = por %p29, %p30
    %p32 = scmp.ne.s32.totalorder %s21, %s24
    %p33 = scmp.eq.s32.totalorder %s16, 1
    %p34 = por %p32, %p33
    %p35 = scmp.ne.s32.totalorder %s24, %s25
    %p36 = scmp.eq.s32.totalorder %s16, 0
    %p37 = por %p35, %p36
    %p38 = scmp.ne.s32.totalorder %s24, %s25
    %p39 = scmp.eq.s32.totalorder %s17, 1
    %p40 = por %p38, %p39
    %p42 = scmp.ne.s32.totalorder %s25, %s41
    %p43 = scmp.eq.s32.totalorder %s17, 0
    %p44 = por %p42, %p43
    %s46 = sadd.s32 %s45, 1
    %p49 = scmp.eq.s32.totalorder %s11, 1
    %p50 = scmp.ne.s32.totalorder %s45, %s47
    %p51 = scmp.eq.s32.totalorder %s11, 0
    %p52 = por %p50, %p51
    %p53 = scmp.ne.s32.totalorder %s45, %s47
    %p54 = scmp.eq.s32.totalorder %s16, 1
    %p55 = por %p53, %p54
    %p56 = scmp.ne.s32.totalorder %s47, %s48
    %p57 = scmp.eq.s32.totalorder %s16, 0
    %p58 = por %p56, %p57
    %p59 = scmp.ne.s32.totalorder %s47, %s48
    %p60 = scmp.eq.s32.totalorder %s17, 1
    %p61 = por %p59, %p60
    %p63 = scmp.ne.s32.totalorder %s48, %s62
    %p64 = scmp.eq.s32.totalorder %s17, 0
    %p65 = por %p63, %p64
    %s67 = sadd.s32 %s66, 1
    %p70 = scmp.eq.s32.totalorder %s11, 1
    %p71 = scmp.ne.s32.totalorder %s66, %s68
    %p72 = scmp.eq.s32.totalorder %s11, 0
    %p73 = por %p71, %p72
    %p74 = scmp.ne.s32.totalorder %s66, %s68
    %p75 = scmp.eq.s32.totalorder %s16, 1
    %p76 = por %p74, %p75
    %p77 = scmp.ne.s32.totalorder %s68, %s69
    %p78 = scmp.eq.s32.totalorder %s16, 0
    %p79 = por %p77, %p78
    %p80 = scmp.ne.s32.totalorder %s68, %s69
    %p81 = scmp.eq.s32.totalorder %s17, 1
    %p82 = por %p80, %p81
    %p84 = scmp.ne.s32.totalorder %s69, %s83
    %p85 = scmp.eq.s32.totalorder %s17, 0
    %p86 = por %p84, %p85
    %s88 = sadd.s32 %s87, 1
    %p91 = scmp.eq.s32.totalorder %s11, 1
    %p92 = scmp.ne.s32.totalorder %s87, %s89
    %p93 = scmp.eq.s32.totalorder %s11, 0
    %p94 = por %p92, %p93
    %p95 = scmp.ne.s32.totalorder %s87, %s89
    %p96 = scmp.eq.s32.totalorder %s16, 1
    %p97 = por %p95, %p96
    %p98 = scmp.ne.s32.totalorder %s89, %s90
    %p99 = scmp.eq.s32.totalorder %s16, 0
    %p100 = por %p98, %p99
    %p101 = scmp.ne.s32.totalorder %s89, %s90
    %p102 = scmp.eq.s32.totalorder %s17, 1
    %p103 = por %p101, %p102
    %p105 = scmp.ne.s32.totalorder %s90, %s104
    %p106 = scmp.eq.s32.totalorder %s17, 0
    %p107 = por %p105, %p106
    %s109 = sadd.s32 %s108, 1
    %p112 = scmp.eq.s32.totalorder %s11, 1
    %p113 = scmp.ne.s32.totalorder %s108, %s110
    %p114 = scmp.eq.s32.totalorder %s11, 0
    %p115 = por %p113, %p114
    %p116 = scmp.ne.s32.totalorder %s108, %s110
    %p117 = scmp.eq.s32.totalorder %s16, 1
    %p118 = por %p116, %p117
    %p119 = scmp.ne.s32.totalorder %s110, %s111
    %p120 = scmp.eq.s32.totalorder %s16, 0
    %p121 = por %p119, %p120
    %p122 = scmp.ne.s32.totalorder %s110, %s111
    %p123 = scmp.eq.s32.totalorder %s17, 1
    %p124 = por %p122, %p123
    %p126 = scmp.ne.s32.totalorder %s111, %s125
    %p127 = scmp.eq.s32.totalorder %s17, 0
    %p128 = por %p126, %p127
    %s129 = ssub.s32 %s11, %s18
    %p130 = scmp.eq.s32.totalorder %s129, 0
    %s132 = sadd.s32 %s131, 1
    %s133 = scalar_select %p130, %s131, %s132
    %p136 = pneg %p130
    %p137 = scmp.eq.s32.totalorder %s11, 1
    %p138 = por %p136, %p137
    %p139 = scmp.ne.s32.totalorder %s131, %s134
    %p140 = scmp.eq.s32.totalorder %s11, 0
    %p141 = por %p139, %p140
    %p142 = scmp.ne.s32.totalorder %s131, %s134
    %p143 = scmp.eq.s32.totalorder %s16, 1
    %p144 = por %p142, %p143
    %p145 = scmp.ne.s32.totalorder %s134, %s135
    %p146 = scmp.eq.s32.totalorder %s16, 0
    %p147 = por %p145, %p146
    %p148 = scmp.ne.s32.totalorder %s134, %s135
    %p149 = scmp.eq.s32.totalorder %s17, 1
    %p150 = por %p148, %p149
    %p152 = scmp.ne.s32.totalorder %s135, %s151
    %p153 = scmp.eq.s32.totalorder %s17, 0
    %p154 = por %p152, %p153
    %p155 = scmp.le.s32.totalorder 1, %s11
    %p156 = scmp.lt.s32.totalorder %s11, 3
    %p157 = pnand %p155, %p156
    %p158 = pneg %p157
    // Predicated region
    $region9: #{a_call__.41} parent=5 // pred_check
      _
    $region10: #{a_call__.41} parent=5 // pred_check_branch
      %160 = sbr.rel (%p157) target = $region12
    $region11: #{a_call__.41} parent=5 // pred_region
      %s161 = ssub.s32 %s11, 1
      // Predicated region
      $region13: #{a_call__.41} parent=11 // pred_check
        %p162 = pneg %p58
      $region14: #{a_call__.41} parent=11 // pred_check_branch
        %164 = sbr.rel (%p162) target = $region16
      $region15: #{a_call__.41} parent=11 // pred_region
        _
      $region16: #{a_call__.41} parent=11 // pred_fallthru
        _
      // Predicated region
      $region17: #{a_call__.41} parent=11 // pred_check
        %p165 = pneg %p79
      $region18: #{a_call__.41} parent=11 // pred_check_branch
        %167 = sbr.rel (%p165) target = $region20
      $region19: #{a_call__.41} parent=11 // pred_region
        _
      $region20: #{a_call__.41} parent=11 // pred_fallthru
        _
      // Predicated region
      $region21: #{a_call__.41} parent=11 // pred_check
        %p168 = pneg %p100
      $region22: #{a_call__.41} parent=11 // pred_check_branch
        %170 = sbr.rel (%p168) target = $region24
      $region23: #{a_call__.41} parent=11 // pred_region
        _
      $region24: #{a_call__.41} parent=11 // pred_fallthru
        _
      // Predicated region
      $region25: #{a_call__.41} parent=11 // pred_check
        %p171 = pneg %p121
      $region26: #{a_call__.41} parent=11 // pred_check_branch
        %173 = sbr.rel (%p171) target = $region28
      $region27: #{a_call__.41} parent=11 // pred_region
        _
      $region28: #{a_call__.41} parent=11 // pred_fallthru
        _
    $region12: #{a_call__.41} parent=5 // pred_fallthru
      _
    %p174 = scmp.lt.s32.totalorder %s11, 2
    // Predicated region
    $region29: #{a_call__.41} parent=5 // pred_check
      %p175 = pneg %p174
    $region30: #{a_call__.41} parent=5 // pred_check_branch
      %177 = sbr.rel (%p175) target = $region32
    $region31: #{a_call__.41} parent=5 // pred_region
      // Predicated region
      $region33: #{a_call__.41} parent=31 // pred_check
        %p178 = pneg %p31
      $region34: #{a_call__.41} parent=31 // pred_check_branch
        %180 = sbr.rel (%p178) target = $region36
      $region35: #{a_call__.41} parent=31 // pred_region
        %p181 = scmp.lt.s32.totalorder %s11, 1
        %s182 = scalar_select %p181, %s11, 1
        %s183 = smul.addr %s182, 54
        %s184 = smul.addr %s183, 8
        %s185 = scalar_lea.vmem %s0, %s184
      $region36: #{a_call__.41} parent=31 // pred_fallthru
        _
    $region32: #{a_call__.41} parent=5 // pred_fallthru
      _
    %p186 = scmp.le.s32.totalorder 1, %s11
    %p187 = scmp.lt.s32.totalorder %s11, 3
    %p188 = pnand %p186, %p187
    %p189 = pneg %p188
    // Predicated region
    $region37: #{a_call__.41} parent=5 // pred_check
      _
    $region38: #{a_call__.41} parent=5 // pred_check_branch
      %191 = sbr.rel (%p188) target = $region40
    $region39: #{a_call__.41} parent=5 // pred_region
      %s192 = ssub.s32 %s11, 1
      %p193 = scmp.lt.s32.totalorder %s16, 1
      %s194 = scalar_select %p193, %s16, 1
      %s195 = smul.addr %s194, 54
      %s196 = smul.addr %s195, 8
      %s197 = scalar_lea.vmem %s0, %s196
      %p198 = pneg %p37
      %p199 = pneg %p34
      %p200 = pneg %p58
      %p201 = pneg %p55
      %p202 = pneg %p79
      %p203 = pneg %p76
      %p204 = pneg %p100
      %p205 = pneg %p97
      %p206 = pneg %p121
      %p207 = pneg %p118
      %p208 = pneg %p147
      %p209 = pneg %p144
      %p210 = scmp.lt.s32.totalorder %s16, 1
      %s211 = scalar_select %p210, %s16, 1
      %s212 = smul.addr %s211, 32
      %s213 = smul.addr %s212, 8
      %s214 = scalar_lea.vmem %s5, %s213
      %p215 = scmp.lt.s32.totalorder %s16, 1
      %s216 = scalar_select %p215, %s16, 1
      %s217 = smul.addr %s216, 54
      %s218 = smul.addr %s217, 8
      %s219 = scalar_lea.vmem %s0, %s218
      %p220 = scmp.lt.s32.totalorder %s16, 1
      %s221 = scalar_select %p220, %s16, 1
      %s222 = smul.addr %s221, 32
      %s223 = smul.addr %s222, 8
      %s224 = scalar_lea.vmem %s5, %s223
      %v225 = vld [vmem:[%s219] sm:$0xff]
      %v226 = vld [vmem:[%s219 + $0x8] sm:$0xff]
      %v227 = vld [vmem:[%s219 + $0x10] sm:$0x3]
      %v228 = vld [vmem:[%s219 + $0x18] sm:$0xff]
      %v229 = vld [vmem:[%s219 + $0x20] sm:$0xff]
      %v230 = vld [vmem:[%s219 + $0x28] sm:$0x3]
      %v231 = vld [vmem:[%s219 + $0x30] sm:$0xff]
      %v232 = vld [vmem:[%s219 + $0x38] sm:$0xff]
      %v233 = vld [vmem:[%s219 + $0x40] sm:$0x3]
      %v234 = vld [vmem:[%s219 + $0x48] sm:$0xff]
      %v235 = vld [vmem:[%s219 + $0x50] sm:$0xff]
      %v236 = vld [vmem:[%s219 + $0x58] sm:$0x3]
      %v237 = vld [vmem:[%s219 + $0x60] sm:$0xff]
      %v238 = vld [vmem:[%s219 + $0x68] sm:$0xff]
      %v239 = vld [vmem:[%s219 + $0x70] sm:$0x3]
      %v240 = vld [vmem:[%s219 + $0x78] sm:$0xff]
      %v241 = vld [vmem:[%s219 + $0x80] sm:$0xff]
      %v242 = vld [vmem:[%s219 + $0x88] sm:$0x3]
      %v243 = vld [vmem:[%s219 + $0x90] sm:$0xff]
      %v244 = vld [vmem:[%s219 + $0x98] sm:$0xff]
      %v245 = vld [vmem:[%s219 + $0xa0] sm:$0x3]
      %v246 = vld [vmem:[%s219 + $0xa8] sm:$0xff]
      %v247 = vld [vmem:[%s219 + $0xb0] sm:$0xff]
      %v248 = vld [vmem:[%s219 + $0xb8] sm:$0x3]
      %v249 = vld [vmem:[%s219 + $0xc0] sm:$0xff]
      %v250 = vld [vmem:[%s219 + $0xc8] sm:$0xff]
      %v251 = vld [vmem:[%s219 + $0xd0] sm:$0x3]
      %v252 = vld [vmem:[%s219 + $0xd8] sm:$0xff]
      %v253 = vld [vmem:[%s219 + $0xe0] sm:$0xff]
      %v254 = vld [vmem:[%s219 + $0xe8] sm:$0x3]
      %v255 = vld [vmem:[%s219 + $0xf0] sm:$0xff]
      %v256 = vld [vmem:[%s219 + $0xf8] sm:$0xff]
      %v257 = vld [vmem:[%s219 + $0x100] sm:$0x3]
      %v258 = vld [vmem:[%s219 + $0x108] sm:$0xff]
      %v259 = vld [vmem:[%s219 + $0x110] sm:$0xff]
      %v260 = vld [vmem:[%s219 + $0x118] sm:$0x3]
      %v261 = vld [vmem:[%s219 + $0x120] sm:$0xff]
      %v262 = vld [vmem:[%s219 + $0x128] sm:$0xff]
      %v263 = vld [vmem:[%s219 + $0x130] sm:$0x3]
      %v264 = vld [vmem:[%s219 + $0x138] sm:$0xff]
      %v265 = vld [vmem:[%s219 + $0x140] sm:$0xff]
      %v266 = vld [vmem:[%s219 + $0x148] sm:$0x3]
      %v267 = vld [vmem:[%s219 + $0x150] sm:$0xff]
      %v268 = vld [vmem:[%s219 + $0x158] sm:$0xff]
      %v269 = vld [vmem:[%s219 + $0x160] sm:$0x3]
      %v270 = vld [vmem:[%s219 + $0x168] sm:$0xff]
      %v271 = vld [vmem:[%s219 + $0x170] sm:$0xff]
      %v272 = vld [vmem:[%s219 + $0x178] sm:$0x3]
      %v273 = vld [vmem:[%s219 + $0x180] sm:$0xff]
      %v274 = vld [vmem:[%s219 + $0x188] sm:$0xff]
      %v275 = vld [vmem:[%s219 + $0x190] sm:$0x3]
      %v276 = vld [vmem:[%s219 + $0x198] sm:$0xff]
      %v277 = vld [vmem:[%s219 + $0x1a0] sm:$0xff]
      %v278 = vld [vmem:[%s219 + $0x1a8] sm:$0x3]
      %v279 = vmax.f32 %v225, 0.0
      %v280 = vmax.f32 %v226, 0.0
      %v281 = vmax.f32 %v227, 0.0
      %v282 = vmax.f32 %v228, 0.0
      %v283 = vmax.f32 %v229, 0.0
      %v284 = vmax.f32 %v230, 0.0
      %v285 = vmax.f32 %v231, 0.0
      %v286 = vmax.f32 %v232, 0.0
      %v287 = vmax.f32 %v233, 0.0
      %v288 = vmax.f32 %v234, 0.0
      %v289 = vmax.f32 %v235, 0.0
      %v290 = vmax.f32 %v236, 0.0
      %v291 = vmax.f32 %v237, 0.0
      %v292 = vmax.f32 %v238, 0.0
      %v293 = vmax.f32 %v239, 0.0
      %v294 = vmax.f32 %v240, 0.0
      %v295 = vmax.f32 %v241, 0.0
      %v296 = vmax.f32 %v242, 0.0
      %v297 = vmax.f32 %v243, 0.0
      %v298 = vmax.f32 %v244, 0.0
      %v299 = vmax.f32 %v245, 0.0
      %v300 = vmax.f32 %v246, 0.0
      %v301 = vmax.f32 %v247, 0.0
      %v302 = vmax.f32 %v248, 0.0
      %v303 = vmax.f32 %v249, 0.0
      %v304 = vmax.f32 %v250, 0.0
      %v305 = vmax.f32 %v251, 0.0
      %v306 = vmax.f32 %v252, 0.0
      %v307 = vmax.f32 %v253, 0.0
      %v308 = vmax.f32 %v254, 0.0
      %v309 = vmax.f32 %v255, 0.0
      %v310 = vmax.f32 %v256, 0.0
      %v311 = vmax.f32 %v257, 0.0
      %v312 = vmax.f32 %v258, 0.0
      %v313 = vmax.f32 %v259, 0.0
      %v314 = vmax.f32 %v260, 0.0
      %v315 = vmax.f32 %v261, 0.0
      %v316 = vmax.f32 %v262, 0.0
      %v317 = vmax.f32 %v263, 0.0
      %v318 = vmax.f32 %v264, 0.0
      %v319 = vmax.f32 %v265, 0.0
      %v320 = vmax.f32 %v266, 0.0
      %v321 = vmax.f32 %v267, 0.0
      %v322 = vmax.f32 %v268, 0.0
      %v323 = vmax.f32 %v269, 0.0
      %v324 = vmax.f32 %v270, 0.0
      %v325 = vmax.f32 %v271, 0.0
      %v326 = vmax.f32 %v272, 0.0
      %v327 = vmax.f32 %v273, 0.0
      %v328 = vmax.f32 %v274, 0.0
      %v329 = vmax.f32 %v275, 0.0
      %v330 = vmax.f32 %v276, 0.0
      %v331 = vmax.f32 %v277, 0.0
      %v332 = vmax.f32 %v278, 0.0
      %v333 = vld [vmem:[%s1] sm:$0x1]
      %v334 = vld [vmem:[%s1 + $0x1] sm:$0x1]
      %v335 = vld [vmem:[%s1 + $0x2] sm:$0x1]
      %v336 = vld [vmem:[%s1 + $0x3] sm:$0x1]
      %v337 = vld [vmem:[%s1 + $0x4] sm:$0x1]
      %v338 = vld [vmem:[%s1 + $0x5] sm:$0x1]
      %v339 = vld [vmem:[%s1 + $0x6] sm:$0x1]
      %v340 = vld [vmem:[%s1 + $0x7] sm:$0x1]
      %v341 = vld [vmem:[%s1 + $0x8] sm:$0x1]
      %v343 = vlaneseq
      %v344 = vshrl.u32 %v343, 7
      %v345 = vsub.s32 0, %v344
      %v346 = vrot.slane %v333, %v345
      %v348 = vmul.f32 %v279, %v346
      %v349 = vmul.f32 %v280, %v346
      %v350 = vmul.f32 %v282, %v346
      %v351 = vmul.f32 %v283, %v346
      %v352 = vmul.f32 %v285, %v346
      %v353 = vmul.f32 %v286, %v346
      %v354 = vmul.f32 %v288, %v346
      %v355 = vmul.f32 %v289, %v346
      %v356 = vmul.f32 %v291, %v346
      %v357 = vmul.f32 %v292, %v346
      %v358 = vmul.f32 %v294, %v346
      %v359 = vmul.f32 %v295, %v346
      %v360 = vmul.f32 %v297, %v346
      %v361 = vmul.f32 %v298, %v346
      %v362 = vmul.f32 %v300, %v346
      %v363 = vmul.f32 %v301, %v346
      %v364 = vmul.f32 %v303, %v346
      %v365 = vmul.f32 %v304, %v346
      %v366 = vmul.f32 %v306, %v346
      %v367 = vmul.f32 %v307, %v346
      %v368 = vmul.f32 %v309, %v346
      %v369 = vmul.f32 %v310, %v346
      %v370 = vmul.f32 %v312, %v346
      %v371 = vmul.f32 %v313, %v346
      %v372 = vmul.f32 %v315, %v346
      %v373 = vmul.f32 %v316, %v346
      %v374 = vmul.f32 %v318, %v346
      %v375 = vmul.f32 %v319, %v346
      %v376 = vmul.f32 %v321, %v346
      %v377 = vmul.f32 %v322, %v346
      %v378 = vmul.f32 %v324, %v346
      %v379 = vmul.f32 %v325, %v346
      %v381 = vlaneseq
      %v382 = vshrl.u32 %v381, 7
      %v383 = vsub.s32 0, %v382
      %v384 = vrot.slane %v334, %v383
      %v386 = vmul.f32 %v279, %v384
      %v387 = vmul.f32 %v280, %v384
      %v388 = vmul.f32 %v281, %v384
      %v389 = vmul.f32 %v282, %v384
      %v390 = vmul.f32 %v283, %v384
      %v391 = vmul.f32 %v284, %v384
      %v392 = vmul.f32 %v285, %v384
      %v393 = vmul.f32 %v286, %v384
      %v394 = vmul.f32 %v287, %v384
      %v395 = vmul.f32 %v288, %v384
      %v396 = vmul.f32 %v289, %v384
      %v397 = vmul.f32 %v290, %v384
      %v398 = vmul.f32 %v291, %v384
      %v399 = vmul.f32 %v292, %v384
      %v400 = vmul.f32 %v293, %v384
      %v401 = vmul.f32 %v294, %v384
      %v402 = vmul.f32 %v295, %v384
      %v403 = vmul.f32 %v296, %v384
      %v404 = vmul.f32 %v297, %v384
      %v405 = vmul.f32 %v298, %v384
      %v406 = vmul.f32 %v299, %v384
      %v407 = vmul.f32 %v300, %v384
      %v408 = vmul.f32 %v301, %v384
      %v409 = vmul.f32 %v302, %v384
      %v410 = vmul.f32 %v303, %v384
      %v411 = vmul.f32 %v304, %v384
      %v412 = vmul.f32 %v305, %v384
      %v413 = vmul.f32 %v306, %v384
      %v414 = vmul.f32 %v307, %v384
      %v415 = vmul.f32 %v308, %v384
      %v416 = vmul.f32 %v309, %v384
      %v417 = vmul.f32 %v310, %v384
      %v418 = vmul.f32 %v311, %v384
      %v419 = vmul.f32 %v312, %v384
      %v420 = vmul.f32 %v313, %v384
      %v421 = vmul.f32 %v314, %v384
      %v422 = vmul.f32 %v315, %v384
      %v423 = vmul.f32 %v316, %v384
      %v424 = vmul.f32 %v317, %v384
      %v425 = vmul.f32 %v318, %v384
      %v426 = vmul.f32 %v319, %v384
      %v427 = vmul.f32 %v320, %v384
      %v428 = vmul.f32 %v321, %v384
      %v429 = vmul.f32 %v322, %v384
      %v430 = vmul.f32 %v323, %v384
      %v431 = vmul.f32 %v324, %v384
      %v432 = vmul.f32 %v325, %v384
      %v433 = vmul.f32 %v326, %v384
      %vm482 = vcmask 1046528
      %v483 = vrot.slane %v386, 1
      %v484 = vrot.slane %v387, 1
      %v485 = vsel %vm482, %v483, %v484
      %v486 = vrot.slane %v388, 1
      %v487 = vsel %vm482, %v484, %v486
      %v488 = vrot.slane %v389, 1
      %v489 = vrot.slane %v390, 1
      %v490 = vsel %vm482, %v488, %v489
      %v491 = vrot.slane %v391, 1
      %v492 = vsel %vm482, %v489, %v491
      %v493 = vrot.slane %v392, 1
      %v494 = vrot.slane %v393, 1
      %v495 = vsel %vm482, %v493, %v494
      %v496 = vrot.slane %v394, 1
      %v497 = vsel %vm482, %v494, %v496
      %v498 = vrot.slane %v395, 1
      %v499 = vrot.slane %v396, 1
      %v500 = vsel %vm482, %v498, %v499
      %v501 = vrot.slane %v397, 1
      %v502 = vsel %vm482, %v499, %v501
      %v503 = vrot.slane %v398, 1
      %v504 = vrot.slane %v399, 1
      %v505 = vsel %vm482, %v503, %v504
      %v506 = vrot.slane %v400, 1
      %v507 = vsel %vm482, %v504, %v506
      %v508 = vrot.slane %v401, 1
      %v509 = vrot.slane %v402, 1
      %v510 = vsel %vm482, %v508, %v509
      %v511 = vrot.slane %v403, 1
      %v512 = vsel %vm482, %v509, %v511
      %v513 = vrot.slane %v404, 1
      %v514 = vrot.slane %v405, 1
      %v515 = vsel %vm482, %v513, %v514
      %v516 = vrot.slane %v406, 1
      %v517 = vsel %vm482, %v514, %v516
      %v518 = vrot.slane %v407, 1
      %v519 = vrot.slane %v408, 1
      %v520 = vsel %vm482, %v518, %v519
      %v521 = vrot.slane %v409, 1
      %v522 = vsel %vm482, %v519, %v521
      %v523 = vrot.slane %v410, 1
      %v524 = vrot.slane %v411, 1
      %v525 = vsel %vm482, %v523, %v524
      %v526 = vrot.slane %v412, 1
      %v527 = vsel %vm482, %v524, %v526
      %v528 = vrot.slane %v413, 1
      %v529 = vrot.slane %v414, 1
      %v530 = vsel %vm482, %v528, %v529
      %v531 = vrot.slane %v415, 1
      %v532 = vsel %vm482, %v529, %v531
      %v533 = vrot.slane %v416, 1
      %v534 = vrot.slane %v417, 1
      %v535 = vsel %vm482, %v533, %v534
      %v536 = vrot.slane %v418, 1
      %v537 = vsel %vm482, %v534, %v536
      %v538 = vrot.slane %v419, 1
      %v539 = vrot.slane %v420, 1
      %v540 = vsel %vm482, %v538, %v539
      %v541 = vrot.slane %v421, 1
      %v542 = vsel %vm482, %v539, %v541
      %v543 = vrot.slane %v422, 1
      %v544 = vrot.slane %v423, 1
      %v545 = vsel %vm482, %v543, %v544
      %v546 = vrot.slane %v424, 1
      %v547 = vsel %vm482, %v544, %v546
      %v548 = vrot.slane %v425, 1
      %v549 = vrot.slane %v426, 1
      %v550 = vsel %vm482, %v548, %v549
      %v551 = vrot.slane %v427, 1
      %v552 = vsel %vm482, %v549, %v551
      %v553 = vrot.slane %v428, 1
      %v554 = vrot.slane %v429, 1
      %v555 = vsel %vm482, %v553, %v554
      %v556 = vrot.slane %v430, 1
      %v557 = vsel %vm482, %v554, %v556
      %v558 = vrot.slane %v431, 1
      %v559 = vrot.slane %v432, 1
      %v560 = vsel %vm482, %v558, %v559
      %v561 = vrot.slane %v433, 1
      %v562 = vsel %vm482, %v559, %v561
      %v595 = vadd.f32 %v348, %v485
      %v596 = vadd.f32 %v349, %v487
      %v597 = vadd.f32 %v350, %v490
      %v598 = vadd.f32 %v351, %v492
      %v599 = vadd.f32 %v352, %v495
      %v600 = vadd.f32 %v353, %v497
      %v601 = vadd.f32 %v354, %v500
      %v602 = vadd.f32 %v355, %v502
      %v603 = vadd.f32 %v356, %v505
      %v604 = vadd.f32 %v357, %v507
      %v605 = vadd.f32 %v358, %v510
      %v606 = vadd.f32 %v359, %v512
      %v607 = vadd.f32 %v360, %v515
      %v608 = vadd.f32 %v361, %v517
      %v609 = vadd.f32 %v362, %v520
      %v610 = vadd.f32 %v363, %v522
      %v611 = vadd.f32 %v364, %v525
      %v612 = vadd.f32 %v365, %v527
      %v613 = vadd.f32 %v366, %v530
      %v614 = vadd.f32 %v367, %v532
      %v615 = vadd.f32 %v368, %v535
      %v616 = vadd.f32 %v369, %v537
      %v617 = vadd.f32 %v370, %v540
      %v618 = vadd.f32 %v371, %v542
      %v619 = vadd.f32 %v372, %v545
      %v620 = vadd.f32 %v373, %v547
      %v621 = vadd.f32 %v374, %v550
      %v622 = vadd.f32 %v375, %v552
      %v623 = vadd.f32 %v376, %v555
      %v624 = vadd.f32 %v377, %v557
      %v625 = vadd.f32 %v378, %v560
      %v626 = vadd.f32 %v379, %v562
      %v628 = vlaneseq
      %v629 = vshrl.u32 %v628, 7
      %v630 = vsub.s32 0, %v629
      %v631 = vrot.slane %v335, %v630
      %v633 = vmul.f32 %v279, %v631
      %v634 = vmul.f32 %v280, %v631
      %v635 = vmul.f32 %v281, %v631
      %v636 = vmul.f32 %v282, %v631
      %v637 = vmul.f32 %v283, %v631
      %v638 = vmul.f32 %v284, %v631
      %v639 = vmul.f32 %v285, %v631
      %v640 = vmul.f32 %v286, %v631
      %v641 = vmul.f32 %v287, %v631
      %v642 = vmul.f32 %v288, %v631
      %v643 = vmul.f32 %v289, %v631
      %v644 = vmul.f32 %v290, %v631
      %v645 = vmul.f32 %v291, %v631
      %v646 = vmul.f32 %v292, %v631
      %v647 = vmul.f32 %v293, %v631
      %v648 = vmul.f32 %v294, %v631
      %v649 = vmul.f32 %v295, %v631
      %v650 = vmul.f32 %v296, %v631
      %v651 = vmul.f32 %v297, %v631
      %v652 = vmul.f32 %v298, %v631
      %v653 = vmul.f32 %v299, %v631
      %v654 = vmul.f32 %v300, %v631
      %v655 = vmul.f32 %v301, %v631
      %v656 = vmul.f32 %v302, %v631
      %v657 = vmul.f32 %v303, %v631
      %v658 = vmul.f32 %v304, %v631
      %v659 = vmul.f32 %v305, %v631
      %v660 = vmul.f32 %v306, %v631
      %v661 = vmul.f32 %v307, %v631
      %v662 = vmul.f32 %v308, %v631
      %v663 = vmul.f32 %v309, %v631
      %v664 = vmul.f32 %v310, %v631
      %v665 = vmul.f32 %v311, %v631
      %v666 = vmul.f32 %v312, %v631
      %v667 = vmul.f32 %v313, %v631
      %v668 = vmul.f32 %v314, %v631
      %v669 = vmul.f32 %v315, %v631
      %v670 = vmul.f32 %v316, %v631
      %v671 = vmul.f32 %v317, %v631
      %v672 = vmul.f32 %v318, %v631
      %v673 = vmul.f32 %v319, %v631
      %v674 = vmul.f32 %v320, %v631
      %v675 = vmul.f32 %v321, %v631
      %v676 = vmul.f32 %v322, %v631
      %v677 = vmul.f32 %v323, %v631
      %v678 = vmul.f32 %v324, %v631
      %v679 = vmul.f32 %v325, %v631
      %v680 = vmul.f32 %v326, %v631
      %vm729 = vcmask 1045504
      %v730 = vrot.slane %v633, 2
      %v731 = vrot.slane %v634, 2
      %v732 = vsel %vm729, %v730, %v731
      %v733 = vrot.slane %v635, 2
      %v734 = vsel %vm729, %v731, %v733
      %v735 = vrot.slane %v636, 2
      %v736 = vrot.slane %v637, 2
      %v737 = vsel %vm729, %v735, %v736
      %v738 = vrot.slane %v638, 2
      %v739 = vsel %vm729, %v736, %v738
      %v740 = vrot.slane %v639, 2
      %v741 = vrot.slane %v640, 2
      %v742 = vsel %vm729, %v740, %v741
      %v743 = vrot.slane %v641, 2
      %v744 = vsel %vm729, %v741, %v743
      %v745 = vrot.slane %v642, 2
      %v746 = vrot.slane %v643, 2
      %v747 = vsel %vm729, %v745, %v746
      %v748 = vrot.slane %v644, 2
      %v749 = vsel %vm729, %v746, %v748
      %v750 = vrot.slane %v645, 2
      %v751 = vrot.slane %v646, 2
      %v752 = vsel %vm729, %v750, %v751
      %v753 = vrot.slane %v647, 2
      %v754 = vsel %vm729, %v751, %v753
      %v755 = vrot.slane %v648, 2
      %v756 = vrot.slane %v649, 2
      %v757 = vsel %vm729, %v755, %v756
      %v758 = vrot.slane %v650, 2
      %v759 = vsel %vm729, %v756, %v758
      %v760 = vrot.slane %v651, 2
      %v761 = vrot.slane %v652, 2
      %v762 = vsel %vm729, %v760, %v761
      %v763 = vrot.slane %v653, 2
      %v764 = vsel %vm729, %v761, %v763
      %v765 = vrot.slane %v654, 2
      %v766 = vrot.slane %v655, 2
      %v767 = vsel %vm729, %v765, %v766
      %v768 = vrot.slane %v656, 2
      %v769 = vsel %vm729, %v766, %v768
      %v770 = vrot.slane %v657, 2
      %v771 = vrot.slane %v658, 2
      %v772 = vsel %vm729, %v770, %v771
      %v773 = vrot.slane %v659, 2
      %v774 = vsel %vm729, %v771, %v773
      %v775 = vrot.slane %v660, 2
      %v776 = vrot.slane %v661, 2
      %v777 = vsel %vm729, %v775, %v776
      %v778 = vrot.slane %v662, 2
      %v779 = vsel %vm729, %v776, %v778
      %v780 = vrot.slane %v663, 2
      %v781 = vrot.slane %v664, 2
      %v782 = vsel %vm729, %v780, %v781
      %v783 = vrot.slane %v665, 2
      %v784 = vsel %vm729, %v781, %v783
      %v785 = vrot.slane %v666, 2
      %v786 = vrot.slane %v667, 2
      %v787 = vsel %vm729, %v785, %v786
      %v788 = vrot.slane %v668, 2
      %v789 = vsel %vm729, %v786, %v788
      %v790 = vrot.slane %v669, 2
      %v791 = vrot.slane %v670, 2
      %v792 = vsel %vm729, %v790, %v791
      %v793 = vrot.slane %v671, 2
      %v794 = vsel %vm729, %v791, %v793
      %v795 = vrot.slane %v672, 2
      %v796 = vrot.slane %v673, 2
      %v797 = vsel %vm729, %v795, %v796
      %v798 = vrot.slane %v674, 2
      %v799 = vsel %vm729, %v796, %v798
      %v800 = vrot.slane %v675, 2
      %v801 = vrot.slane %v676, 2
      %v802 = vsel %vm729, %v800, %v801
      %v803 = vrot.slane %v677, 2
      %v804 = vsel %vm729, %v801, %v803
      %v805 = vrot.slane %v678, 2
      %v806 = vrot.slane %v679, 2
      %v807 = vsel %vm729, %v805, %v806
      %v808 = vrot.slane %v680, 2
      %v809 = vsel %vm729, %v806, %v808
      %v842 = vadd.f32 %v595, %v732
      %v843 = vadd.f32 %v596, %v734
      %v844 = vadd.f32 %v597, %v737
      %v845 = vadd.f32 %v598, %v739
      %v846 = vadd.f32 %v599, %v742
      %v847 = vadd.f32 %v600, %v744
      %v848 = vadd.f32 %v601, %v747
      %v849 = vadd.f32 %v602, %v749
      %v850 = vadd.f32 %v603, %v752
      %v851 = vadd.f32 %v604, %v754
      %v852 = vadd.f32 %v605, %v757
      %v853 = vadd.f32 %v606, %v759
      %v854 = vadd.f32 %v607, %v762
      %v855 = vadd.f32 %v608, %v764
      %v856 = vadd.f32 %v609, %v767
      %v857 = vadd.f32 %v610, %v769
      %v858 = vadd.f32 %v611, %v772
      %v859 = vadd.f32 %v612, %v774
      %v860 = vadd.f32 %v613, %v777
      %v861 = vadd.f32 %v614, %v779
      %v862 = vadd.f32 %v615, %v782
      %v863 = vadd.f32 %v616, %v784
      %v864 = vadd.f32 %v617, %v787
      %v865 = vadd.f32 %v618, %v789
      %v866 = vadd.f32 %v619, %v792
      %v867 = vadd.f32 %v620, %v794
      %v868 = vadd.f32 %v621, %v797
      %v869 = vadd.f32 %v622, %v799
      %v870 = vadd.f32 %v623, %v802
      %v871 = vadd.f32 %v624, %v804
      %v872 = vadd.f32 %v625, %v807
      %v873 = vadd.f32 %v626, %v809
      %v875 = vlaneseq
      %v876 = vshrl.u32 %v875, 7
      %v877 = vsub.s32 0, %v876
      %v878 = vrot.slane %v336, %v877
      %v880 = vmul.f32 %v282, %v878
      %v881 = vmul.f32 %v283, %v878
      %v882 = vmul.f32 %v285, %v878
      %v883 = vmul.f32 %v286, %v878
      %v884 = vmul.f32 %v288, %v878
      %v885 = vmul.f32 %v289, %v878
      %v886 = vmul.f32 %v291, %v878
      %v887 = vmul.f32 %v292, %v878
      %v888 = vmul.f32 %v294, %v878
      %v889 = vmul.f32 %v295, %v878
      %v890 = vmul.f32 %v297, %v878
      %v891 = vmul.f32 %v298, %v878
      %v892 = vmul.f32 %v300, %v878
      %v893 = vmul.f32 %v301, %v878
      %v894 = vmul.f32 %v303, %v878
      %v895 = vmul.f32 %v304, %v878
      %v896 = vmul.f32 %v306, %v878
      %v897 = vmul.f32 %v307, %v878
      %v898 = vmul.f32 %v309, %v878
      %v899 = vmul.f32 %v310, %v878
      %v900 = vmul.f32 %v312, %v878
      %v901 = vmul.f32 %v313, %v878
      %v902 = vmul.f32 %v315, %v878
      %v903 = vmul.f32 %v316, %v878
      %v904 = vmul.f32 %v318, %v878
      %v905 = vmul.f32 %v319, %v878
      %v906 = vmul.f32 %v321, %v878
      %v907 = vmul.f32 %v322, %v878
      %v908 = vmul.f32 %v324, %v878
      %v909 = vmul.f32 %v325, %v878
      %v910 = vmul.f32 %v327, %v878
      %v911 = vmul.f32 %v328, %v878
      %v912 = vadd.f32 %v842, %v880
      %v913 = vadd.f32 %v843, %v881
      %v914 = vadd.f32 %v844, %v882
      %v915 = vadd.f32 %v845, %v883
      %v916 = vadd.f32 %v846, %v884
      %v917 = vadd.f32 %v847, %v885
      %v918 = vadd.f32 %v848, %v886
      %v919 = vadd.f32 %v849, %v887
      %v920 = vadd.f32 %v850, %v888
      %v921 = vadd.f32 %v851, %v889
      %v922 = vadd.f32 %v852, %v890
      %v923 = vadd.f32 %v853, %v891
      %v924 = vadd.f32 %v854, %v892
      %v925 = vadd.f32 %v855, %v893
      %v926 = vadd.f32 %v856, %v894
      %v927 = vadd.f32 %v857, %v895
      %v928 = vadd.f32 %v858, %v896
      %v929 = vadd.f32 %v859, %v897
      %v930 = vadd.f32 %v860, %v898
      %v931 = vadd.f32 %v861, %v899
      %v932 = vadd.f32 %v862, %v900
      %v933 = vadd.f32 %v863, %v901
      %v934 = vadd.f32 %v864, %v902
      %v935 = vadd.f32 %v865, %v903
      %v936 = vadd.f32 %v866, %v904
      %v937 = vadd.f32 %v867, %v905
      %v938 = vadd.f32 %v868, %v906
      %v939 = vadd.f32 %v869, %v907
      %v940 = vadd.f32 %v870, %v908
      %v941 = vadd.f32 %v871, %v909
      %v942 = vadd.f32 %v872, %v910
      %v943 = vadd.f32 %v873, %v911
      %v945 = vlaneseq
      %v946 = vshrl.u32 %v945, 7
      %v947 = vsub.s32 0, %v946
      %v948 = vrot.slane %v337, %v947
      %v950 = vmul.f32 %v282, %v948
      %v951 = vmul.f32 %v283, %v948
      %v952 = vmul.f32 %v284, %v948
      %v953 = vmul.f32 %v285, %v948
      %v954 = vmul.f32 %v286, %v948
      %v955 = vmul.f32 %v287, %v948
      %v956 = vmul.f32 %v288, %v948
      %v957 = vmul.f32 %v289, %v948
      %v958 = vmul.f32 %v290, %v948
      %v959 = vmul.f32 %v291, %v948
      %v960 = vmul.f32 %v292, %v948
      %v961 = vmul.f32 %v293, %v948
      %v962 = vmul.f32 %v294, %v948
      %v963 = vmul.f32 %v295, %v948
      %v964 = vmul.f32 %v296, %v948
      %v965 = vmul.f32 %v297, %v948
      %v966 = vmul.f32 %v298, %v948
      %v967 = vmul.f32 %v299, %v948
      %v968 = vmul.f32 %v300, %v948
      %v969 = vmul.f32 %v301, %v948
      %v970 = vmul.f32 %v302, %v948
      %v971 = vmul.f32 %v303, %v948
      %v972 = vmul.f32 %v304, %v948
      %v973 = vmul.f32 %v305, %v948
      %v974 = vmul.f32 %v306, %v948
      %v975 = vmul.f32 %v307, %v948
      %v976 = vmul.f32 %v308, %v948
      %v977 = vmul.f32 %v309, %v948
      %v978 = vmul.f32 %v310, %v948
      %v979 = vmul.f32 %v311, %v948
      %v980 = vmul.f32 %v312, %v948
      %v981 = vmul.f32 %v313, %v948
      %v982 = vmul.f32 %v314, %v948
      %v983 = vmul.f32 %v315, %v948
      %v984 = vmul.f32 %v316, %v948
      %v985 = vmul.f32 %v317, %v948
      %v986 = vmul.f32 %v318, %v948
      %v987 = vmul.f32 %v319, %v948
      %v988 = vmul.f32 %v320, %v948
      %v989 = vmul.f32 %v321, %v948
      %v990 = vmul.f32 %v322, %v948
      %v991 = vmul.f32 %v323, %v948
      %v992 = vmul.f32 %v324, %v948
      %v993 = vmul.f32 %v325, %v948
      %v994 = vmul.f32 %v326, %v948
      %v995 = vmul.f32 %v327, %v948
      %v996 = vmul.f32 %v328, %v948
      %v997 = vmul.f32 %v329, %v948
      %v1046 = vrot.slane %v950, 1
      %v1047 = vrot.slane %v951, 1
      %v1048 = vsel %vm482, %v1046, %v1047
      %v1049 = vrot.slane %v952, 1
      %v1050 = vsel %vm482, %v1047, %v1049
      %v1051 = vrot.slane %v953, 1
      %v1052 = vrot.slane %v954, 1
      %v1053 = vsel %vm482, %v1051, %v1052
      %v1054 = vrot.slane %v955, 1
      %v1055 = vsel %vm482, %v1052, %v1054
      %v1056 = vrot.slane %v956, 1
      %v1057 = vrot.slane %v957, 1
      %v1058 = vsel %vm482, %v1056, %v1057
      %v1059 = vrot.slane %v958, 1
      %v1060 = vsel %vm482, %v1057, %v1059
      %v1061 = vrot.slane %v959, 1
      %v1062 = vrot.slane %v960, 1
      %v1063 = vsel %vm482, %v1061, %v1062
      %v1064 = vrot.slane %v961, 1
      %v1065 = vsel %vm482, %v1062, %v1064
      %v1066 = vrot.slane %v962, 1
      %v1067 = vrot.slane %v963, 1
      %v1068 = vsel %vm482, %v1066, %v1067
      %v1069 = vrot.slane %v964, 1
      %v1070 = vsel %vm482, %v1067, %v1069
      %v1071 = vrot.slane %v965, 1
      %v1072 = vrot.slane %v966, 1
      %v1073 = vsel %vm482, %v1071, %v1072
      %v1074 = vrot.slane %v967, 1
      %v1075 = vsel %vm482, %v1072, %v1074
      %v1076 = vrot.slane %v968, 1
      %v1077 = vrot.slane %v969, 1
      %v1078 = vsel %vm482, %v1076, %v1077
      %v1079 = vrot.slane %v970, 1
      %v1080 = vsel %vm482, %v1077, %v1079
      %v1081 = vrot.slane %v971, 1
      %v1082 = vrot.slane %v972, 1
      %v1083 = vsel %vm482, %v1081, %v1082
      %v1084 = vrot.slane %v973, 1
      %v1085 = vsel %vm482, %v1082, %v1084
      %v1086 = vrot.slane %v974, 1
      %v1087 = vrot.slane %v975, 1
      %v1088 = vsel %vm482, %v1086, %v1087
      %v1089 = vrot.slane %v976, 1
      %v1090 = vsel %vm482, %v1087, %v1089
      %v1091 = vrot.slane %v977, 1
      %v1092 = vrot.slane %v978, 1
      %v1093 = vsel %vm482, %v1091, %v1092
      %v1094 = vrot.slane %v979, 1
      %v1095 = vsel %vm482, %v1092, %v1094
      %v1096 = vrot.slane %v980, 1
      %v1097 = vrot.slane %v981, 1
      %v1098 = vsel %vm482, %v1096, %v1097
      %v1099 = vrot.slane %v982, 1
      %v1100 = vsel %vm482, %v1097, %v1099
      %v1101 = vrot.slane %v983, 1
      %v1102 = vrot.slane %v984, 1
      %v1103 = vsel %vm482, %v1101, %v1102
      %v1104 = vrot.slane %v985, 1
      %v1105 = vsel %vm482, %v1102, %v1104
      %v1106 = vrot.slane %v986, 1
      %v1107 = vrot.slane %v987, 1
      %v1108 = vsel %vm482, %v1106, %v1107
      %v1109 = vrot.slane %v988, 1
      %v1110 = vsel %vm482, %v1107, %v1109
      %v1111 = vrot.slane %v989, 1
      %v1112 = vrot.slane %v990, 1
      %v1113 = vsel %vm482, %v1111, %v1112
      %v1114 = vrot.slane %v991, 1
      %v1115 = vsel %vm482, %v1112, %v1114
      %v1116 = vrot.slane %v992, 1
      %v1117 = vrot.slane %v993, 1
      %v1118 = vsel %vm482, %v1116, %v1117
      %v1119 = vrot.slane %v994, 1
      %v1120 = vsel %vm482, %v1117, %v1119
      %v1121 = vrot.slane %v995, 1
      %v1122 = vrot.slane %v996, 1
      %v1123 = vsel %vm482, %v1121, %v1122
      %v1124 = vrot.slane %v997, 1
      %v1125 = vsel %vm482, %v1122, %v1124
      %v1158 = vadd.f32 %v912, %v1048
      %v1159 = vadd.f32 %v913, %v1050
      %v1160 = vadd.f32 %v914, %v1053
      %v1161 = vadd.f32 %v915, %v1055
      %v1162 = vadd.f32 %v916, %v1058
      %v1163 = vadd.f32 %v917, %v1060
      %v1164 = vadd.f32 %v918, %v1063
      %v1165 = vadd.f32 %v919, %v1065
      %v1166 = vadd.f32 %v920, %v1068
      %v1167 = vadd.f32 %v921, %v1070
      %v1168 = vadd.f32 %v922, %v1073
      %v1169 = vadd.f32 %v923, %v1075
      %v1170 = vadd.f32 %v924, %v1078
      %v1171 = vadd.f32 %v925, %v1080
      %v1172 = vadd.f32 %v926, %v1083
      %v1173 = vadd.f32 %v927, %v1085
      %v1174 = vadd.f32 %v928, %v1088
      %v1175 = vadd.f32 %v929, %v1090
      %v1176 = vadd.f32 %v930, %v1093
      %v1177 = vadd.f32 %v931, %v1095
      %v1178 = vadd.f32 %v932, %v1098
      %v1179 = vadd.f32 %v933, %v1100
      %v1180 = vadd.f32 %v934, %v1103
      %v1181 = vadd.f32 %v935, %v1105
      %v1182 = vadd.f32 %v936, %v1108
      %v1183 = vadd.f32 %v937, %v1110
      %v1184 = vadd.f32 %v938, %v1113
      %v1185 = vadd.f32 %v939, %v1115
      %v1186 = vadd.f32 %v940, %v1118
      %v1187 = vadd.f32 %v941, %v1120
      %v1188 = vadd.f32 %v942, %v1123
      %v1189 = vadd.f32 %v943, %v1125
      %v1191 = vlaneseq
      %v1192 = vshrl.u32 %v1191, 7
      %v1193 = vsub.s32 0, %v1192
      %v1194 = vrot.slane %v338, %v1193
      %v1196 = vmul.f32 %v282, %v1194
      %v1197 = vmul.f32 %v283, %v1194
      %v1198 = vmul.f32 %v284, %v1194
      %v1199 = vmul.f32 %v285, %v1194
      %v1200 = vmul.f32 %v286, %v1194
      %v1201 = vmul.f32 %v287, %v1194
      %v1202 = vmul.f32 %v288, %v1194
      %v1203 = vmul.f32 %v289, %v1194
      %v1204 = vmul.f32 %v290, %v1194
      %v1205 = vmul.f32 %v291, %v1194
      %v1206 = vmul.f32 %v292, %v1194
      %v1207 = vmul.f32 %v293, %v1194
      %v1208 = vmul.f32 %v294, %v1194
      %v1209 = vmul.f32 %v295, %v1194
      %v1210 = vmul.f32 %v296, %v1194
      %v1211 = vmul.f32 %v297, %v1194
      %v1212 = vmul.f32 %v298, %v1194
      %v1213 = vmul.f32 %v299, %v1194
      %v1214 = vmul.f32 %v300, %v1194
      %v1215 = vmul.f32 %v301, %v1194
      %v1216 = vmul.f32 %v302, %v1194
      %v1217 = vmul.f32 %v303, %v1194
      %v1218 = vmul.f32 %v304, %v1194
      %v1219 = vmul.f32 %v305, %v1194
      %v1220 = vmul.f32 %v306, %v1194
      %v1221 = vmul.f32 %v307, %v1194
      %v1222 = vmul.f32 %v308, %v1194
      %v1223 = vmul.f32 %v309, %v1194
      %v1224 = vmul.f32 %v310, %v1194
      %v1225 = vmul.f32 %v311, %v1194
      %v1226 = vmul.f32 %v312, %v1194
      %v1227 = vmul.f32 %v313, %v1194
      %v1228 = vmul.f32 %v314, %v1194
      %v1229 = vmul.f32 %v315, %v1194
      %v1230 = vmul.f32 %v316, %v1194
      %v1231 = vmul.f32 %v317, %v1194
      %v1232 = vmul.f32 %v318, %v1194
      %v1233 = vmul.f32 %v319, %v1194
      %v1234 = vmul.f32 %v320, %v1194
      %v1235 = vmul.f32 %v321, %v1194
      %v1236 = vmul.f32 %v322, %v1194
      %v1237 = vmul.f32 %v323, %v1194
      %v1238 = vmul.f32 %v324, %v1194
      %v1239 = vmul.f32 %v325, %v1194
      %v1240 = vmul.f32 %v326, %v1194
      %v1241 = vmul.f32 %v327, %v1194
      %v1242 = vmul.f32 %v328, %v1194
      %v1243 = vmul.f32 %v329, %v1194
      %v1292 = vrot.slane %v1196, 2
      %v1293 = vrot.slane %v1197, 2
      %v1294 = vsel %vm729, %v1292, %v1293
      %v1295 = vrot.slane %v1198, 2
      %v1296 = vsel %vm729, %v1293, %v1295
      %v1297 = vrot.slane %v1199, 2
      %v1298 = vrot.slane %v1200, 2
      %v1299 = vsel %vm729, %v1297, %v1298
      %v1300 = vrot.slane %v1201, 2
      %v1301 = vsel %vm729, %v1298, %v1300
      %v1302 = vrot.slane %v1202, 2
      %v1303 = vrot.slane %v1203, 2
      %v1304 = vsel %vm729, %v1302, %v1303
      %v1305 = vrot.slane %v1204, 2
      %v1306 = vsel %vm729, %v1303, %v1305
      %v1307 = vrot.slane %v1205, 2
      %v1308 = vrot.slane %v1206, 2
      %v1309 = vsel %vm729, %v1307, %v1308
      %v1310 = vrot.slane %v1207, 2
      %v1311 = vsel %vm729, %v1308, %v1310
      %v1312 = vrot.slane %v1208, 2
      %v1313 = vrot.slane %v1209, 2
      %v1314 = vsel %vm729, %v1312, %v1313
      %v1315 = vrot.slane %v1210, 2
      %v1316 = vsel %vm729, %v1313, %v1315
      %v1317 = vrot.slane %v1211, 2
      %v1318 = vrot.slane %v1212, 2
      %v1319 = vsel %vm729, %v1317, %v1318
      %v1320 = vrot.slane %v1213, 2
      %v1321 = vsel %vm729, %v1318, %v1320
      %v1322 = vrot.slane %v1214, 2
      %v1323 = vrot.slane %v1215, 2
      %v1324 = vsel %vm729, %v1322, %v1323
      %v1325 = vrot.slane %v1216, 2
      %v1326 = vsel %vm729, %v1323, %v1325
      %v1327 = vrot.slane %v1217, 2
      %v1328 = vrot.slane %v1218, 2
      %v1329 = vsel %vm729, %v1327, %v1328
      %v1330 = vrot.slane %v1219, 2
      %v1331 = vsel %vm729, %v1328, %v1330
      %v1332 = vrot.slane %v1220, 2
      %v1333 = vrot.slane %v1221, 2
      %v1334 = vsel %vm729, %v1332, %v1333
      %v1335 = vrot.slane %v1222, 2
      %v1336 = vsel %vm729, %v1333, %v1335
      %v1337 = vrot.slane %v1223, 2
      %v1338 = vrot.slane %v1224, 2
      %v1339 = vsel %vm729, %v1337, %v1338
      %v1340 = vrot.slane %v1225, 2
      %v1341 = vsel %vm729, %v1338, %v1340
      %v1342 = vrot.slane %v1226, 2
      %v1343 = vrot.slane %v1227, 2
      %v1344 = vsel %vm729, %v1342, %v1343
      %v1345 = vrot.slane %v1228, 2
      %v1346 = vsel %vm729, %v1343, %v1345
      %v1347 = vrot.slane %v1229, 2
      %v1348 = vrot.slane %v1230, 2
      %v1349 = vsel %vm729, %v1347, %v1348
      %v1350 = vrot.slane %v1231, 2
      %v1351 = vsel %vm729, %v1348, %v1350
      %v1352 = vrot.slane %v1232, 2
      %v1353 = vrot.slane %v1233, 2
      %v1354 = vsel %vm729, %v1352, %v1353
      %v1355 = vrot.slane %v1234, 2
      %v1356 = vsel %vm729, %v1353, %v1355
      %v1357 = vrot.slane %v1235, 2
      %v1358 = vrot.slane %v1236, 2
      %v1359 = vsel %vm729, %v1357, %v1358
      %v1360 = vrot.slane %v1237, 2
      %v1361 = vsel %vm729, %v1358, %v1360
      %v1362 = vrot.slane %v1238, 2
      %v1363 = vrot.slane %v1239, 2
      %v1364 = vsel %vm729, %v1362, %v1363
      %v1365 = vrot.slane %v1240, 2
      %v1366 = vsel %vm729, %v1363, %v1365
      %v1367 = vrot.slane %v1241, 2
      %v1368 = vrot.slane %v1242, 2
      %v1369 = vsel %vm729, %v1367, %v1368
      %v1370 = vrot.slane %v1243, 2
      %v1371 = vsel %vm729, %v1368, %v1370
      %v1404 = vadd.f32 %v1158, %v1294
      %v1405 = vadd.f32 %v1159, %v1296
      %v1406 = vadd.f32 %v1160, %v1299
      %v1407 = vadd.f32 %v1161, %v1301
      %v1408 = vadd.f32 %v1162, %v1304
      %v1409 = vadd.f32 %v1163, %v1306
      %v1410 = vadd.f32 %v1164, %v1309
      %v1411 = vadd.f32 %v1165, %v1311
      %v1412 = vadd.f32 %v1166, %v1314
      %v1413 = vadd.f32 %v1167, %v1316
      %v1414 = vadd.f32 %v1168, %v1319
      %v1415 = vadd.f32 %v1169, %v1321
      %v1416 = vadd.f32 %v1170, %v1324
      %v1417 = vadd.f32 %v1171, %v1326
      %v1418 = vadd.f32 %v1172, %v1329
      %v1419 = vadd.f32 %v1173, %v1331
      %v1420 = vadd.f32 %v1174, %v1334
      %v1421 = vadd.f32 %v1175, %v1336
      %v1422 = vadd.f32 %v1176, %v1339
      %v1423 = vadd.f32 %v1177, %v1341
      %v1424 = vadd.f32 %v1178, %v1344
      %v1425 = vadd.f32 %v1179, %v1346
      %v1426 = vadd.f32 %v1180, %v1349
      %v1427 = vadd.f32 %v1181, %v1351
      %v1428 = vadd.f32 %v1182, %v1354
      %v1429 = vadd.f32 %v1183, %v1356
      %v1430 = vadd.f32 %v1184, %v1359
      %v1431 = vadd.f32 %v1185, %v1361
      %v1432 = vadd.f32 %v1186, %v1364
      %v1433 = vadd.f32 %v1187, %v1366
      %v1434 = vadd.f32 %v1188, %v1369
      %v1435 = vadd.f32 %v1189, %v1371
      %v1437 = vlaneseq
      %v1438 = vshrl.u32 %v1437, 7
      %v1439 = vsub.s32 0, %v1438
      %v1440 = vrot.slane %v339, %v1439
      %v1442 = vmul.f32 %v285, %v1440
      %v1443 = vmul.f32 %v286, %v1440
      %v1444 = vmul.f32 %v288, %v1440
      %v1445 = vmul.f32 %v289, %v1440
      %v1446 = vmul.f32 %v291, %v1440
      %v1447 = vmul.f32 %v292, %v1440
      %v1448 = vmul.f32 %v294, %v1440
      %v1449 = vmul.f32 %v295, %v1440
      %v1450 = vmul.f32 %v297, %v1440
      %v1451 = vmul.f32 %v298, %v1440
      %v1452 = vmul.f32 %v300, %v1440
      %v1453 = vmul.f32 %v301, %v1440
      %v1454 = vmul.f32 %v303, %v1440
      %v1455 = vmul.f32 %v304, %v1440
      %v1456 = vmul.f32 %v306, %v1440
      %v1457 = vmul.f32 %v307, %v1440
      %v1458 = vmul.f32 %v309, %v1440
      %v1459 = vmul.f32 %v310, %v1440
      %v1460 = vmul.f32 %v312, %v1440
      %v1461 = vmul.f32 %v313, %v1440
      %v1462 = vmul.f32 %v315, %v1440
      %v1463 = vmul.f32 %v316, %v1440
      %v1464 = vmul.f32 %v318, %v1440
      %v1465 = vmul.f32 %v319, %v1440
      %v1466 = vmul.f32 %v321, %v1440
      %v1467 = vmul.f32 %v322, %v1440
      %v1468 = vmul.f32 %v324, %v1440
      %v1469 = vmul.f32 %v325, %v1440
      %v1470 = vmul.f32 %v327, %v1440
      %v1471 = vmul.f32 %v328, %v1440
      %v1472 = vmul.f32 %v330, %v1440
      %v1473 = vmul.f32 %v331, %v1440
      %v1474 = vadd.f32 %v1404, %v1442
      %v1475 = vadd.f32 %v1405, %v1443
      %v1476 = vadd.f32 %v1406, %v1444
      %v1477 = vadd.f32 %v1407, %v1445
      %v1478 = vadd.f32 %v1408, %v1446
      %v1479 = vadd.f32 %v1409, %v1447
      %v1480 = vadd.f32 %v1410, %v1448
      %v1481 = vadd.f32 %v1411, %v1449
      %v1482 = vadd.f32 %v1412, %v1450
      %v1483 = vadd.f32 %v1413, %v1451
      %v1484 = vadd.f32 %v1414, %v1452
      %v1485 = vadd.f32 %v1415, %v1453
      %v1486 = vadd.f32 %v1416, %v1454
      %v1487 = vadd.f32 %v1417, %v1455
      %v1488 = vadd.f32 %v1418, %v1456
      %v1489 = vadd.f32 %v1419, %v1457
      %v1490 = vadd.f32 %v1420, %v1458
      %v1491 = vadd.f32 %v1421, %v1459
      %v1492 = vadd.f32 %v1422, %v1460
      %v1493 = vadd.f32 %v1423, %v1461
      %v1494 = vadd.f32 %v1424, %v1462
      %v1495 = vadd.f32 %v1425, %v1463
      %v1496 = vadd.f32 %v1426, %v1464
      %v1497 = vadd.f32 %v1427, %v1465
      %v1498 = vadd.f32 %v1428, %v1466
      %v1499 = vadd.f32 %v1429, %v1467
      %v1500 = vadd.f32 %v1430, %v1468
      %v1501 = vadd.f32 %v1431, %v1469
      %v1502 = vadd.f32 %v1432, %v1470
      %v1503 = vadd.f32 %v1433, %v1471
      %v1504 = vadd.f32 %v1434, %v1472
      %v1505 = vadd.f32 %v1435, %v1473
      %v1507 = vlaneseq
      %v1508 = vshrl.u32 %v1507, 7
      %v1509 = vsub.s32 0, %v1508
      %v1510 = vrot.slane %v340, %v1509
      %v1512 = vmul.f32 %v285, %v1510
      %v1513 = vmul.f32 %v286, %v1510
      %v1514 = vmul.f32 %v287, %v1510
      %v1515 = vmul.f32 %v288, %v1510
      %v1516 = vmul.f32 %v289, %v1510
      %v1517 = vmul.f32 %v290, %v1510
      %v1518 = vmul.f32 %v291, %v1510
      %v1519 = vmul.f32 %v292, %v1510
      %v1520 = vmul.f32 %v293, %v1510
      %v1521 = vmul.f32 %v294, %v1510
      %v1522 = vmul.f32 %v295, %v1510
      %v1523 = vmul.f32 %v296, %v1510
      %v1524 = vmul.f32 %v297, %v1510
      %v1525 = vmul.f32 %v298, %v1510
      %v1526 = vmul.f32 %v299, %v1510
      %v1527 = vmul.f32 %v300, %v1510
      %v1528 = vmul.f32 %v301, %v1510
      %v1529 = vmul.f32 %v302, %v1510
      %v1530 = vmul.f32 %v303, %v1510
      %v1531 = vmul.f32 %v304, %v1510
      %v1532 = vmul.f32 %v305, %v1510
      %v1533 = vmul.f32 %v306, %v1510
      %v1534 = vmul.f32 %v307, %v1510
      %v1535 = vmul.f32 %v308, %v1510
      %v1536 = vmul.f32 %v309, %v1510
      %v1537 = vmul.f32 %v310, %v1510
      %v1538 = vmul.f32 %v311, %v1510
      %v1539 = vmul.f32 %v312, %v1510
      %v1540 = vmul.f32 %v313, %v1510
      %v1541 = vmul.f32 %v314, %v1510
      %v1542 = vmul.f32 %v315, %v1510
      %v1543 = vmul.f32 %v316, %v1510
      %v1544 = vmul.f32 %v317, %v1510
      %v1545 = vmul.f32 %v318, %v1510
      %v1546 = vmul.f32 %v319, %v1510
      %v1547 = vmul.f32 %v320, %v1510
      %v1548 = vmul.f32 %v321, %v1510
      %v1549 = vmul.f32 %v322, %v1510
      %v1550 = vmul.f32 %v323, %v1510
      %v1551 = vmul.f32 %v324, %v1510
      %v1552 = vmul.f32 %v325, %v1510
      %v1553 = vmul.f32 %v326, %v1510
      %v1554 = vmul.f32 %v327, %v1510
      %v1555 = vmul.f32 %v328, %v1510
      %v1556 = vmul.f32 %v329, %v1510
      %v1557 = vmul.f32 %v330, %v1510
      %v1558 = vmul.f32 %v331, %v1510
      %v1559 = vmul.f32 %v332, %v1510
      %v1608 = vrot.slane %v1512, 1
      %v1609 = vrot.slane %v1513, 1
      %v1610 = vsel %vm482, %v1608, %v1609
      %v1611 = vrot.slane %v1514, 1
      %v1612 = vsel %vm482, %v1609, %v1611
      %v1613 = vrot.slane %v1515, 1
      %v1614 = vrot.slane %v1516, 1
      %v1615 = vsel %vm482, %v1613, %v1614
      %v1616 = vrot.slane %v1517, 1
      %v1617 = vsel %vm482, %v1614, %v1616
      %v1618 = vrot.slane %v1518, 1
      %v1619 = vrot.slane %v1519, 1
      %v1620 = vsel %vm482, %v1618, %v1619
      %v1621 = vrot.slane %v1520, 1
      %v1622 = vsel %vm482, %v1619, %v1621
      %v1623 = vrot.slane %v1521, 1
      %v1624 = vrot.slane %v1522, 1
      %v1625 = vsel %vm482, %v1623, %v1624
      %v1626 = vrot.slane %v1523, 1
      %v1627 = vsel %vm482, %v1624, %v1626
      %v1628 = vrot.slane %v1524, 1
      %v1629 = vrot.slane %v1525, 1
      %v1630 = vsel %vm482, %v1628, %v1629
      %v1631 = vrot.slane %v1526, 1
      %v1632 = vsel %vm482, %v1629, %v1631
      %v1633 = vrot.slane %v1527, 1
      %v1634 = vrot.slane %v1528, 1
      %v1635 = vsel %vm482, %v1633, %v1634
      %v1636 = vrot.slane %v1529, 1
      %v1637 = vsel %vm482, %v1634, %v1636
      %v1638 = vrot.slane %v1530, 1
      %v1639 = vrot.slane %v1531, 1
      %v1640 = vsel %vm482, %v1638, %v1639
      %v1641 = vrot.slane %v1532, 1
      %v1642 = vsel %vm482, %v1639, %v1641
      %v1643 = vrot.slane %v1533, 1
      %v1644 = vrot.slane %v1534, 1
      %v1645 = vsel %vm482, %v1643, %v1644
      %v1646 = vrot.slane %v1535, 1
      %v1647 = vsel %vm482, %v1644, %v1646
      %v1648 = vrot.slane %v1536, 1
      %v1649 = vrot.slane %v1537, 1
      %v1650 = vsel %vm482, %v1648, %v1649
      %v1651 = vrot.slane %v1538, 1
      %v1652 = vsel %vm482, %v1649, %v1651
      %v1653 = vrot.slane %v1539, 1
      %v1654 = vrot.slane %v1540, 1
      %v1655 = vsel %vm482, %v1653, %v1654
      %v1656 = vrot.slane %v1541, 1
      %v1657 = vsel %vm482, %v1654, %v1656
      %v1658 = vrot.slane %v1542, 1
      %v1659 = vrot.slane %v1543, 1
      %v1660 = vsel %vm482, %v1658, %v1659
      %v1661 = vrot.slane %v1544, 1
      %v1662 = vsel %vm482, %v1659, %v1661
      %v1663 = vrot.slane %v1545, 1
      %v1664 = vrot.slane %v1546, 1
      %v1665 = vsel %vm482, %v1663, %v1664
      %v1666 = vrot.slane %v1547, 1
      %v1667 = vsel %vm482, %v1664, %v1666
      %v1668 = vrot.slane %v1548, 1
      %v1669 = vrot.slane %v1549, 1
      %v1670 = vsel %vm482, %v1668, %v1669
      %v1671 = vrot.slane %v1550, 1
      %v1672 = vsel %vm482, %v1669, %v1671
      %v1673 = vrot.slane %v1551, 1
      %v1674 = vrot.slane %v1552, 1
      %v1675 = vsel %vm482, %v1673, %v1674
      %v1676 = vrot.slane %v1553, 1
      %v1677 = vsel %vm482, %v1674, %v1676
      %v1678 = vrot.slane %v1554, 1
      %v1679 = vrot.slane %v1555, 1
      %v1680 = vsel %vm482, %v1678, %v1679
      %v1681 = vrot.slane %v1556, 1
      %v1682 = vsel %vm482, %v1679, %v1681
      %v1683 = vrot.slane %v1557, 1
      %v1684 = vrot.slane %v1558, 1
      %v1685 = vsel %vm482, %v1683, %v1684
      %v1686 = vrot.slane %v1559, 1
      %v1687 = vsel %vm482, %v1684, %v1686
      %v1720 = vadd.f32 %v1474, %v1610
      %v1721 = vadd.f32 %v1475, %v1612
      %v1722 = vadd.f32 %v1476, %v1615
      %v1723 = vadd.f32 %v1477, %v1617
      %v1724 = vadd.f32 %v1478, %v1620
      %v1725 = vadd.f32 %v1479, %v1622
      %v1726 = vadd.f32 %v1480, %v1625
      %v1727 = vadd.f32 %v1481, %v1627
      %v1728 = vadd.f32 %v1482, %v1630
      %v1729 = vadd.f32 %v1483, %v1632
      %v1730 = vadd.f32 %v1484, %v1635
      %v1731 = vadd.f32 %v1485, %v1637
      %v1732 = vadd.f32 %v1486, %v1640
      %v1733 = vadd.f32 %v1487, %v1642
      %v1734 = vadd.f32 %v1488, %v1645
      %v1735 = vadd.f32 %v1489, %v1647
      %v1736 = vadd.f32 %v1490, %v1650
      %v1737 = vadd.f32 %v1491, %v1652
      %v1738 = vadd.f32 %v1492, %v1655
      %v1739 = vadd.f32 %v1493, %v1657
      %v1740 = vadd.f32 %v1494, %v1660
      %v1741 = vadd.f32 %v1495, %v1662
      %v1742 = vadd.f32 %v1496, %v1665
      %v1743 = vadd.f32 %v1497, %v1667
      %v1744 = vadd.f32 %v1498, %v1670
      %v1745 = vadd.f32 %v1499, %v1672
      %v1746 = vadd.f32 %v1500, %v1675
      %v1747 = vadd.f32 %v1501, %v1677
      %v1748 = vadd.f32 %v1502, %v1680
      %v1749 = vadd.f32 %v1503, %v1682
      %v1750 = vadd.f32 %v1504, %v1685
      %v1751 = vadd.f32 %v1505, %v1687
      %v1753 = vlaneseq
      %v1754 = vshrl.u32 %v1753, 7
      %v1755 = vsub.s32 0, %v1754
      %v1756 = vrot.slane %v341, %v1755
      %v1758 = vmul.f32 %v285, %v1756
      %v1759 = vmul.f32 %v286, %v1756
      %v1760 = vmul.f32 %v287, %v1756
      %v1761 = vmul.f32 %v288, %v1756
      %v1762 = vmul.f32 %v289, %v1756
      %v1763 = vmul.f32 %v290, %v1756
      %v1764 = vmul.f32 %v291, %v1756
      %v1765 = vmul.f32 %v292, %v1756
      %v1766 = vmul.f32 %v293, %v1756
      %v1767 = vmul.f32 %v294, %v1756
      %v1768 = vmul.f32 %v295, %v1756
      %v1769 = vmul.f32 %v296, %v1756
      %v1770 = vmul.f32 %v297, %v1756
      %v1771 = vmul.f32 %v298, %v1756
      %v1772 = vmul.f32 %v299, %v1756
      %v1773 = vmul.f32 %v300, %v1756
      %v1774 = vmul.f32 %v301, %v1756
      %v1775 = vmul.f32 %v302, %v1756
      %v1776 = vmul.f32 %v303, %v1756
      %v1777 = vmul.f32 %v304, %v1756
      %v1778 = vmul.f32 %v305, %v1756
      %v1779 = vmul.f32 %v306, %v1756
      %v1780 = vmul.f32 %v307, %v1756
      %v1781 = vmul.f32 %v308, %v1756
      %v1782 = vmul.f32 %v309, %v1756
      %v1783 = vmul.f32 %v310, %v1756
      %v1784 = vmul.f32 %v311, %v1756
      %v1785 = vmul.f32 %v312, %v1756
      %v1786 = vmul.f32 %v313, %v1756
      %v1787 = vmul.f32 %v314, %v1756
      %v1788 = vmul.f32 %v315, %v1756
      %v1789 = vmul.f32 %v316, %v1756
      %v1790 = vmul.f32 %v317, %v1756
      %v1791 = vmul.f32 %v318, %v1756
      %v1792 = vmul.f32 %v319, %v1756
      %v1793 = vmul.f32 %v320, %v1756
      %v1794 = vmul.f32 %v321, %v1756
      %v1795 = vmul.f32 %v322, %v1756
      %v1796 = vmul.f32 %v323, %v1756
      %v1797 = vmul.f32 %v324, %v1756
      %v1798 = vmul.f32 %v325, %v1756
      %v1799 = vmul.f32 %v326, %v1756
      %v1800 = vmul.f32 %v327, %v1756
      %v1801 = vmul.f32 %v328, %v1756
      %v1802 = vmul.f32 %v329, %v1756
      %v1803 = vmul.f32 %v330, %v1756
      %v1804 = vmul.f32 %v331, %v1756
      %v1805 = vmul.f32 %v332, %v1756
      %v1854 = vrot.slane %v1758, 2
      %v1855 = vrot.slane %v1759, 2
      %v1856 = vsel %vm729, %v1854, %v1855
      %v1857 = vrot.slane %v1760, 2
      %v1858 = vsel %vm729, %v1855, %v1857
      %v1859 = vrot.slane %v1761, 2
      %v1860 = vrot.slane %v1762, 2
      %v1861 = vsel %vm729, %v1859, %v1860
      %v1862 = vrot.slane %v1763, 2
      %v1863 = vsel %vm729, %v1860, %v1862
      %v1864 = vrot.slane %v1764, 2
      %v1865 = vrot.slane %v1765, 2
      %v1866 = vsel %vm729, %v1864, %v1865
      %v1867 = vrot.slane %v1766, 2
      %v1868 = vsel %vm729, %v1865, %v1867
      %v1869 = vrot.slane %v1767, 2
      %v1870 = vrot.slane %v1768, 2
      %v1871 = vsel %vm729, %v1869, %v1870
      %v1872 = vrot.slane %v1769, 2
      %v1873 = vsel %vm729, %v1870, %v1872
      %v1874 = vrot.slane %v1770, 2
      %v1875 = vrot.slane %v1771, 2
      %v1876 = vsel %vm729, %v1874, %v1875
      %v1877 = vrot.slane %v1772, 2
      %v1878 = vsel %vm729, %v1875, %v1877
      %v1879 = vrot.slane %v1773, 2
      %v1880 = vrot.slane %v1774, 2
      %v1881 = vsel %vm729, %v1879, %v1880
      %v1882 = vrot.slane %v1775, 2
      %v1883 = vsel %vm729, %v1880, %v1882
      %v1884 = vrot.slane %v1776, 2
      %v1885 = vrot.slane %v1777, 2
      %v1886 = vsel %vm729, %v1884, %v1885
      %v1887 = vrot.slane %v1778, 2
      %v1888 = vsel %vm729, %v1885, %v1887
      %v1889 = vrot.slane %v1779, 2
      %v1890 = vrot.slane %v1780, 2
      %v1891 = vsel %vm729, %v1889, %v1890
      %v1892 = vrot.slane %v1781, 2
      %v1893 = vsel %vm729, %v1890, %v1892
      %v1894 = vrot.slane %v1782, 2
      %v1895 = vrot.slane %v1783, 2
      %v1896 = vsel %vm729, %v1894, %v1895
      %v1897 = vrot.slane %v1784, 2
      %v1898 = vsel %vm729, %v1895, %v1897
      %v1899 = vrot.slane %v1785, 2
      %v1900 = vrot.slane %v1786, 2
      %v1901 = vsel %vm729, %v1899, %v1900
      %v1902 = vrot.slane %v1787, 2
      %v1903 = vsel %vm729, %v1900, %v1902
      %v1904 = vrot.slane %v1788, 2
      %v1905 = vrot.slane %v1789, 2
      %v1906 = vsel %vm729, %v1904, %v1905
      %v1907 = vrot.slane %v1790, 2
      %v1908 = vsel %vm729, %v1905, %v1907
      %v1909 = vrot.slane %v1791, 2
      %v1910 = vrot.slane %v1792, 2
      %v1911 = vsel %vm729, %v1909, %v1910
      %v1912 = vrot.slane %v1793, 2
      %v1913 = vsel %vm729, %v1910, %v1912
      %v1914 = vrot.slane %v1794, 2
      %v1915 = vrot.slane %v1795, 2
      %v1916 = vsel %vm729, %v1914, %v1915
      %v1917 = vrot.slane %v1796, 2
      %v1918 = vsel %vm729, %v1915, %v1917
      %v1919 = vrot.slane %v1797, 2
      %v1920 = vrot.slane %v1798, 2
      %v1921 = vsel %vm729, %v1919, %v1920
      %v1922 = vrot.slane %v1799, 2
      %v1923 = vsel %vm729, %v1920, %v1922
      %v1924 = vrot.slane %v1800, 2
      %v1925 = vrot.slane %v1801, 2
      %v1926 = vsel %vm729, %v1924, %v1925
      %v1927 = vrot.slane %v1802, 2
      %v1928 = vsel %vm729, %v1925, %v1927
      %v1929 = vrot.slane %v1803, 2
      %v1930 = vrot.slane %v1804, 2
      %v1931 = vsel %vm729, %v1929, %v1930
      %v1932 = vrot.slane %v1805, 2
      %v1933 = vsel %vm729, %v1930, %v1932
      %v1966 = vadd.f32 %v1720, %v1856
      %v1967 = vadd.f32 %v1721, %v1858
      %v1968 = vadd.f32 %v1722, %v1861
      %v1969 = vadd.f32 %v1723, %v1863
      %v1970 = vadd.f32 %v1724, %v1866
      %v1971 = vadd.f32 %v1725, %v1868
      %v1972 = vadd.f32 %v1726, %v1871
      %v1973 = vadd.f32 %v1727, %v1873
      %v1974 = vadd.f32 %v1728, %v1876
      %v1975 = vadd.f32 %v1729, %v1878
      %v1976 = vadd.f32 %v1730, %v1881
      %v1977 = vadd.f32 %v1731, %v1883
      %v1978 = vadd.f32 %v1732, %v1886
      %v1979 = vadd.f32 %v1733, %v1888
      %v1980 = vadd.f32 %v1734, %v1891
      %v1981 = vadd.f32 %v1735, %v1893
      %v1982 = vadd.f32 %v1736, %v1896
      %v1983 = vadd.f32 %v1737, %v1898
      %v1984 = vadd.f32 %v1738, %v1901
      %v1985 = vadd.f32 %v1739, %v1903
      %v1986 = vadd.f32 %v1740, %v1906
      %v1987 = vadd.f32 %v1741, %v1908
      %v1988 = vadd.f32 %v1742, %v1911
      %v1989 = vadd.f32 %v1743, %v1913
      %v1990 = vadd.f32 %v1744, %v1916
      %v1991 = vadd.f32 %v1745, %v1918
      %v1992 = vadd.f32 %v1746, %v1921
      %v1993 = vadd.f32 %v1747, %v1923
      %v1994 = vadd.f32 %v1748, %v1926
      %v1995 = vadd.f32 %v1749, %v1928
      %v1996 = vadd.f32 %v1750, %v1931
      %v1997 = vadd.f32 %v1751, %v1933
      %v1998 = vld [vmem:[%s2] sm:$0xf]
      %vm1999 = vcmask 31744
      %v2001 = vsel %vm1999, %v1966, 0
      %v2004 = vsel %vm1999, %v1967, 0
      %v2007 = vsel %vm1999, %v1968, 0
      %v2010 = vsel %vm1999, %v1969, 0
      %v2013 = vsel %vm1999, %v1970, 0
      %v2016 = vsel %vm1999, %v1971, 0
      %v2019 = vsel %vm1999, %v1972, 0
      %v2022 = vsel %vm1999, %v1973, 0
      %v2025 = vsel %vm1999, %v1974, 0
      %v2028 = vsel %vm1999, %v1975, 0
      %v2031 = vsel %vm1999, %v1976, 0
      %v2034 = vsel %vm1999, %v1977, 0
      %v2037 = vsel %vm1999, %v1978, 0
      %v2040 = vsel %vm1999, %v1979, 0
      %v2043 = vsel %vm1999, %v1980, 0
      %v2046 = vsel %vm1999, %v1981, 0
      %v2049 = vsel %vm1999, %v1982, 0
      %v2052 = vsel %vm1999, %v1983, 0
      %v2055 = vsel %vm1999, %v1984, 0
      %v2058 = vsel %vm1999, %v1985, 0
      %v2061 = vsel %vm1999, %v1986, 0
      %v2064 = vsel %vm1999, %v1987, 0
      %v2067 = vsel %vm1999, %v1988, 0
      %v2070 = vsel %vm1999, %v1989, 0
      %v2073 = vsel %vm1999, %v1990, 0
      %v2076 = vsel %vm1999, %v1991, 0
      %v2079 = vsel %vm1999, %v1992, 0
      %v2082 = vsel %vm1999, %v1993, 0
      %v2085 = vsel %vm1999, %v1994, 0
      %v2088 = vsel %vm1999, %v1995, 0
      %v2091 = vsel %vm1999, %v1996, 0
      %v2094 = vsel %vm1999, %v1997, 0
      %vm2096 = vcmask 1043456
      %v2098 = vsel %vm2096, %v1998, 0
      %2100 = vmatprep.subr.mxu0 0.0
      %2101 = vmatpush1.msra.mxu0 %v2098
      %2102 = vmatprep.subr.mxu0 0.0
      %2103 = vmatpush1.msra.mxu0 0.0
      %2104 = vmatprep.subr.mxu0 0.0
      %2105 = vmatpush1.msra.mxu0 0.0
      %2106 = vmatprep.subr.mxu0 0.0
      %2107 = vmatpush1.msra.mxu0 0.0
      %2108 = vmatprep.subr.mxu0 0.0
      %2109 = vmatpush1.msra.mxu0 0.0
      %2110 = vmatprep.subr.mxu0 0.0
      %2111 = vmatpush1.msra.mxu0 0.0
      %2112 = vmatprep.subr.mxu0 0.0
      %2113 = vmatpush1.msra.mxu0 0.0
      %2114 = vmatprep.subr.mxu0 0.0
      %2115 = vmatpush1.msra.mxu0 0.0
      %2116 = vmatprep.subr.mxu0 0.0
      %2117 = vmatpush1.msra.mxu0 0.0
      %2118 = vmatprep.subr.mxu0 0.0
      %2119 = vmatpush1.msra.mxu0 0.0
      %2120 = vmatprep.subr.mxu0 0.0
      %2121 = vmatpush1.msra.mxu0 0.0
      %2122 = vmatprep.subr.mxu0 0.0
      %2123 = vmatpush1.msra.mxu0 0.0
      %2124 = vmatprep.subr.mxu0 0.0
      %2125 = vmatpush1.msra.mxu0 0.0
      %2126 = vmatprep.subr.mxu0 0.0
      %2127 = vmatpush1.msra.mxu0 0.0
      %2128 = vmatprep.subr.mxu0 0.0
      %2129 = vmatpush1.msra.mxu0 0.0
      %2130 = vmatprep.subr.mxu0 0.0
      %2131 = vmatpush1.msra.mxu0 0.0
      %2132 = vmatprep.subr.mxu0 0.0
      %2133 = vmatpush1.msra.mxu0 0.0
      %2134 = vmatprep.subr.mxu0 0.0
      %2135 = vmatpush1.msra.mxu0 0.0
      %2136 = vmatprep.subr.mxu0 0.0
      %2137 = vmatpush1.msra.mxu0 0.0
      %2138 = vmatprep.subr.mxu0 0.0
      %2139 = vmatpush1.msra.mxu0 0.0
      %2140 = vmatprep.subr.mxu0 0.0
      %2141 = vmatpush1.msra.mxu0 0.0
      %2142 = vmatprep.subr.mxu0 0.0
      %2143 = vmatpush1.msra.mxu0 0.0
      %2144 = vmatprep.subr.mxu0 0.0
      %2145 = vmatpush1.msra.mxu0 0.0
      %2146 = vmatprep.subr.mxu0 0.0
      %2147 = vmatpush1.msra.mxu0 0.0
      %2148 = vmatprep.subr.mxu0 0.0
      %2149 = vmatpush1.msra.mxu0 0.0
      %2150 = vmatprep.subr.mxu0 0.0
      %2151 = vmatpush1.msra.mxu0 0.0
      %2152 = vmatprep.subr.mxu0 0.0
      %2153 = vmatpush1.msra.mxu0 0.0
      %2154 = vmatprep.subr.mxu0 0.0
      %2155 = vmatpush1.msra.mxu0 0.0
      %2156 = vmatprep.subr.mxu0 0.0
      %2157 = vmatpush1.msra.mxu0 0.0
      %2158 = vmatprep.subr.mxu0 0.0
      %2159 = vmatpush1.msra.mxu0 0.0
      %2160 = vmatprep.subr.mxu0 0.0
      %2161 = vmatpush1.msra.mxu0 0.0
      %2162 = vmatprep.subr.mxu0 0.0
      %2163 = vmatpush1.msra.mxu0 0.0
      %2164 = vmatprep.mubr.f32.mxu0 0.0
      %2165 = vmatmul.mubr.f32.gmra.mrb[0].mxu0 %v2001
      %v2166 = vpop.f32.mrb[0].mxu0
      %v2167 = vadd.f32 0.0, %v2166
      %v2168 = vpop.f32.mrb[0].mxu0
      %2169 = vmatprep.mubr.f32.mxu0 0.0
      %2170 = vmatmul.mubr.f32.gmra.mrb[0].mxu0 %v2004
      %v2171 = vpop.f32.mrb[0].mxu0
      %v2172 = vadd.f32 0.0, %v2171
      %v2173 = vpop.f32.mrb[0].mxu0
      %2174 = vmatprep.mubr.f32.mxu0 0.0
      %2175 = vmatmul.mubr.f32.gmra.mrb[0].mxu0 %v2007
      %v2176 = vpop.f32.mrb[0].mxu0
      %v2177 = vadd.f32 0.0, %v2176
      %v2178 = vpop.f32.mrb[0].mxu0
      %2179 = vmatprep.mubr.f32.mxu0 0.0
      %2180 = vmatmul.mubr.f32.gmra.mrb[0].mxu0 %v2010
      %v2181 = vpop.f32.mrb[0].mxu0
      %v2182 = vadd.f32 0.0, %v2181
      %v2183 = vpop.f32.mrb[0].mxu0
      %2184 = vmatprep.mubr.f32.mxu0 0.0
      %2185 = vmatmul.mubr.f32.gmra.mrb[0].mxu0 %v2013
      %v2186 = vpop.f32.mrb[0].mxu0
      %v2187 = vadd.f32 0.0, %v2186
      %v2188 = vpop.f32.mrb[0].mxu0
      %2189 = vmatprep.mubr.f32.mxu0 0.0
      %2190 = vmatmul.mubr.f32.gmra.mrb[0].mxu0 %v2016
      %v2191 = vpop.f32.mrb[0].mxu0
      %v2192 = vadd.f32 0.0, %v2191
      %v2193 = vpop.f32.mrb[0].mxu0
      %2194 = vmatprep.mubr.f32.mxu0 0.0
      %2195 = vmatmul.mubr.f32.gmra.mrb[0].mxu0 %v2019
      %v2196 = vpop.f32.mrb[0].mxu0
      %v2197 = vadd.f32 0.0, %v2196
      %v2198 = vpop.f32.mrb[0].mxu0
      %2199 = vmatprep.mubr.f32.mxu0 0.0
      %2200 = vmatmul.mubr.f32.gmra.mrb[0].mxu0 %v2022
      %v2201 = vpop.f32.mrb[0].mxu0
      %v2202 = vadd.f32 0.0, %v2201
      %v2203 = vpop.f32.mrb[0].mxu0
      %2204 = vmatprep.mubr.f32.mxu0 0.0
      %2205 = vmatmul.mubr.f32.gmra.mrb[0].mxu0 %v2025
      %v2206 = vpop.f32.mrb[0].mxu0
      %v2207 = vadd.f32 0.0, %v2206
      %v2208 = vpop.f32.mrb[0].mxu0
      %2209 = vmatprep.mubr.f32.mxu0 0.0
      %2210 = vmatmul.mubr.f32.gmra.mrb[0].mxu0 %v2028
      %v2211 = vpop.f32.mrb[0].mxu0
      %v2212 = vadd.f32 0.0, %v2211
      %v2213 = vpop.f32.mrb[0].mxu0
      %2214 = vmatprep.mubr.f32.mxu0 0.0
      %2215 = vmatmul.mubr.f32.gmra.mrb[0].mxu0 %v2031
      %v2216 = vpop.f32.mrb[0].mxu0
      %v2217 = vadd.f32 0.0, %v2216
      %v2218 = vpop.f32.mrb[0].mxu0
      %2219 = vmatprep.mubr.f32.mxu0 0.0
      %2220 = vmatmul.mubr.f32.gmra.mrb[0].mxu0 %v2034
      %v2221 = vpop.f32.mrb[0].mxu0
      %v2222 = vadd.f32 0.0, %v2221
      %v2223 = vpop.f32.mrb[0].mxu0
      %2224 = vmatprep.mubr.f32.mxu0 0.0
      %2225 = vmatmul.mubr.f32.gmra.mrb[0].mxu0 %v2037
      %v2226 = vpop.f32.mrb[0].mxu0
      %v2227 = vadd.f32 0.0, %v2226
      %v2228 = vpop.f32.mrb[0].mxu0
      %2229 = vmatprep.mubr.f32.mxu0 0.0
      %2230 = vmatmul.mubr.f32.gmra.mrb[0].mxu0 %v2040
      %v2231 = vpop.f32.mrb[0].mxu0
      %v2232 = vadd.f32 0.0, %v2231
      %v2233 = vpop.f32.mrb[0].mxu0
      %2234 = vmatprep.mubr.f32.mxu0 0.0
      %2235 = vmatmul.mubr.f32.gmra.mrb[0].mxu0 %v2043
      %v2236 = vpop.f32.mrb[0].mxu0
      %v2237 = vadd.f32 0.0, %v2236
      %v2238 = vpop.f32.mrb[0].mxu0
      %2239 = vmatprep.mubr.f32.mxu0 0.0
      %2240 = vmatmul.mubr.f32.gmra.mrb[0].mxu0 %v2046
      %v2241 = vpop.f32.mrb[0].mxu0
      %v2242 = vadd.f32 0.0, %v2241
      %v2243 = vpop.f32.mrb[0].mxu0
      %2244 = vmatprep.mubr.f32.mxu0 0.0
      %2245 = vmatmul.mubr.f32.gmra.mrb[0].mxu0 %v2049
      %v2246 = vpop.f32.mrb[0].mxu0
      %v2247 = vadd.f32 0.0, %v2246
      %v2248 = vpop.f32.mrb[0].mxu0
      %2249 = vmatprep.mubr.f32.mxu0 0.0
      %2250 = vmatmul.mubr.f32.gmra.mrb[0].mxu0 %v2052
      %v2251 = vpop.f32.mrb[0].mxu0
      %v2252 = vadd.f32 0.0, %v2251
      %v2253 = vpop.f32.mrb[0].mxu0
      %2254 = vmatprep.mubr.f32.mxu0 0.0
      %2255 = vmatmul.mubr.f32.gmra.mrb[0].mxu0 %v2055
      %v2256 = vpop.f32.mrb[0].mxu0
      %v2257 = vadd.f32 0.0, %v2256
      %v2258 = vpop.f32.mrb[0].mxu0
      %2259 = vmatprep.mubr.f32.mxu0 0.0
      %2260 = vmatmul.mubr.f32.gmra.mrb[0].mxu0 %v2058
      %v2261 = vpop.f32.mrb[0].mxu0
      %v2262 = vadd.f32 0.0, %v2261
      %v2263 = vpop.f32.mrb[0].mxu0
      %2264 = vmatprep.mubr.f32.mxu0 0.0
      %2265 = vmatmul.mubr.f32.gmra.mrb[0].mxu0 %v2061
      %v2266 = vpop.f32.mrb[0].mxu0
      %v2267 = vadd.f32 0.0, %v2266
      %v2268 = vpop.f32.mrb[0].mxu0
      %2269 = vmatprep.mubr.f32.mxu0 0.0
      %2270 = vmatmul.mubr.f32.gmra.mrb[0].mxu0 %v2064
      %v2271 = vpop.f32.mrb[0].mxu0
      %v2272 = vadd.f32 0.0, %v2271
      %v2273 = vpop.f32.mrb[0].mxu0
      %2274 = vmatprep.mubr.f32.mxu0 0.0
      %2275 = vmatmul.mubr.f32.gmra.mrb[0].mxu0 %v2067
      %v2276 = vpop.f32.mrb[0].mxu0
      %v2277 = vadd.f32 0.0, %v2276
      %v2278 = vpop.f32.mrb[0].mxu0
      %2279 = vmatprep.mubr.f32.mxu0 0.0
      %2280 = vmatmul.mubr.f32.gmra.mrb[0].mxu0 %v2070
      %v2281 = vpop.f32.mrb[0].mxu0
      %v2282 = vadd.f32 0.0, %v2281
      %v2283 = vpop.f32.mrb[0].mxu0
      %2284 = vmatprep.mubr.f32.mxu0 0.0
      %2285 = vmatmul.mubr.f32.gmra.mrb[0].mxu0 %v2073
      %v2286 = vpop.f32.mrb[0].mxu0
      %v2287 = vadd.f32 0.0, %v2286
      %v2288 = vpop.f32.mrb[0].mxu0
      %2289 = vmatprep.mubr.f32.mxu0 0.0
      %2290 = vmatmul.mubr.f32.gmra.mrb[0].mxu0 %v2076
      %v2291 = vpop.f32.mrb[0].mxu0
      %v2292 = vadd.f32 0.0, %v2291
      %v2293 = vpop.f32.mrb[0].mxu0
      %2294 = vmatprep.mubr.f32.mxu0 0.0
      %2295 = vmatmul.mubr.f32.gmra.mrb[0].mxu0 %v2079
      %v2296 = vpop.f32.mrb[0].mxu0
      %v2297 = vadd.f32 0.0, %v2296
      %v2298 = vpop.f32.mrb[0].mxu0
      %2299 = vmatprep.mubr.f32.mxu0 0.0
      %2300 = vmatmul.mubr.f32.gmra.mrb[0].mxu0 %v2082
      %v2301 = vpop.f32.mrb[0].mxu0
      %v2302 = vadd.f32 0.0, %v2301
      %v2303 = vpop.f32.mrb[0].mxu0
      %2304 = vmatprep.mubr.f32.mxu0 0.0
      %2305 = vmatmul.mubr.f32.gmra.mrb[0].mxu0 %v2085
      %v2306 = vpop.f32.mrb[0].mxu0
      %v2307 = vadd.f32 0.0, %v2306
      %v2308 = vpop.f32.mrb[0].mxu0
      %2309 = vmatprep.mubr.f32.mxu0 0.0
      %2310 = vmatmul.mubr.f32.gmra.mrb[0].mxu0 %v2088
      %v2311 = vpop.f32.mrb[0].mxu0
      %v2312 = vadd.f32 0.0, %v2311
      %v2313 = vpop.f32.mrb[0].mxu0
      %2314 = vmatprep.mubr.f32.mxu0 0.0
      %2315 = vmatmul.mubr.f32.gmra.mrb[0].mxu0 %v2091
      %v2316 = vpop.f32.mrb[0].mxu0
      %v2317 = vadd.f32 0.0, %v2316
      %v2318 = vpop.f32.mrb[0].mxu0
      %2319 = vmatprep.mubr.f32.mxu0 0.0
      %2320 = vmatmul.mubr.f32.gmra.mrb[0].mxu0 %v2094
      %v2321 = vpop.f32.mrb[0].mxu0
      %v2322 = vadd.f32 0.0, %v2321
      %v2323 = vpop.f32.mrb[0].mxu0
      %2324 = vdwg.mxu0
      %v2325 = vld [vmem:[%s3] sm:$0x1]
      %v2327 = vlaneseq
      %v2328 = vshrl.u32 %v2327, 7
      %v2329 = vsub.s32 0, %v2328
      %v2330 = vrot.slane %v2325, %v2329
      %v2332 = vmul.f32 %v2167, %v2330
      %v2333 = vmul.f32 %v2172, %v2330
      %v2334 = vmul.f32 %v2177, %v2330
      %v2335 = vmul.f32 %v2182, %v2330
      %v2336 = vmul.f32 %v2187, %v2330
      %v2337 = vmul.f32 %v2192, %v2330
      %v2338 = vmul.f32 %v2197, %v2330
      %v2339 = vmul.f32 %v2202, %v2330
      %v2340 = vmul.f32 %v2207, %v2330
      %v2341 = vmul.f32 %v2212, %v2330
      %v2342 = vmul.f32 %v2217, %v2330
      %v2343 = vmul.f32 %v2222, %v2330
      %v2344 = vmul.f32 %v2227, %v2330
      %v2345 = vmul.f32 %v2232, %v2330
      %v2346 = vmul.f32 %v2237, %v2330
      %v2347 = vmul.f32 %v2242, %v2330
      %v2348 = vmul.f32 %v2247, %v2330
      %v2349 = vmul.f32 %v2252, %v2330
      %v2350 = vmul.f32 %v2257, %v2330
      %v2351 = vmul.f32 %v2262, %v2330
      %v2352 = vmul.f32 %v2267, %v2330
      %v2353 = vmul.f32 %v2272, %v2330
      %v2354 = vmul.f32 %v2277, %v2330
      %v2355 = vmul.f32 %v2282, %v2330
      %v2356 = vmul.f32 %v2287, %v2330
      %v2357 = vmul.f32 %v2292, %v2330
      %v2358 = vmul.f32 %v2297, %v2330
      %v2359 = vmul.f32 %v2302, %v2330
      %v2360 = vmul.f32 %v2307, %v2330
      %v2361 = vmul.f32 %v2312, %v2330
      %v2362 = vmul.f32 %v2317, %v2330
      %v2363 = vmul.f32 %v2322, %v2330
      %v2364 = vld [vmem:[%s4] sm:$0x1]
      %v2366 = vlaneseq
      %v2367 = vshrl.u32 %v2366, 7
      %v2368 = vsub.s32 0, %v2367
      %v2369 = vrot.slane %v2364, %v2368
      %v2371 = vadd.f32 %v2332, %v2369
      %v2372 = vadd.f32 %v2333, %v2369
      %v2373 = vadd.f32 %v2334, %v2369
      %v2374 = vadd.f32 %v2335, %v2369
      %v2375 = vadd.f32 %v2336, %v2369
      %v2376 = vadd.f32 %v2337, %v2369
      %v2377 = vadd.f32 %v2338, %v2369
      %v2378 = vadd.f32 %v2339, %v2369
      %v2379 = vadd.f32 %v2340, %v2369
      %v2380 = vadd.f32 %v2341, %v2369
      %v2381 = vadd.f32 %v2342, %v2369
      %v2382 = vadd.f32 %v2343, %v2369
      %v2383 = vadd.f32 %v2344, %v2369
      %v2384 = vadd.f32 %v2345, %v2369
      %v2385 = vadd.f32 %v2346, %v2369
      %v2386 = vadd.f32 %v2347, %v2369
      %v2387 = vadd.f32 %v2348, %v2369
      %v2388 = vadd.f32 %v2349, %v2369
      %v2389 = vadd.f32 %v2350, %v2369
      %v2390 = vadd.f32 %v2351, %v2369
      %v2391 = vadd.f32 %v2352, %v2369
      %v2392 = vadd.f32 %v2353, %v2369
      %v2393 = vadd.f32 %v2354, %v2369
      %v2394 = vadd.f32 %v2355, %v2369
      %v2395 = vadd.f32 %v2356, %v2369
      %v2396 = vadd.f32 %v2357, %v2369
      %v2397 = vadd.f32 %v2358, %v2369
      %v2398 = vadd.f32 %v2359, %v2369
      %v2399 = vadd.f32 %v2360, %v2369
      %v2400 = vadd.f32 %v2361, %v2369
      %v2401 = vadd.f32 %v2362, %v2369
      %v2402 = vadd.f32 %v2363, %v2369
      %2403 = vst.msk [vmem:[%s224] sm:$0xff] %vm1999, %v2371
      %2404 = vst.msk [vmem:[%s224 + $0x8] sm:$0xff] %vm1999, %v2372
      %2405 = vst.msk [vmem:[%s224 + $0x10] sm:$0xff] %vm1999, %v2373
      %2406 = vst.msk [vmem:[%s224 + $0x18] sm:$0xff] %vm1999, %v2374
      %2407 = vst.msk [vmem:[%s224 + $0x20] sm:$0xff] %vm1999, %v2375
      %2408 = vst.msk [vmem:[%s224 + $0x28] sm:$0xff] %vm1999, %v2376
      %2409 = vst.msk [vmem:[%s224 + $0x30] sm:$0xff] %vm1999, %v2377
      %2410 = vst.msk [vmem:[%s224 + $0x38] sm:$0xff] %vm1999, %v2378
      %2411 = vst.msk [vmem:[%s224 + $0x40] sm:$0xff] %vm1999, %v2379
      %2412 = vst.msk [vmem:[%s224 + $0x48] sm:$0xff] %vm1999, %v2380
      %2413 = vst.msk [vmem:[%s224 + $0x50] sm:$0xff] %vm1999, %v2381
      %2414 = vst.msk [vmem:[%s224 + $0x58] sm:$0xff] %vm1999, %v2382
      %2415 = vst.msk [vmem:[%s224 + $0x60] sm:$0xff] %vm1999, %v2383
      %2416 = vst.msk [vmem:[%s224 + $0x68] sm:$0xff] %vm1999, %v2384
      %2417 = vst.msk [vmem:[%s224 + $0x70] sm:$0xff] %vm1999, %v2385
      %2418 = vst.msk [vmem:[%s224 + $0x78] sm:$0xff] %vm1999, %v2386
      %2419 = vst.msk [vmem:[%s224 + $0x80] sm:$0xff] %vm1999, %v2387
      %2420 = vst.msk [vmem:[%s224 + $0x88] sm:$0xff] %vm1999, %v2388
      %2421 = vst.msk [vmem:[%s224 + $0x90] sm:$0xff] %vm1999, %v2389
      %2422 = vst.msk [vmem:[%s224 + $0x98] sm:$0xff] %vm1999, %v2390
      %2423 = vst.msk [vmem:[%s224 + $0xa0] sm:$0xff] %vm1999, %v2391
      %2424 = vst.msk [vmem:[%s224 + $0xa8] sm:$0xff] %vm1999, %v2392
      %2425 = vst.msk [vmem:[%s224 + $0xb0] sm:$0xff] %vm1999, %v2393
      %2426 = vst.msk [vmem:[%s224 + $0xb8] sm:$0xff] %vm1999, %v2394
      %2427 = vst.msk [vmem:[%s224 + $0xc0] sm:$0xff] %vm1999, %v2395
      %2428 = vst.msk [vmem:[%s224 + $0xc8] sm:$0xff] %vm1999, %v2396
      %2429 = vst.msk [vmem:[%s224 + $0xd0] sm:$0xff] %vm1999, %v2397
      %2430 = vst.msk [vmem:[%s224 + $0xd8] sm:$0xff] %vm1999, %v2398
      %2431 = vst.msk [vmem:[%s224 + $0xe0] sm:$0xff] %vm1999, %v2399
      %2432 = vst.msk [vmem:[%s224 + $0xe8] sm:$0xff] %vm1999, %v2400
      %2433 = vst.msk [vmem:[%s224 + $0xf0] sm:$0xff] %vm1999, %v2401
      %2434 = vst.msk [vmem:[%s224 + $0xf8] sm:$0xff] %vm1999, %v2402
      %p2435 = scmp.lt.s32.totalorder %s16, 1
      %s2436 = scalar_select %p2435, %s16, 1
      %s2437 = smul.addr %s2436, 32
      %s2438 = smul.addr %s2437, 8
      %s2439 = scalar_lea.vmem %s5, %s2438
      // Predicated region
      $region41: #{a_call__.41} parent=39 // pred_check
        %p2440 = pneg %p144
      $region42: #{a_call__.41} parent=39 // pred_check_branch
        %2442 = sbr.rel (%p2440) target = $region44
      $region43: #{a_call__.41} parent=39 // pred_region
        _
      $region44: #{a_call__.41} parent=39 // pred_fallthru
        _
    $region40: #{a_call__.41} parent=5 // pred_fallthru
      _
    %p2443 = scmp.le.s32.totalorder 2, %s11
    // Predicated region
    $region45: #{a_call__.41} parent=5 // pred_check
      %p2444 = pneg %p2443
    $region46: #{a_call__.41} parent=5 // pred_check_branch
      %2446 = sbr.rel (%p2444) target = $region48
    $region47: #{a_call__.41} parent=5 // pred_region
      %s2447 = ssub.s32 %s11, 2
      // Predicated region
      $region49: #{a_call__.41} parent=47 // pred_check
        %p2448 = pneg %p150
      $region50: #{a_call__.41} parent=47 // pred_check_branch
        %2450 = sbr.rel (%p2448) target = $region52
      $region51: #{a_call__.41} parent=47 // pred_region
        %p2451 = scmp.lt.s32.totalorder %s17, 1
        %s2452 = scalar_select %p2451, %s17, 1
        %s2453 = smul.addr %s2452, 32
        %s2454 = smul.addr %s2453, 8
        %s2455 = scalar_lea.vmem %s5, %s2454
      $region52: #{a_call__.41} parent=47 // pred_fallthru
        _
    $region48: #{a_call__.41} parent=5 // pred_fallthru
      _
  $region6: #{a_call__.41} parent=0 // loop_footer
    %s15 = sadd.s32 1, %s11
  $region7: #{a_call__.41} parent=0 // loop_footer_branch
    %10 = sbr.rel target = $region3
  $region8: #{a_call__.41} parent=0 // loop_exit
    _

// kernel: a_call__.43
$region0: #{a_call__.43}
  #allocation0 [shape = 'u32[]', space=smem, size = 0x4, offset = 0x4, fixed_abs, tag = 'smem constant byte address 0x4 - core index']
  #allocation1 [shape = 'u32[144,128]{1,0:T(1,128)}', space=vmem, size = 0x12000, scoped, tag = 'internal scratch']
  %s0 = inlined_call_operand.vmem [shape: f32[2,20,20,4], index: 0, kind: input, shape index: {}]
  %s1 = inlined_call_operand.vmem [shape: f32[9,1,4], index: 1, kind: input, shape index: {}]
  %s2 = inlined_call_operand.vmem [shape: f32[4,4], index: 2, kind: input, shape index: {}]
  %s3 = inlined_call_operand.vmem [shape: f32[1,4], index: 3, kind: input, shape index: {}]
  %s4 = inlined_call_operand.vmem [shape: f32[1,4], index: 4, kind: input, shape index: {}]
  %s5 = inlined_call_operand.vmem [shape: f32[2,256,4], index: 5, kind: output, shape index: {}]
  %s6 = sld [smem:[#allocation0]]
  $region53: #{a_call__.43} parent=0
    _
  %s8 = ssub.s32 1, %s6
  %s9 = scalar_select 0, %s8, %s6
  loop: start=0, step=1, limit=4
  $region2: #{a_call__.43} parent=0 // loop_pre_header
    _
  $region3: #{a_call__.43} parent=0 // loop_header
    %s11 = sphi 0, %s15
    %p12 = scmp.ge.s32.totalorder %s11, 4
    %s21 = sphi 0, %s23
    %s24 = sphi 0, %s21
    %s25 = sphi 0, %s24
    %s41 = sphi 0, %s25
    %s45 = sphi 0, %s45
    %s47 = sphi 0, %s45
    %s48 = sphi 0, %s47
    %s62 = sphi 0, %s48
    %s66 = sphi 0, %s66
    %s68 = sphi 0, %s66
    %s69 = sphi 0, %s68
    %s83 = sphi 0, %s69
    %s87 = sphi 0, %s87
    %s89 = sphi 0, %s87
    %s90 = sphi 0, %s89
    %s104 = sphi 0, %s90
    %s108 = sphi 0, %s108
    %s110 = sphi 0, %s108
    %s111 = sphi 0, %s110
    %s125 = sphi 0, %s111
    %s131 = sphi 0, %s133
    %s134 = sphi 0, %s131
    %s135 = sphi 0, %s134
    %s151 = sphi 0, %s135
  $region4: #{a_call__.43} parent=0 // loop_header_branch
    %14 = sbr.rel (%p12) target = $region8
  $region5: #{a_call__.43} parent=0 // loop_body
    %s16 = ssub.s32 %s11, 1
    %s17 = ssub.s32 %s11, 2
    %s18 = sadd.s32 %s11, 1
    %s19 = ssub.s32 %s11, %s18
    %p20 = scmp.eq.s32.totalorder %s19, 0
    %s22 = sadd.s32 %s21, 1
    %s23 = scalar_select %p20, %s21, %s22
    %p26 = pneg %p20
    %p27 = scmp.eq.s32.totalorder %s11, 1
    %p28 = por %p26, %p27
    %p29 = scmp.ne.s32.totalorder %s21, %s24
    %p30 = scmp.eq.s32.totalorder %s11, 0
    %p31 = por %p29, %p30
    %p32 = scmp.ne.s32.totalorder %s21, %s24
    %p33 = scmp.eq.s32.totalorder %s16, 1
    %p34 = por %p32, %p33
    %p35 = scmp.ne.s32.totalorder %s24, %s25
    %p36 = scmp.eq.s32.totalorder %s16, 0
    %p37 = por %p35, %p36
    %p38 = scmp.ne.s32.totalorder %s24, %s25
    %p39 = scmp.eq.s32.totalorder %s17, 1
    %p40 = por %p38, %p39
    %p42 = scmp.ne.s32.totalorder %s25, %s41
    %p43 = scmp.eq.s32.totalorder %s17, 0
    %p44 = por %p42, %p43
    %s46 = sadd.s32 %s45, 1
    %p49 = scmp.eq.s32.totalorder %s11, 1
    %p50 = scmp.ne.s32.totalorder %s45, %s47
    %p51 = scmp.eq.s32.totalorder %s11, 0
    %p52 = por %p50, %p51
    %p53 = scmp.ne.s32.totalorder %s45, %s47
    %p54 = scmp.eq.s32.totalorder %s16, 1
    %p55 = por %p53, %p54
    %p56 = scmp.ne.s32.totalorder %s47, %s48
    %p57 = scmp.eq.s32.totalorder %s16, 0
    %p58 = por %p56, %p57
    %p59 = scmp.ne.s32.totalorder %s47, %s48
    %p60 = scmp.eq.s32.totalorder %s17, 1
    %p61 = por %p59, %p60
    %p63 = scmp.ne.s32.totalorder %s48, %s62
    %p64 = scmp.eq.s32.totalorder %s17, 0
    %p65 = por %p63, %p64
    %s67 = sadd.s32 %s66, 1
    %p70 = scmp.eq.s32.totalorder %s11, 1
    %p71 = scmp.ne.s32.totalorder %s66, %s68
    %p72 = scmp.eq.s32.totalorder %s11, 0
    %p73 = por %p71, %p72
    %p74 = scmp.ne.s32.totalorder %s66, %s68
    %p75 = scmp.eq.s32.totalorder %s16, 1
    %p76 = por %p74, %p75
    %p77 = scmp.ne.s32.totalorder %s68, %s69
    %p78 = scmp.eq.s32.totalorder %s16, 0
    %p79 = por %p77, %p78
    %p80 = scmp.ne.s32.totalorder %s68, %s69
    %p81 = scmp.eq.s32.totalorder %s17, 1
    %p82 = por %p80, %p81
    %p84 = scmp.ne.s32.totalorder %s69, %s83
    %p85 = scmp.eq.s32.totalorder %s17, 0
    %p86 = por %p84, %p85
    %s88 = sadd.s32 %s87, 1
    %p91 = scmp.eq.s32.totalorder %s11, 1
    %p92 = scmp.ne.s32.totalorder %s87, %s89
    %p93 = scmp.eq.s32.totalorder %s11, 0
    %p94 = por %p92, %p93
    %p95 = scmp.ne.s32.totalorder %s87, %s89
    %p96 = scmp.eq.s32.totalorder %s16, 1
    %p97 = por %p95, %p96
    %p98 = scmp.ne.s32.totalorder %s89, %s90
    %p99 = scmp.eq.s32.totalorder %s16, 0
    %p100 = por %p98, %p99
    %p101 = scmp.ne.s32.totalorder %s89, %s90
    %p102 = scmp.eq.s32.totalorder %s17, 1
    %p103 = por %p101, %p102
    %p105 = scmp.ne.s32.totalorder %s90, %s104
    %p106 = scmp.eq.s32.totalorder %s17, 0
    %p107 = por %p105, %p106
    %s109 = sadd.s32 %s108, 1
    %p112 = scmp.eq.s32.totalorder %s11, 1
    %p113 = scmp.ne.s32.totalorder %s108, %s110
    %p114 = scmp.eq.s32.totalorder %s11, 0
    %p115 = por %p113, %p114
    %p116 = scmp.ne.s32.totalorder %s108, %s110
    %p117 = scmp.eq.s32.totalorder %s16, 1
    %p118 = por %p116, %p117
    %p119 = scmp.ne.s32.totalorder %s110, %s111
    %p120 = scmp.eq.s32.totalorder %s16, 0
    %p121 = por %p119, %p120
    %p122 = scmp.ne.s32.totalorder %s110, %s111
    %p123 = scmp.eq.s32.totalorder %s17, 1
    %p124 = por %p122, %p123
    %p126 = scmp.ne.s32.totalorder %s111, %s125
    %p127 = scmp.eq.s32.totalorder %s17, 0
    %p128 = por %p126, %p127
    %s129 = ssub.s32 %s11, %s18
    %p130 = scmp.eq.s32.totalorder %s129, 0
    %s132 = sadd.s32 %s131, 1
    %s133 = scalar_select %p130, %s131, %s132
    %p136 = pneg %p130
    %p137 = scmp.eq.s32.totalorder %s11, 1
    %p138 = por %p136, %p137
    %p139 = scmp.ne.s32.totalorder %s131, %s134
    %p140 = scmp.eq.s32.totalorder %s11, 0
    %p141 = por %p139, %p140
    %p142 = scmp.ne.s32.totalorder %s131, %s134
    %p143 = scmp.eq.s32.totalorder %s16, 1
    %p144 = por %p142, %p143
    %p145 = scmp.ne.s32.totalorder %s134, %s135
    %p146 = scmp.eq.s32.totalorder %s16, 0
    %p147 = por %p145, %p146
    %p148 = scmp.ne.s32.totalorder %s134, %s135
    %p149 = scmp.eq.s32.totalorder %s17, 1
    %p150 = por %p148, %p149
    %p152 = scmp.ne.s32.totalorder %s135, %s151
    %p153 = scmp.eq.s32.totalorder %s17, 0
    %p154 = por %p152, %p153
    %p155 = scmp.le.s32.totalorder 1, %s11
    %p156 = scmp.lt.s32.totalorder %s11, 3
    %p157 = pnand %p155, %p156
    %p158 = pneg %p157
    // Predicated region
    $region9: #{a_call__.43} parent=5 // pred_check
      _
    $region10: #{a_call__.43} parent=5 // pred_check_branch
      %160 = sbr.rel (%p157) target = $region12
    $region11: #{a_call__.43} parent=5 // pred_region
      %s161 = ssub.s32 %s11, 1
      // Predicated region
      $region13: #{a_call__.43} parent=11 // pred_check
        %p162 = pneg %p58
      $region14: #{a_call__.43} parent=11 // pred_check_branch
        %164 = sbr.rel (%p162) target = $region16
      $region15: #{a_call__.43} parent=11 // pred_region
        _
      $region16: #{a_call__.43} parent=11 // pred_fallthru
        _
      // Predicated region
      $region17: #{a_call__.43} parent=11 // pred_check
        %p165 = pneg %p79
      $region18: #{a_call__.43} parent=11 // pred_check_branch
        %167 = sbr.rel (%p165) target = $region20
      $region19: #{a_call__.43} parent=11 // pred_region
        _
      $region20: #{a_call__.43} parent=11 // pred_fallthru
        _
      // Predicated region
      $region21: #{a_call__.43} parent=11 // pred_check
        %p168 = pneg %p100
      $region22: #{a_call__.43} parent=11 // pred_check_branch
        %170 = sbr.rel (%p168) target = $region24
      $region23: #{a_call__.43} parent=11 // pred_region
        _
      $region24: #{a_call__.43} parent=11 // pred_fallthru
        _
      // Predicated region
      $region25: #{a_call__.43} parent=11 // pred_check
        %p171 = pneg %p121
      $region26: #{a_call__.43} parent=11 // pred_check_branch
        %173 = sbr.rel (%p171) target = $region28
      $region27: #{a_call__.43} parent=11 // pred_region
        _
      $region28: #{a_call__.43} parent=11 // pred_fallthru
        _
    $region12: #{a_call__.43} parent=5 // pred_fallthru
      _
    %p174 = scmp.lt.s32.totalorder %s11, 2
    // Predicated region
    $region29: #{a_call__.43} parent=5 // pred_check
      %p175 = pneg %p174
    $region30: #{a_call__.43} parent=5 // pred_check_branch
      %177 = sbr.rel (%p175) target = $region32
    $region31: #{a_call__.43} parent=5 // pred_region
      // Predicated region
      $region33: #{a_call__.43} parent=31 // pred_check
        %p178 = pneg %p31
      $region34: #{a_call__.43} parent=31 // pred_check_branch
        %180 = sbr.rel (%p178) target = $region36
      $region35: #{a_call__.43} parent=31 // pred_region
        %p181 = scmp.lt.s32.totalorder %s11, 1
        %s182 = scalar_select %p181, %s11, 1
        %s183 = smul.addr %s182, 60
        %s184 = smul.addr %s183, 8
        %s185 = scalar_lea.vmem %s0, %s184
      $region36: #{a_call__.43} parent=31 // pred_fallthru
        _
    $region32: #{a_call__.43} parent=5 // pred_fallthru
      _
    %p186 = scmp.le.s32.totalorder 1, %s11
    %p187 = scmp.lt.s32.totalorder %s11, 3
    %p188 = pnand %p186, %p187
    %p189 = pneg %p188
    // Predicated region
    $region37: #{a_call__.43} parent=5 // pred_check
      _
    $region38: #{a_call__.43} parent=5 // pred_check_branch
      %191 = sbr.rel (%p188) target = $region40
    $region39: #{a_call__.43} parent=5 // pred_region
      %s192 = ssub.s32 %s11, 1
      %p193 = scmp.lt.s32.totalorder %s16, 1
      %s194 = scalar_select %p193, %s16, 1
      %s195 = smul.addr %s194, 60
      %s196 = smul.addr %s195, 8
      %s197 = scalar_lea.vmem %s0, %s196
      %p198 = pneg %p37
      %p199 = pneg %p34
      %p200 = pneg %p58
      %p201 = pneg %p55
      %p202 = pneg %p79
      %p203 = pneg %p76
      %p204 = pneg %p100
      %p205 = pneg %p97
      %p206 = pneg %p121
      %p207 = pneg %p118
      %p208 = pneg %p147
      %p209 = pneg %p144
      %p210 = scmp.lt.s32.totalorder %s16, 1
      %s211 = scalar_select %p210, %s16, 1
      %s212 = smul.addr %s211, 32
      %s213 = smul.addr %s212, 8
      %s214 = scalar_lea.vmem %s5, %s213
      %p215 = scmp.lt.s32.totalorder %s16, 1
      %s216 = scalar_select %p215, %s16, 1
      %s217 = smul.addr %s216, 60
      %s218 = smul.addr %s217, 8
      %s219 = scalar_lea.vmem %s0, %s218
      %p220 = scmp.lt.s32.totalorder %s16, 1
      %s221 = scalar_select %p220, %s16, 1
      %s222 = smul.addr %s221, 32
      %s223 = smul.addr %s222, 8
      %s224 = scalar_lea.vmem %s5, %s223
      %v225 = vld [vmem:[%s219] sm:$0xff]
      %v226 = vld [vmem:[%s219 + $0x8] sm:$0xff]
      %v227 = vld [vmem:[%s219 + $0x10] sm:$0xf]
      %v228 = vld [vmem:[%s219 + $0x18] sm:$0xff]
      %v229 = vld [vmem:[%s219 + $0x20] sm:$0xff]
      %v230 = vld [vmem:[%s219 + $0x28] sm:$0xf]
      %v231 = vld [vmem:[%s219 + $0x30] sm:$0xff]
      %v232 = vld [vmem:[%s219 + $0x38] sm:$0xff]
      %v233 = vld [vmem:[%s219 + $0x40] sm:$0xf]
      %v234 = vld [vmem:[%s219 + $0x48] sm:$0xff]
      %v235 = vld [vmem:[%s219 + $0x50] sm:$0xff]
      %v236 = vld [vmem:[%s219 + $0x58] sm:$0xf]
      %v237 = vld [vmem:[%s219 + $0x60] sm:$0xff]
      %v238 = vld [vmem:[%s219 + $0x68] sm:$0xff]
      %v239 = vld [vmem:[%s219 + $0x70] sm:$0xf]
      %v240 = vld [vmem:[%s219 + $0x78] sm:$0xff]
      %v241 = vld [vmem:[%s219 + $0x80] sm:$0xff]
      %v242 = vld [vmem:[%s219 + $0x88] sm:$0xf]
      %v243 = vld [vmem:[%s219 + $0x90] sm:$0xff]
      %v244 = vld [vmem:[%s219 + $0x98] sm:$0xff]
      %v245 = vld [vmem:[%s219 + $0xa0] sm:$0xf]
      %v246 = vld [vmem:[%s219 + $0xa8] sm:$0xff]
      %v247 = vld [vmem:[%s219 + $0xb0] sm:$0xff]
      %v248 = vld [vmem:[%s219 + $0xb8] sm:$0xf]
      %v249 = vld [vmem:[%s219 + $0xc0] sm:$0xff]
      %v250 = vld [vmem:[%s219 + $0xc8] sm:$0xff]
      %v251 = vld [vmem:[%s219 + $0xd0] sm:$0xf]
      %v252 = vld [vmem:[%s219 + $0xd8] sm:$0xff]
      %v253 = vld [vmem:[%s219 + $0xe0] sm:$0xff]
      %v254 = vld [vmem:[%s219 + $0xe8] sm:$0xf]
      %v255 = vld [vmem:[%s219 + $0xf0] sm:$0xff]
      %v256 = vld [vmem:[%s219 + $0xf8] sm:$0xff]
      %v257 = vld [vmem:[%s219 + $0x100] sm:$0xf]
      %v258 = vld [vmem:[%s219 + $0x108] sm:$0xff]
      %v259 = vld [vmem:[%s219 + $0x110] sm:$0xff]
      %v260 = vld [vmem:[%s219 + $0x118] sm:$0xf]
      %v261 = vld [vmem:[%s219 + $0x120] sm:$0xff]
      %v262 = vld [vmem:[%s219 + $0x128] sm:$0xff]
      %v263 = vld [vmem:[%s219 + $0x130] sm:$0xf]
      %v264 = vld [vmem:[%s219 + $0x138] sm:$0xff]
      %v265 = vld [vmem:[%s219 + $0x140] sm:$0xff]
      %v266 = vld [vmem:[%s219 + $0x148] sm:$0xf]
      %v267 = vld [vmem:[%s219 + $0x150] sm:$0xff]
      %v268 = vld [vmem:[%s219 + $0x158] sm:$0xff]
      %v269 = vld [vmem:[%s219 + $0x160] sm:$0xf]
      %v270 = vld [vmem:[%s219 + $0x168] sm:$0xff]
      %v271 = vld [vmem:[%s219 + $0x170] sm:$0xff]
      %v272 = vld [vmem:[%s219 + $0x178] sm:$0xf]
      %v273 = vld [vmem:[%s219 + $0x180] sm:$0xff]
      %v274 = vld [vmem:[%s219 + $0x188] sm:$0xff]
      %v275 = vld [vmem:[%s219 + $0x190] sm:$0xf]
      %v276 = vld [vmem:[%s219 + $0x198] sm:$0xff]
      %v277 = vld [vmem:[%s219 + $0x1a0] sm:$0xff]
      %v278 = vld [vmem:[%s219 + $0x1a8] sm:$0xf]
      %v279 = vld [vmem:[%s219 + $0x1b0] sm:$0xff]
      %v280 = vld [vmem:[%s219 + $0x1b8] sm:$0xff]
      %v281 = vld [vmem:[%s219 + $0x1c0] sm:$0xf]
      %v282 = vld [vmem:[%s219 + $0x1c8] sm:$0xff]
      %v283 = vld [vmem:[%s219 + $0x1d0] sm:$0xff]
      %v284 = vld [vmem:[%s219 + $0x1d8] sm:$0xf]
      %v285 = vmax.f32 %v225, 0.0
      %v286 = vmax.f32 %v226, 0.0
      %v287 = vmax.f32 %v227, 0.0
      %v288 = vmax.f32 %v228, 0.0
      %v289 = vmax.f32 %v229, 0.0
      %v290 = vmax.f32 %v230, 0.0
      %v291 = vmax.f32 %v231, 0.0
      %v292 = vmax.f32 %v232, 0.0
      %v293 = vmax.f32 %v233, 0.0
      %v294 = vmax.f32 %v234, 0.0
      %v295 = vmax.f32 %v235, 0.0
      %v296 = vmax.f32 %v236, 0.0
      %v297 = vmax.f32 %v237, 0.0
      %v298 = vmax.f32 %v238, 0.0
      %v299 = vmax.f32 %v239, 0.0
      %v300 = vmax.f32 %v240, 0.0
      %v301 = vmax.f32 %v241, 0.0
      %v302 = vmax.f32 %v242, 0.0
      %v303 = vmax.f32 %v243, 0.0
      %v304 = vmax.f32 %v244, 0.0
      %v305 = vmax.f32 %v245, 0.0
      %v306 = vmax.f32 %v246, 0.0
      %v307 = vmax.f32 %v247, 0.0
      %v308 = vmax.f32 %v248, 0.0
      %v309 = vmax.f32 %v249, 0.0
      %v310 = vmax.f32 %v250, 0.0
      %v311 = vmax.f32 %v251, 0.0
      %v312 = vmax.f32 %v252, 0.0
      %v313 = vmax.f32 %v253, 0.0
      %v314 = vmax.f32 %v254, 0.0
      %v315 = vmax.f32 %v255, 0.0
      %v316 = vmax.f32 %v256, 0.0
      %v317 = vmax.f32 %v257, 0.0
      %v318 = vmax.f32 %v258, 0.0
      %v319 = vmax.f32 %v259, 0.0
      %v320 = vmax.f32 %v260, 0.0
      %v321 = vmax.f32 %v261, 0.0
      %v322 = vmax.f32 %v262, 0.0
      %v323 = vmax.f32 %v263, 0.0
      %v324 = vmax.f32 %v264, 0.0
      %v325 = vmax.f32 %v265, 0.0
      %v326 = vmax.f32 %v266, 0.0
      %v327 = vmax.f32 %v267, 0.0
      %v328 = vmax.f32 %v268, 0.0
      %v329 = vmax.f32 %v269, 0.0
      %v330 = vmax.f32 %v270, 0.0
      %v331 = vmax.f32 %v271, 0.0
      %v332 = vmax.f32 %v272, 0.0
      %v333 = vmax.f32 %v273, 0.0
      %v334 = vmax.f32 %v274, 0.0
      %v335 = vmax.f32 %v275, 0.0
      %v336 = vmax.f32 %v276, 0.0
      %v337 = vmax.f32 %v277, 0.0
      %v338 = vmax.f32 %v278, 0.0
      %v339 = vmax.f32 %v279, 0.0
      %v340 = vmax.f32 %v280, 0.0
      %v341 = vmax.f32 %v281, 0.0
      %v342 = vmax.f32 %v282, 0.0
      %v343 = vmax.f32 %v283, 0.0
      %v344 = vmax.f32 %v284, 0.0
      %v345 = vld [vmem:[%s1] sm:$0x1]
      %v346 = vld [vmem:[%s1 + $0x1] sm:$0x1]
      %v347 = vld [vmem:[%s1 + $0x2] sm:$0x1]
      %v348 = vld [vmem:[%s1 + $0x3] sm:$0x1]
      %v349 = vld [vmem:[%s1 + $0x4] sm:$0x1]
      %v350 = vld [vmem:[%s1 + $0x5] sm:$0x1]
      %v351 = vld [vmem:[%s1 + $0x6] sm:$0x1]
      %v352 = vld [vmem:[%s1 + $0x7] sm:$0x1]
      %v353 = vld [vmem:[%s1 + $0x8] sm:$0x1]
      %v355 = vlaneseq
      %v356 = vshrl.u32 %v355, 7
      %v357 = vsub.s32 0, %v356
      %v358 = vrot.slane %v345, %v357
      %v360 = vmul.f32 %v285, %v358
      %v361 = vmul.f32 %v286, %v358
      %v362 = vmul.f32 %v288, %v358
      %v363 = vmul.f32 %v289, %v358
      %v364 = vmul.f32 %v291, %v358
      %v365 = vmul.f32 %v292, %v358
      %v366 = vmul.f32 %v294, %v358
      %v367 = vmul.f32 %v295, %v358
      %v368 = vmul.f32 %v297, %v358
      %v369 = vmul.f32 %v298, %v358
      %v370 = vmul.f32 %v300, %v358
      %v371 = vmul.f32 %v301, %v358
      %v372 = vmul.f32 %v303, %v358
      %v373 = vmul.f32 %v304, %v358
      %v374 = vmul.f32 %v306, %v358
      %v375 = vmul.f32 %v307, %v358
      %v376 = vmul.f32 %v309, %v358
      %v377 = vmul.f32 %v310, %v358
      %v378 = vmul.f32 %v312, %v358
      %v379 = vmul.f32 %v313, %v358
      %v380 = vmul.f32 %v315, %v358
      %v381 = vmul.f32 %v316, %v358
      %v382 = vmul.f32 %v318, %v358
      %v383 = vmul.f32 %v319, %v358
      %v384 = vmul.f32 %v321, %v358
      %v385 = vmul.f32 %v322, %v358
      %v386 = vmul.f32 %v324, %v358
      %v387 = vmul.f32 %v325, %v358
      %v388 = vmul.f32 %v327, %v358
      %v389 = vmul.f32 %v328, %v358
      %v390 = vmul.f32 %v330, %v358
      %v391 = vmul.f32 %v331, %v358
      %v393 = vlaneseq
      %v394 = vshrl.u32 %v393, 7
      %v395 = vsub.s32 0, %v394
      %v396 = vrot.slane %v346, %v395
      %v398 = vmul.f32 %v285, %v396
      %v399 = vmul.f32 %v286, %v396
      %v400 = vmul.f32 %v287, %v396
      %v401 = vmul.f32 %v288, %v396
      %v402 = vmul.f32 %v289, %v396
      %v403 = vmul.f32 %v290, %v396
      %v404 = vmul.f32 %v291, %v396
      %v405 = vmul.f32 %v292, %v396
      %v406 = vmul.f32 %v293, %v396
      %v407 = vmul.f32 %v294, %v396
      %v408 = vmul.f32 %v295, %v396
      %v409 = vmul.f32 %v296, %v396
      %v410 = vmul.f32 %v297, %v396
      %v411 = vmul.f32 %v298, %v396
      %v412 = vmul.f32 %v299, %v396
      %v413 = vmul.f32 %v300, %v396
      %v414 = vmul.f32 %v301, %v396
      %v415 = vmul.f32 %v302, %v396
      %v416 = vmul.f32 %v303, %v396
      %v417 = vmul.f32 %v304, %v396
      %v418 = vmul.f32 %v305, %v396
      %v419 = vmul.f32 %v306, %v396
      %v420 = vmul.f32 %v307, %v396
      %v421 = vmul.f32 %v308, %v396
      %v422 = vmul.f32 %v309, %v396
      %v423 = vmul.f32 %v310, %v396
      %v424 = vmul.f32 %v311, %v396
      %v425 = vmul.f32 %v312, %v396
      %v426 = vmul.f32 %v313, %v396
      %v427 = vmul.f32 %v314, %v396
      %v428 = vmul.f32 %v315, %v396
      %v429 = vmul.f32 %v316, %v396
      %v430 = vmul.f32 %v317, %v396
      %v431 = vmul.f32 %v318, %v396
      %v432 = vmul.f32 %v319, %v396
      %v433 = vmul.f32 %v320, %v396
      %v434 = vmul.f32 %v321, %v396
      %v435 = vmul.f32 %v322, %v396
      %v436 = vmul.f32 %v323, %v396
      %v437 = vmul.f32 %v324, %v396
      %v438 = vmul.f32 %v325, %v396
      %v439 = vmul.f32 %v326, %v396
      %v440 = vmul.f32 %v327, %v396
      %v441 = vmul.f32 %v328, %v396
      %v442 = vmul.f32 %v329, %v396
      %v443 = vmul.f32 %v330, %v396
      %v444 = vmul.f32 %v331, %v396
      %v445 = vmul.f32 %v332, %v396
      %vm494 = vcmask 1045504
      %v495 = vrot.slane %v398, 2
      %v496 = vrot.slane %v399, 2
      %v497 = vsel %vm494, %v495, %v496
      %v498 = vrot.slane %v400, 2
      %v499 = vsel %vm494, %v496, %v498
      %v500 = vrot.slane %v401, 2
      %v501 = vrot.slane %v402, 2
      %v502 = vsel %vm494, %v500, %v501
      %v503 = vrot.slane %v403, 2
      %v504 = vsel %vm494, %v501, %v503
      %v505 = vrot.slane %v404, 2
      %v506 = vrot.slane %v405, 2
      %v507 = vsel %vm494, %v505, %v506
      %v508 = vrot.slane %v406, 2
      %v509 = vsel %vm494, %v506, %v508
      %v510 = vrot.slane %v407, 2
      %v511 = vrot.slane %v408, 2
      %v512 = vsel %vm494, %v510, %v511
      %v513 = vrot.slane %v409, 2
      %v514 = vsel %vm494, %v511, %v513
      %v515 = vrot.slane %v410, 2
      %v516 = vrot.slane %v411, 2
      %v517 = vsel %vm494, %v515, %v516
      %v518 = vrot.slane %v412, 2
      %v519 = vsel %vm494, %v516, %v518
      %v520 = vrot.slane %v413, 2
      %v521 = vrot.slane %v414, 2
      %v522 = vsel %vm494, %v520, %v521
      %v523 = vrot.slane %v415, 2
      %v524 = vsel %vm494, %v521, %v523
      %v525 = vrot.slane %v416, 2
      %v526 = vrot.slane %v417, 2
      %v527 = vsel %vm494, %v525, %v526
      %v528 = vrot.slane %v418, 2
      %v529 = vsel %vm494, %v526, %v528
      %v530 = vrot.slane %v419, 2
      %v531 = vrot.slane %v420, 2
      %v532 = vsel %vm494, %v530, %v531
      %v533 = vrot.slane %v421, 2
      %v534 = vsel %vm494, %v531, %v533
      %v535 = vrot.slane %v422, 2
      %v536 = vrot.slane %v423, 2
      %v537 = vsel %vm494, %v535, %v536
      %v538 = vrot.slane %v424, 2
      %v539 = vsel %vm494, %v536, %v538
      %v540 = vrot.slane %v425, 2
      %v541 = vrot.slane %v426, 2
      %v542 = vsel %vm494, %v540, %v541
      %v543 = vrot.slane %v427, 2
      %v544 = vsel %vm494, %v541, %v543
      %v545 = vrot.slane %v428, 2
      %v546 = vrot.slane %v429, 2
      %v547 = vsel %vm494, %v545, %v546
      %v548 = vrot.slane %v430, 2
      %v549 = vsel %vm494, %v546, %v548
      %v550 = vrot.slane %v431, 2
      %v551 = vrot.slane %v432, 2
      %v552 = vsel %vm494, %v550, %v551
      %v553 = vrot.slane %v433, 2
      %v554 = vsel %vm494, %v551, %v553
      %v555 = vrot.slane %v434, 2
      %v556 = vrot.slane %v435, 2
      %v557 = vsel %vm494, %v555, %v556
      %v558 = vrot.slane %v436, 2
      %v559 = vsel %vm494, %v556, %v558
      %v560 = vrot.slane %v437, 2
      %v561 = vrot.slane %v438, 2
      %v562 = vsel %vm494, %v560, %v561
      %v563 = vrot.slane %v439, 2
      %v564 = vsel %vm494, %v561, %v563
      %v565 = vrot.slane %v440, 2
      %v566 = vrot.slane %v441, 2
      %v567 = vsel %vm494, %v565, %v566
      %v568 = vrot.slane %v442, 2
      %v569 = vsel %vm494, %v566, %v568
      %v570 = vrot.slane %v443, 2
      %v571 = vrot.slane %v444, 2
      %v572 = vsel %vm494, %v570, %v571
      %v573 = vrot.slane %v445, 2
      %v574 = vsel %vm494, %v571, %v573
      %v607 = vadd.f32 %v360, %v497
      %v608 = vadd.f32 %v361, %v499
      %v609 = vadd.f32 %v362, %v502
      %v610 = vadd.f32 %v363, %v504
      %v611 = vadd.f32 %v364, %v507
      %v612 = vadd.f32 %v365, %v509
      %v613 = vadd.f32 %v366, %v512
      %v614 = vadd.f32 %v367, %v514
      %v615 = vadd.f32 %v368, %v517
      %v616 = vadd.f32 %v369, %v519
      %v617 = vadd.f32 %v370, %v522
      %v618 = vadd.f32 %v371, %v524
      %v619 = vadd.f32 %v372, %v527
      %v620 = vadd.f32 %v373, %v529
      %v621 = vadd.f32 %v374, %v532
      %v622 = vadd.f32 %v375, %v534
      %v623 = vadd.f32 %v376, %v537
      %v624 = vadd.f32 %v377, %v539
      %v625 = vadd.f32 %v378, %v542
      %v626 = vadd.f32 %v379, %v544
      %v627 = vadd.f32 %v380, %v547
      %v628 = vadd.f32 %v381, %v549
      %v629 = vadd.f32 %v382, %v552
      %v630 = vadd.f32 %v383, %v554
      %v631 = vadd.f32 %v384, %v557
      %v632 = vadd.f32 %v385, %v559
      %v633 = vadd.f32 %v386, %v562
      %v634 = vadd.f32 %v387, %v564
      %v635 = vadd.f32 %v388, %v567
      %v636 = vadd.f32 %v389, %v569
      %v637 = vadd.f32 %v390, %v572
      %v638 = vadd.f32 %v391, %v574
      %v640 = vlaneseq
      %v641 = vshrl.u32 %v640, 7
      %v642 = vsub.s32 0, %v641
      %v643 = vrot.slane %v347, %v642
      %v645 = vmul.f32 %v285, %v643
      %v646 = vmul.f32 %v286, %v643
      %v647 = vmul.f32 %v287, %v643
      %v648 = vmul.f32 %v288, %v643
      %v649 = vmul.f32 %v289, %v643
      %v650 = vmul.f32 %v290, %v643
      %v651 = vmul.f32 %v291, %v643
      %v652 = vmul.f32 %v292, %v643
      %v653 = vmul.f32 %v293, %v643
      %v654 = vmul.f32 %v294, %v643
      %v655 = vmul.f32 %v295, %v643
      %v656 = vmul.f32 %v296, %v643
      %v657 = vmul.f32 %v297, %v643
      %v658 = vmul.f32 %v298, %v643
      %v659 = vmul.f32 %v299, %v643
      %v660 = vmul.f32 %v300, %v643
      %v661 = vmul.f32 %v301, %v643
      %v662 = vmul.f32 %v302, %v643
      %v663 = vmul.f32 %v303, %v643
      %v664 = vmul.f32 %v304, %v643
      %v665 = vmul.f32 %v305, %v643
      %v666 = vmul.f32 %v306, %v643
      %v667 = vmul.f32 %v307, %v643
      %v668 = vmul.f32 %v308, %v643
      %v669 = vmul.f32 %v309, %v643
      %v670 = vmul.f32 %v310, %v643
      %v671 = vmul.f32 %v311, %v643
      %v672 = vmul.f32 %v312, %v643
      %v673 = vmul.f32 %v313, %v643
      %v674 = vmul.f32 %v314, %v643
      %v675 = vmul.f32 %v315, %v643
      %v676 = vmul.f32 %v316, %v643
      %v677 = vmul.f32 %v317, %v643
      %v678 = vmul.f32 %v318, %v643
      %v679 = vmul.f32 %v319, %v643
      %v680 = vmul.f32 %v320, %v643
      %v681 = vmul.f32 %v321, %v643
      %v682 = vmul.f32 %v322, %v643
      %v683 = vmul.f32 %v323, %v643
      %v684 = vmul.f32 %v324, %v643
      %v685 = vmul.f32 %v325, %v643
      %v686 = vmul.f32 %v326, %v643
      %v687 = vmul.f32 %v327, %v643
      %v688 = vmul.f32 %v328, %v643
      %v689 = vmul.f32 %v329, %v643
      %v690 = vmul.f32 %v330, %v643
      %v691 = vmul.f32 %v331, %v643
      %v692 = vmul.f32 %v332, %v643
      %vm741 = vcmask 1043456
      %v742 = vrot.slane %v645, 4
      %v743 = vrot.slane %v646, 4
      %v744 = vsel %vm741, %v742, %v743
      %v745 = vrot.slane %v647, 4
      %v746 = vsel %vm741, %v743, %v745
      %v747 = vrot.slane %v648, 4
      %v748 = vrot.slane %v649, 4
      %v749 = vsel %vm741, %v747, %v748
      %v750 = vrot.slane %v650, 4
      %v751 = vsel %vm741, %v748, %v750
      %v752 = vrot.slane %v651, 4
      %v753 = vrot.slane %v652, 4
      %v754 = vsel %vm741, %v752, %v753
      %v755 = vrot.slane %v653, 4
      %v756 = vsel %vm741, %v753, %v755
      %v757 = vrot.slane %v654, 4
      %v758 = vrot.slane %v655, 4
      %v759 = vsel %vm741, %v757, %v758
      %v760 = vrot.slane %v656, 4
      %v761 = vsel %vm741, %v758, %v760
      %v762 = vrot.slane %v657, 4
      %v763 = vrot.slane %v658, 4
      %v764 = vsel %vm741, %v762, %v763
      %v765 = vrot.slane %v659, 4
      %v766 = vsel %vm741, %v763, %v765
      %v767 = vrot.slane %v660, 4
      %v768 = vrot.slane %v661, 4
      %v769 = vsel %vm741, %v767, %v768
      %v770 = vrot.slane %v662, 4
      %v771 = vsel %vm741, %v768, %v770
      %v772 = vrot.slane %v663, 4
      %v773 = vrot.slane %v664, 4
      %v774 = vsel %vm741, %v772, %v773
      %v775 = vrot.slane %v665, 4
      %v776 = vsel %vm741, %v773, %v775
      %v777 = vrot.slane %v666, 4
      %v778 = vrot.slane %v667, 4
      %v779 = vsel %vm741, %v777, %v778
      %v780 = vrot.slane %v668, 4
      %v781 = vsel %vm741, %v778, %v780
      %v782 = vrot.slane %v669, 4
      %v783 = vrot.slane %v670, 4
      %v784 = vsel %vm741, %v782, %v783
      %v785 = vrot.slane %v671, 4
      %v786 = vsel %vm741, %v783, %v785
      %v787 = vrot.slane %v672, 4
      %v788 = vrot.slane %v673, 4
      %v789 = vsel %vm741, %v787, %v788
      %v790 = vrot.slane %v674, 4
      %v791 = vsel %vm741, %v788, %v790
      %v792 = vrot.slane %v675, 4
      %v793 = vrot.slane %v676, 4
      %v794 = vsel %vm741, %v792, %v793
      %v795 = vrot.slane %v677, 4
      %v796 = vsel %vm741, %v793, %v795
      %v797 = vrot.slane %v678, 4
      %v798 = vrot.slane %v679, 4
      %v799 = vsel %vm741, %v797, %v798
      %v800 = vrot.slane %v680, 4
      %v801 = vsel %vm741, %v798, %v800
      %v802 = vrot.slane %v681, 4
      %v803 = vrot.slane %v682, 4
      %v804 = vsel %vm741, %v802, %v803
      %v805 = vrot.slane %v683, 4
      %v806 = vsel %vm741, %v803, %v805
      %v807 = vrot.slane %v684, 4
      %v808 = vrot.slane %v685, 4
      %v809 = vsel %vm741, %v807, %v808
      %v810 = vrot.slane %v686, 4
      %v811 = vsel %vm741, %v808, %v810
      %v812 = vrot.slane %v687, 4
      %v813 = vrot.slane %v688, 4
      %v814 = vsel %vm741, %v812, %v813
      %v815 = vrot.slane %v689, 4
      %v816 = vsel %vm741, %v813, %v815
      %v817 = vrot.slane %v690, 4
      %v818 = vrot.slane %v691, 4
      %v819 = vsel %vm741, %v817, %v818
      %v820 = vrot.slane %v692, 4
      %v821 = vsel %vm741, %v818, %v820
      %v854 = vadd.f32 %v607, %v744
      %v855 = vadd.f32 %v608, %v746
      %v856 = vadd.f32 %v609, %v749
      %v857 = vadd.f32 %v610, %v751
      %v858 = vadd.f32 %v611, %v754
      %v859 = vadd.f32 %v612, %v756
      %v860 = vadd.f32 %v613, %v759
      %v861 = vadd.f32 %v614, %v761
      %v862 = vadd.f32 %v615, %v764
      %v863 = vadd.f32 %v616, %v766
      %v864 = vadd.f32 %v617, %v769
      %v865 = vadd.f32 %v618, %v771
      %v866 = vadd.f32 %v619, %v774
      %v867 = vadd.f32 %v620, %v776
      %v868 = vadd.f32 %v621, %v779
      %v869 = vadd.f32 %v622, %v781
      %v870 = vadd.f32 %v623, %v784
      %v871 = vadd.f32 %v624, %v786
      %v872 = vadd.f32 %v625, %v789
      %v873 = vadd.f32 %v626, %v791
      %v874 = vadd.f32 %v627, %v794
      %v875 = vadd.f32 %v628, %v796
      %v876 = vadd.f32 %v629, %v799
      %v877 = vadd.f32 %v630, %v801
      %v878 = vadd.f32 %v631, %v804
      %v879 = vadd.f32 %v632, %v806
      %v880 = vadd.f32 %v633, %v809
      %v881 = vadd.f32 %v634, %v811
      %v882 = vadd.f32 %v635, %v814
      %v883 = vadd.f32 %v636, %v816
      %v884 = vadd.f32 %v637, %v819
      %v885 = vadd.f32 %v638, %v821
      %v887 = vlaneseq
      %v888 = vshrl.u32 %v887, 7
      %v889 = vsub.s32 0, %v888
      %v890 = vrot.slane %v348, %v889
      %v892 = vmul.f32 %v291, %v890
      %v893 = vmul.f32 %v292, %v890
      %v894 = vmul.f32 %v294, %v890
      %v895 = vmul.f32 %v295, %v890
      %v896 = vmul.f32 %v297, %v890
      %v897 = vmul.f32 %v298, %v890
      %v898 = vmul.f32 %v300, %v890
      %v899 = vmul.f32 %v301, %v890
      %v900 = vmul.f32 %v303, %v890
      %v901 = vmul.f32 %v304, %v890
      %v902 = vmul.f32 %v306, %v890
      %v903 = vmul.f32 %v307, %v890
      %v904 = vmul.f32 %v309, %v890
      %v905 = vmul.f32 %v310, %v890
      %v906 = vmul.f32 %v312, %v890
      %v907 = vmul.f32 %v313, %v890
      %v908 = vmul.f32 %v315, %v890
      %v909 = vmul.f32 %v316, %v890
      %v910 = vmul.f32 %v318, %v890
      %v911 = vmul.f32 %v319, %v890
      %v912 = vmul.f32 %v321, %v890
      %v913 = vmul.f32 %v322, %v890
      %v914 = vmul.f32 %v324, %v890
      %v915 = vmul.f32 %v325, %v890
      %v916 = vmul.f32 %v327, %v890
      %v917 = vmul.f32 %v328, %v890
      %v918 = vmul.f32 %v330, %v890
      %v919 = vmul.f32 %v331, %v890
      %v920 = vmul.f32 %v333, %v890
      %v921 = vmul.f32 %v334, %v890
      %v922 = vmul.f32 %v336, %v890
      %v923 = vmul.f32 %v337, %v890
      %v924 = vadd.f32 %v854, %v892
      %v925 = vadd.f32 %v855, %v893
      %v926 = vadd.f32 %v856, %v894
      %v927 = vadd.f32 %v857, %v895
      %v928 = vadd.f32 %v858, %v896
      %v929 = vadd.f32 %v859, %v897
      %v930 = vadd.f32 %v860, %v898
      %v931 = vadd.f32 %v861, %v899
      %v932 = vadd.f32 %v862, %v900
      %v933 = vadd.f32 %v863, %v901
      %v934 = vadd.f32 %v864, %v902
      %v935 = vadd.f32 %v865, %v903
      %v936 = vadd.f32 %v866, %v904
      %v937 = vadd.f32 %v867, %v905
      %v938 = vadd.f32 %v868, %v906
      %v939 = vadd.f32 %v869, %v907
      %v940 = vadd.f32 %v870, %v908
      %v941 = vadd.f32 %v871, %v909
      %v942 = vadd.f32 %v872, %v910
      %v943 = vadd.f32 %v873, %v911
      %v944 = vadd.f32 %v874, %v912
      %v945 = vadd.f32 %v875, %v913
      %v946 = vadd.f32 %v876, %v914
      %v947 = vadd.f32 %v877, %v915
      %v948 = vadd.f32 %v878, %v916
      %v949 = vadd.f32 %v879, %v917
      %v950 = vadd.f32 %v880, %v918
      %v951 = vadd.f32 %v881, %v919
      %v952 = vadd.f32 %v882, %v920
      %v953 = vadd.f32 %v883, %v921
      %v954 = vadd.f32 %v884, %v922
      %v955 = vadd.f32 %v885, %v923
      %v957 = vlaneseq
      %v958 = vshrl.u32 %v957, 7
      %v959 = vsub.s32 0, %v958
      %v960 = vrot.slane %v349, %v959
      %v962 = vmul.f32 %v291, %v960
      %v963 = vmul.f32 %v292, %v960
      %v964 = vmul.f32 %v293, %v960
      %v965 = vmul.f32 %v294, %v960
      %v966 = vmul.f32 %v295, %v960
      %v967 = vmul.f32 %v296, %v960
      %v968 = vmul.f32 %v297, %v960
      %v969 = vmul.f32 %v298, %v960
      %v970 = vmul.f32 %v299, %v960
      %v971 = vmul.f32 %v300, %v960
      %v972 = vmul.f32 %v301, %v960
      %v973 = vmul.f32 %v302, %v960
      %v974 = vmul.f32 %v303, %v960
      %v975 = vmul.f32 %v304, %v960
      %v976 = vmul.f32 %v305, %v960
      %v977 = vmul.f32 %v306, %v960
      %v978 = vmul.f32 %v307, %v960
      %v979 = vmul.f32 %v308, %v960
      %v980 = vmul.f32 %v309, %v960
      %v981 = vmul.f32 %v310, %v960
      %v982 = vmul.f32 %v311, %v960
      %v983 = vmul.f32 %v312, %v960
      %v984 = vmul.f32 %v313, %v960
      %v985 = vmul.f32 %v314, %v960
      %v986 = vmul.f32 %v315, %v960
      %v987 = vmul.f32 %v316, %v960
      %v988 = vmul.f32 %v317, %v960
      %v989 = vmul.f32 %v318, %v960
      %v990 = vmul.f32 %v319, %v960
      %v991 = vmul.f32 %v320, %v960
      %v992 = vmul.f32 %v321, %v960
      %v993 = vmul.f32 %v322, %v960
      %v994 = vmul.f32 %v323, %v960
      %v995 = vmul.f32 %v324, %v960
      %v996 = vmul.f32 %v325, %v960
      %v997 = vmul.f32 %v326, %v960
      %v998 = vmul.f32 %v327, %v960
      %v999 = vmul.f32 %v328, %v960
      %v1000 = vmul.f32 %v329, %v960
      %v1001 = vmul.f32 %v330, %v960
      %v1002 = vmul.f32 %v331, %v960
      %v1003 = vmul.f32 %v332, %v960
      %v1004 = vmul.f32 %v333, %v960
      %v1005 = vmul.f32 %v334, %v960
      %v1006 = vmul.f32 %v335, %v960
      %v1007 = vmul.f32 %v336, %v960
      %v1008 = vmul.f32 %v337, %v960
      %v1009 = vmul.f32 %v338, %v960
      %v1058 = vrot.slane %v962, 2
      %v1059 = vrot.slane %v963, 2
      %v1060 = vsel %vm494, %v1058, %v1059
      %v1061 = vrot.slane %v964, 2
      %v1062 = vsel %vm494, %v1059, %v1061
      %v1063 = vrot.slane %v965, 2
      %v1064 = vrot.slane %v966, 2
      %v1065 = vsel %vm494, %v1063, %v1064
      %v1066 = vrot.slane %v967, 2
      %v1067 = vsel %vm494, %v1064, %v1066
      %v1068 = vrot.slane %v968, 2
      %v1069 = vrot.slane %v969, 2
      %v1070 = vsel %vm494, %v1068, %v1069
      %v1071 = vrot.slane %v970, 2
      %v1072 = vsel %vm494, %v1069, %v1071
      %v1073 = vrot.slane %v971, 2
      %v1074 = vrot.slane %v972, 2
      %v1075 = vsel %vm494, %v1073, %v1074
      %v1076 = vrot.slane %v973, 2
      %v1077 = vsel %vm494, %v1074, %v1076
      %v1078 = vrot.slane %v974, 2
      %v1079 = vrot.slane %v975, 2
      %v1080 = vsel %vm494, %v1078, %v1079
      %v1081 = vrot.slane %v976, 2
      %v1082 = vsel %vm494, %v1079, %v1081
      %v1083 = vrot.slane %v977, 2
      %v1084 = vrot.slane %v978, 2
      %v1085 = vsel %vm494, %v1083, %v1084
      %v1086 = vrot.slane %v979, 2
      %v1087 = vsel %vm494, %v1084, %v1086
      %v1088 = vrot.slane %v980, 2
      %v1089 = vrot.slane %v981, 2
      %v1090 = vsel %vm494, %v1088, %v1089
      %v1091 = vrot.slane %v982, 2
      %v1092 = vsel %vm494, %v1089, %v1091
      %v1093 = vrot.slane %v983, 2
      %v1094 = vrot.slane %v984, 2
      %v1095 = vsel %vm494, %v1093, %v1094
      %v1096 = vrot.slane %v985, 2
      %v1097 = vsel %vm494, %v1094, %v1096
      %v1098 = vrot.slane %v986, 2
      %v1099 = vrot.slane %v987, 2
      %v1100 = vsel %vm494, %v1098, %v1099
      %v1101 = vrot.slane %v988, 2
      %v1102 = vsel %vm494, %v1099, %v1101
      %v1103 = vrot.slane %v989, 2
      %v1104 = vrot.slane %v990, 2
      %v1105 = vsel %vm494, %v1103, %v1104
      %v1106 = vrot.slane %v991, 2
      %v1107 = vsel %vm494, %v1104, %v1106
      %v1108 = vrot.slane %v992, 2
      %v1109 = vrot.slane %v993, 2
      %v1110 = vsel %vm494, %v1108, %v1109
      %v1111 = vrot.slane %v994, 2
      %v1112 = vsel %vm494, %v1109, %v1111
      %v1113 = vrot.slane %v995, 2
      %v1114 = vrot.slane %v996, 2
      %v1115 = vsel %vm494, %v1113, %v1114
      %v1116 = vrot.slane %v997, 2
      %v1117 = vsel %vm494, %v1114, %v1116
      %v1118 = vrot.slane %v998, 2
      %v1119 = vrot.slane %v999, 2
      %v1120 = vsel %vm494, %v1118, %v1119
      %v1121 = vrot.slane %v1000, 2
      %v1122 = vsel %vm494, %v1119, %v1121
      %v1123 = vrot.slane %v1001, 2
      %v1124 = vrot.slane %v1002, 2
      %v1125 = vsel %vm494, %v1123, %v1124
      %v1126 = vrot.slane %v1003, 2
      %v1127 = vsel %vm494, %v1124, %v1126
      %v1128 = vrot.slane %v1004, 2
      %v1129 = vrot.slane %v1005, 2
      %v1130 = vsel %vm494, %v1128, %v1129
      %v1131 = vrot.slane %v1006, 2
      %v1132 = vsel %vm494, %v1129, %v1131
      %v1133 = vrot.slane %v1007, 2
      %v1134 = vrot.slane %v1008, 2
      %v1135 = vsel %vm494, %v1133, %v1134
      %v1136 = vrot.slane %v1009, 2
      %v1137 = vsel %vm494, %v1134, %v1136
      %v1170 = vadd.f32 %v924, %v1060
      %v1171 = vadd.f32 %v925, %v1062
      %v1172 = vadd.f32 %v926, %v1065
      %v1173 = vadd.f32 %v927, %v1067
      %v1174 = vadd.f32 %v928, %v1070
      %v1175 = vadd.f32 %v929, %v1072
      %v1176 = vadd.f32 %v930, %v1075
      %v1177 = vadd.f32 %v931, %v1077
      %v1178 = vadd.f32 %v932, %v1080
      %v1179 = vadd.f32 %v933, %v1082
      %v1180 = vadd.f32 %v934, %v1085
      %v1181 = vadd.f32 %v935, %v1087
      %v1182 = vadd.f32 %v936, %v1090
      %v1183 = vadd.f32 %v937, %v1092
      %v1184 = vadd.f32 %v938, %v1095
      %v1185 = vadd.f32 %v939, %v1097
      %v1186 = vadd.f32 %v940, %v1100
      %v1187 = vadd.f32 %v941, %v1102
      %v1188 = vadd.f32 %v942, %v1105
      %v1189 = vadd.f32 %v943, %v1107
      %v1190 = vadd.f32 %v944, %v1110
      %v1191 = vadd.f32 %v945, %v1112
      %v1192 = vadd.f32 %v946, %v1115
      %v1193 = vadd.f32 %v947, %v1117
      %v1194 = vadd.f32 %v948, %v1120
      %v1195 = vadd.f32 %v949, %v1122
      %v1196 = vadd.f32 %v950, %v1125
      %v1197 = vadd.f32 %v951, %v1127
      %v1198 = vadd.f32 %v952, %v1130
      %v1199 = vadd.f32 %v953, %v1132
      %v1200 = vadd.f32 %v954, %v1135
      %v1201 = vadd.f32 %v955, %v1137
      %v1203 = vlaneseq
      %v1204 = vshrl.u32 %v1203, 7
      %v1205 = vsub.s32 0, %v1204
      %v1206 = vrot.slane %v350, %v1205
      %v1208 = vmul.f32 %v291, %v1206
      %v1209 = vmul.f32 %v292, %v1206
      %v1210 = vmul.f32 %v293, %v1206
      %v1211 = vmul.f32 %v294, %v1206
      %v1212 = vmul.f32 %v295, %v1206
      %v1213 = vmul.f32 %v296, %v1206
      %v1214 = vmul.f32 %v297, %v1206
      %v1215 = vmul.f32 %v298, %v1206
      %v1216 = vmul.f32 %v299, %v1206
      %v1217 = vmul.f32 %v300, %v1206
      %v1218 = vmul.f32 %v301, %v1206
      %v1219 = vmul.f32 %v302, %v1206
      %v1220 = vmul.f32 %v303, %v1206
      %v1221 = vmul.f32 %v304, %v1206
      %v1222 = vmul.f32 %v305, %v1206
      %v1223 = vmul.f32 %v306, %v1206
      %v1224 = vmul.f32 %v307, %v1206
      %v1225 = vmul.f32 %v308, %v1206
      %v1226 = vmul.f32 %v309, %v1206
      %v1227 = vmul.f32 %v310, %v1206
      %v1228 = vmul.f32 %v311, %v1206
      %v1229 = vmul.f32 %v312, %v1206
      %v1230 = vmul.f32 %v313, %v1206
      %v1231 = vmul.f32 %v314, %v1206
      %v1232 = vmul.f32 %v315, %v1206
      %v1233 = vmul.f32 %v316, %v1206
      %v1234 = vmul.f32 %v317, %v1206
      %v1235 = vmul.f32 %v318, %v1206
      %v1236 = vmul.f32 %v319, %v1206
      %v1237 = vmul.f32 %v320, %v1206
      %v1238 = vmul.f32 %v321, %v1206
      %v1239 = vmul.f32 %v322, %v1206
      %v1240 = vmul.f32 %v323, %v1206
      %v1241 = vmul.f32 %v324, %v1206
      %v1242 = vmul.f32 %v325, %v1206
      %v1243 = vmul.f32 %v326, %v1206
      %v1244 = vmul.f32 %v327, %v1206
      %v1245 = vmul.f32 %v328, %v1206
      %v1246 = vmul.f32 %v329, %v1206
      %v1247 = vmul.f32 %v330, %v1206
      %v1248 = vmul.f32 %v331, %v1206
      %v1249 = vmul.f32 %v332, %v1206
      %v1250 = vmul.f32 %v333, %v1206
      %v1251 = vmul.f32 %v334, %v1206
      %v1252 = vmul.f32 %v335, %v1206
      %v1253 = vmul.f32 %v336, %v1206
      %v1254 = vmul.f32 %v337, %v1206
      %v1255 = vmul.f32 %v338, %v1206
      %v1304 = vrot.slane %v1208, 4
      %v1305 = vrot.slane %v1209, 4
      %v1306 = vsel %vm741, %v1304, %v1305
      %v1307 = vrot.slane %v1210, 4
      %v1308 = vsel %vm741, %v1305, %v1307
      %v1309 = vrot.slane %v1211, 4
      %v1310 = vrot.slane %v1212, 4
      %v1311 = vsel %vm741, %v1309, %v1310
      %v1312 = vrot.slane %v1213, 4
      %v1313 = vsel %vm741, %v1310, %v1312
      %v1314 = vrot.slane %v1214, 4
      %v1315 = vrot.slane %v1215, 4
      %v1316 = vsel %vm741, %v1314, %v1315
      %v1317 = vrot.slane %v1216, 4
      %v1318 = vsel %vm741, %v1315, %v1317
      %v1319 = vrot.slane %v1217, 4
      %v1320 = vrot.slane %v1218, 4
      %v1321 = vsel %vm741, %v1319, %v1320
      %v1322 = vrot.slane %v1219, 4
      %v1323 = vsel %vm741, %v1320, %v1322
      %v1324 = vrot.slane %v1220, 4
      %v1325 = vrot.slane %v1221, 4
      %v1326 = vsel %vm741, %v1324, %v1325
      %v1327 = vrot.slane %v1222, 4
      %v1328 = vsel %vm741, %v1325, %v1327
      %v1329 = vrot.slane %v1223, 4
      %v1330 = vrot.slane %v1224, 4
      %v1331 = vsel %vm741, %v1329, %v1330
      %v1332 = vrot.slane %v1225, 4
      %v1333 = vsel %vm741, %v1330, %v1332
      %v1334 = vrot.slane %v1226, 4
      %v1335 = vrot.slane %v1227, 4
      %v1336 = vsel %vm741, %v1334, %v1335
      %v1337 = vrot.slane %v1228, 4
      %v1338 = vsel %vm741, %v1335, %v1337
      %v1339 = vrot.slane %v1229, 4
      %v1340 = vrot.slane %v1230, 4
      %v1341 = vsel %vm741, %v1339, %v1340
      %v1342 = vrot.slane %v1231, 4
      %v1343 = vsel %vm741, %v1340, %v1342
      %v1344 = vrot.slane %v1232, 4
      %v1345 = vrot.slane %v1233, 4
      %v1346 = vsel %vm741, %v1344, %v1345
      %v1347 = vrot.slane %v1234, 4
      %v1348 = vsel %vm741, %v1345, %v1347
      %v1349 = vrot.slane %v1235, 4
      %v1350 = vrot.slane %v1236, 4
      %v1351 = vsel %vm741, %v1349, %v1350
      %v1352 = vrot.slane %v1237, 4
      %v1353 = vsel %vm741, %v1350, %v1352
      %v1354 = vrot.slane %v1238, 4
      %v1355 = vrot.slane %v1239, 4
      %v1356 = vsel %vm741, %v1354, %v1355
      %v1357 = vrot.slane %v1240, 4
      %v1358 = vsel %vm741, %v1355, %v1357
      %v1359 = vrot.slane %v1241, 4
      %v1360 = vrot.slane %v1242, 4
      %v1361 = vsel %vm741, %v1359, %v1360
      %v1362 = vrot.slane %v1243, 4
      %v1363 = vsel %vm741, %v1360, %v1362
      %v1364 = vrot.slane %v1244, 4
      %v1365 = vrot.slane %v1245, 4
      %v1366 = vsel %vm741, %v1364, %v1365
      %v1367 = vrot.slane %v1246, 4
      %v1368 = vsel %vm741, %v1365, %v1367
      %v1369 = vrot.slane %v1247, 4
      %v1370 = vrot.slane %v1248, 4
      %v1371 = vsel %vm741, %v1369, %v1370
      %v1372 = vrot.slane %v1249, 4
      %v1373 = vsel %vm741, %v1370, %v1372
      %v1374 = vrot.slane %v1250, 4
      %v1375 = vrot.slane %v1251, 4
      %v1376 = vsel %vm741, %v1374, %v1375
      %v1377 = vrot.slane %v1252, 4
      %v1378 = vsel %vm741, %v1375, %v1377
      %v1379 = vrot.slane %v1253, 4
      %v1380 = vrot.slane %v1254, 4
      %v1381 = vsel %vm741, %v1379, %v1380
      %v1382 = vrot.slane %v1255, 4
      %v1383 = vsel %vm741, %v1380, %v1382
      %v1416 = vadd.f32 %v1170, %v1306
      %v1417 = vadd.f32 %v1171, %v1308
      %v1418 = vadd.f32 %v1172, %v1311
      %v1419 = vadd.f32 %v1173, %v1313
      %v1420 = vadd.f32 %v1174, %v1316
      %v1421 = vadd.f32 %v1175, %v1318
      %v1422 = vadd.f32 %v1176, %v1321
      %v1423 = vadd.f32 %v1177, %v1323
      %v1424 = vadd.f32 %v1178, %v1326
      %v1425 = vadd.f32 %v1179, %v1328
      %v1426 = vadd.f32 %v1180, %v1331
      %v1427 = vadd.f32 %v1181, %v1333
      %v1428 = vadd.f32 %v1182, %v1336
      %v1429 = vadd.f32 %v1183, %v1338
      %v1430 = vadd.f32 %v1184, %v1341
      %v1431 = vadd.f32 %v1185, %v1343
      %v1432 = vadd.f32 %v1186, %v1346
      %v1433 = vadd.f32 %v1187, %v1348
      %v1434 = vadd.f32 %v1188, %v1351
      %v1435 = vadd.f32 %v1189, %v1353
      %v1436 = vadd.f32 %v1190, %v1356
      %v1437 = vadd.f32 %v1191, %v1358
      %v1438 = vadd.f32 %v1192, %v1361
      %v1439 = vadd.f32 %v1193, %v1363
      %v1440 = vadd.f32 %v1194, %v1366
      %v1441 = vadd.f32 %v1195, %v1368
      %v1442 = vadd.f32 %v1196, %v1371
      %v1443 = vadd.f32 %v1197, %v1373
      %v1444 = vadd.f32 %v1198, %v1376
      %v1445 = vadd.f32 %v1199, %v1378
      %v1446 = vadd.f32 %v1200, %v1381
      %v1447 = vadd.f32 %v1201, %v1383
      %v1449 = vlaneseq
      %v1450 = vshrl.u32 %v1449, 7
      %v1451 = vsub.s32 0, %v1450
      %v1452 = vrot.slane %v351, %v1451
      %v1454 = vmul.f32 %v297, %v1452
      %v1455 = vmul.f32 %v298, %v1452
      %v1456 = vmul.f32 %v300, %v1452
      %v1457 = vmul.f32 %v301, %v1452
      %v1458 = vmul.f32 %v303, %v1452
      %v1459 = vmul.f32 %v304, %v1452
      %v1460 = vmul.f32 %v306, %v1452
      %v1461 = vmul.f32 %v307, %v1452
      %v1462 = vmul.f32 %v309, %v1452
      %v1463 = vmul.f32 %v310, %v1452
      %v1464 = vmul.f32 %v312, %v1452
      %v1465 = vmul.f32 %v313, %v1452
      %v1466 = vmul.f32 %v315, %v1452
      %v1467 = vmul.f32 %v316, %v1452
      %v1468 = vmul.f32 %v318, %v1452
      %v1469 = vmul.f32 %v319, %v1452
      %v1470 = vmul.f32 %v321, %v1452
      %v1471 = vmul.f32 %v322, %v1452
      %v1472 = vmul.f32 %v324, %v1452
      %v1473 = vmul.f32 %v325, %v1452
      %v1474 = vmul.f32 %v327, %v1452
      %v1475 = vmul.f32 %v328, %v1452
      %v1476 = vmul.f32 %v330, %v1452
      %v1477 = vmul.f32 %v331, %v1452
      %v1478 = vmul.f32 %v333, %v1452
      %v1479 = vmul.f32 %v334, %v1452
      %v1480 = vmul.f32 %v336, %v1452
      %v1481 = vmul.f32 %v337, %v1452
      %v1482 = vmul.f32 %v339, %v1452
      %v1483 = vmul.f32 %v340, %v1452
      %v1484 = vmul.f32 %v342, %v1452
      %v1485 = vmul.f32 %v343, %v1452
      %v1486 = vadd.f32 %v1416, %v1454
      %v1487 = vadd.f32 %v1417, %v1455
      %v1488 = vadd.f32 %v1418, %v1456
      %v1489 = vadd.f32 %v1419, %v1457
      %v1490 = vadd.f32 %v1420, %v1458
      %v1491 = vadd.f32 %v1421, %v1459
      %v1492 = vadd.f32 %v1422, %v1460
      %v1493 = vadd.f32 %v1423, %v1461
      %v1494 = vadd.f32 %v1424, %v1462
      %v1495 = vadd.f32 %v1425, %v1463
      %v1496 = vadd.f32 %v1426, %v1464
      %v1497 = vadd.f32 %v1427, %v1465
      %v1498 = vadd.f32 %v1428, %v1466
      %v1499 = vadd.f32 %v1429, %v1467
      %v1500 = vadd.f32 %v1430, %v1468
      %v1501 = vadd.f32 %v1431, %v1469
      %v1502 = vadd.f32 %v1432, %v1470
      %v1503 = vadd.f32 %v1433, %v1471
      %v1504 = vadd.f32 %v1434, %v1472
      %v1505 = vadd.f32 %v1435, %v1473
      %v1506 = vadd.f32 %v1436, %v1474
      %v1507 = vadd.f32 %v1437, %v1475
      %v1508 = vadd.f32 %v1438, %v1476
      %v1509 = vadd.f32 %v1439, %v1477
      %v1510 = vadd.f32 %v1440, %v1478
      %v1511 = vadd.f32 %v1441, %v1479
      %v1512 = vadd.f32 %v1442, %v1480
      %v1513 = vadd.f32 %v1443, %v1481
      %v1514 = vadd.f32 %v1444, %v1482
      %v1515 = vadd.f32 %v1445, %v1483
      %v1516 = vadd.f32 %v1446, %v1484
      %v1517 = vadd.f32 %v1447, %v1485
      %v1519 = vlaneseq
      %v1520 = vshrl.u32 %v1519, 7
      %v1521 = vsub.s32 0, %v1520
      %v1522 = vrot.slane %v352, %v1521
      %v1524 = vmul.f32 %v297, %v1522
      %v1525 = vmul.f32 %v298, %v1522
      %v1526 = vmul.f32 %v299, %v1522
      %v1527 = vmul.f32 %v300, %v1522
      %v1528 = vmul.f32 %v301, %v1522
      %v1529 = vmul.f32 %v302, %v1522
      %v1530 = vmul.f32 %v303, %v1522
      %v1531 = vmul.f32 %v304, %v1522
      %v1532 = vmul.f32 %v305, %v1522
      %v1533 = vmul.f32 %v306, %v1522
      %v1534 = vmul.f32 %v307, %v1522
      %v1535 = vmul.f32 %v308, %v1522
      %v1536 = vmul.f32 %v309, %v1522
      %v1537 = vmul.f32 %v310, %v1522
      %v1538 = vmul.f32 %v311, %v1522
      %v1539 = vmul.f32 %v312, %v1522
      %v1540 = vmul.f32 %v313, %v1522
      %v1541 = vmul.f32 %v314, %v1522
      %v1542 = vmul.f32 %v315, %v1522
      %v1543 = vmul.f32 %v316, %v1522
      %v1544 = vmul.f32 %v317, %v1522
      %v1545 = vmul.f32 %v318, %v1522
      %v1546 = vmul.f32 %v319, %v1522
      %v1547 = vmul.f32 %v320, %v1522
      %v1548 = vmul.f32 %v321, %v1522
      %v1549 = vmul.f32 %v322, %v1522
      %v1550 = vmul.f32 %v323, %v1522
      %v1551 = vmul.f32 %v324, %v1522
      %v1552 = vmul.f32 %v325, %v1522
      %v1553 = vmul.f32 %v326, %v1522
      %v1554 = vmul.f32 %v327, %v1522
      %v1555 = vmul.f32 %v328, %v1522
      %v1556 = vmul.f32 %v329, %v1522
      %v1557 = vmul.f32 %v330, %v1522
      %v1558 = vmul.f32 %v331, %v1522
      %v1559 = vmul.f32 %v332, %v1522
      %v1560 = vmul.f32 %v333, %v1522
      %v1561 = vmul.f32 %v334, %v1522
      %v1562 = vmul.f32 %v335, %v1522
      %v1563 = vmul.f32 %v336, %v1522
      %v1564 = vmul.f32 %v337, %v1522
      %v1565 = vmul.f32 %v338, %v1522
      %v1566 = vmul.f32 %v339, %v1522
      %v1567 = vmul.f32 %v340, %v1522
      %v1568 = vmul.f32 %v341, %v1522
      %v1569 = vmul.f32 %v342, %v1522
      %v1570 = vmul.f32 %v343, %v1522
      %v1571 = vmul.f32 %v344, %v1522
      %v1620 = vrot.slane %v1524, 2
      %v1621 = vrot.slane %v1525, 2
      %v1622 = vsel %vm494, %v1620, %v1621
      %v1623 = vrot.slane %v1526, 2
      %v1624 = vsel %vm494, %v1621, %v1623
      %v1625 = vrot.slane %v1527, 2
      %v1626 = vrot.slane %v1528, 2
      %v1627 = vsel %vm494, %v1625, %v1626
      %v1628 = vrot.slane %v1529, 2
      %v1629 = vsel %vm494, %v1626, %v1628
      %v1630 = vrot.slane %v1530, 2
      %v1631 = vrot.slane %v1531, 2
      %v1632 = vsel %vm494, %v1630, %v1631
      %v1633 = vrot.slane %v1532, 2
      %v1634 = vsel %vm494, %v1631, %v1633
      %v1635 = vrot.slane %v1533, 2
      %v1636 = vrot.slane %v1534, 2
      %v1637 = vsel %vm494, %v1635, %v1636
      %v1638 = vrot.slane %v1535, 2
      %v1639 = vsel %vm494, %v1636, %v1638
      %v1640 = vrot.slane %v1536, 2
      %v1641 = vrot.slane %v1537, 2
      %v1642 = vsel %vm494, %v1640, %v1641
      %v1643 = vrot.slane %v1538, 2
      %v1644 = vsel %vm494, %v1641, %v1643
      %v1645 = vrot.slane %v1539, 2
      %v1646 = vrot.slane %v1540, 2
      %v1647 = vsel %vm494, %v1645, %v1646
      %v1648 = vrot.slane %v1541, 2
      %v1649 = vsel %vm494, %v1646, %v1648
      %v1650 = vrot.slane %v1542, 2
      %v1651 = vrot.slane %v1543, 2
      %v1652 = vsel %vm494, %v1650, %v1651
      %v1653 = vrot.slane %v1544, 2
      %v1654 = vsel %vm494, %v1651, %v1653
      %v1655 = vrot.slane %v1545, 2
      %v1656 = vrot.slane %v1546, 2
      %v1657 = vsel %vm494, %v1655, %v1656
      %v1658 = vrot.slane %v1547, 2
      %v1659 = vsel %vm494, %v1656, %v1658
      %v1660 = vrot.slane %v1548, 2
      %v1661 = vrot.slane %v1549, 2
      %v1662 = vsel %vm494, %v1660, %v1661
      %v1663 = vrot.slane %v1550, 2
      %v1664 = vsel %vm494, %v1661, %v1663
      %v1665 = vrot.slane %v1551, 2
      %v1666 = vrot.slane %v1552, 2
      %v1667 = vsel %vm494, %v1665, %v1666
      %v1668 = vrot.slane %v1553, 2
      %v1669 = vsel %vm494, %v1666, %v1668
      %v1670 = vrot.slane %v1554, 2
      %v1671 = vrot.slane %v1555, 2
      %v1672 = vsel %vm494, %v1670, %v1671
      %v1673 = vrot.slane %v1556, 2
      %v1674 = vsel %vm494, %v1671, %v1673
      %v1675 = vrot.slane %v1557, 2
      %v1676 = vrot.slane %v1558, 2
      %v1677 = vsel %vm494, %v1675, %v1676
      %v1678 = vrot.slane %v1559, 2
      %v1679 = vsel %vm494, %v1676, %v1678
      %v1680 = vrot.slane %v1560, 2
      %v1681 = vrot.slane %v1561, 2
      %v1682 = vsel %vm494, %v1680, %v1681
      %v1683 = vrot.slane %v1562, 2
      %v1684 = vsel %vm494, %v1681, %v1683
      %v1685 = vrot.slane %v1563, 2
      %v1686 = vrot.slane %v1564, 2
      %v1687 = vsel %vm494, %v1685, %v1686
      %v1688 = vrot.slane %v1565, 2
      %v1689 = vsel %vm494, %v1686, %v1688
      %v1690 = vrot.slane %v1566, 2
      %v1691 = vrot.slane %v1567, 2
      %v1692 = vsel %vm494, %v1690, %v1691
      %v1693 = vrot.slane %v1568, 2
      %v1694 = vsel %vm494, %v1691, %v1693
      %v1695 = vrot.slane %v1569, 2
      %v1696 = vrot.slane %v1570, 2
      %v1697 = vsel %vm494, %v1695, %v1696
      %v1698 = vrot.slane %v1571, 2
      %v1699 = vsel %vm494, %v1696, %v1698
      %v1732 = vadd.f32 %v1486, %v1622
      %v1733 = vadd.f32 %v1487, %v1624
      %v1734 = vadd.f32 %v1488, %v1627
      %v1735 = vadd.f32 %v1489, %v1629
      %v1736 = vadd.f32 %v1490, %v1632
      %v1737 = vadd.f32 %v1491, %v1634
      %v1738 = vadd.f32 %v1492, %v1637
      %v1739 = vadd.f32 %v1493, %v1639
      %v1740 = vadd.f32 %v1494, %v1642
      %v1741 = vadd.f32 %v1495, %v1644
      %v1742 = vadd.f32 %v1496, %v1647
      %v1743 = vadd.f32 %v1497, %v1649
      %v1744 = vadd.f32 %v1498, %v1652
      %v1745 = vadd.f32 %v1499, %v1654
      %v1746 = vadd.f32 %v1500, %v1657
      %v1747 = vadd.f32 %v1501, %v1659
      %v1748 = vadd.f32 %v1502, %v1662
      %v1749 = vadd.f32 %v1503, %v1664
      %v1750 = vadd.f32 %v1504, %v1667
      %v1751 = vadd.f32 %v1505, %v1669
      %v1752 = vadd.f32 %v1506, %v1672
      %v1753 = vadd.f32 %v1507, %v1674
      %v1754 = vadd.f32 %v1508, %v1677
      %v1755 = vadd.f32 %v1509, %v1679
      %v1756 = vadd.f32 %v1510, %v1682
      %v1757 = vadd.f32 %v1511, %v1684
      %v1758 = vadd.f32 %v1512, %v1687
      %v1759 = vadd.f32 %v1513, %v1689
      %v1760 = vadd.f32 %v1514, %v1692
      %v1761 = vadd.f32 %v1515, %v1694
      %v1762 = vadd.f32 %v1516, %v1697
      %v1763 = vadd.f32 %v1517, %v1699
      %v1765 = vlaneseq
      %v1766 = vshrl.u32 %v1765, 7
      %v1767 = vsub.s32 0, %v1766
      %v1768 = vrot.slane %v353, %v1767
      %v1770 = vmul.f32 %v297, %v1768
      %v1771 = vmul.f32 %v298, %v1768
      %v1772 = vmul.f32 %v299, %v1768
      %v1773 = vmul.f32 %v300, %v1768
      %v1774 = vmul.f32 %v301, %v1768
      %v1775 = vmul.f32 %v302, %v1768
      %v1776 = vmul.f32 %v303, %v1768
      %v1777 = vmul.f32 %v304, %v1768
      %v1778 = vmul.f32 %v305, %v1768
      %v1779 = vmul.f32 %v306, %v1768
      %v1780 = vmul.f32 %v307, %v1768
      %v1781 = vmul.f32 %v308, %v1768
      %v1782 = vmul.f32 %v309, %v1768
      %v1783 = vmul.f32 %v310, %v1768
      %v1784 = vmul.f32 %v311, %v1768
      %v1785 = vmul.f32 %v312, %v1768
      %v1786 = vmul.f32 %v313, %v1768
      %v1787 = vmul.f32 %v314, %v1768
      %v1788 = vmul.f32 %v315, %v1768
      %v1789 = vmul.f32 %v316, %v1768
      %v1790 = vmul.f32 %v317, %v1768
      %v1791 = vmul.f32 %v318, %v1768
      %v1792 = vmul.f32 %v319, %v1768
      %v1793 = vmul.f32 %v320, %v1768
      %v1794 = vmul.f32 %v321, %v1768
      %v1795 = vmul.f32 %v322, %v1768
      %v1796 = vmul.f32 %v323, %v1768
      %v1797 = vmul.f32 %v324, %v1768
      %v1798 = vmul.f32 %v325, %v1768
      %v1799 = vmul.f32 %v326, %v1768
      %v1800 = vmul.f32 %v327, %v1768
      %v1801 = vmul.f32 %v328, %v1768
      %v1802 = vmul.f32 %v329, %v1768
      %v1803 = vmul.f32 %v330, %v1768
      %v1804 = vmul.f32 %v331, %v1768
      %v1805 = vmul.f32 %v332, %v1768
      %v1806 = vmul.f32 %v333, %v1768
      %v1807 = vmul.f32 %v334, %v1768
      %v1808 = vmul.f32 %v335, %v1768
      %v1809 = vmul.f32 %v336, %v1768
      %v1810 = vmul.f32 %v337, %v1768
      %v1811 = vmul.f32 %v338, %v1768
      %v1812 = vmul.f32 %v339, %v1768
      %v1813 = vmul.f32 %v340, %v1768
      %v1814 = vmul.f32 %v341, %v1768
      %v1815 = vmul.f32 %v342, %v1768
      %v1816 = vmul.f32 %v343, %v1768
      %v1817 = vmul.f32 %v344, %v1768
      %v1866 = vrot.slane %v1770, 4
      %v1867 = vrot.slane %v1771, 4
      %v1868 = vsel %vm741, %v1866, %v1867
      %v1869 = vrot.slane %v1772, 4
      %v1870 = vsel %vm741, %v1867, %v1869
      %v1871 = vrot.slane %v1773, 4
      %v1872 = vrot.slane %v1774, 4
      %v1873 = vsel %vm741, %v1871, %v1872
      %v1874 = vrot.slane %v1775, 4
      %v1875 = vsel %vm741, %v1872, %v1874
      %v1876 = vrot.slane %v1776, 4
      %v1877 = vrot.slane %v1777, 4
      %v1878 = vsel %vm741, %v1876, %v1877
      %v1879 = vrot.slane %v1778, 4
      %v1880 = vsel %vm741, %v1877, %v1879
      %v1881 = vrot.slane %v1779, 4
      %v1882 = vrot.slane %v1780, 4
      %v1883 = vsel %vm741, %v1881, %v1882
      %v1884 = vrot.slane %v1781, 4
      %v1885 = vsel %vm741, %v1882, %v1884
      %v1886 = vrot.slane %v1782, 4
      %v1887 = vrot.slane %v1783, 4
      %v1888 = vsel %vm741, %v1886, %v1887
      %v1889 = vrot.slane %v1784, 4
      %v1890 = vsel %vm741, %v1887, %v1889
      %v1891 = vrot.slane %v1785, 4
      %v1892 = vrot.slane %v1786, 4
      %v1893 = vsel %vm741, %v1891, %v1892
      %v1894 = vrot.slane %v1787, 4
      %v1895 = vsel %vm741, %v1892, %v1894
      %v1896 = vrot.slane %v1788, 4
      %v1897 = vrot.slane %v1789, 4
      %v1898 = vsel %vm741, %v1896, %v1897
      %v1899 = vrot.slane %v1790, 4
      %v1900 = vsel %vm741, %v1897, %v1899
      %v1901 = vrot.slane %v1791, 4
      %v1902 = vrot.slane %v1792, 4
      %v1903 = vsel %vm741, %v1901, %v1902
      %v1904 = vrot.slane %v1793, 4
      %v1905 = vsel %vm741, %v1902, %v1904
      %v1906 = vrot.slane %v1794, 4
      %v1907 = vrot.slane %v1795, 4
      %v1908 = vsel %vm741, %v1906, %v1907
      %v1909 = vrot.slane %v1796, 4
      %v1910 = vsel %vm741, %v1907, %v1909
      %v1911 = vrot.slane %v1797, 4
      %v1912 = vrot.slane %v1798, 4
      %v1913 = vsel %vm741, %v1911, %v1912
      %v1914 = vrot.slane %v1799, 4
      %v1915 = vsel %vm741, %v1912, %v1914
      %v1916 = vrot.slane %v1800, 4
      %v1917 = vrot.slane %v1801, 4
      %v1918 = vsel %vm741, %v1916, %v1917
      %v1919 = vrot.slane %v1802, 4
      %v1920 = vsel %vm741, %v1917, %v1919
      %v1921 = vrot.slane %v1803, 4
      %v1922 = vrot.slane %v1804, 4
      %v1923 = vsel %vm741, %v1921, %v1922
      %v1924 = vrot.slane %v1805, 4
      %v1925 = vsel %vm741, %v1922, %v1924
      %v1926 = vrot.slane %v1806, 4
      %v1927 = vrot.slane %v1807, 4
      %v1928 = vsel %vm741, %v1926, %v1927
      %v1929 = vrot.slane %v1808, 4
      %v1930 = vsel %vm741, %v1927, %v1929
      %v1931 = vrot.slane %v1809, 4
      %v1932 = vrot.slane %v1810, 4
      %v1933 = vsel %vm741, %v1931, %v1932
      %v1934 = vrot.slane %v1811, 4
      %v1935 = vsel %vm741, %v1932, %v1934
      %v1936 = vrot.slane %v1812, 4
      %v1937 = vrot.slane %v1813, 4
      %v1938 = vsel %vm741, %v1936, %v1937
      %v1939 = vrot.slane %v1814, 4
      %v1940 = vsel %vm741, %v1937, %v1939
      %v1941 = vrot.slane %v1815, 4
      %v1942 = vrot.slane %v1816, 4
      %v1943 = vsel %vm741, %v1941, %v1942
      %v1944 = vrot.slane %v1817, 4
      %v1945 = vsel %vm741, %v1942, %v1944
      %v1978 = vadd.f32 %v1732, %v1868
      %v1979 = vadd.f32 %v1733, %v1870
      %v1980 = vadd.f32 %v1734, %v1873
      %v1981 = vadd.f32 %v1735, %v1875
      %v1982 = vadd.f32 %v1736, %v1878
      %v1983 = vadd.f32 %v1737, %v1880
      %v1984 = vadd.f32 %v1738, %v1883
      %v1985 = vadd.f32 %v1739, %v1885
      %v1986 = vadd.f32 %v1740, %v1888
      %v1987 = vadd.f32 %v1741, %v1890
      %v1988 = vadd.f32 %v1742, %v1893
      %v1989 = vadd.f32 %v1743, %v1895
      %v1990 = vadd.f32 %v1744, %v1898
      %v1991 = vadd.f32 %v1745, %v1900
      %v1992 = vadd.f32 %v1746, %v1903
      %v1993 = vadd.f32 %v1747, %v1905
      %v1994 = vadd.f32 %v1748, %v1908
      %v1995 = vadd.f32 %v1749, %v1910
      %v1996 = vadd.f32 %v1750, %v1913
      %v1997 = vadd.f32 %v1751, %v1915
      %v1998 = vadd.f32 %v1752, %v1918
      %v1999 = vadd.f32 %v1753, %v1920
      %v2000 = vadd.f32 %v1754, %v1923
      %v2001 = vadd.f32 %v1755, %v1925
      %v2002 = vadd.f32 %v1756, %v1928
      %v2003 = vadd.f32 %v1757, %v1930
      %v2004 = vadd.f32 %v1758, %v1933
      %v2005 = vadd.f32 %v1759, %v1935
      %v2006 = vadd.f32 %v1760, %v1938
      %v2007 = vadd.f32 %v1761, %v1940
      %v2008 = vadd.f32 %v1762, %v1943
      %v2009 = vadd.f32 %v1763, %v1945
      %v2010 = vld [vmem:[%s2] sm:$0xf]
      %vm2011 = vcmask 31744
      %v2013 = vsel %vm2011, %v1978, 0
      %v2016 = vsel %vm2011, %v1979, 0
      %v2019 = vsel %vm2011, %v1980, 0
      %v2022 = vsel %vm2011, %v1981, 0
      %v2025 = vsel %vm2011, %v1982, 0
      %v2028 = vsel %vm2011, %v1983, 0
      %v2031 = vsel %vm2011, %v1984, 0
      %v2034 = vsel %vm2011, %v1985, 0
      %v2037 = vsel %vm2011, %v1986, 0
      %v2040 = vsel %vm2011, %v1987, 0
      %v2043 = vsel %vm2011, %v1988, 0
      %v2046 = vsel %vm2011, %v1989, 0
      %v2049 = vsel %vm2011, %v1990, 0
      %v2052 = vsel %vm2011, %v1991, 0
      %v2055 = vsel %vm2011, %v1992, 0
      %v2058 = vsel %vm2011, %v1993, 0
      %v2061 = vsel %vm2011, %v1994, 0
      %v2064 = vsel %vm2011, %v1995, 0
      %v2067 = vsel %vm2011, %v1996, 0
      %v2070 = vsel %vm2011, %v1997, 0
      %v2073 = vsel %vm2011, %v1998, 0
      %v2076 = vsel %vm2011, %v1999, 0
      %v2079 = vsel %vm2011, %v2000, 0
      %v2082 = vsel %vm2011, %v2001, 0
      %v2085 = vsel %vm2011, %v2002, 0
      %v2088 = vsel %vm2011, %v2003, 0
      %v2091 = vsel %vm2011, %v2004, 0
      %v2094 = vsel %vm2011, %v2005, 0
      %v2097 = vsel %vm2011, %v2006, 0
      %v2100 = vsel %vm2011, %v2007, 0
      %v2103 = vsel %vm2011, %v2008, 0
      %v2106 = vsel %vm2011, %v2009, 0
      %v2109 = vsel %vm741, %v2010, 0
      %2111 = vmatprep.subr.mxu0 0.0
      %2112 = vmatpush1.msra.mxu0 %v2109
      %2113 = vmatprep.subr.mxu0 0.0
      %2114 = vmatpush1.msra.mxu0 0.0
      %2115 = vmatprep.subr.mxu0 0.0
      %2116 = vmatpush1.msra.mxu0 0.0
      %2117 = vmatprep.subr.mxu0 0.0
      %2118 = vmatpush1.msra.mxu0 0.0
      %2119 = vmatprep.subr.mxu0 0.0
      %2120 = vmatpush1.msra.mxu0 0.0
      %2121 = vmatprep.subr.mxu0 0.0
      %2122 = vmatpush1.msra.mxu0 0.0
      %2123 = vmatprep.subr.mxu0 0.0
      %2124 = vmatpush1.msra.mxu0 0.0
      %2125 = vmatprep.subr.mxu0 0.0
      %2126 = vmatpush1.msra.mxu0 0.0
      %2127 = vmatprep.subr.mxu0 0.0
      %2128 = vmatpush1.msra.mxu0 0.0
      %2129 = vmatprep.subr.mxu0 0.0
      %2130 = vmatpush1.msra.mxu0 0.0
      %2131 = vmatprep.subr.mxu0 0.0
      %2132 = vmatpush1.msra.mxu0 0.0
      %2133 = vmatprep.subr.mxu0 0.0
      %2134 = vmatpush1.msra.mxu0 0.0
      %2135 = vmatprep.subr.mxu0 0.0
      %2136 = vmatpush1.msra.mxu0 0.0
      %2137 = vmatprep.subr.mxu0 0.0
      %2138 = vmatpush1.msra.mxu0 0.0
      %2139 = vmatprep.subr.mxu0 0.0
      %2140 = vmatpush1.msra.mxu0 0.0
      %2141 = vmatprep.subr.mxu0 0.0
      %2142 = vmatpush1.msra.mxu0 0.0
      %2143 = vmatprep.subr.mxu0 0.0
      %2144 = vmatpush1.msra.mxu0 0.0
      %2145 = vmatprep.subr.mxu0 0.0
      %2146 = vmatpush1.msra.mxu0 0.0
      %2147 = vmatprep.subr.mxu0 0.0
      %2148 = vmatpush1.msra.mxu0 0.0
      %2149 = vmatprep.subr.mxu0 0.0
      %2150 = vmatpush1.msra.mxu0 0.0
      %2151 = vmatprep.subr.mxu0 0.0
      %2152 = vmatpush1.msra.mxu0 0.0
      %2153 = vmatprep.subr.mxu0 0.0
      %2154 = vmatpush1.msra.mxu0 0.0
      %2155 = vmatprep.subr.mxu0 0.0
      %2156 = vmatpush1.msra.mxu0 0.0
      %2157 = vmatprep.subr.mxu0 0.0
      %2158 = vmatpush1.msra.mxu0 0.0
      %2159 = vmatprep.subr.mxu0 0.0
      %2160 = vmatpush1.msra.mxu0 0.0
      %2161 = vmatprep.subr.mxu0 0.0
      %2162 = vmatpush1.msra.mxu0 0.0
      %2163 = vmatprep.subr.mxu0 0.0
      %2164 = vmatpush1.msra.mxu0 0.0
      %2165 = vmatprep.subr.mxu0 0.0
      %2166 = vmatpush1.msra.mxu0 0.0
      %2167 = vmatprep.subr.mxu0 0.0
      %2168 = vmatpush1.msra.mxu0 0.0
      %2169 = vmatprep.subr.mxu0 0.0
      %2170 = vmatpush1.msra.mxu0 0.0
      %2171 = vmatprep.subr.mxu0 0.0
      %2172 = vmatpush1.msra.mxu0 0.0
      %2173 = vmatprep.subr.mxu0 0.0
      %2174 = vmatpush1.msra.mxu0 0.0
      %2175 = vmatprep.mubr.f32.mxu0 0.0
      %2176 = vmatmul.mubr.f32.gmra.mrb[0].mxu0 %v2013
      %v2177 = vpop.f32.mrb[0].mxu0
      %v2178 = vadd.f32 0.0, %v2177
      %v2179 = vpop.f32.mrb[0].mxu0
      %2180 = vmatprep.mubr.f32.mxu0 0.0
      %2181 = vmatmul.mubr.f32.gmra.mrb[0].mxu0 %v2016
      %v2182 = vpop.f32.mrb[0].mxu0
      %v2183 = vadd.f32 0.0, %v2182
      %v2184 = vpop.f32.mrb[0].mxu0
      %2185 = vmatprep.mubr.f32.mxu0 0.0
      %2186 = vmatmul.mubr.f32.gmra.mrb[0].mxu0 %v2019
      %v2187 = vpop.f32.mrb[0].mxu0
      %v2188 = vadd.f32 0.0, %v2187
      %v2189 = vpop.f32.mrb[0].mxu0
      %2190 = vmatprep.mubr.f32.mxu0 0.0
      %2191 = vmatmul.mubr.f32.gmra.mrb[0].mxu0 %v2022
      %v2192 = vpop.f32.mrb[0].mxu0
      %v2193 = vadd.f32 0.0, %v2192
      %v2194 = vpop.f32.mrb[0].mxu0
      %2195 = vmatprep.mubr.f32.mxu0 0.0
      %2196 = vmatmul.mubr.f32.gmra.mrb[0].mxu0 %v2025
      %v2197 = vpop.f32.mrb[0].mxu0
      %v2198 = vadd.f32 0.0, %v2197
      %v2199 = vpop.f32.mrb[0].mxu0
      %2200 = vmatprep.mubr.f32.mxu0 0.0
      %2201 = vmatmul.mubr.f32.gmra.mrb[0].mxu0 %v2028
      %v2202 = vpop.f32.mrb[0].mxu0
      %v2203 = vadd.f32 0.0, %v2202
      %v2204 = vpop.f32.mrb[0].mxu0
      %2205 = vmatprep.mubr.f32.mxu0 0.0
      %2206 = vmatmul.mubr.f32.gmra.mrb[0].mxu0 %v2031
      %v2207 = vpop.f32.mrb[0].mxu0
      %v2208 = vadd.f32 0.0, %v2207
      %v2209 = vpop.f32.mrb[0].mxu0
      %2210 = vmatprep.mubr.f32.mxu0 0.0
      %2211 = vmatmul.mubr.f32.gmra.mrb[0].mxu0 %v2034
      %v2212 = vpop.f32.mrb[0].mxu0
      %v2213 = vadd.f32 0.0, %v2212
      %v2214 = vpop.f32.mrb[0].mxu0
      %2215 = vmatprep.mubr.f32.mxu0 0.0
      %2216 = vmatmul.mubr.f32.gmra.mrb[0].mxu0 %v2037
      %v2217 = vpop.f32.mrb[0].mxu0
      %v2218 = vadd.f32 0.0, %v2217
      %v2219 = vpop.f32.mrb[0].mxu0
      %2220 = vmatprep.mubr.f32.mxu0 0.0
      %2221 = vmatmul.mubr.f32.gmra.mrb[0].mxu0 %v2040
      %v2222 = vpop.f32.mrb[0].mxu0
      %v2223 = vadd.f32 0.0, %v2222
      %v2224 = vpop.f32.mrb[0].mxu0
      %2225 = vmatprep.mubr.f32.mxu0 0.0
      %2226 = vmatmul.mubr.f32.gmra.mrb[0].mxu0 %v2043
      %v2227 = vpop.f32.mrb[0].mxu0
      %v2228 = vadd.f32 0.0, %v2227
      %v2229 = vpop.f32.mrb[0].mxu0
      %2230 = vmatprep.mubr.f32.mxu0 0.0
      %2231 = vmatmul.mubr.f32.gmra.mrb[0].mxu0 %v2046
      %v2232 = vpop.f32.mrb[0].mxu0
      %v2233 = vadd.f32 0.0, %v2232
      %v2234 = vpop.f32.mrb[0].mxu0
      %2235 = vmatprep.mubr.f32.mxu0 0.0
      %2236 = vmatmul.mubr.f32.gmra.mrb[0].mxu0 %v2049
      %v2237 = vpop.f32.mrb[0].mxu0
      %v2238 = vadd.f32 0.0, %v2237
      %v2239 = vpop.f32.mrb[0].mxu0
      %2240 = vmatprep.mubr.f32.mxu0 0.0
      %2241 = vmatmul.mubr.f32.gmra.mrb[0].mxu0 %v2052
      %v2242 = vpop.f32.mrb[0].mxu0
      %v2243 = vadd.f32 0.0, %v2242
      %v2244 = vpop.f32.mrb[0].mxu0
      %2245 = vmatprep.mubr.f32.mxu0 0.0
      %2246 = vmatmul.mubr.f32.gmra.mrb[0].mxu0 %v2055
      %v2247 = vpop.f32.mrb[0].mxu0
      %v2248 = vadd.f32 0.0, %v2247
      %v2249 = vpop.f32.mrb[0].mxu0
      %2250 = vmatprep.mubr.f32.mxu0 0.0
      %2251 = vmatmul.mubr.f32.gmra.mrb[0].mxu0 %v2058
      %v2252 = vpop.f32.mrb[0].mxu0
      %v2253 = vadd.f32 0.0, %v2252
      %v2254 = vpop.f32.mrb[0].mxu0
      %2255 = vmatprep.mubr.f32.mxu0 0.0
      %2256 = vmatmul.mubr.f32.gmra.mrb[0].mxu0 %v2061
      %v2257 = vpop.f32.mrb[0].mxu0
      %v2258 = vadd.f32 0.0, %v2257
      %v2259 = vpop.f32.mrb[0].mxu0
      %2260 = vmatprep.mubr.f32.mxu0 0.0
      %2261 = vmatmul.mubr.f32.gmra.mrb[0].mxu0 %v2064
      %v2262 = vpop.f32.mrb[0].mxu0
      %v2263 = vadd.f32 0.0, %v2262
      %v2264 = vpop.f32.mrb[0].mxu0
      %2265 = vmatprep.mubr.f32.mxu0 0.0
      %2266 = vmatmul.mubr.f32.gmra.mrb[0].mxu0 %v2067
      %v2267 = vpop.f32.mrb[0].mxu0
      %v2268 = vadd.f32 0.0, %v2267
      %v2269 = vpop.f32.mrb[0].mxu0
      %2270 = vmatprep.mubr.f32.mxu0 0.0
      %2271 = vmatmul.mubr.f32.gmra.mrb[0].mxu0 %v2070
      %v2272 = vpop.f32.mrb[0].mxu0
      %v2273 = vadd.f32 0.0, %v2272
      %v2274 = vpop.f32.mrb[0].mxu0
      %2275 = vmatprep.mubr.f32.mxu0 0.0
      %2276 = vmatmul.mubr.f32.gmra.mrb[0].mxu0 %v2073
      %v2277 = vpop.f32.mrb[0].mxu0
      %v2278 = vadd.f32 0.0, %v2277
      %v2279 = vpop.f32.mrb[0].mxu0
      %2280 = vmatprep.mubr.f32.mxu0 0.0
      %2281 = vmatmul.mubr.f32.gmra.mrb[0].mxu0 %v2076
      %v2282 = vpop.f32.mrb[0].mxu0
      %v2283 = vadd.f32 0.0, %v2282
      %v2284 = vpop.f32.mrb[0].mxu0
      %2285 = vmatprep.mubr.f32.mxu0 0.0
      %2286 = vmatmul.mubr.f32.gmra.mrb[0].mxu0 %v2079
      %v2287 = vpop.f32.mrb[0].mxu0
      %v2288 = vadd.f32 0.0, %v2287
      %v2289 = vpop.f32.mrb[0].mxu0
      %2290 = vmatprep.mubr.f32.mxu0 0.0
      %2291 = vmatmul.mubr.f32.gmra.mrb[0].mxu0 %v2082
      %v2292 = vpop.f32.mrb[0].mxu0
      %v2293 = vadd.f32 0.0, %v2292
      %v2294 = vpop.f32.mrb[0].mxu0
      %2295 = vmatprep.mubr.f32.mxu0 0.0
      %2296 = vmatmul.mubr.f32.gmra.mrb[0].mxu0 %v2085
      %v2297 = vpop.f32.mrb[0].mxu0
      %v2298 = vadd.f32 0.0, %v2297
      %v2299 = vpop.f32.mrb[0].mxu0
      %2300 = vmatprep.mubr.f32.mxu0 0.0
      %2301 = vmatmul.mubr.f32.gmra.mrb[0].mxu0 %v2088
      %v2302 = vpop.f32.mrb[0].mxu0
      %v2303 = vadd.f32 0.0, %v2302
      %v2304 = vpop.f32.mrb[0].mxu0
      %2305 = vmatprep.mubr.f32.mxu0 0.0
      %2306 = vmatmul.mubr.f32.gmra.mrb[0].mxu0 %v2091
      %v2307 = vpop.f32.mrb[0].mxu0
      %v2308 = vadd.f32 0.0, %v2307
      %v2309 = vpop.f32.mrb[0].mxu0
      %2310 = vmatprep.mubr.f32.mxu0 0.0
      %2311 = vmatmul.mubr.f32.gmra.mrb[0].mxu0 %v2094
      %v2312 = vpop.f32.mrb[0].mxu0
      %v2313 = vadd.f32 0.0, %v2312
      %v2314 = vpop.f32.mrb[0].mxu0
      %2315 = vmatprep.mubr.f32.mxu0 0.0
      %2316 = vmatmul.mubr.f32.gmra.mrb[0].mxu0 %v2097
      %v2317 = vpop.f32.mrb[0].mxu0
      %v2318 = vadd.f32 0.0, %v2317
      %v2319 = vpop.f32.mrb[0].mxu0
      %2320 = vmatprep.mubr.f32.mxu0 0.0
      %2321 = vmatmul.mubr.f32.gmra.mrb[0].mxu0 %v2100
      %v2322 = vpop.f32.mrb[0].mxu0
      %v2323 = vadd.f32 0.0, %v2322
      %v2324 = vpop.f32.mrb[0].mxu0
      %2325 = vmatprep.mubr.f32.mxu0 0.0
      %2326 = vmatmul.mubr.f32.gmra.mrb[0].mxu0 %v2103
      %v2327 = vpop.f32.mrb[0].mxu0
      %v2328 = vadd.f32 0.0, %v2327
      %v2329 = vpop.f32.mrb[0].mxu0
      %2330 = vmatprep.mubr.f32.mxu0 0.0
      %2331 = vmatmul.mubr.f32.gmra.mrb[0].mxu0 %v2106
      %v2332 = vpop.f32.mrb[0].mxu0
      %v2333 = vadd.f32 0.0, %v2332
      %v2334 = vpop.f32.mrb[0].mxu0
      %2335 = vdwg.mxu0
      %v2336 = vld [vmem:[%s3] sm:$0x1]
      %v2338 = vlaneseq
      %v2339 = vshrl.u32 %v2338, 7
      %v2340 = vsub.s32 0, %v2339
      %v2341 = vrot.slane %v2336, %v2340
      %v2343 = vmul.f32 %v2178, %v2341
      %v2344 = vmul.f32 %v2183, %v2341
      %v2345 = vmul.f32 %v2188, %v2341
      %v2346 = vmul.f32 %v2193, %v2341
      %v2347 = vmul.f32 %v2198, %v2341
      %v2348 = vmul.f32 %v2203, %v2341
      %v2349 = vmul.f32 %v2208, %v2341
      %v2350 = vmul.f32 %v2213, %v2341
      %v2351 = vmul.f32 %v2218, %v2341
      %v2352 = vmul.f32 %v2223, %v2341
      %v2353 = vmul.f32 %v2228, %v2341
      %v2354 = vmul.f32 %v2233, %v2341
      %v2355 = vmul.f32 %v2238, %v2341
      %v2356 = vmul.f32 %v2243, %v2341
      %v2357 = vmul.f32 %v2248, %v2341
      %v2358 = vmul.f32 %v2253, %v2341
      %v2359 = vmul.f32 %v2258, %v2341
      %v2360 = vmul.f32 %v2263, %v2341
      %v2361 = vmul.f32 %v2268, %v2341
      %v2362 = vmul.f32 %v2273, %v2341
      %v2363 = vmul.f32 %v2278, %v2341
      %v2364 = vmul.f32 %v2283, %v2341
      %v2365 = vmul.f32 %v2288, %v2341
      %v2366 = vmul.f32 %v2293, %v2341
      %v2367 = vmul.f32 %v2298, %v2341
      %v2368 = vmul.f32 %v2303, %v2341
      %v2369 = vmul.f32 %v2308, %v2341
      %v2370 = vmul.f32 %v2313, %v2341
      %v2371 = vmul.f32 %v2318, %v2341
      %v2372 = vmul.f32 %v2323, %v2341
      %v2373 = vmul.f32 %v2328, %v2341
      %v2374 = vmul.f32 %v2333, %v2341
      %v2375 = vld [vmem:[%s4] sm:$0x1]
      %v2377 = vlaneseq
      %v2378 = vshrl.u32 %v2377, 7
      %v2379 = vsub.s32 0, %v2378
      %v2380 = vrot.slane %v2375, %v2379
      %v2382 = vadd.f32 %v2343, %v2380
      %v2383 = vadd.f32 %v2344, %v2380
      %v2384 = vadd.f32 %v2345, %v2380
      %v2385 = vadd.f32 %v2346, %v2380
      %v2386 = vadd.f32 %v2347, %v2380
      %v2387 = vadd.f32 %v2348, %v2380
      %v2388 = vadd.f32 %v2349, %v2380
      %v2389 = vadd.f32 %v2350, %v2380
      %v2390 = vadd.f32 %v2351, %v2380
      %v2391 = vadd.f32 %v2352, %v2380
      %v2392 = vadd.f32 %v2353, %v2380
      %v2393 = vadd.f32 %v2354, %v2380
      %v2394 = vadd.f32 %v2355, %v2380
      %v2395 = vadd.f32 %v2356, %v2380
      %v2396 = vadd.f32 %v2357, %v2380
      %v2397 = vadd.f32 %v2358, %v2380
      %v2398 = vadd.f32 %v2359, %v2380
      %v2399 = vadd.f32 %v2360, %v2380
      %v2400 = vadd.f32 %v2361, %v2380
      %v2401 = vadd.f32 %v2362, %v2380
      %v2402 = vadd.f32 %v2363, %v2380
      %v2403 = vadd.f32 %v2364, %v2380
      %v2404 = vadd.f32 %v2365, %v2380
      %v2405 = vadd.f32 %v2366, %v2380
      %v2406 = vadd.f32 %v2367, %v2380
      %v2407 = vadd.f32 %v2368, %v2380
      %v2408 = vadd.f32 %v2369, %v2380
      %v2409 = vadd.f32 %v2370, %v2380
      %v2410 = vadd.f32 %v2371, %v2380
      %v2411 = vadd.f32 %v2372, %v2380
      %v2412 = vadd.f32 %v2373, %v2380
      %v2413 = vadd.f32 %v2374, %v2380
      %2414 = vst.msk [vmem:[%s224] sm:$0xff] %vm2011, %v2382
      %2415 = vst.msk [vmem:[%s224 + $0x8] sm:$0xff] %vm2011, %v2383
      %2416 = vst.msk [vmem:[%s224 + $0x10] sm:$0xff] %vm2011, %v2384
      %2417 = vst.msk [vmem:[%s224 + $0x18] sm:$0xff] %vm2011, %v2385
      %2418 = vst.msk [vmem:[%s224 + $0x20] sm:$0xff] %vm2011, %v2386
      %2419 = vst.msk [vmem:[%s224 + $0x28] sm:$0xff] %vm2011, %v2387
      %2420 = vst.msk [vmem:[%s224 + $0x30] sm:$0xff] %vm2011, %v2388
      %2421 = vst.msk [vmem:[%s224 + $0x38] sm:$0xff] %vm2011, %v2389
      %2422 = vst.msk [vmem:[%s224 + $0x40] sm:$0xff] %vm2011, %v2390
      %2423 = vst.msk [vmem:[%s224 + $0x48] sm:$0xff] %vm2011, %v2391
      %2424 = vst.msk [vmem:[%s224 + $0x50] sm:$0xff] %vm2011, %v2392
      %2425 = vst.msk [vmem:[%s224 + $0x58] sm:$0xff] %vm2011, %v2393
      %2426 = vst.msk [vmem:[%s224 + $0x60] sm:$0xff] %vm2011, %v2394
      %2427 = vst.msk [vmem:[%s224 + $0x68] sm:$0xff] %vm2011, %v2395
      %2428 = vst.msk [vmem:[%s224 + $0x70] sm:$0xff] %vm2011, %v2396
      %2429 = vst.msk [vmem:[%s224 + $0x78] sm:$0xff] %vm2011, %v2397
      %2430 = vst.msk [vmem:[%s224 + $0x80] sm:$0xff] %vm2011, %v2398
      %2431 = vst.msk [vmem:[%s224 + $0x88] sm:$0xff] %vm2011, %v2399
      %2432 = vst.msk [vmem:[%s224 + $0x90] sm:$0xff] %vm2011, %v2400
      %2433 = vst.msk [vmem:[%s224 + $0x98] sm:$0xff] %vm2011, %v2401
      %2434 = vst.msk [vmem:[%s224 + $0xa0] sm:$0xff] %vm2011, %v2402
      %2435 = vst.msk [vmem:[%s224 + $0xa8] sm:$0xff] %vm2011, %v2403
      %2436 = vst.msk [vmem:[%s224 + $0xb0] sm:$0xff] %vm2011, %v2404
      %2437 = vst.msk [vmem:[%s224 + $0xb8] sm:$0xff] %vm2011, %v2405
      %2438 = vst.msk [vmem:[%s224 + $0xc0] sm:$0xff] %vm2011, %v2406
      %2439 = vst.msk [vmem:[%s224 + $0xc8] sm:$0xff] %vm2011, %v2407
      %2440 = vst.msk [vmem:[%s224 + $0xd0] sm:$0xff] %vm2011, %v2408
      %2441 = vst.msk [vmem:[%s224 + $0xd8] sm:$0xff] %vm2011, %v2409
      %2442 = vst.msk [vmem:[%s224 + $0xe0] sm:$0xff] %vm2011, %v2410
      %2443 = vst.msk [vmem:[%s224 + $0xe8] sm:$0xff] %vm2011, %v2411
      %2444 = vst.msk [vmem:[%s224 + $0xf0] sm:$0xff] %vm2011, %v2412
      %2445 = vst.msk [vmem:[%s224 + $0xf8] sm:$0xff] %vm2011, %v2413
      %p2446 = scmp.lt.s32.totalorder %s16, 1
      %s2447 = scalar_select %p2446, %s16, 1
      %s2448 = smul.addr %s2447, 32
      %s2449 = smul.addr %s2448, 8
      %s2450 = scalar_lea.vmem %s5, %s2449
      // Predicated region
      $region41: #{a_call__.43} parent=39 // pred_check
        %p2451 = pneg %p144
      $region42: #{a_call__.43} parent=39 // pred_check_branch
        %2453 = sbr.rel (%p2451) target = $region44
      $region43: #{a_call__.43} parent=39 // pred_region
        _
      $region44: #{a_call__.43} parent=39 // pred_fallthru
        _
    $region40: #{a_call__.43} parent=5 // pred_fallthru
      _
    %p2454 = scmp.le.s32.totalorder 2, %s11
    // Predicated region
    $region45: #{a_call__.43} parent=5 // pred_check
      %p2455 = pneg %p2454
    $region46: #{a_call__.43} parent=5 // pred_check_branch
      %2457 = sbr.rel (%p2455) target = $region48
    $region47: #{a_call__.43} parent=5 // pred_region
      %s2458 = ssub.s32 %s11, 2
      // Predicated region
      $region49: #{a_call__.43} parent=47 // pred_check
        %p2459 = pneg %p150
      $region50: #{a_call__.43} parent=47 // pred_check_branch
        %2461 = sbr.rel (%p2459) target = $region52
      $region51: #{a_call__.43} parent=47 // pred_region
        %p2462 = scmp.lt.s32.totalorder %s17, 1
        %s2463 = scalar_select %p2462, %s17, 1
        %s2464 = smul.addr %s2463, 32
        %s2465 = smul.addr %s2464, 8
        %s2466 = scalar_lea.vmem %s5, %s2465
      $region52: #{a_call__.43} parent=47 // pred_fallthru
        _
    $region48: #{a_call__.43} parent=5 // pred_fallthru
      _
  $region6: #{a_call__.43} parent=0 // loop_footer
    %s15 = sadd.s32 1, %s11
  $region7: #{a_call__.43} parent=0 // loop_footer_branch
    %10 = sbr.rel target = $region3
  $region8: #{a_call__.43} parent=0 // loop_exit
    _

// kernel: a_call__.48
$region0: #{a_call__.48}
  #allocation0 [shape = 'u32[]', space=smem, size = 0x4, offset = 0x4, fixed_abs, tag = 'smem constant byte address 0x4 - core index']
  #allocation1 [shape = 'u32[144,128]{1,0:T(1,128)}', space=vmem, size = 0x12000, scoped, tag = 'internal scratch']
  %s0 = inlined_call_operand.vmem [shape: f32[128,16], index: 0, kind: input, shape index: {}]
  %s1 = inlined_call_operand.vmem [shape: f32[16,8], index: 1, kind: input, shape index: {}]
  %s2 = inlined_call_operand.vmem [shape: f32[1,8], index: 2, kind: input, shape index: {}]
  %s3 = inlined_call_operand.vmem [shape: f32[1,8], index: 3, kind: input, shape index: {}]
  %s4 = inlined_call_operand.vmem [shape: f32[128,8], index: 4, kind: output, shape index: {}]
  %s5 = sld [smem:[#allocation0]]
  $region26: #{a_call__.48} parent=0
    _
  %s7 = ssub.s32 1, %s5
  %s8 = scalar_select 0, %s7, %s5
  // Predicated region
  $region2: #{a_call__.48} parent=0 // pred_check
    _
  $region3: #{a_call__.48} parent=0 // pred_check_branch
    %10 = sbr.rel (0) target = $region5
  $region4: #{a_call__.48} parent=0 // pred_region
    _
  $region5: #{a_call__.48} parent=0 // pred_fallthru
    _
  // Predicated region
  $region6: #{a_call__.48} parent=0 // pred_check
    _
  $region7: #{a_call__.48} parent=0 // pred_check_branch
    %12 = sbr.rel (0) target = $region9
  $region8: #{a_call__.48} parent=0 // pred_region
    _
  $region9: #{a_call__.48} parent=0 // pred_fallthru
    _
  // Predicated region
  $region10: #{a_call__.48} parent=0 // pred_check
    _
  $region11: #{a_call__.48} parent=0 // pred_check_branch
    %14 = sbr.rel (0) target = $region13
  $region12: #{a_call__.48} parent=0 // pred_region
    _
  $region13: #{a_call__.48} parent=0 // pred_fallthru
    _
  // Predicated region
  $region14: #{a_call__.48} parent=0 // pred_check
    _
  $region15: #{a_call__.48} parent=0 // pred_check_branch
    %16 = sbr.rel (0) target = $region17
  $region16: #{a_call__.48} parent=0 // pred_region
    _
  $region17: #{a_call__.48} parent=0 // pred_fallthru
    _
  %v17 = vld [vmem:[%s0] sm:$0xff]
  %v18 = vld [vmem:[%s0 + $0x8] sm:$0xff]
  %v19 = vld [vmem:[%s0 + $0x10] sm:$0xff]
  %v20 = vld [vmem:[%s0 + $0x18] sm:$0xff]
  %v21 = vld [vmem:[%s0 + $0x20] sm:$0xff]
  %v22 = vld [vmem:[%s0 + $0x28] sm:$0xff]
  %v23 = vld [vmem:[%s0 + $0x30] sm:$0xff]
  %v24 = vld [vmem:[%s0 + $0x38] sm:$0xff]
  %v25 = vld [vmem:[%s0 + $0x40] sm:$0xff]
  %v26 = vld [vmem:[%s0 + $0x48] sm:$0xff]
  %v27 = vld [vmem:[%s0 + $0x50] sm:$0xff]
  %v28 = vld [vmem:[%s0 + $0x58] sm:$0xff]
  %v29 = vld [vmem:[%s0 + $0x60] sm:$0xff]
  %v30 = vld [vmem:[%s0 + $0x68] sm:$0xff]
  %v31 = vld [vmem:[%s0 + $0x70] sm:$0xff]
  %v32 = vld [vmem:[%s0 + $0x78] sm:$0xff]
  %v33 = vmax.f32 %v17, 0.0
  %v34 = vmax.f32 %v18, 0.0
  %v35 = vmax.f32 %v19, 0.0
  %v36 = vmax.f32 %v20, 0.0
  %v37 = vmax.f32 %v21, 0.0
  %v38 = vmax.f32 %v22, 0.0
  %v39 = vmax.f32 %v23, 0.0
  %v40 = vmax.f32 %v24, 0.0
  %v41 = vmax.f32 %v25, 0.0
  %v42 = vmax.f32 %v26, 0.0
  %v43 = vmax.f32 %v27, 0.0
  %v44 = vmax.f32 %v28, 0.0
  %v45 = vmax.f32 %v29, 0.0
  %v46 = vmax.f32 %v30, 0.0
  %v47 = vmax.f32 %v31, 0.0
  %v48 = vmax.f32 %v32, 0.0
  %v49 = vld [vmem:[%s1] sm:$0xff]
  %v50 = vld [vmem:[%s1 + $0x8] sm:$0xff]
  %vm51 = vcmask 130048
  %v53 = vsel %vm51, %v33, 0
  %v56 = vsel %vm51, %v34, 0
  %v59 = vsel %vm51, %v35, 0
  %v62 = vsel %vm51, %v36, 0
  %v65 = vsel %vm51, %v37, 0
  %v68 = vsel %vm51, %v38, 0
  %v71 = vsel %vm51, %v39, 0
  %v74 = vsel %vm51, %v40, 0
  %v77 = vsel %vm51, %v41, 0
  %v80 = vsel %vm51, %v42, 0
  %v83 = vsel %vm51, %v43, 0
  %v86 = vsel %vm51, %v44, 0
  %v89 = vsel %vm51, %v45, 0
  %v92 = vsel %vm51, %v46, 0
  %v95 = vsel %vm51, %v47, 0
  %v98 = vsel %vm51, %v48, 0
  %100 = vmatprep.subr.mxu0 0.0
  %101 = vmatpush1.msra.mxu0 %v49
  %102 = vmatprep.subr.mxu0 0.0
  %103 = vmatpush1.msra.mxu0 %v50
  %104 = vmatprep.subr.mxu0 0.0
  %105 = vmatpush1.msra.mxu0 0.0
  %106 = vmatprep.subr.mxu0 0.0
  %107 = vmatpush1.msra.mxu0 0.0
  %108 = vmatprep.subr.mxu0 0.0
  %109 = vmatpush1.msra.mxu0 0.0
  %110 = vmatprep.subr.mxu0 0.0
  %111 = vmatpush1.msra.mxu0 0.0
  %112 = vmatprep.subr.mxu0 0.0
  %113 = vmatpush1.msra.mxu0 0.0
  %114 = vmatprep.subr.mxu0 0.0
  %115 = vmatpush1.msra.mxu0 0.0
  %116 = vmatprep.subr.mxu0 0.0
  %117 = vmatpush1.msra.mxu0 0.0
  %118 = vmatprep.subr.mxu0 0.0
  %119 = vmatpush1.msra.mxu0 0.0
  %120 = vmatprep.subr.mxu0 0.0
  %121 = vmatpush1.msra.mxu0 0.0
  %122 = vmatprep.subr.mxu0 0.0
  %123 = vmatpush1.msra.mxu0 0.0
  %124 = vmatprep.subr.mxu0 0.0
  %125 = vmatpush1.msra.mxu0 0.0
  %126 = vmatprep.subr.mxu0 0.0
  %127 = vmatpush1.msra.mxu0 0.0
  %128 = vmatprep.subr.mxu0 0.0
  %129 = vmatpush1.msra.mxu0 0.0
  %130 = vmatprep.subr.mxu0 0.0
  %131 = vmatpush1.msra.mxu0 0.0
  %132 = vmatprep.subr.mxu0 0.0
  %133 = vmatpush1.msra.mxu0 0.0
  %134 = vmatprep.subr.mxu0 0.0
  %135 = vmatpush1.msra.mxu0 0.0
  %136 = vmatprep.subr.mxu0 0.0
  %137 = vmatpush1.msra.mxu0 0.0
  %138 = vmatprep.subr.mxu0 0.0
  %139 = vmatpush1.msra.mxu0 0.0
  %140 = vmatprep.subr.mxu0 0.0
  %141 = vmatpush1.msra.mxu0 0.0
  %142 = vmatprep.subr.mxu0 0.0
  %143 = vmatpush1.msra.mxu0 0.0
  %144 = vmatprep.subr.mxu0 0.0
  %145 = vmatpush1.msra.mxu0 0.0
  %146 = vmatprep.subr.mxu0 0.0
  %147 = vmatpush1.msra.mxu0 0.0
  %148 = vmatprep.subr.mxu0 0.0
  %149 = vmatpush1.msra.mxu0 0.0
  %150 = vmatprep.subr.mxu0 0.0
  %151 = vmatpush1.msra.mxu0 0.0
  %152 = vmatprep.subr.mxu0 0.0
  %153 = vmatpush1.msra.mxu0 0.0
  %154 = vmatprep.subr.mxu0 0.0
  %155 = vmatpush1.msra.mxu0 0.0
  %156 = vmatprep.subr.mxu0 0.0
  %157 = vmatpush1.msra.mxu0 0.0
  %158 = vmatprep.subr.mxu0 0.0
  %159 = vmatpush1.msra.mxu0 0.0
  %160 = vmatprep.subr.mxu0 0.0
  %161 = vmatpush1.msra.mxu0 0.0
  %162 = vmatprep.subr.mxu0 0.0
  %163 = vmatpush1.msra.mxu0 0.0
  %164 = vmatprep.mubr.f32.mxu0 0.0
  %165 = vmatmul.mubr.f32.gmra.mrb[0].mxu0 %v53
  %v166 = vpop.f32.mrb[0].mxu0
  %v167 = vadd.f32 0.0, %v166
  %v168 = vpop.f32.mrb[0].mxu0
  %169 = vmatprep.mubr.f32.mxu0 0.0
  %170 = vmatmul.mubr.f32.gmra.mrb[0].mxu0 %v56
  %v171 = vpop.f32.mrb[0].mxu0
  %v172 = vadd.f32 0.0, %v171
  %v173 = vpop.f32.mrb[0].mxu0
  %174 = vmatprep.mubr.f32.mxu0 0.0
  %175 = vmatmul.mubr.f32.gmra.mrb[0].mxu0 %v59
  %v176 = vpop.f32.mrb[0].mxu0
  %v177 = vadd.f32 0.0, %v176
  %v178 = vpop.f32.mrb[0].mxu0
  %179 = vmatprep.mubr.f32.mxu0 0.0
  %180 = vmatmul.mubr.f32.gmra.mrb[0].mxu0 %v62
  %v181 = vpop.f32.mrb[0].mxu0
  %v182 = vadd.f32 0.0, %v181
  %v183 = vpop.f32.mrb[0].mxu0
  %184 = vmatprep.mubr.f32.mxu0 0.0
  %185 = vmatmul.mubr.f32.gmra.mrb[0].mxu0 %v65
  %v186 = vpop.f32.mrb[0].mxu0
  %v187 = vadd.f32 0.0, %v186
  %v188 = vpop.f32.mrb[0].mxu0
  %189 = vmatprep.mubr.f32.mxu0 0.0
  %190 = vmatmul.mubr.f32.gmra.mrb[0].mxu0 %v68
  %v191 = vpop.f32.mrb[0].mxu0
  %v192 = vadd.f32 0.0, %v191
  %v193 = vpop.f32.mrb[0].mxu0
  %194 = vmatprep.mubr.f32.mxu0 0.0
  %195 = vmatmul.mubr.f32.gmra.mrb[0].mxu0 %v71
  %v196 = vpop.f32.mrb[0].mxu0
  %v197 = vadd.f32 0.0, %v196
  %v198 = vpop.f32.mrb[0].mxu0
  %199 = vmatprep.mubr.f32.mxu0 0.0
  %200 = vmatmul.mubr.f32.gmra.mrb[0].mxu0 %v74
  %v201 = vpop.f32.mrb[0].mxu0
  %v202 = vadd.f32 0.0, %v201
  %v203 = vpop.f32.mrb[0].mxu0
  %204 = vmatprep.mubr.f32.mxu0 0.0
  %205 = vmatmul.mubr.f32.gmra.mrb[0].mxu0 %v77
  %v206 = vpop.f32.mrb[0].mxu0
  %v207 = vadd.f32 0.0, %v206
  %v208 = vpop.f32.mrb[0].mxu0
  %209 = vmatprep.mubr.f32.mxu0 0.0
  %210 = vmatmul.mubr.f32.gmra.mrb[0].mxu0 %v80
  %v211 = vpop.f32.mrb[0].mxu0
  %v212 = vadd.f32 0.0, %v211
  %v213 = vpop.f32.mrb[0].mxu0
  %214 = vmatprep.mubr.f32.mxu0 0.0
  %215 = vmatmul.mubr.f32.gmra.mrb[0].mxu0 %v83
  %v216 = vpop.f32.mrb[0].mxu0
  %v217 = vadd.f32 0.0, %v216
  %v218 = vpop.f32.mrb[0].mxu0
  %219 = vmatprep.mubr.f32.mxu0 0.0
  %220 = vmatmul.mubr.f32.gmra.mrb[0].mxu0 %v86
  %v221 = vpop.f32.mrb[0].mxu0
  %v222 = vadd.f32 0.0, %v221
  %v223 = vpop.f32.mrb[0].mxu0
  %224 = vmatprep.mubr.f32.mxu0 0.0
  %225 = vmatmul.mubr.f32.gmra.mrb[0].mxu0 %v89
  %v226 = vpop.f32.mrb[0].mxu0
  %v227 = vadd.f32 0.0, %v226
  %v228 = vpop.f32.mrb[0].mxu0
  %229 = vmatprep.mubr.f32.mxu0 0.0
  %230 = vmatmul.mubr.f32.gmra.mrb[0].mxu0 %v92
  %v231 = vpop.f32.mrb[0].mxu0
  %v232 = vadd.f32 0.0, %v231
  %v233 = vpop.f32.mrb[0].mxu0
  %234 = vmatprep.mubr.f32.mxu0 0.0
  %235 = vmatmul.mubr.f32.gmra.mrb[0].mxu0 %v95
  %v236 = vpop.f32.mrb[0].mxu0
  %v237 = vadd.f32 0.0, %v236
  %v238 = vpop.f32.mrb[0].mxu0
  %239 = vmatprep.mubr.f32.mxu0 0.0
  %240 = vmatmul.mubr.f32.gmra.mrb[0].mxu0 %v98
  %v241 = vpop.f32.mrb[0].mxu0
  %v242 = vadd.f32 0.0, %v241
  %v243 = vpop.f32.mrb[0].mxu0
  %244 = vdwg.mxu0
  %v245 = vld [vmem:[%s2] sm:$0x1]
  %v247 = vlaneseq
  %v248 = vshrl.u32 %v247, 7
  %v249 = vsub.s32 0, %v248
  %v250 = vrot.slane %v245, %v249
  %v252 = vmul.f32 %v167, %v250
  %v253 = vmul.f32 %v172, %v250
  %v254 = vmul.f32 %v177, %v250
  %v255 = vmul.f32 %v182, %v250
  %v256 = vmul.f32 %v187, %v250
  %v257 = vmul.f32 %v192, %v250
  %v258 = vmul.f32 %v197, %v250
  %v259 = vmul.f32 %v202, %v250
  %v260 = vmul.f32 %v207, %v250
  %v261 = vmul.f32 %v212, %v250
  %v262 = vmul.f32 %v217, %v250
  %v263 = vmul.f32 %v222, %v250
  %v264 = vmul.f32 %v227, %v250
  %v265 = vmul.f32 %v232, %v250
  %v266 = vmul.f32 %v237, %v250
  %v267 = vmul.f32 %v242, %v250
  %v268 = vld [vmem:[%s3] sm:$0x1]
  %v270 = vlaneseq
  %v271 = vshrl.u32 %v270, 7
  %v272 = vsub.s32 0, %v271
  %v273 = vrot.slane %v268, %v272
  %v275 = vadd.f32 %v252, %v273
  %v276 = vadd.f32 %v253, %v273
  %v277 = vadd.f32 %v254, %v273
  %v278 = vadd.f32 %v255, %v273
  %v279 = vadd.f32 %v256, %v273
  %v280 = vadd.f32 %v257, %v273
  %v281 = vadd.f32 %v258, %v273
  %v282 = vadd.f32 %v259, %v273
  %v283 = vadd.f32 %v260, %v273
  %v284 = vadd.f32 %v261, %v273
  %v285 = vadd.f32 %v262, %v273
  %v286 = vadd.f32 %v263, %v273
  %v287 = vadd.f32 %v264, %v273
  %v288 = vadd.f32 %v265, %v273
  %v289 = vadd.f32 %v266, %v273
  %v290 = vadd.f32 %v267, %v273
  %vm291 = vcmask 64512
  %292 = vst.msk [vmem:[%s4] sm:$0xff] %vm291, %v275
  %293 = vst.msk [vmem:[%s4 + $0x8] sm:$0xff] %vm291, %v276
  %294 = vst.msk [vmem:[%s4 + $0x10] sm:$0xff] %vm291, %v277
  %295 = vst.msk [vmem:[%s4 + $0x18] sm:$0xff] %vm291, %v278
  %296 = vst.msk [vmem:[%s4 + $0x20] sm:$0xff] %vm291, %v279
  %297 = vst.msk [vmem:[%s4 + $0x28] sm:$0xff] %vm291, %v280
  %298 = vst.msk [vmem:[%s4 + $0x30] sm:$0xff] %vm291, %v281
  %299 = vst.msk [vmem:[%s4 + $0x38] sm:$0xff] %vm291, %v282
  %300 = vst.msk [vmem:[%s4 + $0x40] sm:$0xff] %vm291, %v283
  %301 = vst.msk [vmem:[%s4 + $0x48] sm:$0xff] %vm291, %v284
  %302 = vst.msk [vmem:[%s4 + $0x50] sm:$0xff] %vm291, %v285
  %303 = vst.msk [vmem:[%s4 + $0x58] sm:$0xff] %vm291, %v286
  %304 = vst.msk [vmem:[%s4 + $0x60] sm:$0xff] %vm291, %v287
  %305 = vst.msk [vmem:[%s4 + $0x68] sm:$0xff] %vm291, %v288
  %306 = vst.msk [vmem:[%s4 + $0x70] sm:$0xff] %vm291, %v289
  %307 = vst.msk [vmem:[%s4 + $0x78] sm:$0xff] %vm291, %v290
  // Predicated region
  $region18: #{a_call__.48} parent=0 // pred_check
    _
  $region19: #{a_call__.48} parent=0 // pred_check_branch
    %309 = sbr.rel (0) target = $region21
  $region20: #{a_call__.48} parent=0 // pred_region
    _
  $region21: #{a_call__.48} parent=0 // pred_fallthru
    _
  // Predicated region
  $region22: #{a_call__.48} parent=0 // pred_check
    _
  $region23: #{a_call__.48} parent=0 // pred_check_branch
    %311 = sbr.rel (0) target = $region25
  $region24: #{a_call__.48} parent=0 // pred_region
    _
  $region25: #{a_call__.48} parent=0 // pred_fallthru
    _

// kernel: a_call__.51
$region0: #{a_call__.51}
  #allocation0 [shape = 'u32[]', space=smem, size = 0x4, offset = 0x4, fixed_abs, tag = 'smem constant byte address 0x4 - core index']
  #allocation1 [shape = 'u32[144,128]{1,0:T(1,128)}', space=vmem, size = 0x12000, scoped, tag = 'internal scratch']
  %s0 = inlined_call_operand.vmem [shape: f32[2,10,10,16], index: 0, kind: input, shape index: {}]
  %s1 = inlined_call_operand.vmem [shape: f32[2,8,8,16], index: 1, kind: output, shape index: {}]
  %s2 = sld [smem:[#allocation0]]
  $region37: #{a_call__.51} parent=0
    _
  %s4 = ssub.s32 1, %s2
  %s5 = scalar_select 0, %s4, %s2
  loop: start=0, step=1, limit=4
  $region2: #{a_call__.51} parent=0 // loop_pre_header
    _
  $region3: #{a_call__.51} parent=0 // loop_header
    %s7 = sphi 0, %s11
    %p8 = scmp.ge.s32.totalorder %s7, 4
    %s17 = sphi 0, %s19
    %s20 = sphi 0, %s17
    %s21 = sphi 0, %s20
    %s37 = sphi 0, %s21
    %s43 = sphi 0, %s45
    %s46 = sphi 0, %s43
    %s47 = sphi 0, %s46
    %s63 = sphi 0, %s47
  $region4: #{a_call__.51} parent=0 // loop_header_branch
    %10 = sbr.rel (%p8) target = $region8
  $region5: #{a_call__.51} parent=0 // loop_body
    %s12 = ssub.s32 %s7, 1
    %s13 = ssub.s32 %s7, 2
    %s14 = sadd.s32 %s7, 1
    %s15 = ssub.s32 %s7, %s14
    %p16 = scmp.eq.s32.totalorder %s15, 0
    %s18 = sadd.s32 %s17, 1
    %s19 = scalar_select %p16, %s17, %s18
    %p22 = pneg %p16
    %p23 = scmp.eq.s32.totalorder %s7, 1
    %p24 = por %p22, %p23
    %p25 = scmp.ne.s32.totalorder %s17, %s20
    %p26 = scmp.eq.s32.totalorder %s7, 0
    %p27 = por %p25, %p26
    %p28 = scmp.ne.s32.totalorder %s17, %s20
    %p29 = scmp.eq.s32.totalorder %s12, 1
    %p30 = por %p28, %p29
    %p31 = scmp.ne.s32.totalorder %s20, %s21
    %p32 = scmp.eq.s32.totalorder %s12, 0
    %p33 = por %p31, %p32
    %p34 = scmp.ne.s32.totalorder %s20, %s21
    %p35 = scmp.eq.s32.totalorder %s13, 1
    %p36 = por %p34, %p35
    %p38 = scmp.ne.s32.totalorder %s21, %s37
    %p39 = scmp.eq.s32.totalorder %s13, 0
    %p40 = por %p38, %p39
    %s41 = ssub.s32 %s7, %s14
    %p42 = scmp.eq.s32.totalorder %s41, 0
    %s44 = sadd.s32 %s43, 1
    %s45 = scalar_select %p42, %s43, %s44
    %p48 = pneg %p42
    %p49 = scmp.eq.s32.totalorder %s7, 1
    %p50 = por %p48, %p49
    %p51 = scmp.ne.s32.totalorder %s43, %s46
    %p52 = scmp.eq.s32.totalorder %s7, 0
    %p53 = por %p51, %p52
    %p54 = scmp.ne.s32.totalorder %s43, %s46
    %p55 = scmp.eq.s32.totalorder %s12, 1
    %p56 = por %p54, %p55
    %p57 = scmp.ne.s32.totalorder %s46, %s47
    %p58 = scmp.eq.s32.totalorder %s12, 0
    %p59 = por %p57, %p58
    %p60 = scmp.ne.s32.totalorder %s46, %s47
    %p61 = scmp.eq.s32.totalorder %s13, 1
    %p62 = por %p60, %p61
    %p64 = scmp.ne.s32.totalorder %s47, %s63
    %p65 = scmp.eq.s32.totalorder %s13, 0
    %p66 = por %p64, %p65
    %p67 = scmp.le.s32.totalorder 1, %s7
    %p68 = scmp.lt.s32.totalorder %s7, 3
    %p69 = pnand %p67, %p68
    %p70 = pneg %p69
    // Predicated region
    $region9: #{a_call__.51} parent=5 // pred_check
      _
    $region10: #{a_call__.51} parent=5 // pred_check_branch
      %72 = sbr.rel (%p69) target = $region12
    $region11: #{a_call__.51} parent=5 // pred_region
      %s73 = ssub.s32 %s7, 1
    $region12: #{a_call__.51} parent=5 // pred_fallthru
      _
    %p74 = scmp.lt.s32.totalorder %s7, 2
    // Predicated region
    $region13: #{a_call__.51} parent=5 // pred_check
      %p75 = pneg %p74
    $region14: #{a_call__.51} parent=5 // pred_check_branch
      %77 = sbr.rel (%p75) target = $region16
    $region15: #{a_call__.51} parent=5 // pred_region
      // Predicated region
      $region17: #{a_call__.51} parent=15 // pred_check
        %p78 = pneg %p27
      $region18: #{a_call__.51} parent=15 // pred_check_branch
        %80 = sbr.rel (%p78) target = $region20
      $region19: #{a_call__.51} parent=15 // pred_region
        %p81 = scmp.lt.s32.totalorder %s7, 1
        %s82 = scalar_select %p81, %s7, 1
        %s83 = smul.addr %s82, 20
        %s84 = smul.addr %s83, 8
        %s85 = scalar_lea.vmem %s0, %s84
      $region20: #{a_call__.51} parent=15 // pred_fallthru
        _
    $region16: #{a_call__.51} parent=5 // pred_fallthru
      _
    %p86 = scmp.le.s32.totalorder 1, %s7
    %p87 = scmp.lt.s32.totalorder %s7, 3
    %p88 = pnand %p86, %p87
    %p89 = pneg %p88
    // Predicated region
    $region21: #{a_call__.51} parent=5 // pred_check
      _
    $region22: #{a_call__.51} parent=5 // pred_check_branch
      %91 = sbr.rel (%p88) target = $region24
    $region23: #{a_call__.51} parent=5 // pred_region
      %s92 = ssub.s32 %s7, 1
      %p93 = scmp.lt.s32.totalorder %s12, 1
      %s94 = scalar_select %p93, %s12, 1
      %s95 = smul.addr %s94, 20
      %s96 = smul.addr %s95, 8
      %s97 = scalar_lea.vmem %s0, %s96
      %p98 = pneg %p33
      %p99 = pneg %p30
      %p100 = pneg %p59
      %p101 = pneg %p56
      %p102 = scmp.lt.s32.totalorder %s12, 1
      %s103 = scalar_select %p102, %s12, 1
      %s104 = smul.addr %s103, 8
      %s105 = smul.addr %s104, 8
      %s106 = scalar_lea.vmem %s1, %s105
      %p107 = scmp.lt.s32.totalorder %s12, 1
      %s108 = scalar_select %p107, %s12, 1
      %s109 = smul.addr %s108, 20
      %s110 = smul.addr %s109, 8
      %s111 = scalar_lea.vmem %s0, %s110
      %p112 = scmp.lt.s32.totalorder %s12, 1
      %s113 = scalar_select %p112, %s12, 1
      %s114 = smul.addr %s113, 8
      %s115 = smul.addr %s114, 8
      %s116 = scalar_lea.vmem %s1, %s115
      %v117 = vld [vmem:[%s111] sm:$0xff]
      %v118 = vld [vmem:[%s111 + $0x8] sm:$0x3]
      %v119 = vld [vmem:[%s111 + $0x10] sm:$0xff]
      %v120 = vld [vmem:[%s111 + $0x18] sm:$0x3]
      %v121 = vld [vmem:[%s111 + $0x20] sm:$0xff]
      %v122 = vld [vmem:[%s111 + $0x28] sm:$0x3]
      %v123 = vld [vmem:[%s111 + $0x30] sm:$0xff]
      %v124 = vld [vmem:[%s111 + $0x38] sm:$0x3]
      %v125 = vld [vmem:[%s111 + $0x40] sm:$0xff]
      %v126 = vld [vmem:[%s111 + $0x48] sm:$0x3]
      %v127 = vld [vmem:[%s111 + $0x50] sm:$0xff]
      %v128 = vld [vmem:[%s111 + $0x58] sm:$0x3]
      %v129 = vld [vmem:[%s111 + $0x60] sm:$0xff]
      %v130 = vld [vmem:[%s111 + $0x68] sm:$0x3]
      %v131 = vld [vmem:[%s111 + $0x70] sm:$0xff]
      %v132 = vld [vmem:[%s111 + $0x78] sm:$0x3]
      %v133 = vld [vmem:[%s111 + $0x80] sm:$0xff]
      %v134 = vld [vmem:[%s111 + $0x88] sm:$0x3]
      %v135 = vld [vmem:[%s111 + $0x90] sm:$0xff]
      %v136 = vld [vmem:[%s111 + $0x98] sm:$0x3]
      %vm153 = vcmask 1046528
      %v154 = vrot.slane %v117, 1
      %v155 = vrot.slane %v118, 1
      %v156 = vsel %vm153, %v154, %v155
      %v157 = vrot.slane %v119, 1
      %v158 = vrot.slane %v120, 1
      %v159 = vsel %vm153, %v157, %v158
      %v160 = vrot.slane %v121, 1
      %v161 = vrot.slane %v122, 1
      %v162 = vsel %vm153, %v160, %v161
      %v163 = vrot.slane %v123, 1
      %v164 = vrot.slane %v124, 1
      %v165 = vsel %vm153, %v163, %v164
      %v166 = vrot.slane %v125, 1
      %v167 = vrot.slane %v126, 1
      %v168 = vsel %vm153, %v166, %v167
      %v169 = vrot.slane %v127, 1
      %v170 = vrot.slane %v128, 1
      %v171 = vsel %vm153, %v169, %v170
      %v172 = vrot.slane %v129, 1
      %v173 = vrot.slane %v130, 1
      %v174 = vsel %vm153, %v172, %v173
      %v175 = vrot.slane %v131, 1
      %v176 = vrot.slane %v132, 1
      %v177 = vsel %vm153, %v175, %v176
      %v186 = vmax.f32 %v117, %v156
      %v187 = vmax.f32 %v119, %v159
      %v188 = vmax.f32 %v121, %v162
      %v189 = vmax.f32 %v123, %v165
      %v190 = vmax.f32 %v125, %v168
      %v191 = vmax.f32 %v127, %v171
      %v192 = vmax.f32 %v129, %v174
      %v193 = vmax.f32 %v131, %v177
      %vm194 = vcmask 1045504
      %v195 = vrot.slane %v117, 2
      %v196 = vrot.slane %v118, 2
      %v197 = vsel %vm194, %v195, %v196
      %v198 = vrot.slane %v119, 2
      %v199 = vrot.slane %v120, 2
      %v200 = vsel %vm194, %v198, %v199
      %v201 = vrot.slane %v121, 2
      %v202 = vrot.slane %v122, 2
      %v203 = vsel %vm194, %v201, %v202
      %v204 = vrot.slane %v123, 2
      %v205 = vrot.slane %v124, 2
      %v206 = vsel %vm194, %v204, %v205
      %v207 = vrot.slane %v125, 2
      %v208 = vrot.slane %v126, 2
      %v209 = vsel %vm194, %v207, %v208
      %v210 = vrot.slane %v127, 2
      %v211 = vrot.slane %v128, 2
      %v212 = vsel %vm194, %v210, %v211
      %v213 = vrot.slane %v129, 2
      %v214 = vrot.slane %v130, 2
      %v215 = vsel %vm194, %v213, %v214
      %v216 = vrot.slane %v131, 2
      %v217 = vrot.slane %v132, 2
      %v218 = vsel %vm194, %v216, %v217
      %v227 = vmax.f32 %v186, %v197
      %v228 = vmax.f32 %v187, %v200
      %v229 = vmax.f32 %v188, %v203
      %v230 = vmax.f32 %v189, %v206
      %v231 = vmax.f32 %v190, %v209
      %v232 = vmax.f32 %v191, %v212
      %v233 = vmax.f32 %v192, %v215
      %v234 = vmax.f32 %v193, %v218
      %v235 = vmax.f32 %v227, %v119
      %v236 = vmax.f32 %v228, %v121
      %v237 = vmax.f32 %v229, %v123
      %v238 = vmax.f32 %v230, %v125
      %v239 = vmax.f32 %v231, %v127
      %v240 = vmax.f32 %v232, %v129
      %v241 = vmax.f32 %v233, %v131
      %v242 = vmax.f32 %v234, %v133
      %v245 = vrot.slane %v133, 1
      %v246 = vrot.slane %v134, 1
      %v247 = vsel %vm153, %v245, %v246
      %v249 = vmax.f32 %v235, %v159
      %v250 = vmax.f32 %v236, %v162
      %v251 = vmax.f32 %v237, %v165
      %v252 = vmax.f32 %v238, %v168
      %v253 = vmax.f32 %v239, %v171
      %v254 = vmax.f32 %v240, %v174
      %v255 = vmax.f32 %v241, %v177
      %v256 = vmax.f32 %v242, %v247
      %v257 = vrot.slane %v133, 2
      %v258 = vrot.slane %v134, 2
      %v259 = vsel %vm194, %v257, %v258
      %v261 = vmax.f32 %v249, %v200
      %v262 = vmax.f32 %v250, %v203
      %v263 = vmax.f32 %v251, %v206
      %v264 = vmax.f32 %v252, %v209
      %v265 = vmax.f32 %v253, %v212
      %v266 = vmax.f32 %v254, %v215
      %v267 = vmax.f32 %v255, %v218
      %v268 = vmax.f32 %v256, %v259
      %v269 = vmax.f32 %v261, %v121
      %v270 = vmax.f32 %v262, %v123
      %v271 = vmax.f32 %v263, %v125
      %v272 = vmax.f32 %v264, %v127
      %v273 = vmax.f32 %v265, %v129
      %v274 = vmax.f32 %v266, %v131
      %v275 = vmax.f32 %v267, %v133
      %v276 = vmax.f32 %v268, %v135
      %v279 = vrot.slane %v135, 1
      %v280 = vrot.slane %v136, 1
      %v281 = vsel %vm153, %v279, %v280
      %v283 = vmax.f32 %v269, %v162
      %v284 = vmax.f32 %v270, %v165
      %v285 = vmax.f32 %v271, %v168
      %v286 = vmax.f32 %v272, %v171
      %v287 = vmax.f32 %v273, %v174
      %v288 = vmax.f32 %v274, %v177
      %v289 = vmax.f32 %v275, %v247
      %v290 = vmax.f32 %v276, %v281
      %v291 = vrot.slane %v135, 2
      %v292 = vrot.slane %v136, 2
      %v293 = vsel %vm194, %v291, %v292
      %v295 = vmax.f32 %v283, %v203
      %v296 = vmax.f32 %v284, %v206
      %v297 = vmax.f32 %v285, %v209
      %v298 = vmax.f32 %v286, %v212
      %v299 = vmax.f32 %v287, %v215
      %v300 = vmax.f32 %v288, %v218
      %v301 = vmax.f32 %v289, %v259
      %v302 = vmax.f32 %v290, %v293
      %vm303 = vcmask 130048
      %304 = vst.msk [vmem:[%s116] sm:$0xff] %vm303, %v295
      %305 = vst.msk [vmem:[%s116 + $0x8] sm:$0xff] %vm303, %v296
      %306 = vst.msk [vmem:[%s116 + $0x10] sm:$0xff] %vm303, %v297
      %307 = vst.msk [vmem:[%s116 + $0x18] sm:$0xff] %vm303, %v298
      %308 = vst.msk [vmem:[%s116 + $0x20] sm:$0xff] %vm303, %v299
      %309 = vst.msk [vmem:[%s116 + $0x28] sm:$0xff] %vm303, %v300
      %310 = vst.msk [vmem:[%s116 + $0x30] sm:$0xff] %vm303, %v301
      %311 = vst.msk [vmem:[%s116 + $0x38] sm:$0xff] %vm303, %v302
      %p312 = scmp.lt.s32.totalorder %s12, 1
      %s313 = scalar_select %p312, %s12, 1
      %s314 = smul.addr %s313, 8
      %s315 = smul.addr %s314, 8
      %s316 = scalar_lea.vmem %s1, %s315
      // Predicated region
      $region25: #{a_call__.51} parent=23 // pred_check
        %p317 = pneg %p56
      $region26: #{a_call__.51} parent=23 // pred_check_branch
        %319 = sbr.rel (%p317) target = $region28
      $region27: #{a_call__.51} parent=23 // pred_region
        _
      $region28: #{a_call__.51} parent=23 // pred_fallthru
        _
    $region24: #{a_call__.51} parent=5 // pred_fallthru
      _
    %p320 = scmp.le.s32.totalorder 2, %s7
    // Predicated region
    $region29: #{a_call__.51} parent=5 // pred_check
      %p321 = pneg %p320
    $region30: #{a_call__.51} parent=5 // pred_check_branch
      %323 = sbr.rel (%p321) target = $region32
    $region31: #{a_call__.51} parent=5 // pred_region
      %s324 = ssub.s32 %s7, 2
      // Predicated region
      $region33: #{a_call__.51} parent=31 // pred_check
        %p325 = pneg %p62
      $region34: #{a_call__.51} parent=31 // pred_check_branch
        %327 = sbr.rel (%p325) target = $region36
      $region35: #{a_call__.51} parent=31 // pred_region
        %p328 = scmp.lt.s32.totalorder %s13, 1
        %s329 = scalar_select %p328, %s13, 1
        %s330 = smul.addr %s329, 8
        %s331 = smul.addr %s330, 8
        %s332 = scalar_lea.vmem %s1, %s331
      $region36: #{a_call__.51} parent=31 // pred_fallthru
        _
    $region32: #{a_call__.51} parent=5 // pred_fallthru
      _
  $region6: #{a_call__.51} parent=0 // loop_footer
    %s11 = sadd.s32 1, %s7
  $region7: #{a_call__.51} parent=0 // loop_footer_branch
    %6 = sbr.rel target = $region3
  $region8: #{a_call__.51} parent=0 // loop_exit
    _

// kernel: a_call__.45
$region0: #{a_call__.45}
  #allocation0 [shape = 'u32[]', space=smem, size = 0x4, offset = 0x4, fixed_abs, tag = 'smem constant byte address 0x4 - core index']
  #allocation1 [shape = 'u32[144,128]{1,0:T(1,128)}', space=vmem, size = 0x12000, scoped, tag = 'internal scratch']
  %s0 = inlined_call_operand.vmem [shape: f32[512,16], index: 0, kind: input, shape index: {}]
  %s1 = inlined_call_operand.vmem [shape: f32[16,8], index: 1, kind: input, shape index: {}]
  %s2 = inlined_call_operand.vmem [shape: f32[1,8], index: 2, kind: input, shape index: {}]
  %s3 = inlined_call_operand.vmem [shape: f32[1,8], index: 3, kind: input, shape index: {}]
  %s4 = inlined_call_operand.vmem [shape: f32[512,8], index: 4, kind: output, shape index: {}]
  %s5 = sld [smem:[#allocation0]]
  $region49: #{a_call__.45} parent=0
    _
  %s7 = ssub.s32 1, %s5
  %s8 = scalar_select 0, %s7, %s5
  loop: start=0, step=1, limit=4
  $region2: #{a_call__.45} parent=0 // loop_pre_header
    _
  $region3: #{a_call__.45} parent=0 // loop_header
    %s10 = sphi 0, %s14
    %p11 = scmp.ge.s32.totalorder %s10, 4
    %s20 = sphi 0, %s22
    %s23 = sphi 0, %s20
    %s24 = sphi 0, %s23
    %s40 = sphi 0, %s24
    %s44 = sphi 0, %s44
    %s46 = sphi 0, %s44
    %s47 = sphi 0, %s46
    %s61 = sphi 0, %s47
    %s65 = sphi 0, %s65
    %s67 = sphi 0, %s65
    %s68 = sphi 0, %s67
    %s82 = sphi 0, %s68
    %s86 = sphi 0, %s86
    %s88 = sphi 0, %s86
    %s89 = sphi 0, %s88
    %s103 = sphi 0, %s89
    %s109 = sphi 0, %s111
    %s112 = sphi 0, %s109
    %s113 = sphi 0, %s112
    %s129 = sphi 0, %s113
  $region4: #{a_call__.45} parent=0 // loop_header_branch
    %13 = sbr.rel (%p11) target = $region8
  $region5: #{a_call__.45} parent=0 // loop_body
    %s15 = ssub.s32 %s10, 1
    %s16 = ssub.s32 %s10, 2
    %s17 = sadd.s32 %s10, 1
    %s18 = ssub.s32 %s10, %s17
    %p19 = scmp.eq.s32.totalorder %s18, 0
    %s21 = sadd.s32 %s20, 1
    %s22 = scalar_select %p19, %s20, %s21
    %p25 = pneg %p19
    %p26 = scmp.eq.s32.totalorder %s10, 1
    %p27 = por %p25, %p26
    %p28 = scmp.ne.s32.totalorder %s20, %s23
    %p29 = scmp.eq.s32.totalorder %s10, 0
    %p30 = por %p28, %p29
    %p31 = scmp.ne.s32.totalorder %s20, %s23
    %p32 = scmp.eq.s32.totalorder %s15, 1
    %p33 = por %p31, %p32
    %p34 = scmp.ne.s32.totalorder %s23, %s24
    %p35 = scmp.eq.s32.totalorder %s15, 0
    %p36 = por %p34, %p35
    %p37 = scmp.ne.s32.totalorder %s23, %s24
    %p38 = scmp.eq.s32.totalorder %s16, 1
    %p39 = por %p37, %p38
    %p41 = scmp.ne.s32.totalorder %s24, %s40
    %p42 = scmp.eq.s32.totalorder %s16, 0
    %p43 = por %p41, %p42
    %s45 = sadd.s32 %s44, 1
    %p48 = scmp.eq.s32.totalorder %s10, 1
    %p49 = scmp.ne.s32.totalorder %s44, %s46
    %p50 = scmp.eq.s32.totalorder %s10, 0
    %p51 = por %p49, %p50
    %p52 = scmp.ne.s32.totalorder %s44, %s46
    %p53 = scmp.eq.s32.totalorder %s15, 1
    %p54 = por %p52, %p53
    %p55 = scmp.ne.s32.totalorder %s46, %s47
    %p56 = scmp.eq.s32.totalorder %s15, 0
    %p57 = por %p55, %p56
    %p58 = scmp.ne.s32.totalorder %s46, %s47
    %p59 = scmp.eq.s32.totalorder %s16, 1
    %p60 = por %p58, %p59
    %p62 = scmp.ne.s32.totalorder %s47, %s61
    %p63 = scmp.eq.s32.totalorder %s16, 0
    %p64 = por %p62, %p63
    %s66 = sadd.s32 %s65, 1
    %p69 = scmp.eq.s32.totalorder %s10, 1
    %p70 = scmp.ne.s32.totalorder %s65, %s67
    %p71 = scmp.eq.s32.totalorder %s10, 0
    %p72 = por %p70, %p71
    %p73 = scmp.ne.s32.totalorder %s65, %s67
    %p74 = scmp.eq.s32.totalorder %s15, 1
    %p75 = por %p73, %p74
    %p76 = scmp.ne.s32.totalorder %s67, %s68
    %p77 = scmp.eq.s32.totalorder %s15, 0
    %p78 = por %p76, %p77
    %p79 = scmp.ne.s32.totalorder %s67, %s68
    %p80 = scmp.eq.s32.totalorder %s16, 1
    %p81 = por %p79, %p80
    %p83 = scmp.ne.s32.totalorder %s68, %s82
    %p84 = scmp.eq.s32.totalorder %s16, 0
    %p85 = por %p83, %p84
    %s87 = sadd.s32 %s86, 1
    %p90 = scmp.eq.s32.totalorder %s10, 1
    %p91 = scmp.ne.s32.totalorder %s86, %s88
    %p92 = scmp.eq.s32.totalorder %s10, 0
    %p93 = por %p91, %p92
    %p94 = scmp.ne.s32.totalorder %s86, %s88
    %p95 = scmp.eq.s32.totalorder %s15, 1
    %p96 = por %p94, %p95
    %p97 = scmp.ne.s32.totalorder %s88, %s89
    %p98 = scmp.eq.s32.totalorder %s15, 0
    %p99 = por %p97, %p98
    %p100 = scmp.ne.s32.totalorder %s88, %s89
    %p101 = scmp.eq.s32.totalorder %s16, 1
    %p102 = por %p100, %p101
    %p104 = scmp.ne.s32.totalorder %s89, %s103
    %p105 = scmp.eq.s32.totalorder %s16, 0
    %p106 = por %p104, %p105
    %s107 = ssub.s32 %s10, %s17
    %p108 = scmp.eq.s32.totalorder %s107, 0
    %s110 = sadd.s32 %s109, 1
    %s111 = scalar_select %p108, %s109, %s110
    %p114 = pneg %p108
    %p115 = scmp.eq.s32.totalorder %s10, 1
    %p116 = por %p114, %p115
    %p117 = scmp.ne.s32.totalorder %s109, %s112
    %p118 = scmp.eq.s32.totalorder %s10, 0
    %p119 = por %p117, %p118
    %p120 = scmp.ne.s32.totalorder %s109, %s112
    %p121 = scmp.eq.s32.totalorder %s15, 1
    %p122 = por %p120, %p121
    %p123 = scmp.ne.s32.totalorder %s112, %s113
    %p124 = scmp.eq.s32.totalorder %s15, 0
    %p125 = por %p123, %p124
    %p126 = scmp.ne.s32.totalorder %s112, %s113
    %p127 = scmp.eq.s32.totalorder %s16, 1
    %p128 = por %p126, %p127
    %p130 = scmp.ne.s32.totalorder %s113, %s129
    %p131 = scmp.eq.s32.totalorder %s16, 0
    %p132 = por %p130, %p131
    %p133 = scmp.le.s32.totalorder 1, %s10
    %p134 = scmp.lt.s32.totalorder %s10, 3
    %p135 = pnand %p133, %p134
    %p136 = pneg %p135
    // Predicated region
    $region9: #{a_call__.45} parent=5 // pred_check
      _
    $region10: #{a_call__.45} parent=5 // pred_check_branch
      %138 = sbr.rel (%p135) target = $region12
    $region11: #{a_call__.45} parent=5 // pred_region
      %s139 = ssub.s32 %s10, 1
      // Predicated region
      $region13: #{a_call__.45} parent=11 // pred_check
        %p140 = pneg %p57
      $region14: #{a_call__.45} parent=11 // pred_check_branch
        %142 = sbr.rel (%p140) target = $region16
      $region15: #{a_call__.45} parent=11 // pred_region
        _
      $region16: #{a_call__.45} parent=11 // pred_fallthru
        _
      // Predicated region
      $region17: #{a_call__.45} parent=11 // pred_check
        %p143 = pneg %p78
      $region18: #{a_call__.45} parent=11 // pred_check_branch
        %145 = sbr.rel (%p143) target = $region20
      $region19: #{a_call__.45} parent=11 // pred_region
        _
      $region20: #{a_call__.45} parent=11 // pred_fallthru
        _
      // Predicated region
      $region21: #{a_call__.45} parent=11 // pred_check
        %p146 = pneg %p99
      $region22: #{a_call__.45} parent=11 // pred_check_branch
        %148 = sbr.rel (%p146) target = $region24
      $region23: #{a_call__.45} parent=11 // pred_region
        _
      $region24: #{a_call__.45} parent=11 // pred_fallthru
        _
    $region12: #{a_call__.45} parent=5 // pred_fallthru
      _
    %p149 = scmp.lt.s32.totalorder %s10, 2
    // Predicated region
    $region25: #{a_call__.45} parent=5 // pred_check
      %p150 = pneg %p149
    $region26: #{a_call__.45} parent=5 // pred_check_branch
      %152 = sbr.rel (%p150) target = $region28
    $region27: #{a_call__.45} parent=5 // pred_region
      // Predicated region
      $region29: #{a_call__.45} parent=27 // pred_check
        %p153 = pneg %p30
      $region30: #{a_call__.45} parent=27 // pred_check_branch
        %155 = sbr.rel (%p153) target = $region32
      $region31: #{a_call__.45} parent=27 // pred_region
        %s156 = smul.u32 32, %s10
        %p157 = scmp.lt.s32.totalorder %s156, 63
        %s158 = scalar_select %p157, %s156, 63
        %s159 = smul.addr %s158, 8
        %s160 = scalar_lea.vmem %s0, %s159
        %s161 = smul.u32 32, %s10
      $region32: #{a_call__.45} parent=27 // pred_fallthru
        _
    $region28: #{a_call__.45} parent=5 // pred_fallthru
      _
    %p162 = scmp.le.s32.totalorder 1, %s10
    %p163 = scmp.lt.s32.totalorder %s10, 3
    %p164 = pnand %p162, %p163
    %p165 = pneg %p164
    // Predicated region
    $region33: #{a_call__.45} parent=5 // pred_check
      _
    $region34: #{a_call__.45} parent=5 // pred_check_branch
      %167 = sbr.rel (%p164) target = $region36
    $region35: #{a_call__.45} parent=5 // pred_region
      %s168 = ssub.s32 %s10, 1
      %s169 = smul.u32 32, %s15
      %p170 = scmp.lt.s32.totalorder %s169, 63
      %s171 = scalar_select %p170, %s169, 63
      %s172 = smul.addr %s171, 8
      %s173 = scalar_lea.vmem %s0, %s172
      %p174 = pneg %p36
      %p175 = pneg %p33
      %p176 = pneg %p57
      %p177 = pneg %p54
      %p178 = pneg %p78
      %p179 = pneg %p75
      %p180 = pneg %p99
      %p181 = pneg %p96
      %p182 = pneg %p125
      %p183 = pneg %p122
      %s184 = smul.u32 32, %s15
      %p185 = scmp.lt.s32.totalorder %s184, 63
      %s186 = scalar_select %p185, %s184, 63
      %s187 = smul.addr %s186, 8
      %s188 = scalar_lea.vmem %s4, %s187
      %s189 = smul.u32 32, %s15
      %p190 = scmp.lt.s32.totalorder %s189, 63
      %s191 = scalar_select %p190, %s189, 63
      %s192 = smul.addr %s191, 8
      %s193 = scalar_lea.vmem %s0, %s192
      %s194 = smul.u32 32, %s15
      %s195 = smul.u32 32, %s15
      %p196 = scmp.lt.s32.totalorder %s195, 63
      %s197 = scalar_select %p196, %s195, 63
      %s198 = smul.addr %s197, 8
      %s199 = scalar_lea.vmem %s4, %s198
      %s200 = smul.u32 32, %s15
      %v201 = vld [vmem:[%s193] sm:$0xff]
      %v202 = vld [vmem:[%s193 + $0x8] sm:$0xff]
      %v203 = vld [vmem:[%s193 + $0x10] sm:$0xff]
      %v204 = vld [vmem:[%s193 + $0x18] sm:$0xff]
      %v205 = vld [vmem:[%s193 + $0x20] sm:$0xff]
      %v206 = vld [vmem:[%s193 + $0x28] sm:$0xff]
      %v207 = vld [vmem:[%s193 + $0x30] sm:$0xff]
      %v208 = vld [vmem:[%s193 + $0x38] sm:$0xff]
      %v209 = vld [vmem:[%s193 + $0x40] sm:$0xff]
      %v210 = vld [vmem:[%s193 + $0x48] sm:$0xff]
      %v211 = vld [vmem:[%s193 + $0x50] sm:$0xff]
      %v212 = vld [vmem:[%s193 + $0x58] sm:$0xff]
      %v213 = vld [vmem:[%s193 + $0x60] sm:$0xff]
      %v214 = vld [vmem:[%s193 + $0x68] sm:$0xff]
      %v215 = vld [vmem:[%s193 + $0x70] sm:$0xff]
      %v216 = vld [vmem:[%s193 + $0x78] sm:$0xff]
      %v217 = vld [vmem:[%s193 + $0x80] sm:$0xff]
      %v218 = vld [vmem:[%s193 + $0x88] sm:$0xff]
      %v219 = vld [vmem:[%s193 + $0x90] sm:$0xff]
      %v220 = vld [vmem:[%s193 + $0x98] sm:$0xff]
      %v221 = vld [vmem:[%s193 + $0xa0] sm:$0xff]
      %v222 = vld [vmem:[%s193 + $0xa8] sm:$0xff]
      %v223 = vld [vmem:[%s193 + $0xb0] sm:$0xff]
      %v224 = vld [vmem:[%s193 + $0xb8] sm:$0xff]
      %v225 = vld [vmem:[%s193 + $0xc0] sm:$0xff]
      %v226 = vld [vmem:[%s193 + $0xc8] sm:$0xff]
      %v227 = vld [vmem:[%s193 + $0xd0] sm:$0xff]
      %v228 = vld [vmem:[%s193 + $0xd8] sm:$0xff]
      %v229 = vld [vmem:[%s193 + $0xe0] sm:$0xff]
      %v230 = vld [vmem:[%s193 + $0xe8] sm:$0xff]
      %v231 = vld [vmem:[%s193 + $0xf0] sm:$0xff]
      %v232 = vld [vmem:[%s193 + $0xf8] sm:$0xff]
      %v233 = vmax.f32 %v201, 0.0
      %v234 = vmax.f32 %v202, 0.0
      %v235 = vmax.f32 %v203, 0.0
      %v236 = vmax.f32 %v204, 0.0
      %v237 = vmax.f32 %v205, 0.0
      %v238 = vmax.f32 %v206, 0.0
      %v239 = vmax.f32 %v207, 0.0
      %v240 = vmax.f32 %v208, 0.0
      %v241 = vmax.f32 %v209, 0.0
      %v242 = vmax.f32 %v210, 0.0
      %v243 = vmax.f32 %v211, 0.0
      %v244 = vmax.f32 %v212, 0.0
      %v245 = vmax.f32 %v213, 0.0
      %v246 = vmax.f32 %v214, 0.0
      %v247 = vmax.f32 %v215, 0.0
      %v248 = vmax.f32 %v216, 0.0
      %v249 = vmax.f32 %v217, 0.0
      %v250 = vmax.f32 %v218, 0.0
      %v251 = vmax.f32 %v219, 0.0
      %v252 = vmax.f32 %v220, 0.0
      %v253 = vmax.f32 %v221, 0.0
      %v254 = vmax.f32 %v222, 0.0
      %v255 = vmax.f32 %v223, 0.0
      %v256 = vmax.f32 %v224, 0.0
      %v257 = vmax.f32 %v225, 0.0
      %v258 = vmax.f32 %v226, 0.0
      %v259 = vmax.f32 %v227, 0.0
      %v260 = vmax.f32 %v228, 0.0
      %v261 = vmax.f32 %v229, 0.0
      %v262 = vmax.f32 %v230, 0.0
      %v263 = vmax.f32 %v231, 0.0
      %v264 = vmax.f32 %v232, 0.0
      %v265 = vld [vmem:[%s1] sm:$0xff]
      %v266 = vld [vmem:[%s1 + $0x8] sm:$0xff]
      %vm267 = vcmask 130048
      %v269 = vsel %vm267, %v233, 0
      %v272 = vsel %vm267, %v234, 0
      %v275 = vsel %vm267, %v235, 0
      %v278 = vsel %vm267, %v236, 0
      %v281 = vsel %vm267, %v237, 0
      %v284 = vsel %vm267, %v238, 0
      %v287 = vsel %vm267, %v239, 0
      %v290 = vsel %vm267, %v240, 0
      %v293 = vsel %vm267, %v241, 0
      %v296 = vsel %vm267, %v242, 0
      %v299 = vsel %vm267, %v243, 0
      %v302 = vsel %vm267, %v244, 0
      %v305 = vsel %vm267, %v245, 0
      %v308 = vsel %vm267, %v246, 0
      %v311 = vsel %vm267, %v247, 0
      %v314 = vsel %vm267, %v248, 0
      %v317 = vsel %vm267, %v249, 0
      %v320 = vsel %vm267, %v250, 0
      %v323 = vsel %vm267, %v251, 0
      %v326 = vsel %vm267, %v252, 0
      %v329 = vsel %vm267, %v253, 0
      %v332 = vsel %vm267, %v254, 0
      %v335 = vsel %vm267, %v255, 0
      %v338 = vsel %vm267, %v256, 0
      %v341 = vsel %vm267, %v257, 0
      %v344 = vsel %vm267, %v258, 0
      %v347 = vsel %vm267, %v259, 0
      %v350 = vsel %vm267, %v260, 0
      %v353 = vsel %vm267, %v261, 0
      %v356 = vsel %vm267, %v262, 0
      %v359 = vsel %vm267, %v263, 0
      %v362 = vsel %vm267, %v264, 0
      %364 = vmatprep.subr.mxu0 0.0
      %365 = vmatpush1.msra.mxu0 %v265
      %366 = vmatprep.subr.mxu0 0.0
      %367 = vmatpush1.msra.mxu0 %v266
      %368 = vmatprep.subr.mxu0 0.0
      %369 = vmatpush1.msra.mxu0 0.0
      %370 = vmatprep.subr.mxu0 0.0
      %371 = vmatpush1.msra.mxu0 0.0
      %372 = vmatprep.subr.mxu0 0.0
      %373 = vmatpush1.msra.mxu0 0.0
      %374 = vmatprep.subr.mxu0 0.0
      %375 = vmatpush1.msra.mxu0 0.0
      %376 = vmatprep.subr.mxu0 0.0
      %377 = vmatpush1.msra.mxu0 0.0
      %378 = vmatprep.subr.mxu0 0.0
      %379 = vmatpush1.msra.mxu0 0.0
      %380 = vmatprep.subr.mxu0 0.0
      %381 = vmatpush1.msra.mxu0 0.0
      %382 = vmatprep.subr.mxu0 0.0
      %383 = vmatpush1.msra.mxu0 0.0
      %384 = vmatprep.subr.mxu0 0.0
      %385 = vmatpush1.msra.mxu0 0.0
      %386 = vmatprep.subr.mxu0 0.0
      %387 = vmatpush1.msra.mxu0 0.0
      %388 = vmatprep.subr.mxu0 0.0
      %389 = vmatpush1.msra.mxu0 0.0
      %390 = vmatprep.subr.mxu0 0.0
      %391 = vmatpush1.msra.mxu0 0.0
      %392 = vmatprep.subr.mxu0 0.0
      %393 = vmatpush1.msra.mxu0 0.0
      %394 = vmatprep.subr.mxu0 0.0
      %395 = vmatpush1.msra.mxu0 0.0
      %396 = vmatprep.subr.mxu0 0.0
      %397 = vmatpush1.msra.mxu0 0.0
      %398 = vmatprep.subr.mxu0 0.0
      %399 = vmatpush1.msra.mxu0 0.0
      %400 = vmatprep.subr.mxu0 0.0
      %401 = vmatpush1.msra.mxu0 0.0
      %402 = vmatprep.subr.mxu0 0.0
      %403 = vmatpush1.msra.mxu0 0.0
      %404 = vmatprep.subr.mxu0 0.0
      %405 = vmatpush1.msra.mxu0 0.0
      %406 = vmatprep.subr.mxu0 0.0
      %407 = vmatpush1.msra.mxu0 0.0
      %408 = vmatprep.subr.mxu0 0.0
      %409 = vmatpush1.msra.mxu0 0.0
      %410 = vmatprep.subr.mxu0 0.0
      %411 = vmatpush1.msra.mxu0 0.0
      %412 = vmatprep.subr.mxu0 0.0
      %413 = vmatpush1.msra.mxu0 0.0
      %414 = vmatprep.subr.mxu0 0.0
      %415 = vmatpush1.msra.mxu0 0.0
      %416 = vmatprep.subr.mxu0 0.0
      %417 = vmatpush1.msra.mxu0 0.0
      %418 = vmatprep.subr.mxu0 0.0
      %419 = vmatpush1.msra.mxu0 0.0
      %420 = vmatprep.subr.mxu0 0.0
      %421 = vmatpush1.msra.mxu0 0.0
      %422 = vmatprep.subr.mxu0 0.0
      %423 = vmatpush1.msra.mxu0 0.0
      %424 = vmatprep.subr.mxu0 0.0
      %425 = vmatpush1.msra.mxu0 0.0
      %426 = vmatprep.subr.mxu0 0.0
      %427 = vmatpush1.msra.mxu0 0.0
      %428 = vmatprep.mubr.f32.mxu0 0.0
      %429 = vmatmul.mubr.f32.gmra.mrb[0].mxu0 %v269
      %v430 = vpop.f32.mrb[0].mxu0
      %v431 = vadd.f32 0.0, %v430
      %v432 = vpop.f32.mrb[0].mxu0
      %433 = vmatprep.mubr.f32.mxu0 0.0
      %434 = vmatmul.mubr.f32.gmra.mrb[0].mxu0 %v272
      %v435 = vpop.f32.mrb[0].mxu0
      %v436 = vadd.f32 0.0, %v435
      %v437 = vpop.f32.mrb[0].mxu0
      %438 = vmatprep.mubr.f32.mxu0 0.0
      %439 = vmatmul.mubr.f32.gmra.mrb[0].mxu0 %v275
      %v440 = vpop.f32.mrb[0].mxu0
      %v441 = vadd.f32 0.0, %v440
      %v442 = vpop.f32.mrb[0].mxu0
      %443 = vmatprep.mubr.f32.mxu0 0.0
      %444 = vmatmul.mubr.f32.gmra.mrb[0].mxu0 %v278
      %v445 = vpop.f32.mrb[0].mxu0
      %v446 = vadd.f32 0.0, %v445
      %v447 = vpop.f32.mrb[0].mxu0
      %448 = vmatprep.mubr.f32.mxu0 0.0
      %449 = vmatmul.mubr.f32.gmra.mrb[0].mxu0 %v281
      %v450 = vpop.f32.mrb[0].mxu0
      %v451 = vadd.f32 0.0, %v450
      %v452 = vpop.f32.mrb[0].mxu0
      %453 = vmatprep.mubr.f32.mxu0 0.0
      %454 = vmatmul.mubr.f32.gmra.mrb[0].mxu0 %v284
      %v455 = vpop.f32.mrb[0].mxu0
      %v456 = vadd.f32 0.0, %v455
      %v457 = vpop.f32.mrb[0].mxu0
      %458 = vmatprep.mubr.f32.mxu0 0.0
      %459 = vmatmul.mubr.f32.gmra.mrb[0].mxu0 %v287
      %v460 = vpop.f32.mrb[0].mxu0
      %v461 = vadd.f32 0.0, %v460
      %v462 = vpop.f32.mrb[0].mxu0
      %463 = vmatprep.mubr.f32.mxu0 0.0
      %464 = vmatmul.mubr.f32.gmra.mrb[0].mxu0 %v290
      %v465 = vpop.f32.mrb[0].mxu0
      %v466 = vadd.f32 0.0, %v465
      %v467 = vpop.f32.mrb[0].mxu0
      %468 = vmatprep.mubr.f32.mxu0 0.0
      %469 = vmatmul.mubr.f32.gmra.mrb[0].mxu0 %v293
      %v470 = vpop.f32.mrb[0].mxu0
      %v471 = vadd.f32 0.0, %v470
      %v472 = vpop.f32.mrb[0].mxu0
      %473 = vmatprep.mubr.f32.mxu0 0.0
      %474 = vmatmul.mubr.f32.gmra.mrb[0].mxu0 %v296
      %v475 = vpop.f32.mrb[0].mxu0
      %v476 = vadd.f32 0.0, %v475
      %v477 = vpop.f32.mrb[0].mxu0
      %478 = vmatprep.mubr.f32.mxu0 0.0
      %479 = vmatmul.mubr.f32.gmra.mrb[0].mxu0 %v299
      %v480 = vpop.f32.mrb[0].mxu0
      %v481 = vadd.f32 0.0, %v480
      %v482 = vpop.f32.mrb[0].mxu0
      %483 = vmatprep.mubr.f32.mxu0 0.0
      %484 = vmatmul.mubr.f32.gmra.mrb[0].mxu0 %v302
      %v485 = vpop.f32.mrb[0].mxu0
      %v486 = vadd.f32 0.0, %v485
      %v487 = vpop.f32.mrb[0].mxu0
      %488 = vmatprep.mubr.f32.mxu0 0.0
      %489 = vmatmul.mubr.f32.gmra.mrb[0].mxu0 %v305
      %v490 = vpop.f32.mrb[0].mxu0
      %v491 = vadd.f32 0.0, %v490
      %v492 = vpop.f32.mrb[0].mxu0
      %493 = vmatprep.mubr.f32.mxu0 0.0
      %494 = vmatmul.mubr.f32.gmra.mrb[0].mxu0 %v308
      %v495 = vpop.f32.mrb[0].mxu0
      %v496 = vadd.f32 0.0, %v495
      %v497 = vpop.f32.mrb[0].mxu0
      %498 = vmatprep.mubr.f32.mxu0 0.0
      %499 = vmatmul.mubr.f32.gmra.mrb[0].mxu0 %v311
      %v500 = vpop.f32.mrb[0].mxu0
      %v501 = vadd.f32 0.0, %v500
      %v502 = vpop.f32.mrb[0].mxu0
      %503 = vmatprep.mubr.f32.mxu0 0.0
      %504 = vmatmul.mubr.f32.gmra.mrb[0].mxu0 %v314
      %v505 = vpop.f32.mrb[0].mxu0
      %v506 = vadd.f32 0.0, %v505
      %v507 = vpop.f32.mrb[0].mxu0
      %508 = vmatprep.mubr.f32.mxu0 0.0
      %509 = vmatmul.mubr.f32.gmra.mrb[0].mxu0 %v317
      %v510 = vpop.f32.mrb[0].mxu0
      %v511 = vadd.f32 0.0, %v510
      %v512 = vpop.f32.mrb[0].mxu0
      %513 = vmatprep.mubr.f32.mxu0 0.0
      %514 = vmatmul.mubr.f32.gmra.mrb[0].mxu0 %v320
      %v515 = vpop.f32.mrb[0].mxu0
      %v516 = vadd.f32 0.0, %v515
      %v517 = vpop.f32.mrb[0].mxu0
      %518 = vmatprep.mubr.f32.mxu0 0.0
      %519 = vmatmul.mubr.f32.gmra.mrb[0].mxu0 %v323
      %v520 = vpop.f32.mrb[0].mxu0
      %v521 = vadd.f32 0.0, %v520
      %v522 = vpop.f32.mrb[0].mxu0
      %523 = vmatprep.mubr.f32.mxu0 0.0
      %524 = vmatmul.mubr.f32.gmra.mrb[0].mxu0 %v326
      %v525 = vpop.f32.mrb[0].mxu0
      %v526 = vadd.f32 0.0, %v525
      %v527 = vpop.f32.mrb[0].mxu0
      %528 = vmatprep.mubr.f32.mxu0 0.0
      %529 = vmatmul.mubr.f32.gmra.mrb[0].mxu0 %v329
      %v530 = vpop.f32.mrb[0].mxu0
      %v531 = vadd.f32 0.0, %v530
      %v532 = vpop.f32.mrb[0].mxu0
      %533 = vmatprep.mubr.f32.mxu0 0.0
      %534 = vmatmul.mubr.f32.gmra.mrb[0].mxu0 %v332
      %v535 = vpop.f32.mrb[0].mxu0
      %v536 = vadd.f32 0.0, %v535
      %v537 = vpop.f32.mrb[0].mxu0
      %538 = vmatprep.mubr.f32.mxu0 0.0
      %539 = vmatmul.mubr.f32.gmra.mrb[0].mxu0 %v335
      %v540 = vpop.f32.mrb[0].mxu0
      %v541 = vadd.f32 0.0, %v540
      %v542 = vpop.f32.mrb[0].mxu0
      %543 = vmatprep.mubr.f32.mxu0 0.0
      %544 = vmatmul.mubr.f32.gmra.mrb[0].mxu0 %v338
      %v545 = vpop.f32.mrb[0].mxu0
      %v546 = vadd.f32 0.0, %v545
      %v547 = vpop.f32.mrb[0].mxu0
      %548 = vmatprep.mubr.f32.mxu0 0.0
      %549 = vmatmul.mubr.f32.gmra.mrb[0].mxu0 %v341
      %v550 = vpop.f32.mrb[0].mxu0
      %v551 = vadd.f32 0.0, %v550
      %v552 = vpop.f32.mrb[0].mxu0
      %553 = vmatprep.mubr.f32.mxu0 0.0
      %554 = vmatmul.mubr.f32.gmra.mrb[0].mxu0 %v344
      %v555 = vpop.f32.mrb[0].mxu0
      %v556 = vadd.f32 0.0, %v555
      %v557 = vpop.f32.mrb[0].mxu0
      %558 = vmatprep.mubr.f32.mxu0 0.0
      %559 = vmatmul.mubr.f32.gmra.mrb[0].mxu0 %v347
      %v560 = vpop.f32.mrb[0].mxu0
      %v561 = vadd.f32 0.0, %v560
      %v562 = vpop.f32.mrb[0].mxu0
      %563 = vmatprep.mubr.f32.mxu0 0.0
      %564 = vmatmul.mubr.f32.gmra.mrb[0].mxu0 %v350
      %v565 = vpop.f32.mrb[0].mxu0
      %v566 = vadd.f32 0.0, %v565
      %v567 = vpop.f32.mrb[0].mxu0
      %568 = vmatprep.mubr.f32.mxu0 0.0
      %569 = vmatmul.mubr.f32.gmra.mrb[0].mxu0 %v353
      %v570 = vpop.f32.mrb[0].mxu0
      %v571 = vadd.f32 0.0, %v570
      %v572 = vpop.f32.mrb[0].mxu0
      %573 = vmatprep.mubr.f32.mxu0 0.0
      %574 = vmatmul.mubr.f32.gmra.mrb[0].mxu0 %v356
      %v575 = vpop.f32.mrb[0].mxu0
      %v576 = vadd.f32 0.0, %v575
      %v577 = vpop.f32.mrb[0].mxu0
      %578 = vmatprep.mubr.f32.mxu0 0.0
      %579 = vmatmul.mubr.f32.gmra.mrb[0].mxu0 %v359
      %v580 = vpop.f32.mrb[0].mxu0
      %v581 = vadd.f32 0.0, %v580
      %v582 = vpop.f32.mrb[0].mxu0
      %583 = vmatprep.mubr.f32.mxu0 0.0
      %584 = vmatmul.mubr.f32.gmra.mrb[0].mxu0 %v362
      %v585 = vpop.f32.mrb[0].mxu0
      %v586 = vadd.f32 0.0, %v585
      %v587 = vpop.f32.mrb[0].mxu0
      %588 = vdwg.mxu0
      %v589 = vld [vmem:[%s2] sm:$0x1]
      %v591 = vlaneseq
      %v592 = vshrl.u32 %v591, 7
      %v593 = vsub.s32 0, %v592
      %v594 = vrot.slane %v589, %v593
      %v596 = vmul.f32 %v431, %v594
      %v597 = vmul.f32 %v436, %v594
      %v598 = vmul.f32 %v441, %v594
      %v599 = vmul.f32 %v446, %v594
      %v600 = vmul.f32 %v451, %v594
      %v601 = vmul.f32 %v456, %v594
      %v602 = vmul.f32 %v461, %v594
      %v603 = vmul.f32 %v466, %v594
      %v604 = vmul.f32 %v471, %v594
      %v605 = vmul.f32 %v476, %v594
      %v606 = vmul.f32 %v481, %v594
      %v607 = vmul.f32 %v486, %v594
      %v608 = vmul.f32 %v491, %v594
      %v609 = vmul.f32 %v496, %v594
      %v610 = vmul.f32 %v501, %v594
      %v611 = vmul.f32 %v506, %v594
      %v612 = vmul.f32 %v511, %v594
      %v613 = vmul.f32 %v516, %v594
      %v614 = vmul.f32 %v521, %v594
      %v615 = vmul.f32 %v526, %v594
      %v616 = vmul.f32 %v531, %v594
      %v617 = vmul.f32 %v536, %v594
      %v618 = vmul.f32 %v541, %v594
      %v619 = vmul.f32 %v546, %v594
      %v620 = vmul.f32 %v551, %v594
      %v621 = vmul.f32 %v556, %v594
      %v622 = vmul.f32 %v561, %v594
      %v623 = vmul.f32 %v566, %v594
      %v624 = vmul.f32 %v571, %v594
      %v625 = vmul.f32 %v576, %v594
      %v626 = vmul.f32 %v581, %v594
      %v627 = vmul.f32 %v586, %v594
      %v628 = vld [vmem:[%s3] sm:$0x1]
      %v630 = vlaneseq
      %v631 = vshrl.u32 %v630, 7
      %v632 = vsub.s32 0, %v631
      %v633 = vrot.slane %v628, %v632
      %v635 = vadd.f32 %v596, %v633
      %v636 = vadd.f32 %v597, %v633
      %v637 = vadd.f32 %v598, %v633
      %v638 = vadd.f32 %v599, %v633
      %v639 = vadd.f32 %v600, %v633
      %v640 = vadd.f32 %v601, %v633
      %v641 = vadd.f32 %v602, %v633
      %v642 = vadd.f32 %v603, %v633
      %v643 = vadd.f32 %v604, %v633
      %v644 = vadd.f32 %v605, %v633
      %v645 = vadd.f32 %v606, %v633
      %v646 = vadd.f32 %v607, %v633
      %v647 = vadd.f32 %v608, %v633
      %v648 = vadd.f32 %v609, %v633
      %v649 = vadd.f32 %v610, %v633
      %v650 = vadd.f32 %v611, %v633
      %v651 = vadd.f32 %v612, %v633
      %v652 = vadd.f32 %v613, %v633
      %v653 = vadd.f32 %v614, %v633
      %v654 = vadd.f32 %v615, %v633
      %v655 = vadd.f32 %v616, %v633
      %v656 = vadd.f32 %v617, %v633
      %v657 = vadd.f32 %v618, %v633
      %v658 = vadd.f32 %v619, %v633
      %v659 = vadd.f32 %v620, %v633
      %v660 = vadd.f32 %v621, %v633
      %v661 = vadd.f32 %v622, %v633
      %v662 = vadd.f32 %v623, %v633
      %v663 = vadd.f32 %v624, %v633
      %v664 = vadd.f32 %v625, %v633
      %v665 = vadd.f32 %v626, %v633
      %v666 = vadd.f32 %v627, %v633
      %vm667 = vcmask 64512
      %668 = vst.msk [vmem:[%s199] sm:$0xff] %vm667, %v635
      %669 = vst.msk [vmem:[%s199 + $0x8] sm:$0xff] %vm667, %v636
      %670 = vst.msk [vmem:[%s199 + $0x10] sm:$0xff] %vm667, %v637
      %671 = vst.msk [vmem:[%s199 + $0x18] sm:$0xff] %vm667, %v638
      %672 = vst.msk [vmem:[%s199 + $0x20] sm:$0xff] %vm667, %v639
      %673 = vst.msk [vmem:[%s199 + $0x28] sm:$0xff] %vm667, %v640
      %674 = vst.msk [vmem:[%s199 + $0x30] sm:$0xff] %vm667, %v641
      %675 = vst.msk [vmem:[%s199 + $0x38] sm:$0xff] %vm667, %v642
      %676 = vst.msk [vmem:[%s199 + $0x40] sm:$0xff] %vm667, %v643
      %677 = vst.msk [vmem:[%s199 + $0x48] sm:$0xff] %vm667, %v644
      %678 = vst.msk [vmem:[%s199 + $0x50] sm:$0xff] %vm667, %v645
      %679 = vst.msk [vmem:[%s199 + $0x58] sm:$0xff] %vm667, %v646
      %680 = vst.msk [vmem:[%s199 + $0x60] sm:$0xff] %vm667, %v647
      %681 = vst.msk [vmem:[%s199 + $0x68] sm:$0xff] %vm667, %v648
      %682 = vst.msk [vmem:[%s199 + $0x70] sm:$0xff] %vm667, %v649
      %683 = vst.msk [vmem:[%s199 + $0x78] sm:$0xff] %vm667, %v650
      %684 = vst.msk [vmem:[%s199 + $0x80] sm:$0xff] %vm667, %v651
      %685 = vst.msk [vmem:[%s199 + $0x88] sm:$0xff] %vm667, %v652
      %686 = vst.msk [vmem:[%s199 + $0x90] sm:$0xff] %vm667, %v653
      %687 = vst.msk [vmem:[%s199 + $0x98] sm:$0xff] %vm667, %v654
      %688 = vst.msk [vmem:[%s199 + $0xa0] sm:$0xff] %vm667, %v655
      %689 = vst.msk [vmem:[%s199 + $0xa8] sm:$0xff] %vm667, %v656
      %690 = vst.msk [vmem:[%s199 + $0xb0] sm:$0xff] %vm667, %v657
      %691 = vst.msk [vmem:[%s199 + $0xb8] sm:$0xff] %vm667, %v658
      %692 = vst.msk [vmem:[%s199 + $0xc0] sm:$0xff] %vm667, %v659
      %693 = vst.msk [vmem:[%s199 + $0xc8] sm:$0xff] %vm667, %v660
      %694 = vst.msk [vmem:[%s199 + $0xd0] sm:$0xff] %vm667, %v661
      %695 = vst.msk [vmem:[%s199 + $0xd8] sm:$0xff] %vm667, %v662
      %696 = vst.msk [vmem:[%s199 + $0xe0] sm:$0xff] %vm667, %v663
      %697 = vst.msk [vmem:[%s199 + $0xe8] sm:$0xff] %vm667, %v664
      %698 = vst.msk [vmem:[%s199 + $0xf0] sm:$0xff] %vm667, %v665
      %699 = vst.msk [vmem:[%s199 + $0xf8] sm:$0xff] %vm667, %v666
      %s700 = smul.u32 32, %s15
      %p701 = scmp.lt.s32.totalorder %s700, 63
      %s702 = scalar_select %p701, %s700, 63
      %s703 = smul.addr %s702, 8
      %s704 = scalar_lea.vmem %s4, %s703
      // Predicated region
      $region37: #{a_call__.45} parent=35 // pred_check
        %p705 = pneg %p122
      $region38: #{a_call__.45} parent=35 // pred_check_branch
        %707 = sbr.rel (%p705) target = $region40
      $region39: #{a_call__.45} parent=35 // pred_region
        %s708 = smul.u32 32, %s15
      $region40: #{a_call__.45} parent=35 // pred_fallthru
        _
    $region36: #{a_call__.45} parent=5 // pred_fallthru
      _
    %p709 = scmp.le.s32.totalorder 2, %s10
    // Predicated region
    $region41: #{a_call__.45} parent=5 // pred_check
      %p710 = pneg %p709
    $region42: #{a_call__.45} parent=5 // pred_check_branch
      %712 = sbr.rel (%p710) target = $region44
    $region43: #{a_call__.45} parent=5 // pred_region
      %s713 = ssub.s32 %s10, 2
      // Predicated region
      $region45: #{a_call__.45} parent=43 // pred_check
        %p714 = pneg %p128
      $region46: #{a_call__.45} parent=43 // pred_check_branch
        %716 = sbr.rel (%p714) target = $region48
      $region47: #{a_call__.45} parent=43 // pred_region
        %s717 = smul.u32 32, %s16
        %p718 = scmp.lt.s32.totalorder %s717, 63
        %s719 = scalar_select %p718, %s717, 63
        %s720 = smul.addr %s719, 8
        %s721 = scalar_lea.vmem %s4, %s720
      $region48: #{a_call__.45} parent=43 // pred_fallthru
        _
    $region44: #{a_call__.45} parent=5 // pred_fallthru
      _
  $region6: #{a_call__.45} parent=0 // loop_footer
    %s14 = sadd.s32 1, %s10
  $region7: #{a_call__.45} parent=0 // loop_footer_branch
    %9 = sbr.rel target = $region3
  $region8: #{a_call__.45} parent=0 // loop_exit
    _

// kernel: a_call__.50
$region0: #{a_call__.50}
  #allocation0 [shape = 'u32[]', space=smem, size = 0x4, offset = 0x4, fixed_abs, tag = 'smem constant byte address 0x4 - core index']
  #allocation1 [shape = 'u32[144,128]{1,0:T(1,128)}', space=vmem, size = 0x12000, scoped, tag = 'internal scratch']
  %s0 = inlined_call_operand.vmem [shape: f32[128,32], index: 0, kind: input, shape index: {}]
  %s1 = inlined_call_operand.vmem [shape: f32[32,16], index: 1, kind: input, shape index: {}]
  %s2 = inlined_call_operand.vmem [shape: f32[1,16], index: 2, kind: input, shape index: {}]
  %s3 = inlined_call_operand.vmem [shape: f32[1,16], index: 3, kind: input, shape index: {}]
  %s4 = inlined_call_operand.vmem [shape: f32[128,16], index: 4, kind: output, shape index: {}]
  %s5 = sld [smem:[#allocation0]]
  $region26: #{a_call__.50} parent=0
    _
  %s7 = ssub.s32 1, %s5
  %s8 = scalar_select 0, %s7, %s5
  // Predicated region
  $region2: #{a_call__.50} parent=0 // pred_check
    _
  $region3: #{a_call__.50} parent=0 // pred_check_branch
    %10 = sbr.rel (0) target = $region5
  $region4: #{a_call__.50} parent=0 // pred_region
    _
  $region5: #{a_call__.50} parent=0 // pred_fallthru
    _
  // Predicated region
  $region6: #{a_call__.50} parent=0 // pred_check
    _
  $region7: #{a_call__.50} parent=0 // pred_check_branch
    %12 = sbr.rel (0) target = $region9
  $region8: #{a_call__.50} parent=0 // pred_region
    _
  $region9: #{a_call__.50} parent=0 // pred_fallthru
    _
  // Predicated region
  $region10: #{a_call__.50} parent=0 // pred_check
    _
  $region11: #{a_call__.50} parent=0 // pred_check_branch
    %14 = sbr.rel (0) target = $region13
  $region12: #{a_call__.50} parent=0 // pred_region
    _
  $region13: #{a_call__.50} parent=0 // pred_fallthru
    _
  // Predicated region
  $region14: #{a_call__.50} parent=0 // pred_check
    _
  $region15: #{a_call__.50} parent=0 // pred_check_branch
    %16 = sbr.rel (0) target = $region17
  $region16: #{a_call__.50} parent=0 // pred_region
    _
  $region17: #{a_call__.50} parent=0 // pred_fallthru
    _
  %v17 = vld [vmem:[%s0] sm:$0xff]
  %v18 = vld [vmem:[%s0 + $0x8] sm:$0xff]
  %v19 = vld [vmem:[%s0 + $0x10] sm:$0xff]
  %v20 = vld [vmem:[%s0 + $0x18] sm:$0xff]
  %v21 = vld [vmem:[%s0 + $0x20] sm:$0xff]
  %v22 = vld [vmem:[%s0 + $0x28] sm:$0xff]
  %v23 = vld [vmem:[%s0 + $0x30] sm:$0xff]
  %v24 = vld [vmem:[%s0 + $0x38] sm:$0xff]
  %v25 = vld [vmem:[%s0 + $0x40] sm:$0xff]
  %v26 = vld [vmem:[%s0 + $0x48] sm:$0xff]
  %v27 = vld [vmem:[%s0 + $0x50] sm:$0xff]
  %v28 = vld [vmem:[%s0 + $0x58] sm:$0xff]
  %v29 = vld [vmem:[%s0 + $0x60] sm:$0xff]
  %v30 = vld [vmem:[%s0 + $0x68] sm:$0xff]
  %v31 = vld [vmem:[%s0 + $0x70] sm:$0xff]
  %v32 = vld [vmem:[%s0 + $0x78] sm:$0xff]
  %v33 = vmax.f32 %v17, 0.0
  %v34 = vmax.f32 %v18, 0.0
  %v35 = vmax.f32 %v19, 0.0
  %v36 = vmax.f32 %v20, 0.0
  %v37 = vmax.f32 %v21, 0.0
  %v38 = vmax.f32 %v22, 0.0
  %v39 = vmax.f32 %v23, 0.0
  %v40 = vmax.f32 %v24, 0.0
  %v41 = vmax.f32 %v25, 0.0
  %v42 = vmax.f32 %v26, 0.0
  %v43 = vmax.f32 %v27, 0.0
  %v44 = vmax.f32 %v28, 0.0
  %v45 = vmax.f32 %v29, 0.0
  %v46 = vmax.f32 %v30, 0.0
  %v47 = vmax.f32 %v31, 0.0
  %v48 = vmax.f32 %v32, 0.0
  %v49 = vld [vmem:[%s1] sm:$0xff]
  %v50 = vld [vmem:[%s1 + $0x8] sm:$0xff]
  %v51 = vld [vmem:[%s1 + $0x10] sm:$0xff]
  %v52 = vld [vmem:[%s1 + $0x18] sm:$0xff]
  %vm53 = vcmask 261120
  %v55 = vsel %vm53, %v33, 0
  %v58 = vsel %vm53, %v34, 0
  %v61 = vsel %vm53, %v35, 0
  %v64 = vsel %vm53, %v36, 0
  %v67 = vsel %vm53, %v37, 0
  %v70 = vsel %vm53, %v38, 0
  %v73 = vsel %vm53, %v39, 0
  %v76 = vsel %vm53, %v40, 0
  %v79 = vsel %vm53, %v41, 0
  %v82 = vsel %vm53, %v42, 0
  %v85 = vsel %vm53, %v43, 0
  %v88 = vsel %vm53, %v44, 0
  %v91 = vsel %vm53, %v45, 0
  %v94 = vsel %vm53, %v46, 0
  %v97 = vsel %vm53, %v47, 0
  %v100 = vsel %vm53, %v48, 0
  %102 = vmatprep.subr.mxu0 0.0
  %103 = vmatpush1.msra.mxu0 %v49
  %104 = vmatprep.subr.mxu0 0.0
  %105 = vmatpush1.msra.mxu0 %v50
  %106 = vmatprep.subr.mxu0 0.0
  %107 = vmatpush1.msra.mxu0 %v51
  %108 = vmatprep.subr.mxu0 0.0
  %109 = vmatpush1.msra.mxu0 %v52
  %110 = vmatprep.subr.mxu0 0.0
  %111 = vmatpush1.msra.mxu0 0.0
  %112 = vmatprep.subr.mxu0 0.0
  %113 = vmatpush1.msra.mxu0 0.0
  %114 = vmatprep.subr.mxu0 0.0
  %115 = vmatpush1.msra.mxu0 0.0
  %116 = vmatprep.subr.mxu0 0.0
  %117 = vmatpush1.msra.mxu0 0.0
  %118 = vmatprep.subr.mxu0 0.0
  %119 = vmatpush1.msra.mxu0 0.0
  %120 = vmatprep.subr.mxu0 0.0
  %121 = vmatpush1.msra.mxu0 0.0
  %122 = vmatprep.subr.mxu0 0.0
  %123 = vmatpush1.msra.mxu0 0.0
  %124 = vmatprep.subr.mxu0 0.0
  %125 = vmatpush1.msra.mxu0 0.0
  %126 = vmatprep.subr.mxu0 0.0
  %127 = vmatpush1.msra.mxu0 0.0
  %128 = vmatprep.subr.mxu0 0.0
  %129 = vmatpush1.msra.mxu0 0.0
  %130 = vmatprep.subr.mxu0 0.0
  %131 = vmatpush1.msra.mxu0 0.0
  %132 = vmatprep.subr.mxu0 0.0
  %133 = vmatpush1.msra.mxu0 0.0
  %134 = vmatprep.subr.mxu0 0.0
  %135 = vmatpush1.msra.mxu0 0.0
  %136 = vmatprep.subr.mxu0 0.0
  %137 = vmatpush1.msra.mxu0 0.0
  %138 = vmatprep.subr.mxu0 0.0
  %139 = vmatpush1.msra.mxu0 0.0
  %140 = vmatprep.subr.mxu0 0.0
  %141 = vmatpush1.msra.mxu0 0.0
  %142 = vmatprep.subr.mxu0 0.0
  %143 = vmatpush1.msra.mxu0 0.0
  %144 = vmatprep.subr.mxu0 0.0
  %145 = vmatpush1.msra.mxu0 0.0
  %146 = vmatprep.subr.mxu0 0.0
  %147 = vmatpush1.msra.mxu0 0.0
  %148 = vmatprep.subr.mxu0 0.0
  %149 = vmatpush1.msra.mxu0 0.0
  %150 = vmatprep.subr.mxu0 0.0
  %151 = vmatpush1.msra.mxu0 0.0
  %152 = vmatprep.subr.mxu0 0.0
  %153 = vmatpush1.msra.mxu0 0.0
  %154 = vmatprep.subr.mxu0 0.0
  %155 = vmatpush1.msra.mxu0 0.0
  %156 = vmatprep.subr.mxu0 0.0
  %157 = vmatpush1.msra.mxu0 0.0
  %158 = vmatprep.subr.mxu0 0.0
  %159 = vmatpush1.msra.mxu0 0.0
  %160 = vmatprep.subr.mxu0 0.0
  %161 = vmatpush1.msra.mxu0 0.0
  %162 = vmatprep.subr.mxu0 0.0
  %163 = vmatpush1.msra.mxu0 0.0
  %164 = vmatprep.subr.mxu0 0.0
  %165 = vmatpush1.msra.mxu0 0.0
  %166 = vmatprep.mubr.f32.mxu0 0.0
  %167 = vmatmul.mubr.f32.gmra.mrb[0].mxu0 %v55
  %v168 = vpop.f32.mrb[0].mxu0
  %v169 = vadd.f32 0.0, %v168
  %v170 = vpop.f32.mrb[0].mxu0
  %171 = vmatprep.mubr.f32.mxu0 0.0
  %172 = vmatmul.mubr.f32.gmra.mrb[0].mxu0 %v58
  %v173 = vpop.f32.mrb[0].mxu0
  %v174 = vadd.f32 0.0, %v173
  %v175 = vpop.f32.mrb[0].mxu0
  %176 = vmatprep.mubr.f32.mxu0 0.0
  %177 = vmatmul.mubr.f32.gmra.mrb[0].mxu0 %v61
  %v178 = vpop.f32.mrb[0].mxu0
  %v179 = vadd.f32 0.0, %v178
  %v180 = vpop.f32.mrb[0].mxu0
  %181 = vmatprep.mubr.f32.mxu0 0.0
  %182 = vmatmul.mubr.f32.gmra.mrb[0].mxu0 %v64
  %v183 = vpop.f32.mrb[0].mxu0
  %v184 = vadd.f32 0.0, %v183
  %v185 = vpop.f32.mrb[0].mxu0
  %186 = vmatprep.mubr.f32.mxu0 0.0
  %187 = vmatmul.mubr.f32.gmra.mrb[0].mxu0 %v67
  %v188 = vpop.f32.mrb[0].mxu0
  %v189 = vadd.f32 0.0, %v188
  %v190 = vpop.f32.mrb[0].mxu0
  %191 = vmatprep.mubr.f32.mxu0 0.0
  %192 = vmatmul.mubr.f32.gmra.mrb[0].mxu0 %v70
  %v193 = vpop.f32.mrb[0].mxu0
  %v194 = vadd.f32 0.0, %v193
  %v195 = vpop.f32.mrb[0].mxu0
  %196 = vmatprep.mubr.f32.mxu0 0.0
  %197 = vmatmul.mubr.f32.gmra.mrb[0].mxu0 %v73
  %v198 = vpop.f32.mrb[0].mxu0
  %v199 = vadd.f32 0.0, %v198
  %v200 = vpop.f32.mrb[0].mxu0
  %201 = vmatprep.mubr.f32.mxu0 0.0
  %202 = vmatmul.mubr.f32.gmra.mrb[0].mxu0 %v76
  %v203 = vpop.f32.mrb[0].mxu0
  %v204 = vadd.f32 0.0, %v203
  %v205 = vpop.f32.mrb[0].mxu0
  %206 = vmatprep.mubr.f32.mxu0 0.0
  %207 = vmatmul.mubr.f32.gmra.mrb[0].mxu0 %v79
  %v208 = vpop.f32.mrb[0].mxu0
  %v209 = vadd.f32 0.0, %v208
  %v210 = vpop.f32.mrb[0].mxu0
  %211 = vmatprep.mubr.f32.mxu0 0.0
  %212 = vmatmul.mubr.f32.gmra.mrb[0].mxu0 %v82
  %v213 = vpop.f32.mrb[0].mxu0
  %v214 = vadd.f32 0.0, %v213
  %v215 = vpop.f32.mrb[0].mxu0
  %216 = vmatprep.mubr.f32.mxu0 0.0
  %217 = vmatmul.mubr.f32.gmra.mrb[0].mxu0 %v85
  %v218 = vpop.f32.mrb[0].mxu0
  %v219 = vadd.f32 0.0, %v218
  %v220 = vpop.f32.mrb[0].mxu0
  %221 = vmatprep.mubr.f32.mxu0 0.0
  %222 = vmatmul.mubr.f32.gmra.mrb[0].mxu0 %v88
  %v223 = vpop.f32.mrb[0].mxu0
  %v224 = vadd.f32 0.0, %v223
  %v225 = vpop.f32.mrb[0].mxu0
  %226 = vmatprep.mubr.f32.mxu0 0.0
  %227 = vmatmul.mubr.f32.gmra.mrb[0].mxu0 %v91
  %v228 = vpop.f32.mrb[0].mxu0
  %v229 = vadd.f32 0.0, %v228
  %v230 = vpop.f32.mrb[0].mxu0
  %231 = vmatprep.mubr.f32.mxu0 0.0
  %232 = vmatmul.mubr.f32.gmra.mrb[0].mxu0 %v94
  %v233 = vpop.f32.mrb[0].mxu0
  %v234 = vadd.f32 0.0, %v233
  %v235 = vpop.f32.mrb[0].mxu0
  %236 = vmatprep.mubr.f32.mxu0 0.0
  %237 = vmatmul.mubr.f32.gmra.mrb[0].mxu0 %v97
  %v238 = vpop.f32.mrb[0].mxu0
  %v239 = vadd.f32 0.0, %v238
  %v240 = vpop.f32.mrb[0].mxu0
  %241 = vmatprep.mubr.f32.mxu0 0.0
  %242 = vmatmul.mubr.f32.gmra.mrb[0].mxu0 %v100
  %v243 = vpop.f32.mrb[0].mxu0
  %v244 = vadd.f32 0.0, %v243
  %v245 = vpop.f32.mrb[0].mxu0
  %246 = vdwg.mxu0
  %v247 = vld [vmem:[%s2] sm:$0x1]
  %v249 = vlaneseq
  %v250 = vshrl.u32 %v249, 7
  %v251 = vsub.s32 0, %v250
  %v252 = vrot.slane %v247, %v251
  %v254 = vmul.f32 %v169, %v252
  %v255 = vmul.f32 %v174, %v252
  %v256 = vmul.f32 %v179, %v252
  %v257 = vmul.f32 %v184, %v252
  %v258 = vmul.f32 %v189, %v252
  %v259 = vmul.f32 %v194, %v252
  %v260 = vmul.f32 %v199, %v252
  %v261 = vmul.f32 %v204, %v252
  %v262 = vmul.f32 %v209, %v252
  %v263 = vmul.f32 %v214, %v252
  %v264 = vmul.f32 %v219, %v252
  %v265 = vmul.f32 %v224, %v252
  %v266 = vmul.f32 %v229, %v252
  %v267 = vmul.f32 %v234, %v252
  %v268 = vmul.f32 %v239, %v252
  %v269 = vmul.f32 %v244, %v252
  %v270 = vld [vmem:[%s3] sm:$0x1]
  %v272 = vlaneseq
  %v273 = vshrl.u32 %v272, 7
  %v274 = vsub.s32 0, %v273
  %v275 = vrot.slane %v270, %v274
  %v277 = vadd.f32 %v254, %v275
  %v278 = vadd.f32 %v255, %v275
  %v279 = vadd.f32 %v256, %v275
  %v280 = vadd.f32 %v257, %v275
  %v281 = vadd.f32 %v258, %v275
  %v282 = vadd.f32 %v259, %v275
  %v283 = vadd.f32 %v260, %v275
  %v284 = vadd.f32 %v261, %v275
  %v285 = vadd.f32 %v262, %v275
  %v286 = vadd.f32 %v263, %v275
  %v287 = vadd.f32 %v264, %v275
  %v288 = vadd.f32 %v265, %v275
  %v289 = vadd.f32 %v266, %v275
  %v290 = vadd.f32 %v267, %v275
  %v291 = vadd.f32 %v268, %v275
  %v292 = vadd.f32 %v269, %v275
  %vm293 = vcmask 130048
  %294 = vst.msk [vmem:[%s4] sm:$0xff] %vm293, %v277
  %295 = vst.msk [vmem:[%s4 + $0x8] sm:$0xff] %vm293, %v278
  %296 = vst.msk [vmem:[%s4 + $0x10] sm:$0xff] %vm293, %v279
  %297 = vst.msk [vmem:[%s4 + $0x18] sm:$0xff] %vm293, %v280
  %298 = vst.msk [vmem:[%s4 + $0x20] sm:$0xff] %vm293, %v281
  %299 = vst.msk [vmem:[%s4 + $0x28] sm:$0xff] %vm293, %v282
  %300 = vst.msk [vmem:[%s4 + $0x30] sm:$0xff] %vm293, %v283
  %301 = vst.msk [vmem:[%s4 + $0x38] sm:$0xff] %vm293, %v284
  %302 = vst.msk [vmem:[%s4 + $0x40] sm:$0xff] %vm293, %v285
  %303 = vst.msk [vmem:[%s4 + $0x48] sm:$0xff] %vm293, %v286
  %304 = vst.msk [vmem:[%s4 + $0x50] sm:$0xff] %vm293, %v287
  %305 = vst.msk [vmem:[%s4 + $0x58] sm:$0xff] %vm293, %v288
  %306 = vst.msk [vmem:[%s4 + $0x60] sm:$0xff] %vm293, %v289
  %307 = vst.msk [vmem:[%s4 + $0x68] sm:$0xff] %vm293, %v290
  %308 = vst.msk [vmem:[%s4 + $0x70] sm:$0xff] %vm293, %v291
  %309 = vst.msk [vmem:[%s4 + $0x78] sm:$0xff] %vm293, %v292
  // Predicated region
  $region18: #{a_call__.50} parent=0 // pred_check
    _
  $region19: #{a_call__.50} parent=0 // pred_check_branch
    %311 = sbr.rel (0) target = $region21
  $region20: #{a_call__.50} parent=0 // pred_region
    _
  $region21: #{a_call__.50} parent=0 // pred_fallthru
    _
  // Predicated region
  $region22: #{a_call__.50} parent=0 // pred_check
    _
  $region23: #{a_call__.50} parent=0 // pred_check_branch
    %313 = sbr.rel (0) target = $region25
  $region24: #{a_call__.50} parent=0 // pred_region
    _
  $region25: #{a_call__.50} parent=0 // pred_fallthru
    _

// kernel: a_call__.53
$region0: #{a_call__.53}
  #allocation0 [shape = 'u32[]', space=smem, size = 0x4, offset = 0x4, fixed_abs, tag = 'smem constant byte address 0x4 - core index']
  #allocation1 [shape = 'u32[144,128]{1,0:T(1,128)}', space=vmem, size = 0x12000, scoped, tag = 'internal scratch']
  %s0 = inlined_call_operand.vmem [shape: f32[2,16,64], index: 0, kind: input, shape index: {}]
  %s1 = inlined_call_operand.vmem [shape: f32[64,10], index: 1, kind: input, shape index: {}]
  %s2 = inlined_call_operand.vmem [shape: f32[1,10], index: 2, kind: input, shape index: {}]
  %s3 = inlined_call_operand.hbm [shape: f32[2,10], index: 3, kind: output, shape index: {}]
  %s4 = sld [smem:[#allocation0]]
  $region22: #{a_call__.53} parent=0
    _
  %s6 = ssub.s32 1, %s4
  %s7 = scalar_select 0, %s6, %s4
  $region1: #{a_call__.53} parent=0
    #allocation2 [shape = 'u8[1024]{0}', space=vmem, size = 0x400, scoped, tag = 'output window, operand 0, single buffered']
    #allocation3 [shape = 's32[1]{0}', space=sflag, size = 0x4, scoped, tag = 'scoped memory for a_call__.53']
    %8 = vsyncpa [#allocation3], 0
    // Predicated region
    $region2: #{a_call__.53} parent=1 // pred_check
      _
    $region3: #{a_call__.53} parent=1 // pred_check_branch
      %10 = sbr.rel (0) target = $region5
    $region4: #{a_call__.53} parent=1 // pred_region
      _
    $region5: #{a_call__.53} parent=1 // pred_fallthru
      _
    // Predicated region
    $region6: #{a_call__.53} parent=1 // pred_check
      _
    $region7: #{a_call__.53} parent=1 // pred_check_branch
      %12 = sbr.rel (0) target = $region9
    $region8: #{a_call__.53} parent=1 // pred_region
      _
    $region9: #{a_call__.53} parent=1 // pred_fallthru
      _
    // Predicated region
    $region10: #{a_call__.53} parent=1 // pred_check
      _
    $region11: #{a_call__.53} parent=1 // pred_check_branch
      %14 = sbr.rel (0) target = $region13
    $region12: #{a_call__.53} parent=1 // pred_region
      _
    $region13: #{a_call__.53} parent=1 // pred_fallthru
      _
    %v15 = vld [vmem:[%s0] sm:$0xff]
    %v16 = vld [vmem:[%s0 + $0x8] sm:$0xff]
    %v17 = vld [vmem:[%s0 + $0x10] sm:$0xff]
    %v18 = vld [vmem:[%s0 + $0x18] sm:$0xff]
    %vm19 = vcmask 523264
    %v20 = vsel %vm19, %v15, 0.0
    %v21 = vsel %vm19, %v16, 0.0
    %v22 = vadd.f32 %v20, %v21
    %v23 = vrot.slane %v22, 4
    %v24 = vadd.f32 %v22, %v23
    %v25 = vrot.slane %v24, 2
    %v26 = vadd.f32 %v24, %v25
    %v27 = vrot.slane %v26, 1
    %v28 = vadd.f32 %v26, %v27
    %v29 = vsel %vm19, %v17, 0.0
    %v30 = vsel %vm19, %v18, 0.0
    %v31 = vadd.f32 %v29, %v30
    %v32 = vrot.slane %v31, 4
    %v33 = vadd.f32 %v31, %v32
    %v34 = vrot.slane %v33, 2
    %v35 = vadd.f32 %v33, %v34
    %v36 = vrot.slane %v35, 1
    %v37 = vadd.f32 %v35, %v36
    %v38 = vrcp.pop 16.0
    %v39 = vmul.f32 %v28, %v38
    %v40 = vmul.f32 %v37, %v38
    %v41 = vld [vmem:[%s1] sm:$0xff]
    %v42 = vld [vmem:[%s1 + $0x8] sm:$0xff]
    %v43 = vld [vmem:[%s1 + $0x10] sm:$0xff]
    %v44 = vld [vmem:[%s1 + $0x18] sm:$0xff]
    %v45 = vld [vmem:[%s1 + $0x20] sm:$0xff]
    %v46 = vld [vmem:[%s1 + $0x28] sm:$0xff]
    %v47 = vld [vmem:[%s1 + $0x30] sm:$0xff]
    %v48 = vld [vmem:[%s1 + $0x38] sm:$0xff]
    %v49 = vld [vmem:[%s2] sm:$0x1]
    %v51 = vlaneseq
    %v52 = vshrl.u32 %v51, 7
    %v53 = vsub.s32 0, %v52
    %v54 = vrot.slane %v49, %v53
    %vm58 = vcmask 1041409
    %v59 = vsel %vm58, %v40, %v39
    %v60 = vsel %vm19, %v59, 0
    %62 = vmatprep.subr.mxu0 0.0
    %63 = vmatpush1.msra.mxu0 %v41
    %64 = vmatprep.subr.mxu0 0.0
    %65 = vmatpush1.msra.mxu0 %v42
    %66 = vmatprep.subr.mxu0 0.0
    %67 = vmatpush1.msra.mxu0 %v43
    %68 = vmatprep.subr.mxu0 0.0
    %69 = vmatpush1.msra.mxu0 %v44
    %70 = vmatprep.subr.mxu0 0.0
    %71 = vmatpush1.msra.mxu0 %v45
    %72 = vmatprep.subr.mxu0 0.0
    %73 = vmatpush1.msra.mxu0 %v46
    %74 = vmatprep.subr.mxu0 0.0
    %75 = vmatpush1.msra.mxu0 %v47
    %76 = vmatprep.subr.mxu0 0.0
    %77 = vmatpush1.msra.mxu0 %v48
    %78 = vmatprep.subr.mxu0 0.0
    %79 = vmatpush1.msra.mxu0 0.0
    %80 = vmatprep.subr.mxu0 0.0
    %81 = vmatpush1.msra.mxu0 0.0
    %82 = vmatprep.subr.mxu0 0.0
    %83 = vmatpush1.msra.mxu0 0.0
    %84 = vmatprep.subr.mxu0 0.0
    %85 = vmatpush1.msra.mxu0 0.0
    %86 = vmatprep.subr.mxu0 0.0
    %87 = vmatpush1.msra.mxu0 0.0
    %88 = vmatprep.subr.mxu0 0.0
    %89 = vmatpush1.msra.mxu0 0.0
    %90 = vmatprep.subr.mxu0 0.0
    %91 = vmatpush1.msra.mxu0 0.0
    %92 = vmatprep.subr.mxu0 0.0
    %93 = vmatpush1.msra.mxu0 0.0
    %94 = vmatprep.subr.mxu0 0.0
    %95 = vmatpush1.msra.mxu0 0.0
    %96 = vmatprep.subr.mxu0 0.0
    %97 = vmatpush1.msra.mxu0 0.0
    %98 = vmatprep.subr.mxu0 0.0
    %99 = vmatpush1.msra.mxu0 0.0
    %100 = vmatprep.subr.mxu0 0.0
    %101 = vmatpush1.msra.mxu0 0.0
    %102 = vmatprep.subr.mxu0 0.0
    %103 = vmatpush1.msra.mxu0 0.0
    %104 = vmatprep.subr.mxu0 0.0
    %105 = vmatpush1.msra.mxu0 0.0
    %106 = vmatprep.subr.mxu0 0.0
    %107 = vmatpush1.msra.mxu0 0.0
    %108 = vmatprep.subr.mxu0 0.0
    %109 = vmatpush1.msra.mxu0 0.0
    %110 = vmatprep.subr.mxu0 0.0
    %111 = vmatpush1.msra.mxu0 0.0
    %112 = vmatprep.subr.mxu0 0.0
    %113 = vmatpush1.msra.mxu0 0.0
    %114 = vmatprep.subr.mxu0 0.0
    %115 = vmatpush1.msra.mxu0 0.0
    %116 = vmatprep.subr.mxu0 0.0
    %117 = vmatpush1.msra.mxu0 0.0
    %118 = vmatprep.subr.mxu0 0.0
    %119 = vmatpush1.msra.mxu0 0.0
    %120 = vmatprep.subr.mxu0 0.0
    %121 = vmatpush1.msra.mxu0 0.0
    %122 = vmatprep.subr.mxu0 0.0
    %123 = vmatpush1.msra.mxu0 0.0
    %124 = vmatprep.subr.mxu0 0.0
    %125 = vmatpush1.msra.mxu0 0.0
    %126 = vmatprep.mubr.f32.mxu0 0.0
    %127 = vmatmul.mubr.f32.gmra.mrb[0].mxu0 %v60
    %v128 = vpop.f32.mrb[0].mxu0
    %v129 = vadd.f32 %v54, %v128
    %v130 = vpop.f32.mrb[0].mxu0
    %131 = vdwg.mxu0
    %vm132 = vcmask 74752
    %133 = vst.msk [vmem:[#allocation2] sm:$0x3] %vm132, %v129
    // Predicated region
    $region14: #{a_call__.53} parent=1 // pred_check
      _
    $region15: #{a_call__.53} parent=1 // pred_check_branch
      %135 = sbr.rel (0) target = $region17
    $region16: #{a_call__.53} parent=1 // pred_region
      %s137 = ssub.s32 32, 32
      %138 = vsyncadd [#allocation3], %s137
      %s140 = sshll.u32 [#allocation2], 4
      %s141 = int_to_ptr.vmem [resolvable:$true] %s140
      %143 = dma.vmem_to_hbm [thread:$0]  %s141, 32, %s3, [#allocation3]
    $region17: #{a_call__.53} parent=1 // pred_fallthru
      _
    // Predicated region
    $region18: #{a_call__.53} parent=1 // pred_check
      _
    $region19: #{a_call__.53} parent=1 // pred_check_branch
      %145 = sbr.rel (0) target = $region21
    $region20: #{a_call__.53} parent=1 // pred_region
      %146 = dma.done [#allocation3], 32
    $region21: #{a_call__.53} parent=1 // pred_fallthru
      _
    %147 = vsyncpa [#allocation3], 1

</llo_original>
